<compile_context>
chip_gen: v7x
topology: tpu7x:2x2x1
jax: 0.10.0
libtpu: 0.0.40
codegen_flags: <defaults>
</compile_context>

<pallas_src>
import functools

import jax
import jax.numpy as jnp
from jax import lax
from jax.experimental import pallas as pl
from jax.experimental.pallas import tpu as pltpu


def _round_up(x, m):
    return (x + m - 1) // m * m


# ----------------- fused conv3x3 + bias + ReLU + maxpool kernel ---------------

def _conv_relu_pool_kernel(x_ref, w_ref, b_ref, o_ref, rbuf,
                           *, Hp, W, Cin, Cout, Ho, Wo, pool_pad, TB):
    """Processes TB images per grid step.

    x_ref: (TB*Hp, Wp, Cin)   zero-padded NHWC input rows (VMEM)
    w_ref: (9, Cin, Cout)     conv weights, tap-major (dh*3+dw)  (resident)
    b_ref: (1, Cout) f32      conv bias                           (resident)
    o_ref: (TB*Ho, Wo, Cout)  pooled output rows
    rbuf : (W + pool_pad, Cout) f32 scratch for one row-pooled conv row
    """
    if pool_pad:
        # torch MaxPool2d pads with -inf; sentinel for the left padding column.
        rbuf[0:1, :] = jnp.full((1, Cout), -1e30, dtype=jnp.float32)

    def conv_row(base, r):
        # Conv output row r of image at `base`: 9 shifted-row taps, f32 accum.
        acc = jnp.zeros((W, Cout), jnp.float32)
        for dh in range(3):
            row = x_ref[base + r + dh]                      # (Wp, Cin)
            for dw in range(3):
                sl = row[dw:dw + W, :]                      # (W, Cin)
                wk = w_ref[dh * 3 + dw]                     # (Cin, Cout)
                if Cin == 1:
                    # Degenerate K=1 contraction -> VPU broadcast multiply (f32).
                    acc = acc + sl.astype(jnp.float32) * wk.astype(jnp.float32)
                else:
                    acc = acc + jnp.dot(sl, wk, preferred_element_type=jnp.float32)
        return acc

    def image_body(j, carry):
        in_base = j * Hp
        out_base = j * Ho

        def row_body(ho, c2):
            if pool_pad:
                r_lo = jnp.maximum(2 * ho - 1, 0)   # window row -1 is pool padding
                r_hi = 2 * ho
            else:
                r_lo = 2 * ho
                r_hi = 2 * ho + 1
            # pool over the two conv rows of this window
            m = jnp.maximum(conv_row(in_base, r_lo), conv_row(in_base, r_hi))
            rbuf[pool_pad:pool_pad + W, :] = m
            # pool over column pairs via stride-2 sublane reads
            even = rbuf[pl.ds(0, Wo, stride=2), :]
            odd = rbuf[pl.ds(1, Wo, stride=2), :]
            pooled = jnp.maximum(jnp.maximum(even, odd) + b_ref[...], 0.0)
            o_ref[out_base + ho] = pooled.astype(o_ref.dtype)
            return c2

        return lax.fori_loop(0, Ho, row_body, carry)

    lax.fori_loop(0, TB, image_body, 0)


def conv_relu_pool(x, w9, b, *, pool_pad, batch_tile=4):
    """x: (B,H,W,Cin) NHWC; w9: (9,Cin,Cout); b: (1,Cout) f32 -> (B,Ho,Wo,Cout) bf16."""
    B, H, W, Cin = x.shape
    Cout = w9.shape[-1]
    Hp, Wp = H + 2, W + 2
    Ho, Wo = (H + pool_pad) // 2, (W + pool_pad) // 2

    TB = min(batch_tile, B)
    Bp = _round_up(B, TB)
    # bf16 for the MXU path; Cin==1 layer stays f32 (VPU path, lane dim is 1 anyway).
    dt = jnp.bfloat16 if Cin > 1 else jnp.float32
    xp = jnp.pad(x.astype(dt), ((0, Bp - B), (1, 1), (1, 1), (0, 0)))
    xp = xp.reshape(Bp * Hp, Wp, Cin)                 # leading-dim collapse (free)

    kernel = functools.partial(
        _conv_relu_pool_kernel, Hp=Hp, W=W, Cin=Cin, Cout=Cout,
        Ho=Ho, Wo=Wo, pool_pad=pool_pad, TB=TB)

    out = pl.pallas_call(
        kernel,
        out_shape=jax.ShapeDtypeStruct((Bp * Ho, Wo, Cout), jnp.bfloat16),
        grid=(Bp // TB,),
        in_specs=[
            pl.BlockSpec((TB * Hp, Wp, Cin), lambda i: (i, 0, 0)),   # streamed
            pl.BlockSpec((9, Cin, Cout), lambda i: (0, 0, 0)),       # resident
            pl.BlockSpec((1, Cout), lambda i: (0, 0)),               # resident
        ],
        out_specs=pl.BlockSpec((TB * Ho, Wo, Cout), lambda i: (i, 0, 0)),
        scratch_shapes=[pltpu.VMEM((W + pool_pad, Cout), jnp.float32)],
        compiler_params=pltpu.CompilerParams(dimension_semantics=("parallel",)),
    )(xp, w9.astype(dt), b.astype(jnp.float32))

    out = out.reshape(Bp, Ho, Wo, Cout)
    return out[:B] if Bp != B else out


# ------------------ fused fc1 + ReLU (+dropout) + fc2 kernel ------------------

def _mlp_kernel(x_ref, w1_ref, b1_ref, w2_ref, b2_ref, o_ref):
    h = jnp.dot(x_ref[...], w1_ref[...], preferred_element_type=jnp.float32)
    h = jnp.maximum(h + b1_ref[...], 0.0)
    # TODO(synk): Dropout(p=0.5) after fc1 is identity (eval mode); training RNG mask omitted.
    out = jnp.dot(h.astype(w2_ref.dtype), w2_ref[...],
                  preferred_element_type=jnp.float32)
    o_ref[...] = (out + b2_ref[...]).astype(o_ref.dtype)


def mlp_head(x, w1, b1, w2, b2, *, n_out, tile_m=256):
    """x: (M, K). w1: (K, N1) bf16, w2: (N1, N2) bf16 (lane-dense padded)."""
    M, K = x.shape
    N1 = w1.shape[1]
    N2 = w2.shape[1]
    tm = min(tile_m, _round_up(M, 8))
    Mp = _round_up(M, tm)
    if Mp != M:
        x = jnp.pad(x, ((0, Mp - M), (0, 0)))

    out = pl.pallas_call(
        _mlp_kernel,
        out_shape=jax.ShapeDtypeStruct((Mp, N2), jnp.float32),
        grid=(Mp // tm,),
        in_specs=[
            pl.BlockSpec((tm, K), lambda i: (i, 0)),      # streamed activations
            pl.BlockSpec((K, N1), lambda i: (0, 0)),      # resident weights
            pl.BlockSpec((1, N1), lambda i: (0, 0)),
            pl.BlockSpec((N1, N2), lambda i: (0, 0)),
            pl.BlockSpec((1, N2), lambda i: (0, 0)),
        ],
        out_specs=pl.BlockSpec((tm, N2), lambda i: (i, 0)),
        compiler_params=pltpu.CompilerParams(dimension_semantics=("parallel",)),
    )(x.astype(jnp.bfloat16), w1, b1, w2, b2)
    return out[:M, :n_out]


# --------------------------------- Parameters --------------------------------

def init_params(key):
    """PyTorch-shaped parameters: Conv2d (Cout,Cin,3,3); Linear (out,in)."""
    ks = jax.random.split(key, 10)

    def conv_init(kw, kb, cout, cin):
        bound = (1.0 / (cin * 9)) ** 0.5
        w = jax.random.uniform(kw, (cout, cin, 3, 3), jnp.float32, -bound, bound)
        b = jax.random.uniform(kb, (cout,), jnp.float32, -bound, bound)
        return w, b

    def xavier(kw, out_f, in_f):
        bound = (6.0 / (in_f + out_f)) ** 0.5
        return jax.random.uniform(kw, (out_f, in_f), jnp.float32, -bound, bound)

    p = {}
    p["w1"], p["b1"] = conv_init(ks[0], ks[1], 32, 1)
    p["w2"], p["b2"] = conv_init(ks[2], ks[3], 64, 32)
    p["w3"], p["b3"] = conv_init(ks[4], ks[5], 128, 64)
    p["wfc1"] = xavier(ks[6], 625, 4 * 4 * 128)
    p["bfc1"] = 0.01 * jax.random.normal(ks[7], (625,), jnp.float32)
    p["wfc2"] = xavier(ks[8], 10, 625)
    p["bfc2"] = 0.01 * jax.random.normal(ks[9], (10,), jnp.float32)
    return p


def prepare_params(p):
    """One-time conversion to kernel-friendly layouts (tap-major bf16 conv
    weights, transposed + lane-dense-padded bf16 FC weights, f32 biases)."""
    def conv_w(w):                                  # (Cout,Cin,3,3) -> (9,Cin,Cout)
        cout, cin = w.shape[0], w.shape[1]
        t = jnp.transpose(w, (2, 3, 1, 0)).reshape(9, cin, cout)
        return t.astype(jnp.float32 if cin == 1 else jnp.bfloat16)

    n1p = _round_up(625, 128)    # 640
    n2p = _round_up(10, 128)     # 128
    wfc1 = jnp.transpose(p["wfc1"], (1, 0))                        # (2048, 625)
    wfc1 = jnp.pad(wfc1, ((0, 0), (0, n1p - 625))).astype(jnp.bfloat16)
    bfc1 = jnp.pad(p["bfc1"], (0, n1p - 625)).reshape(1, n1p).astype(jnp.float32)
    wfc2 = jnp.transpose(p["wfc2"], (1, 0))                        # (625, 10)
    wfc2 = jnp.pad(wfc2, ((0, n1p - 625), (0, n2p - 10))).astype(jnp.bfloat16)
    bfc2 = jnp.pad(p["bfc2"], (0, n2p - 10)).reshape(1, n2p).astype(jnp.float32)

    return {
        "w1": conv_w(p["w1"]), "b1": p["b1"].reshape(1, -1).astype(jnp.float32),
        "w2": conv_w(p["w2"]), "b2": p["b2"].reshape(1, -1).astype(jnp.float32),
        "w3": conv_w(p["w3"]), "b3": p["b3"].reshape(1, -1).astype(jnp.float32),
        "wfc1": wfc1, "bfc1": bfc1, "wfc2": wfc2, "bfc2": bfc2,
    }


# ---------------------------------- Forward -----------------------------------

@jax.jit
def cnn_forward(x_nchw, prep):
    # torch NCHW input -> NHWC internally (channels on the TPU lane axis)
    x = jnp.transpose(x_nchw, (0, 2, 3, 1)).astype(jnp.float32)
    B = x.shape[0]

    y = conv_relu_pool(x, prep["w1"], prep["b1"], pool_pad=0)   # 28x28x1  -> 14x14x32
    y = conv_relu_pool(y, prep["w2"], prep["b2"], pool_pad=0)   # 14x14x32 -> 7x7x64
    y = conv_relu_pool(y, prep["w3"], prep["b3"], pool_pad=1)   # 7x7x64   -> 4x4x128

    # flatten in NCHW order to match torch's out.view(B, -1)
    flat = jnp.transpose(y, (0, 3, 1, 2)).reshape(B, 4 * 4 * 128)

    return mlp_head(flat, prep["wfc1"], prep["bfc1"],
                    prep["wfc2"], prep["bfc2"], n_out=10)


# ------------------------------------ Main -------------------------------------

if __name__ == "__main__":
    key = jax.random.PRNGKey(0)
    kx, kp = jax.random.split(key)
    # The module requires 28x28 single-channel input (fc1 expects 4*4*128).
    x = jax.random.normal(kx, (2, 1, 28, 28), jnp.float32)
    params = init_params(kp)
    prep = prepare_params(params)

    out = cnn_forward(x, prep)
    out = jax.block_until_ready(out)
    assert out.shape == (2, 10), out.shape
    print("KERNEL_OK")
</pallas_src>

<mosaic_0001>
module attributes {stable_mosaic.version = 11 : i64} {
  func.func @_conv_relu_pool_kernel(%arg0: i32, %arg1: memref<60x30x1xf32, #tpu.memory_space<vmem>>, %arg2: memref<9x1x32xf32, #tpu.memory_space<vmem>>, %arg3: memref<1x32xf32, #tpu.memory_space<vmem>>, %arg4: memref<28x14x32xbf16, #tpu.memory_space<vmem>>, %arg5: memref<28x32xf32, #tpu.memory_space<vmem>>) attributes {dimension_semantics = [#tpu.dimension_semantics<parallel>], iteration_bounds = array<i64: 1>, scalar_prefetch = 0 : i64, scratch_operands = 1 : i64, tpu.core_type = #tpu.core_type<tc>, window_params = [{transform_indices = @transform_0, window_bounds = array<i64: 60, 30, 1>}, {pipeline_mode = #tpu.pipeline_mode<synchronous>, transform_indices = @transform_1, window_bounds = array<i64: 9, 1, 32>}, {pipeline_mode = #tpu.pipeline_mode<synchronous>, transform_indices = @transform_2, window_bounds = array<i64: 1, 32>}, {transform_indices = @transform_3, window_bounds = array<i64: 28, 14, 32>}]} {
    %c0_i32 = arith.constant 0 : i32
    %c2_i32 = arith.constant 2 : i32
    %0 = arith.addi %c0_i32, %c2_i32 : i32
    %c1_i32 = arith.constant 1 : i32
    scf.for %arg6 = %c0_i32 to %0 step %c1_i32  : i32 {
      %c30_i32 = arith.constant 30 : i32
      %1 = arith.muli %arg6, %c30_i32 : i32
      %c14_i32 = arith.constant 14 : i32
      %2 = arith.muli %arg6, %c14_i32 : i32
      %c0_i32_1 = arith.constant 0 : i32
      %c14_i32_2 = arith.constant 14 : i32
      %3 = arith.addi %c0_i32_1, %c14_i32_2 : i32
      %c1_i32_3 = arith.constant 1 : i32
      scf.for %arg7 = %c0_i32_1 to %3 step %c1_i32_3  : i32 {
        %c2_i32_5 = arith.constant 2 : i32
        %4 = arith.muli %c2_i32_5, %arg7 : i32
        %c2_i32_6 = arith.constant 2 : i32
        %5 = arith.muli %c2_i32_6, %arg7 : i32
        %c1_i32_7 = arith.constant 1 : i32
        %6 = arith.addi %5, %c1_i32_7 : i32
        %cst = arith.constant 0.000000e+00 : f32
        %7 = vector.broadcast %cst : f32 to vector<28x32xf32>
        %8 = arith.addi %1, %4 : i32
        %c0_i32_8 = arith.constant 0 : i32
        %9 = arith.addi %8, %c0_i32_8 : i32
        %10 = arith.index_cast %9 : i32 to index
        %c0 = arith.constant 0 : index
        %c0_9 = arith.constant 0 : index
        %11 = vector.load %arg1[%10, %c0, %c0_9] : memref<60x30x1xf32, #tpu.memory_space<vmem>>, vector<1x30x1xf32>
        %12 = vector.shape_cast %11 : vector<1x30x1xf32> to vector<30x1xf32>
        %13 = vector.extract_strided_slice %12 {offsets = [0, 0], sizes = [28, 1], strides = [1, 1]} : vector<30x1xf32> to vector<28x1xf32>
        %c0_10 = arith.constant 0 : index
        %c0_11 = arith.constant 0 : index
        %c0_12 = arith.constant 0 : index
        %14 = vector.load %arg2[%c0_10, %c0_11, %c0_12] : memref<9x1x32xf32, #tpu.memory_space<vmem>>, vector<1x1x32xf32>
        %15 = vector.shape_cast %14 : vector<1x1x32xf32> to vector<1x32xf32>
        %16 = vector.broadcast %13 : vector<28x1xf32> to vector<28x32xf32>
        %17 = vector.broadcast %15 : vector<1x32xf32> to vector<28x32xf32>
        %18 = arith.mulf %16, %17 : vector<28x32xf32>
        %19 = arith.addf %7, %18 : vector<28x32xf32>
        %20 = vector.extract_strided_slice %12 {offsets = [1, 0], sizes = [28, 1], strides = [1, 1]} : vector<30x1xf32> to vector<28x1xf32>
        %c1 = arith.constant 1 : index
        %c0_13 = arith.constant 0 : index
        %c0_14 = arith.constant 0 : index
        %21 = vector.load %arg2[%c1, %c0_13, %c0_14] : memref<9x1x32xf32, #tpu.memory_space<vmem>>, vector<1x1x32xf32>
        %22 = vector.shape_cast %21 : vector<1x1x32xf32> to vector<1x32xf32>
        %23 = vector.broadcast %20 : vector<28x1xf32> to vector<28x32xf32>
        %24 = vector.broadcast %22 : vector<1x32xf32> to vector<28x32xf32>
        %25 = arith.mulf %23, %24 : vector<28x32xf32>
        %26 = arith.addf %19, %25 : vector<28x32xf32>
        %27 = vector.extract_strided_slice %12 {offsets = [2, 0], sizes = [28, 1], strides = [1, 1]} : vector<30x1xf32> to vector<28x1xf32>
        %c2 = arith.constant 2 : index
        %c0_15 = arith.constant 0 : index
        %c0_16 = arith.constant 0 : index
        %28 = vector.load %arg2[%c2, %c0_15, %c0_16] : memref<9x1x32xf32, #tpu.memory_space<vmem>>, vector<1x1x32xf32>
        %29 = vector.shape_cast %28 : vector<1x1x32xf32> to vector<1x32xf32>
        %30 = vector.broadcast %27 : vector<28x1xf32> to vector<28x32xf32>
        %31 = vector.broadcast %29 : vector<1x32xf32> to vector<28x32xf32>
        %32 = arith.mulf %30, %31 : vector<28x32xf32>
        %33 = arith.addf %26, %32 : vector<28x32xf32>
        %34 = arith.addi %1, %4 : i32
        %c1_i32_17 = arith.constant 1 : i32
        %35 = arith.addi %34, %c1_i32_17 : i32
        %36 = arith.index_cast %35 : i32 to index
        %c0_18 = arith.constant 0 : index
        %c0_19 = arith.constant 0 : index
        %37 = vector.load %arg1[%36, %c0_18, %c0_19] : memref<60x30x1xf32, #tpu.memory_space<vmem>>, vector<1x30x1xf32>
        %38 = vector.shape_cast %37 : vector<1x30x1xf32> to vector<30x1xf32>
        %39 = vector.extract_strided_slice %38 {offsets = [0, 0], sizes = [28, 1], strides = [1, 1]} : vector<30x1xf32> to vector<28x1xf32>
        %c3 = arith.constant 3 : index
        %c0_20 = arith.constant 0 : index
        %c0_21 = arith.constant 0 : index
        %40 = vector.load %arg2[%c3, %c0_20, %c0_21] : memref<9x1x32xf32, #tpu.memory_space<vmem>>, vector<1x1x32xf32>
        %41 = vector.shape_cast %40 : vector<1x1x32xf32> to vector<1x32xf32>
        %42 = vector.broadcast %39 : vector<28x1xf32> to vector<28x32xf32>
        %43 = vector.broadcast %41 : vector<1x32xf32> to vector<28x32xf32>
        %44 = arith.mulf %42, %43 : vector<28x32xf32>
        %45 = arith.addf %33, %44 : vector<28x32xf32>
        %46 = vector.extract_strided_slice %38 {offsets = [1, 0], sizes = [28, 1], strides = [1, 1]} : vector<30x1xf32> to vector<28x1xf32>
        %c4 = arith.constant 4 : index
        %c0_22 = arith.constant 0 : index
        %c0_23 = arith.constant 0 : index
        %47 = vector.load %arg2[%c4, %c0_22, %c0_23] : memref<9x1x32xf32, #tpu.memory_space<vmem>>, vector<1x1x32xf32>
        %48 = vector.shape_cast %47 : vector<1x1x32xf32> to vector<1x32xf32>
        %49 = vector.broadcast %46 : vector<28x1xf32> to vector<28x32xf32>
        %50 = vector.broadcast %48 : vector<1x32xf32> to vector<28x32xf32>
        %51 = arith.mulf %49, %50 : vector<28x32xf32>
        %52 = arith.addf %45, %51 : vector<28x32xf32>
        %53 = vector.extract_strided_slice %38 {offsets = [2, 0], sizes = [28, 1], strides = [1, 1]} : vector<30x1xf32> to vector<28x1xf32>
        %c5 = arith.constant 5 : index
        %c0_24 = arith.constant 0 : index
        %c0_25 = arith.constant 0 : index
        %54 = vector.load %arg2[%c5, %c0_24, %c0_25] : memref<9x1x32xf32, #tpu.memory_space<vmem>>, vector<1x1x32xf32>
        %55 = vector.shape_cast %54 : vector<1x1x32xf32> to vector<1x32xf32>
        %56 = vector.broadcast %53 : vector<28x1xf32> to vector<28x32xf32>
        %57 = vector.broadcast %55 : vector<1x32xf32> to vector<28x32xf32>
        %58 = arith.mulf %56, %57 : vector<28x32xf32>
        %59 = arith.addf %52, %58 : vector<28x32xf32>
        %60 = arith.addi %1, %4 : i32
        %c2_i32_26 = arith.constant 2 : i32
        %61 = arith.addi %60, %c2_i32_26 : i32
        %62 = arith.index_cast %61 : i32 to index
        %c0_27 = arith.constant 0 : index
        %c0_28 = arith.constant 0 : index
        %63 = vector.load %arg1[%62, %c0_27, %c0_28] : memref<60x30x1xf32, #tpu.memory_space<vmem>>, vector<1x30x1xf32>
        %64 = vector.shape_cast %63 : vector<1x30x1xf32> to vector<30x1xf32>
        %65 = vector.extract_strided_slice %64 {offsets = [0, 0], sizes = [28, 1], strides = [1, 1]} : vector<30x1xf32> to vector<28x1xf32>
        %c6 = arith.constant 6 : index
        %c0_29 = arith.constant 0 : index
        %c0_30 = arith.constant 0 : index
        %66 = vector.load %arg2[%c6, %c0_29, %c0_30] : memref<9x1x32xf32, #tpu.memory_space<vmem>>, vector<1x1x32xf32>
        %67 = vector.shape_cast %66 : vector<1x1x32xf32> to vector<1x32xf32>
        %68 = vector.broadcast %65 : vector<28x1xf32> to vector<28x32xf32>
        %69 = vector.broadcast %67 : vector<1x32xf32> to vector<28x32xf32>
        %70 = arith.mulf %68, %69 : vector<28x32xf32>
        %71 = arith.addf %59, %70 : vector<28x32xf32>
        %72 = vector.extract_strided_slice %64 {offsets = [1, 0], sizes = [28, 1], strides = [1, 1]} : vector<30x1xf32> to vector<28x1xf32>
        %c7 = arith.constant 7 : index
        %c0_31 = arith.constant 0 : index
        %c0_32 = arith.constant 0 : index
        %73 = vector.load %arg2[%c7, %c0_31, %c0_32] : memref<9x1x32xf32, #tpu.memory_space<vmem>>, vector<1x1x32xf32>
        %74 = vector.shape_cast %73 : vector<1x1x32xf32> to vector<1x32xf32>
        %75 = vector.broadcast %72 : vector<28x1xf32> to vector<28x32xf32>
        %76 = vector.broadcast %74 : vector<1x32xf32> to vector<28x32xf32>
        %77 = arith.mulf %75, %76 : vector<28x32xf32>
        %78 = arith.addf %71, %77 : vector<28x32xf32>
        %79 = vector.extract_strided_slice %64 {offsets = [2, 0], sizes = [28, 1], strides = [1, 1]} : vector<30x1xf32> to vector<28x1xf32>
        %c8 = arith.constant 8 : index
        %c0_33 = arith.constant 0 : index
        %c0_34 = arith.constant 0 : index
        %80 = vector.load %arg2[%c8, %c0_33, %c0_34] : memref<9x1x32xf32, #tpu.memory_space<vmem>>, vector<1x1x32xf32>
        %81 = vector.shape_cast %80 : vector<1x1x32xf32> to vector<1x32xf32>
        %82 = vector.broadcast %79 : vector<28x1xf32> to vector<28x32xf32>
        %83 = vector.broadcast %81 : vector<1x32xf32> to vector<28x32xf32>
        %84 = arith.mulf %82, %83 : vector<28x32xf32>
        %85 = arith.addf %78, %84 : vector<28x32xf32>
        %cst_35 = arith.constant 0.000000e+00 : f32
        %86 = vector.broadcast %cst_35 : f32 to vector<28x32xf32>
        %87 = arith.addi %1, %6 : i32
        %c0_i32_36 = arith.constant 0 : i32
        %88 = arith.addi %87, %c0_i32_36 : i32
        %89 = arith.index_cast %88 : i32 to index
        %c0_37 = arith.constant 0 : index
        %c0_38 = arith.constant 0 : index
        %90 = vector.load %arg1[%89, %c0_37, %c0_38] : memref<60x30x1xf32, #tpu.memory_space<vmem>>, vector<1x30x1xf32>
        %91 = vector.shape_cast %90 : vector<1x30x1xf32> to vector<30x1xf32>
        %92 = vector.extract_strided_slice %91 {offsets = [0, 0], sizes = [28, 1], strides = [1, 1]} : vector<30x1xf32> to vector<28x1xf32>
        %c0_39 = arith.constant 0 : index
        %c0_40 = arith.constant 0 : index
        %c0_41 = arith.constant 0 : index
        %93 = vector.load %arg2[%c0_39, %c0_40, %c0_41] : memref<9x1x32xf32, #tpu.memory_space<vmem>>, vector<1x1x32xf32>
        %94 = vector.shape_cast %93 : vector<1x1x32xf32> to vector<1x32xf32>
        %95 = vector.broadcast %92 : vector<28x1xf32> to vector<28x32xf32>
        %96 = vector.broadcast %94 : vector<1x32xf32> to vector<28x32xf32>
        %97 = arith.mulf %95, %96 : vector<28x32xf32>
        %98 = arith.addf %86, %97 : vector<28x32xf32>
        %99 = vector.extract_strided_slice %91 {offsets = [1, 0], sizes = [28, 1], strides = [1, 1]} : vector<30x1xf32> to vector<28x1xf32>
        %c1_42 = arith.constant 1 : index
        %c0_43 = arith.constant 0 : index
        %c0_44 = arith.constant 0 : index
        %100 = vector.load %arg2[%c1_42, %c0_43, %c0_44] : memref<9x1x32xf32, #tpu.memory_space<vmem>>, vector<1x1x32xf32>
        %101 = vector.shape_cast %100 : vector<1x1x32xf32> to vector<1x32xf32>
        %102 = vector.broadcast %99 : vector<28x1xf32> to vector<28x32xf32>
        %103 = vector.broadcast %101 : vector<1x32xf32> to vector<28x32xf32>
        %104 = arith.mulf %102, %103 : vector<28x32xf32>
        %105 = arith.addf %98, %104 : vector<28x32xf32>
        %106 = vector.extract_strided_slice %91 {offsets = [2, 0], sizes = [28, 1], strides = [1, 1]} : vector<30x1xf32> to vector<28x1xf32>
        %c2_45 = arith.constant 2 : index
        %c0_46 = arith.constant 0 : index
        %c0_47 = arith.constant 0 : index
        %107 = vector.load %arg2[%c2_45, %c0_46, %c0_47] : memref<9x1x32xf32, #tpu.memory_space<vmem>>, vector<1x1x32xf32>
        %108 = vector.shape_cast %107 : vector<1x1x32xf32> to vector<1x32xf32>
        %109 = vector.broadcast %106 : vector<28x1xf32> to vector<28x32xf32>
        %110 = vector.broadcast %108 : vector<1x32xf32> to vector<28x32xf32>
        %111 = arith.mulf %109, %110 : vector<28x32xf32>
        %112 = arith.addf %105, %111 : vector<28x32xf32>
        %113 = arith.addi %1, %6 : i32
        %c1_i32_48 = arith.constant 1 : i32
        %114 = arith.addi %113, %c1_i32_48 : i32
        %115 = arith.index_cast %114 : i32 to index
        %c0_49 = arith.constant 0 : index
        %c0_50 = arith.constant 0 : index
        %116 = vector.load %arg1[%115, %c0_49, %c0_50] : memref<60x30x1xf32, #tpu.memory_space<vmem>>, vector<1x30x1xf32>
        %117 = vector.shape_cast %116 : vector<1x30x1xf32> to vector<30x1xf32>
        %118 = vector.extract_strided_slice %117 {offsets = [0, 0], sizes = [28, 1], strides = [1, 1]} : vector<30x1xf32> to vector<28x1xf32>
        %c3_51 = arith.constant 3 : index
        %c0_52 = arith.constant 0 : index
        %c0_53 = arith.constant 0 : index
        %119 = vector.load %arg2[%c3_51, %c0_52, %c0_53] : memref<9x1x32xf32, #tpu.memory_space<vmem>>, vector<1x1x32xf32>
        %120 = vector.shape_cast %119 : vector<1x1x32xf32> to vector<1x32xf32>
        %121 = vector.broadcast %118 : vector<28x1xf32> to vector<28x32xf32>
        %122 = vector.broadcast %120 : vector<1x32xf32> to vector<28x32xf32>
        %123 = arith.mulf %121, %122 : vector<28x32xf32>
        %124 = arith.addf %112, %123 : vector<28x32xf32>
        %125 = vector.extract_strided_slice %117 {offsets = [1, 0], sizes = [28, 1], strides = [1, 1]} : vector<30x1xf32> to vector<28x1xf32>
        %c4_54 = arith.constant 4 : index
        %c0_55 = arith.constant 0 : index
        %c0_56 = arith.constant 0 : index
        %126 = vector.load %arg2[%c4_54, %c0_55, %c0_56] : memref<9x1x32xf32, #tpu.memory_space<vmem>>, vector<1x1x32xf32>
        %127 = vector.shape_cast %126 : vector<1x1x32xf32> to vector<1x32xf32>
        %128 = vector.broadcast %125 : vector<28x1xf32> to vector<28x32xf32>
        %129 = vector.broadcast %127 : vector<1x32xf32> to vector<28x32xf32>
        %130 = arith.mulf %128, %129 : vector<28x32xf32>
        %131 = arith.addf %124, %130 : vector<28x32xf32>
        %132 = vector.extract_strided_slice %117 {offsets = [2, 0], sizes = [28, 1], strides = [1, 1]} : vector<30x1xf32> to vector<28x1xf32>
        %c5_57 = arith.constant 5 : index
        %c0_58 = arith.constant 0 : index
        %c0_59 = arith.constant 0 : index
        %133 = vector.load %arg2[%c5_57, %c0_58, %c0_59] : memref<9x1x32xf32, #tpu.memory_space<vmem>>, vector<1x1x32xf32>
        %134 = vector.shape_cast %133 : vector<1x1x32xf32> to vector<1x32xf32>
        %135 = vector.broadcast %132 : vector<28x1xf32> to vector<28x32xf32>
        %136 = vector.broadcast %134 : vector<1x32xf32> to vector<28x32xf32>
        %137 = arith.mulf %135, %136 : vector<28x32xf32>
        %138 = arith.addf %131, %137 : vector<28x32xf32>
        %139 = arith.addi %1, %6 : i32
        %c2_i32_60 = arith.constant 2 : i32
        %140 = arith.addi %139, %c2_i32_60 : i32
        %141 = arith.index_cast %140 : i32 to index
        %c0_61 = arith.constant 0 : index
        %c0_62 = arith.constant 0 : index
        %142 = vector.load %arg1[%141, %c0_61, %c0_62] : memref<60x30x1xf32, #tpu.memory_space<vmem>>, vector<1x30x1xf32>
        %143 = vector.shape_cast %142 : vector<1x30x1xf32> to vector<30x1xf32>
        %144 = vector.extract_strided_slice %143 {offsets = [0, 0], sizes = [28, 1], strides = [1, 1]} : vector<30x1xf32> to vector<28x1xf32>
        %c6_63 = arith.constant 6 : index
        %c0_64 = arith.constant 0 : index
        %c0_65 = arith.constant 0 : index
        %145 = vector.load %arg2[%c6_63, %c0_64, %c0_65] : memref<9x1x32xf32, #tpu.memory_space<vmem>>, vector<1x1x32xf32>
        %146 = vector.shape_cast %145 : vector<1x1x32xf32> to vector<1x32xf32>
        %147 = vector.broadcast %144 : vector<28x1xf32> to vector<28x32xf32>
        %148 = vector.broadcast %146 : vector<1x32xf32> to vector<28x32xf32>
        %149 = arith.mulf %147, %148 : vector<28x32xf32>
        %150 = arith.addf %138, %149 : vector<28x32xf32>
        %151 = vector.extract_strided_slice %143 {offsets = [1, 0], sizes = [28, 1], strides = [1, 1]} : vector<30x1xf32> to vector<28x1xf32>
        %c7_66 = arith.constant 7 : index
        %c0_67 = arith.constant 0 : index
        %c0_68 = arith.constant 0 : index
        %152 = vector.load %arg2[%c7_66, %c0_67, %c0_68] : memref<9x1x32xf32, #tpu.memory_space<vmem>>, vector<1x1x32xf32>
        %153 = vector.shape_cast %152 : vector<1x1x32xf32> to vector<1x32xf32>
        %154 = vector.broadcast %151 : vector<28x1xf32> to vector<28x32xf32>
        %155 = vector.broadcast %153 : vector<1x32xf32> to vector<28x32xf32>
        %156 = arith.mulf %154, %155 : vector<28x32xf32>
        %157 = arith.addf %150, %156 : vector<28x32xf32>
        %158 = vector.extract_strided_slice %143 {offsets = [2, 0], sizes = [28, 1], strides = [1, 1]} : vector<30x1xf32> to vector<28x1xf32>
        %c8_69 = arith.constant 8 : index
        %c0_70 = arith.constant 0 : index
        %c0_71 = arith.constant 0 : index
        %159 = vector.load %arg2[%c8_69, %c0_70, %c0_71] : memref<9x1x32xf32, #tpu.memory_space<vmem>>, vector<1x1x32xf32>
        %160 = vector.shape_cast %159 : vector<1x1x32xf32> to vector<1x32xf32>
        %161 = vector.broadcast %158 : vector<28x1xf32> to vector<28x32xf32>
        %162 = vector.broadcast %160 : vector<1x32xf32> to vector<28x32xf32>
        %163 = arith.mulf %161, %162 : vector<28x32xf32>
        %164 = arith.addf %157, %163 : vector<28x32xf32>
        %165 = arith.maximumf %85, %164 : vector<28x32xf32>
        %c0_72 = arith.constant 0 : index
        %c0_73 = arith.constant 0 : index
        %166 = vector.load %arg5[%c0_72, %c0_73] : memref<28x32xf32, #tpu.memory_space<vmem>>, vector<28x32xf32>
        tpu.vector_store %arg5[%c0_72, %c0_73], %165 {strides = array<i32>} : memref<28x32xf32, #tpu.memory_space<vmem>>, vector<28x32xf32>,
        %c0_74 = arith.constant 0 : index
        %c0_75 = arith.constant 0 : index
        %167 = tpu.strided_load %arg5[%c0_74, %c0_75] {strides = array<i32: 2, 1>} : memref<28x32xf32, #tpu.memory_space<vmem>>, vector<14x32xf32>
        %c1_76 = arith.constant 1 : index
        %c0_77 = arith.constant 0 : index
        %168 = tpu.strided_load %arg5[%c1_76, %c0_77] {strides = array<i32: 2, 1>} : memref<28x32xf32, #tpu.memory_space<vmem>>, vector<14x32xf32>
        %169 = arith.maximumf %167, %168 : vector<14x32xf32>
        %c0_78 = arith.constant 0 : index
        %c0_79 = arith.constant 0 : index
        %170 = vector.load %arg3[%c0_78, %c0_79] : memref<1x32xf32, #tpu.memory_space<vmem>>, vector<1x32xf32>
        %171 = vector.broadcast %170 : vector<1x32xf32> to vector<14x32xf32>
        %172 = arith.addf %169, %171 : vector<14x32xf32>
        %cst_80 = arith.constant 0.000000e+00 : f32
        %173 = vector.broadcast %cst_80 : f32 to vector<14x32xf32>
        %174 = arith.maximumf %172, %173 : vector<14x32xf32>
        %175 = arith.truncf %174 : vector<14x32xf32> to vector<14x32xbf16>
        %176 = arith.addi %2, %arg7 : i32
        %177 = arith.index_cast %176 : i32 to index
        %c0_81 = arith.constant 0 : index
        %c0_82 = arith.constant 0 : index
        %178 = vector.load %arg4[%177, %c0_81, %c0_82] : memref<28x14x32xbf16, #tpu.memory_space<vmem>>, vector<1x14x32xbf16>
        %179 = vector.shape_cast %178 : vector<1x14x32xbf16> to vector<14x32xbf16>
        %180 = vector.shape_cast %175 : vector<14x32xbf16> to vector<1x14x32xbf16>
        tpu.vector_store %arg4[%177, %c0_81, %c0_82], %180 {strides = array<i32>} : memref<28x14x32xbf16, #tpu.memory_space<vmem>>, vector<1x14x32xbf16>,
      }
      %c14_i32_4 = arith.constant 14 : i32
    }
    %c2_i32_0 = arith.constant 2 : i32
    return
  }
  func.func @transform_0(%arg0: i32) -> (i32, i32, i32) {
    %c0_i32 = arith.constant 0 : i32
    %c0_i32_0 = arith.constant 0 : i32
    %c0_i32_1 = arith.constant 0 : i32
    return %arg0, %c0_i32, %c0_i32_0 : i32, i32, i32
  }
  func.func @transform_1(%arg0: i32) -> (i32, i32, i32) {
    %c0_i32 = arith.constant 0 : i32
    %c0_i32_0 = arith.constant 0 : i32
    %c0_i32_1 = arith.constant 0 : i32
    %c0_i32_2 = arith.constant 0 : i32
    return %c0_i32, %c0_i32_0, %c0_i32_1 : i32, i32, i32
  }
  func.func @transform_2(%arg0: i32) -> (i32, i32) {
    %c0_i32 = arith.constant 0 : i32
    %c0_i32_0 = arith.constant 0 : i32
    %c0_i32_1 = arith.constant 0 : i32
    return %c0_i32, %c0_i32_0 : i32, i32
  }
  func.func @transform_3(%arg0: i32) -> (i32, i32, i32) {
    %c0_i32 = arith.constant 0 : i32
    %c0_i32_0 = arith.constant 0 : i32
    %c0_i32_1 = arith.constant 0 : i32
    return %arg0, %c0_i32, %c0_i32_0 : i32, i32, i32
  }
}

module attributes {stable_mosaic.version = 11 : i64} {
  func.func @_conv_relu_pool_kernel(%arg0: i32, %arg1: memref<32x16x32xbf16, #tpu.memory_space<vmem>>, %arg2: memref<9x32x64xbf16, #tpu.memory_space<vmem>>, %arg3: memref<1x64xf32, #tpu.memory_space<vmem>>, %arg4: memref<14x7x64xbf16, #tpu.memory_space<vmem>>, %arg5: memref<14x64xf32, #tpu.memory_space<vmem>>) attributes {dimension_semantics = [#tpu.dimension_semantics<parallel>], iteration_bounds = array<i64: 1>, scalar_prefetch = 0 : i64, scratch_operands = 1 : i64, tpu.core_type = #tpu.core_type<tc>, window_params = [{transform_indices = @transform_0, window_bounds = array<i64: 32, 16, 32>}, {pipeline_mode = #tpu.pipeline_mode<synchronous>, transform_indices = @transform_1, window_bounds = array<i64: 9, 32, 64>}, {pipeline_mode = #tpu.pipeline_mode<synchronous>, transform_indices = @transform_2, window_bounds = array<i64: 1, 64>}, {transform_indices = @transform_3, window_bounds = array<i64: 14, 7, 64>}]} {
    %c0_i32 = arith.constant 0 : i32
    %c2_i32 = arith.constant 2 : i32
    %0 = arith.addi %c0_i32, %c2_i32 : i32
    %c1_i32 = arith.constant 1 : i32
    scf.for %arg6 = %c0_i32 to %0 step %c1_i32  : i32 {
      %c16_i32 = arith.constant 16 : i32
      %1 = arith.muli %arg6, %c16_i32 : i32
      %c7_i32 = arith.constant 7 : i32
      %2 = arith.muli %arg6, %c7_i32 : i32
      %c0_i32_1 = arith.constant 0 : i32
      %c7_i32_2 = arith.constant 7 : i32
      %3 = arith.addi %c0_i32_1, %c7_i32_2 : i32
      %c1_i32_3 = arith.constant 1 : i32
      scf.for %arg7 = %c0_i32_1 to %3 step %c1_i32_3  : i32 {
        %c2_i32_5 = arith.constant 2 : i32
        %4 = arith.muli %c2_i32_5, %arg7 : i32
        %c2_i32_6 = arith.constant 2 : i32
        %5 = arith.muli %c2_i32_6, %arg7 : i32
        %c1_i32_7 = arith.constant 1 : i32
        %6 = arith.addi %5, %c1_i32_7 : i32
        %cst = arith.constant 0.000000e+00 : f32
        %7 = vector.broadcast %cst : f32 to vector<14x64xf32>
        %8 = arith.addi %1, %4 : i32
        %c0_i32_8 = arith.constant 0 : i32
        %9 = arith.addi %8, %c0_i32_8 : i32
        %10 = arith.index_cast %9 : i32 to index
        %c0 = arith.constant 0 : index
        %c0_9 = arith.constant 0 : index
        %11 = vector.load %arg1[%10, %c0, %c0_9] : memref<32x16x32xbf16, #tpu.memory_space<vmem>>, vector<1x16x32xbf16>
        %12 = vector.shape_cast %11 : vector<1x16x32xbf16> to vector<16x32xbf16>
        %13 = vector.extract_strided_slice %12 {offsets = [0, 0], sizes = [14, 32], strides = [1, 1]} : vector<16x32xbf16> to vector<14x32xbf16>
        %c0_10 = arith.constant 0 : index
        %c0_11 = arith.constant 0 : index
        %c0_12 = arith.constant 0 : index
        %14 = vector.load %arg2[%c0_10, %c0_11, %c0_12] : memref<9x32x64xbf16, #tpu.memory_space<vmem>>, vector<1x32x64xbf16>
        %15 = vector.shape_cast %14 : vector<1x32x64xbf16> to vector<32x64xbf16>
        %cst_13 = arith.constant dense<0.000000e+00> : vector<14x64xf32>
        %16 = tpu.matmul %13, %15, %cst_13 {dimension_numbers = #tpu.dot_dimension_numbers<[1], [0], [0], [1], [0, 0, 1, 1], [], []>} : vector<14x32xbf16>, vector<32x64xbf16>, vector<14x64xf32> -> vector<14x64xf32>
        %17 = arith.addf %7, %16 : vector<14x64xf32>
        %18 = vector.extract_strided_slice %12 {offsets = [1, 0], sizes = [14, 32], strides = [1, 1]} : vector<16x32xbf16> to vector<14x32xbf16>
        %c1 = arith.constant 1 : index
        %c0_14 = arith.constant 0 : index
        %c0_15 = arith.constant 0 : index
        %19 = vector.load %arg2[%c1, %c0_14, %c0_15] : memref<9x32x64xbf16, #tpu.memory_space<vmem>>, vector<1x32x64xbf16>
        %20 = vector.shape_cast %19 : vector<1x32x64xbf16> to vector<32x64xbf16>
        %cst_16 = arith.constant dense<0.000000e+00> : vector<14x64xf32>
        %21 = tpu.matmul %18, %20, %cst_16 {dimension_numbers = #tpu.dot_dimension_numbers<[1], [0], [0], [1], [0, 0, 1, 1], [], []>} : vector<14x32xbf16>, vector<32x64xbf16>, vector<14x64xf32> -> vector<14x64xf32>
        %22 = arith.addf %17, %21 : vector<14x64xf32>
        %23 = vector.extract_strided_slice %12 {offsets = [2, 0], sizes = [14, 32], strides = [1, 1]} : vector<16x32xbf16> to vector<14x32xbf16>
        %c2 = arith.constant 2 : index
        %c0_17 = arith.constant 0 : index
        %c0_18 = arith.constant 0 : index
        %24 = vector.load %arg2[%c2, %c0_17, %c0_18] : memref<9x32x64xbf16, #tpu.memory_space<vmem>>, vector<1x32x64xbf16>
        %25 = vector.shape_cast %24 : vector<1x32x64xbf16> to vector<32x64xbf16>
        %cst_19 = arith.constant dense<0.000000e+00> : vector<14x64xf32>
        %26 = tpu.matmul %23, %25, %cst_19 {dimension_numbers = #tpu.dot_dimension_numbers<[1], [0], [0], [1], [0, 0, 1, 1], [], []>} : vector<14x32xbf16>, vector<32x64xbf16>, vector<14x64xf32> -> vector<14x64xf32>
        %27 = arith.addf %22, %26 : vector<14x64xf32>
        %28 = arith.addi %1, %4 : i32
        %c1_i32_20 = arith.constant 1 : i32
        %29 = arith.addi %28, %c1_i32_20 : i32
        %30 = arith.index_cast %29 : i32 to index
        %c0_21 = arith.constant 0 : index
        %c0_22 = arith.constant 0 : index
        %31 = vector.load %arg1[%30, %c0_21, %c0_22] : memref<32x16x32xbf16, #tpu.memory_space<vmem>>, vector<1x16x32xbf16>
        %32 = vector.shape_cast %31 : vector<1x16x32xbf16> to vector<16x32xbf16>
        %33 = vector.extract_strided_slice %32 {offsets = [0, 0], sizes = [14, 32], strides = [1, 1]} : vector<16x32xbf16> to vector<14x32xbf16>
        %c3 = arith.constant 3 : index
        %c0_23 = arith.constant 0 : index
        %c0_24 = arith.constant 0 : index
        %34 = vector.load %arg2[%c3, %c0_23, %c0_24] : memref<9x32x64xbf16, #tpu.memory_space<vmem>>, vector<1x32x64xbf16>
        %35 = vector.shape_cast %34 : vector<1x32x64xbf16> to vector<32x64xbf16>
        %cst_25 = arith.constant dense<0.000000e+00> : vector<14x64xf32>
        %36 = tpu.matmul %33, %35, %cst_25 {dimension_numbers = #tpu.dot_dimension_numbers<[1], [0], [0], [1], [0, 0, 1, 1], [], []>} : vector<14x32xbf16>, vector<32x64xbf16>, vector<14x64xf32> -> vector<14x64xf32>
        %37 = arith.addf %27, %36 : vector<14x64xf32>
        %38 = vector.extract_strided_slice %32 {offsets = [1, 0], sizes = [14, 32], strides = [1, 1]} : vector<16x32xbf16> to vector<14x32xbf16>
        %c4 = arith.constant 4 : index
        %c0_26 = arith.constant 0 : index
        %c0_27 = arith.constant 0 : index
        %39 = vector.load %arg2[%c4, %c0_26, %c0_27] : memref<9x32x64xbf16, #tpu.memory_space<vmem>>, vector<1x32x64xbf16>
        %40 = vector.shape_cast %39 : vector<1x32x64xbf16> to vector<32x64xbf16>
        %cst_28 = arith.constant dense<0.000000e+00> : vector<14x64xf32>
        %41 = tpu.matmul %38, %40, %cst_28 {dimension_numbers = #tpu.dot_dimension_numbers<[1], [0], [0], [1], [0, 0, 1, 1], [], []>} : vector<14x32xbf16>, vector<32x64xbf16>, vector<14x64xf32> -> vector<14x64xf32>
        %42 = arith.addf %37, %41 : vector<14x64xf32>
        %43 = vector.extract_strided_slice %32 {offsets = [2, 0], sizes = [14, 32], strides = [1, 1]} : vector<16x32xbf16> to vector<14x32xbf16>
        %c5 = arith.constant 5 : index
        %c0_29 = arith.constant 0 : index
        %c0_30 = arith.constant 0 : index
        %44 = vector.load %arg2[%c5, %c0_29, %c0_30] : memref<9x32x64xbf16, #tpu.memory_space<vmem>>, vector<1x32x64xbf16>
        %45 = vector.shape_cast %44 : vector<1x32x64xbf16> to vector<32x64xbf16>
        %cst_31 = arith.constant dense<0.000000e+00> : vector<14x64xf32>
        %46 = tpu.matmul %43, %45, %cst_31 {dimension_numbers = #tpu.dot_dimension_numbers<[1], [0], [0], [1], [0, 0, 1, 1], [], []>} : vector<14x32xbf16>, vector<32x64xbf16>, vector<14x64xf32> -> vector<14x64xf32>
        %47 = arith.addf %42, %46 : vector<14x64xf32>
        %48 = arith.addi %1, %4 : i32
        %c2_i32_32 = arith.constant 2 : i32
        %49 = arith.addi %48, %c2_i32_32 : i32
        %50 = arith.index_cast %49 : i32 to index
        %c0_33 = arith.constant 0 : index
        %c0_34 = arith.constant 0 : index
        %51 = vector.load %arg1[%50, %c0_33, %c0_34] : memref<32x16x32xbf16, #tpu.memory_space<vmem>>, vector<1x16x32xbf16>
        %52 = vector.shape_cast %51 : vector<1x16x32xbf16> to vector<16x32xbf16>
        %53 = vector.extract_strided_slice %52 {offsets = [0, 0], sizes = [14, 32], strides = [1, 1]} : vector<16x32xbf16> to vector<14x32xbf16>
        %c6 = arith.constant 6 : index
        %c0_35 = arith.constant 0 : index
        %c0_36 = arith.constant 0 : index
        %54 = vector.load %arg2[%c6, %c0_35, %c0_36] : memref<9x32x64xbf16, #tpu.memory_space<vmem>>, vector<1x32x64xbf16>
        %55 = vector.shape_cast %54 : vector<1x32x64xbf16> to vector<32x64xbf16>
        %cst_37 = arith.constant dense<0.000000e+00> : vector<14x64xf32>
        %56 = tpu.matmul %53, %55, %cst_37 {dimension_numbers = #tpu.dot_dimension_numbers<[1], [0], [0], [1], [0, 0, 1, 1], [], []>} : vector<14x32xbf16>, vector<32x64xbf16>, vector<14x64xf32> -> vector<14x64xf32>
        %57 = arith.addf %47, %56 : vector<14x64xf32>
        %58 = vector.extract_strided_slice %52 {offsets = [1, 0], sizes = [14, 32], strides = [1, 1]} : vector<16x32xbf16> to vector<14x32xbf16>
        %c7 = arith.constant 7 : index
        %c0_38 = arith.constant 0 : index
        %c0_39 = arith.constant 0 : index
        %59 = vector.load %arg2[%c7, %c0_38, %c0_39] : memref<9x32x64xbf16, #tpu.memory_space<vmem>>, vector<1x32x64xbf16>
        %60 = vector.shape_cast %59 : vector<1x32x64xbf16> to vector<32x64xbf16>
        %cst_40 = arith.constant dense<0.000000e+00> : vector<14x64xf32>
        %61 = tpu.matmul %58, %60, %cst_40 {dimension_numbers = #tpu.dot_dimension_numbers<[1], [0], [0], [1], [0, 0, 1, 1], [], []>} : vector<14x32xbf16>, vector<32x64xbf16>, vector<14x64xf32> -> vector<14x64xf32>
        %62 = arith.addf %57, %61 : vector<14x64xf32>
        %63 = vector.extract_strided_slice %52 {offsets = [2, 0], sizes = [14, 32], strides = [1, 1]} : vector<16x32xbf16> to vector<14x32xbf16>
        %c8 = arith.constant 8 : index
        %c0_41 = arith.constant 0 : index
        %c0_42 = arith.constant 0 : index
        %64 = vector.load %arg2[%c8, %c0_41, %c0_42] : memref<9x32x64xbf16, #tpu.memory_space<vmem>>, vector<1x32x64xbf16>
        %65 = vector.shape_cast %64 : vector<1x32x64xbf16> to vector<32x64xbf16>
        %cst_43 = arith.constant dense<0.000000e+00> : vector<14x64xf32>
        %66 = tpu.matmul %63, %65, %cst_43 {dimension_numbers = #tpu.dot_dimension_numbers<[1], [0], [0], [1], [0, 0, 1, 1], [], []>} : vector<14x32xbf16>, vector<32x64xbf16>, vector<14x64xf32> -> vector<14x64xf32>
        %67 = arith.addf %62, %66 : vector<14x64xf32>
        %cst_44 = arith.constant 0.000000e+00 : f32
        %68 = vector.broadcast %cst_44 : f32 to vector<14x64xf32>
        %69 = arith.addi %1, %6 : i32
        %c0_i32_45 = arith.constant 0 : i32
        %70 = arith.addi %69, %c0_i32_45 : i32
        %71 = arith.index_cast %70 : i32 to index
        %c0_46 = arith.constant 0 : index
        %c0_47 = arith.constant 0 : index
        %72 = vector.load %arg1[%71, %c0_46, %c0_47] : memref<32x16x32xbf16, #tpu.memory_space<vmem>>, vector<1x16x32xbf16>
        %73 = vector.shape_cast %72 : vector<1x16x32xbf16> to vector<16x32xbf16>
        %74 = vector.extract_strided_slice %73 {offsets = [0, 0], sizes = [14, 32], strides = [1, 1]} : vector<16x32xbf16> to vector<14x32xbf16>
        %c0_48 = arith.constant 0 : index
        %c0_49 = arith.constant 0 : index
        %c0_50 = arith.constant 0 : index
        %75 = vector.load %arg2[%c0_48, %c0_49, %c0_50] : memref<9x32x64xbf16, #tpu.memory_space<vmem>>, vector<1x32x64xbf16>
        %76 = vector.shape_cast %75 : vector<1x32x64xbf16> to vector<32x64xbf16>
        %cst_51 = arith.constant dense<0.000000e+00> : vector<14x64xf32>
        %77 = tpu.matmul %74, %76, %cst_51 {dimension_numbers = #tpu.dot_dimension_numbers<[1], [0], [0], [1], [0, 0, 1, 1], [], []>} : vector<14x32xbf16>, vector<32x64xbf16>, vector<14x64xf32> -> vector<14x64xf32>
        %78 = arith.addf %68, %77 : vector<14x64xf32>
        %79 = vector.extract_strided_slice %73 {offsets = [1, 0], sizes = [14, 32], strides = [1, 1]} : vector<16x32xbf16> to vector<14x32xbf16>
        %c1_52 = arith.constant 1 : index
        %c0_53 = arith.constant 0 : index
        %c0_54 = arith.constant 0 : index
        %80 = vector.load %arg2[%c1_52, %c0_53, %c0_54] : memref<9x32x64xbf16, #tpu.memory_space<vmem>>, vector<1x32x64xbf16>
        %81 = vector.shape_cast %80 : vector<1x32x64xbf16> to vector<32x64xbf16>
        %cst_55 = arith.constant dense<0.000000e+00> : vector<14x64xf32>
        %82 = tpu.matmul %79, %81, %cst_55 {dimension_numbers = #tpu.dot_dimension_numbers<[1], [0], [0], [1], [0, 0, 1, 1], [], []>} : vector<14x32xbf16>, vector<32x64xbf16>, vector<14x64xf32> -> vector<14x64xf32>
        %83 = arith.addf %78, %82 : vector<14x64xf32>
        %84 = vector.extract_strided_slice %73 {offsets = [2, 0], sizes = [14, 32], strides = [1, 1]} : vector<16x32xbf16> to vector<14x32xbf16>
        %c2_56 = arith.constant 2 : index
        %c0_57 = arith.constant 0 : index
        %c0_58 = arith.constant 0 : index
        %85 = vector.load %arg2[%c2_56, %c0_57, %c0_58] : memref<9x32x64xbf16, #tpu.memory_space<vmem>>, vector<1x32x64xbf16>
        %86 = vector.shape_cast %85 : vector<1x32x64xbf16> to vector<32x64xbf16>
        %cst_59 = arith.constant dense<0.000000e+00> : vector<14x64xf32>
        %87 = tpu.matmul %84, %86, %cst_59 {dimension_numbers = #tpu.dot_dimension_numbers<[1], [0], [0], [1], [0, 0, 1, 1], [], []>} : vector<14x32xbf16>, vector<32x64xbf16>, vector<14x64xf32> -> vector<14x64xf32>
        %88 = arith.addf %83, %87 : vector<14x64xf32>
        %89 = arith.addi %1, %6 : i32
        %c1_i32_60 = arith.constant 1 : i32
        %90 = arith.addi %89, %c1_i32_60 : i32
        %91 = arith.index_cast %90 : i32 to index
        %c0_61 = arith.constant 0 : index
        %c0_62 = arith.constant 0 : index
        %92 = vector.load %arg1[%91, %c0_61, %c0_62] : memref<32x16x32xbf16, #tpu.memory_space<vmem>>, vector<1x16x32xbf16>
        %93 = vector.shape_cast %92 : vector<1x16x32xbf16> to vector<16x32xbf16>
        %94 = vector.extract_strided_slice %93 {offsets = [0, 0], sizes = [14, 32], strides = [1, 1]} : vector<16x32xbf16> to vector<14x32xbf16>
        %c3_63 = arith.constant 3 : index
        %c0_64 = arith.constant 0 : index
        %c0_65 = arith.constant 0 : index
        %95 = vector.load %arg2[%c3_63, %c0_64, %c0_65] : memref<9x32x64xbf16, #tpu.memory_space<vmem>>, vector<1x32x64xbf16>
        %96 = vector.shape_cast %95 : vector<1x32x64xbf16> to vector<32x64xbf16>
        %cst_66 = arith.constant dense<0.000000e+00> : vector<14x64xf32>
        %97 = tpu.matmul %94, %96, %cst_66 {dimension_numbers = #tpu.dot_dimension_numbers<[1], [0], [0], [1], [0, 0, 1, 1], [], []>} : vector<14x32xbf16>, vector<32x64xbf16>, vector<14x64xf32> -> vector<14x64xf32>
        %98 = arith.addf %88, %97 : vector<14x64xf32>
        %99 = vector.extract_strided_slice %93 {offsets = [1, 0], sizes = [14, 32], strides = [1, 1]} : vector<16x32xbf16> to vector<14x32xbf16>
        %c4_67 = arith.constant 4 : index
        %c0_68 = arith.constant 0 : index
        %c0_69 = arith.constant 0 : index
        %100 = vector.load %arg2[%c4_67, %c0_68, %c0_69] : memref<9x32x64xbf16, #tpu.memory_space<vmem>>, vector<1x32x64xbf16>
        %101 = vector.shape_cast %100 : vector<1x32x64xbf16> to vector<32x64xbf16>
        %cst_70 = arith.constant dense<0.000000e+00> : vector<14x64xf32>
        %102 = tpu.matmul %99, %101, %cst_70 {dimension_numbers = #tpu.dot_dimension_numbers<[1], [0], [0], [1], [0, 0, 1, 1], [], []>} : vector<14x32xbf16>, vector<32x64xbf16>, vector<14x64xf32> -> vector<14x64xf32>
        %103 = arith.addf %98, %102 : vector<14x64xf32>
        %104 = vector.extract_strided_slice %93 {offsets = [2, 0], sizes = [14, 32], strides = [1, 1]} : vector<16x32xbf16> to vector<14x32xbf16>
        %c5_71 = arith.constant 5 : index
        %c0_72 = arith.constant 0 : index
        %c0_73 = arith.constant 0 : index
        %105 = vector.load %arg2[%c5_71, %c0_72, %c0_73] : memref<9x32x64xbf16, #tpu.memory_space<vmem>>, vector<1x32x64xbf16>
        %106 = vector.shape_cast %105 : vector<1x32x64xbf16> to vector<32x64xbf16>
        %cst_74 = arith.constant dense<0.000000e+00> : vector<14x64xf32>
        %107 = tpu.matmul %104, %106, %cst_74 {dimension_numbers = #tpu.dot_dimension_numbers<[1], [0], [0], [1], [0, 0, 1, 1], [], []>} : vector<14x32xbf16>, vector<32x64xbf16>, vector<14x64xf32> -> vector<14x64xf32>
        %108 = arith.addf %103, %107 : vector<14x64xf32>
        %109 = arith.addi %1, %6 : i32
        %c2_i32_75 = arith.constant 2 : i32
        %110 = arith.addi %109, %c2_i32_75 : i32
        %111 = arith.index_cast %110 : i32 to index
        %c0_76 = arith.constant 0 : index
        %c0_77 = arith.constant 0 : index
        %112 = vector.load %arg1[%111, %c0_76, %c0_77] : memref<32x16x32xbf16, #tpu.memory_space<vmem>>, vector<1x16x32xbf16>
        %113 = vector.shape_cast %112 : vector<1x16x32xbf16> to vector<16x32xbf16>
        %114 = vector.extract_strided_slice %113 {offsets = [0, 0], sizes = [14, 32], strides = [1, 1]} : vector<16x32xbf16> to vector<14x32xbf16>
        %c6_78 = arith.constant 6 : index
        %c0_79 = arith.constant 0 : index
        %c0_80 = arith.constant 0 : index
        %115 = vector.load %arg2[%c6_78, %c0_79, %c0_80] : memref<9x32x64xbf16, #tpu.memory_space<vmem>>, vector<1x32x64xbf16>
        %116 = vector.shape_cast %115 : vector<1x32x64xbf16> to vector<32x64xbf16>
        %cst_81 = arith.constant dense<0.000000e+00> : vector<14x64xf32>
        %117 = tpu.matmul %114, %116, %cst_81 {dimension_numbers = #tpu.dot_dimension_numbers<[1], [0], [0], [1], [0, 0, 1, 1], [], []>} : vector<14x32xbf16>, vector<32x64xbf16>, vector<14x64xf32> -> vector<14x64xf32>
        %118 = arith.addf %108, %117 : vector<14x64xf32>
        %119 = vector.extract_strided_slice %113 {offsets = [1, 0], sizes = [14, 32], strides = [1, 1]} : vector<16x32xbf16> to vector<14x32xbf16>
        %c7_82 = arith.constant 7 : index
        %c0_83 = arith.constant 0 : index
        %c0_84 = arith.constant 0 : index
        %120 = vector.load %arg2[%c7_82, %c0_83, %c0_84] : memref<9x32x64xbf16, #tpu.memory_space<vmem>>, vector<1x32x64xbf16>
        %121 = vector.shape_cast %120 : vector<1x32x64xbf16> to vector<32x64xbf16>
        %cst_85 = arith.constant dense<0.000000e+00> : vector<14x64xf32>
        %122 = tpu.matmul %119, %121, %cst_85 {dimension_numbers = #tpu.dot_dimension_numbers<[1], [0], [0], [1], [0, 0, 1, 1], [], []>} : vector<14x32xbf16>, vector<32x64xbf16>, vector<14x64xf32> -> vector<14x64xf32>
        %123 = arith.addf %118, %122 : vector<14x64xf32>
        %124 = vector.extract_strided_slice %113 {offsets = [2, 0], sizes = [14, 32], strides = [1, 1]} : vector<16x32xbf16> to vector<14x32xbf16>
        %c8_86 = arith.constant 8 : index
        %c0_87 = arith.constant 0 : index
        %c0_88 = arith.constant 0 : index
        %125 = vector.load %arg2[%c8_86, %c0_87, %c0_88] : memref<9x32x64xbf16, #tpu.memory_space<vmem>>, vector<1x32x64xbf16>
        %126 = vector.shape_cast %125 : vector<1x32x64xbf16> to vector<32x64xbf16>
        %cst_89 = arith.constant dense<0.000000e+00> : vector<14x64xf32>
        %127 = tpu.matmul %124, %126, %cst_89 {dimension_numbers = #tpu.dot_dimension_numbers<[1], [0], [0], [1], [0, 0, 1, 1], [], []>} : vector<14x32xbf16>, vector<32x64xbf16>, vector<14x64xf32> -> vector<14x64xf32>
        %128 = arith.addf %123, %127 : vector<14x64xf32>
        %129 = arith.maximumf %67, %128 : vector<14x64xf32>
        %c0_90 = arith.constant 0 : index
        %c0_91 = arith.constant 0 : index
        %130 = vector.load %arg5[%c0_90, %c0_91] : memref<14x64xf32, #tpu.memory_space<vmem>>, vector<14x64xf32>
        tpu.vector_store %arg5[%c0_90, %c0_91], %129 {strides = array<i32>} : memref<14x64xf32, #tpu.memory_space<vmem>>, vector<14x64xf32>,
        %c0_92 = arith.constant 0 : index
        %c0_93 = arith.constant 0 : index
        %131 = tpu.strided_load %arg5[%c0_92, %c0_93] {strides = array<i32: 2, 1>} : memref<14x64xf32, #tpu.memory_space<vmem>>, vector<7x64xf32>
        %c1_94 = arith.constant 1 : index
        %c0_95 = arith.constant 0 : index
        %132 = tpu.strided_load %arg5[%c1_94, %c0_95] {strides = array<i32: 2, 1>} : memref<14x64xf32, #tpu.memory_space<vmem>>, vector<7x64xf32>
        %133 = arith.maximumf %131, %132 : vector<7x64xf32>
        %c0_96 = arith.constant 0 : index
        %c0_97 = arith.constant 0 : index
        %134 = vector.load %arg3[%c0_96, %c0_97] : memref<1x64xf32, #tpu.memory_space<vmem>>, vector<1x64xf32>
        %135 = vector.broadcast %134 : vector<1x64xf32> to vector<7x64xf32>
        %136 = arith.addf %133, %135 : vector<7x64xf32>
        %cst_98 = arith.constant 0.000000e+00 : f32
        %137 = vector.broadcast %cst_98 : f32 to vector<7x64xf32>
        %138 = arith.maximumf %136, %137 : vector<7x64xf32>
        %139 = arith.truncf %138 : vector<7x64xf32> to vector<7x64xbf16>
        %140 = arith.addi %2, %arg7 : i32
        %141 = arith.index_cast %140 : i32 to index
        %c0_99 = arith.constant 0 : index
        %c0_100 = arith.constant 0 : index
        %142 = vector.load %arg4[%141, %c0_99, %c0_100] : memref<14x7x64xbf16, #tpu.memory_space<vmem>>, vector<1x7x64xbf16>
        %143 = vector.shape_cast %142 : vector<1x7x64xbf16> to vector<7x64xbf16>
        %144 = vector.shape_cast %139 : vector<7x64xbf16> to vector<1x7x64xbf16>
        tpu.vector_store %arg4[%141, %c0_99, %c0_100], %144 {strides = array<i32>} : memref<14x7x64xbf16, #tpu.memory_space<vmem>>, vector<1x7x64xbf16>,
      }
      %c7_i32_4 = arith.constant 7 : i32
    }
    %c2_i32_0 = arith.constant 2 : i32
    return
  }
  func.func @transform_0(%arg0: i32) -> (i32, i32, i32) {
    %c0_i32 = arith.constant 0 : i32
    %c0_i32_0 = arith.constant 0 : i32
    %c0_i32_1 = arith.constant 0 : i32
    return %arg0, %c0_i32, %c0_i32_0 : i32, i32, i32
  }
  func.func @transform_1(%arg0: i32) -> (i32, i32, i32) {
    %c0_i32 = arith.constant 0 : i32
    %c0_i32_0 = arith.constant 0 : i32
    %c0_i32_1 = arith.constant 0 : i32
    %c0_i32_2 = arith.constant 0 : i32
    return %c0_i32, %c0_i32_0, %c0_i32_1 : i32, i32, i32
  }
  func.func @transform_2(%arg0: i32) -> (i32, i32) {
    %c0_i32 = arith.constant 0 : i32
    %c0_i32_0 = arith.constant 0 : i32
    %c0_i32_1 = arith.constant 0 : i32
    return %c0_i32, %c0_i32_0 : i32, i32
  }
  func.func @transform_3(%arg0: i32) -> (i32, i32, i32) {
    %c0_i32 = arith.constant 0 : i32
    %c0_i32_0 = arith.constant 0 : i32
    %c0_i32_1 = arith.constant 0 : i32
    return %arg0, %c0_i32, %c0_i32_0 : i32, i32, i32
  }
}

module attributes {stable_mosaic.version = 11 : i64} {
  func.func @_conv_relu_pool_kernel(%arg0: i32, %arg1: memref<18x9x64xbf16, #tpu.memory_space<vmem>>, %arg2: memref<9x64x128xbf16, #tpu.memory_space<vmem>>, %arg3: memref<1x128xf32, #tpu.memory_space<vmem>>, %arg4: memref<8x4x128xbf16, #tpu.memory_space<vmem>>, %arg5: memref<8x128xf32, #tpu.memory_space<vmem>>) attributes {dimension_semantics = [#tpu.dimension_semantics<parallel>], iteration_bounds = array<i64: 1>, scalar_prefetch = 0 : i64, scratch_operands = 1 : i64, tpu.core_type = #tpu.core_type<tc>, window_params = [{transform_indices = @transform_0, window_bounds = array<i64: 18, 9, 64>}, {pipeline_mode = #tpu.pipeline_mode<synchronous>, transform_indices = @transform_1, window_bounds = array<i64: 9, 64, 128>}, {pipeline_mode = #tpu.pipeline_mode<synchronous>, transform_indices = @transform_2, window_bounds = array<i64: 1, 128>}, {transform_indices = @transform_3, window_bounds = array<i64: 8, 4, 128>}]} {
    %cst = arith.constant -1.000000e+30 : f32
    %0 = vector.broadcast %cst : f32 to vector<1x128xf32>
    %c0 = arith.constant 0 : index
    %c0_0 = arith.constant 0 : index
    %1 = vector.load %arg5[%c0, %c0_0] : memref<8x128xf32, #tpu.memory_space<vmem>>, vector<1x128xf32>
    tpu.vector_store %arg5[%c0, %c0_0], %0 {strides = array<i32>} : memref<8x128xf32, #tpu.memory_space<vmem>>, vector<1x128xf32>,
    %c0_i32 = arith.constant 0 : i32
    %c2_i32 = arith.constant 2 : i32
    %2 = arith.addi %c0_i32, %c2_i32 : i32
    %c1_i32 = arith.constant 1 : i32
    scf.for %arg6 = %c0_i32 to %2 step %c1_i32  : i32 {
      %c9_i32 = arith.constant 9 : i32
      %3 = arith.muli %arg6, %c9_i32 : i32
      %c4_i32 = arith.constant 4 : i32
      %4 = arith.muli %arg6, %c4_i32 : i32
      %c0_i32_2 = arith.constant 0 : i32
      %c4_i32_3 = arith.constant 4 : i32
      %5 = arith.addi %c0_i32_2, %c4_i32_3 : i32
      %c1_i32_4 = arith.constant 1 : i32
      scf.for %arg7 = %c0_i32_2 to %5 step %c1_i32_4  : i32 {
        %c2_i32_6 = arith.constant 2 : i32
        %6 = arith.muli %c2_i32_6, %arg7 : i32
        %c1_i32_7 = arith.constant 1 : i32
        %7 = arith.subi %6, %c1_i32_7 : i32
        %c0_i32_8 = arith.constant 0 : i32
        %8 = arith.maxsi %7, %c0_i32_8 : i32
        %c2_i32_9 = arith.constant 2 : i32
        %9 = arith.muli %c2_i32_9, %arg7 : i32
        %cst_10 = arith.constant 0.000000e+00 : f32
        %10 = vector.broadcast %cst_10 : f32 to vector<7x128xf32>
        %11 = arith.addi %3, %8 : i32
        %c0_i32_11 = arith.constant 0 : i32
        %12 = arith.addi %11, %c0_i32_11 : i32
        %13 = arith.index_cast %12 : i32 to index
        %c0_12 = arith.constant 0 : index
        %c0_13 = arith.constant 0 : index
        %14 = vector.load %arg1[%13, %c0_12, %c0_13] : memref<18x9x64xbf16, #tpu.memory_space<vmem>>, vector<1x9x64xbf16>
        %15 = vector.shape_cast %14 : vector<1x9x64xbf16> to vector<9x64xbf16>
        %16 = vector.extract_strided_slice %15 {offsets = [0, 0], sizes = [7, 64], strides = [1, 1]} : vector<9x64xbf16> to vector<7x64xbf16>
        %c0_14 = arith.constant 0 : index
        %c0_15 = arith.constant 0 : index
        %c0_16 = arith.constant 0 : index
        %17 = vector.load %arg2[%c0_14, %c0_15, %c0_16] : memref<9x64x128xbf16, #tpu.memory_space<vmem>>, vector<1x64x128xbf16>
        %18 = vector.shape_cast %17 : vector<1x64x128xbf16> to vector<64x128xbf16>
        %cst_17 = arith.constant dense<0.000000e+00> : vector<7x128xf32>
        %19 = tpu.matmul %16, %18, %cst_17 {dimension_numbers = #tpu.dot_dimension_numbers<[1], [0], [0], [1], [0, 0, 1, 1], [], []>} : vector<7x64xbf16>, vector<64x128xbf16>, vector<7x128xf32> -> vector<7x128xf32>
        %20 = arith.addf %10, %19 : vector<7x128xf32>
        %21 = vector.extract_strided_slice %15 {offsets = [1, 0], sizes = [7, 64], strides = [1, 1]} : vector<9x64xbf16> to vector<7x64xbf16>
        %c1 = arith.constant 1 : index
        %c0_18 = arith.constant 0 : index
        %c0_19 = arith.constant 0 : index
        %22 = vector.load %arg2[%c1, %c0_18, %c0_19] : memref<9x64x128xbf16, #tpu.memory_space<vmem>>, vector<1x64x128xbf16>
        %23 = vector.shape_cast %22 : vector<1x64x128xbf16> to vector<64x128xbf16>
        %cst_20 = arith.constant dense<0.000000e+00> : vector<7x128xf32>
        %24 = tpu.matmul %21, %23, %cst_20 {dimension_numbers = #tpu.dot_dimension_numbers<[1], [0], [0], [1], [0, 0, 1, 1], [], []>} : vector<7x64xbf16>, vector<64x128xbf16>, vector<7x128xf32> -> vector<7x128xf32>
        %25 = arith.addf %20, %24 : vector<7x128xf32>
        %26 = vector.extract_strided_slice %15 {offsets = [2, 0], sizes = [7, 64], strides = [1, 1]} : vector<9x64xbf16> to vector<7x64xbf16>
        %c2 = arith.constant 2 : index
        %c0_21 = arith.constant 0 : index
        %c0_22 = arith.constant 0 : index
        %27 = vector.load %arg2[%c2, %c0_21, %c0_22] : memref<9x64x128xbf16, #tpu.memory_space<vmem>>, vector<1x64x128xbf16>
        %28 = vector.shape_cast %27 : vector<1x64x128xbf16> to vector<64x128xbf16>
        %cst_23 = arith.constant dense<0.000000e+00> : vector<7x128xf32>
        %29 = tpu.matmul %26, %28, %cst_23 {dimension_numbers = #tpu.dot_dimension_numbers<[1], [0], [0], [1], [0, 0, 1, 1], [], []>} : vector<7x64xbf16>, vector<64x128xbf16>, vector<7x128xf32> -> vector<7x128xf32>
        %30 = arith.addf %25, %29 : vector<7x128xf32>
        %31 = arith.addi %3, %8 : i32
        %c1_i32_24 = arith.constant 1 : i32
        %32 = arith.addi %31, %c1_i32_24 : i32
        %33 = arith.index_cast %32 : i32 to index
        %c0_25 = arith.constant 0 : index
        %c0_26 = arith.constant 0 : index
        %34 = vector.load %arg1[%33, %c0_25, %c0_26] : memref<18x9x64xbf16, #tpu.memory_space<vmem>>, vector<1x9x64xbf16>
        %35 = vector.shape_cast %34 : vector<1x9x64xbf16> to vector<9x64xbf16>
        %36 = vector.extract_strided_slice %35 {offsets = [0, 0], sizes = [7, 64], strides = [1, 1]} : vector<9x64xbf16> to vector<7x64xbf16>
        %c3 = arith.constant 3 : index
        %c0_27 = arith.constant 0 : index
        %c0_28 = arith.constant 0 : index
        %37 = vector.load %arg2[%c3, %c0_27, %c0_28] : memref<9x64x128xbf16, #tpu.memory_space<vmem>>, vector<1x64x128xbf16>
        %38 = vector.shape_cast %37 : vector<1x64x128xbf16> to vector<64x128xbf16>
        %cst_29 = arith.constant dense<0.000000e+00> : vector<7x128xf32>
        %39 = tpu.matmul %36, %38, %cst_29 {dimension_numbers = #tpu.dot_dimension_numbers<[1], [0], [0], [1], [0, 0, 1, 1], [], []>} : vector<7x64xbf16>, vector<64x128xbf16>, vector<7x128xf32> -> vector<7x128xf32>
        %40 = arith.addf %30, %39 : vector<7x128xf32>
        %41 = vector.extract_strided_slice %35 {offsets = [1, 0], sizes = [7, 64], strides = [1, 1]} : vector<9x64xbf16> to vector<7x64xbf16>
        %c4 = arith.constant 4 : index
        %c0_30 = arith.constant 0 : index
        %c0_31 = arith.constant 0 : index
        %42 = vector.load %arg2[%c4, %c0_30, %c0_31] : memref<9x64x128xbf16, #tpu.memory_space<vmem>>, vector<1x64x128xbf16>
        %43 = vector.shape_cast %42 : vector<1x64x128xbf16> to vector<64x128xbf16>
        %cst_32 = arith.constant dense<0.000000e+00> : vector<7x128xf32>
        %44 = tpu.matmul %41, %43, %cst_32 {dimension_numbers = #tpu.dot_dimension_numbers<[1], [0], [0], [1], [0, 0, 1, 1], [], []>} : vector<7x64xbf16>, vector<64x128xbf16>, vector<7x128xf32> -> vector<7x128xf32>
        %45 = arith.addf %40, %44 : vector<7x128xf32>
        %46 = vector.extract_strided_slice %35 {offsets = [2, 0], sizes = [7, 64], strides = [1, 1]} : vector<9x64xbf16> to vector<7x64xbf16>
        %c5 = arith.constant 5 : index
        %c0_33 = arith.constant 0 : index
        %c0_34 = arith.constant 0 : index
        %47 = vector.load %arg2[%c5, %c0_33, %c0_34] : memref<9x64x128xbf16, #tpu.memory_space<vmem>>, vector<1x64x128xbf16>
        %48 = vector.shape_cast %47 : vector<1x64x128xbf16> to vector<64x128xbf16>
        %cst_35 = arith.constant dense<0.000000e+00> : vector<7x128xf32>
        %49 = tpu.matmul %46, %48, %cst_35 {dimension_numbers = #tpu.dot_dimension_numbers<[1], [0], [0], [1], [0, 0, 1, 1], [], []>} : vector<7x64xbf16>, vector<64x128xbf16>, vector<7x128xf32> -> vector<7x128xf32>
        %50 = arith.addf %45, %49 : vector<7x128xf32>
        %51 = arith.addi %3, %8 : i32
        %c2_i32_36 = arith.constant 2 : i32
        %52 = arith.addi %51, %c2_i32_36 : i32
        %53 = arith.index_cast %52 : i32 to index
        %c0_37 = arith.constant 0 : index
        %c0_38 = arith.constant 0 : index
        %54 = vector.load %arg1[%53, %c0_37, %c0_38] : memref<18x9x64xbf16, #tpu.memory_space<vmem>>, vector<1x9x64xbf16>
        %55 = vector.shape_cast %54 : vector<1x9x64xbf16> to vector<9x64xbf16>
        %56 = vector.extract_strided_slice %55 {offsets = [0, 0], sizes = [7, 64], strides = [1, 1]} : vector<9x64xbf16> to vector<7x64xbf16>
        %c6 = arith.constant 6 : index
        %c0_39 = arith.constant 0 : index
        %c0_40 = arith.constant 0 : index
        %57 = vector.load %arg2[%c6, %c0_39, %c0_40] : memref<9x64x128xbf16, #tpu.memory_space<vmem>>, vector<1x64x128xbf16>
        %58 = vector.shape_cast %57 : vector<1x64x128xbf16> to vector<64x128xbf16>
        %cst_41 = arith.constant dense<0.000000e+00> : vector<7x128xf32>
        %59 = tpu.matmul %56, %58, %cst_41 {dimension_numbers = #tpu.dot_dimension_numbers<[1], [0], [0], [1], [0, 0, 1, 1], [], []>} : vector<7x64xbf16>, vector<64x128xbf16>, vector<7x128xf32> -> vector<7x128xf32>
        %60 = arith.addf %50, %59 : vector<7x128xf32>
        %61 = vector.extract_strided_slice %55 {offsets = [1, 0], sizes = [7, 64], strides = [1, 1]} : vector<9x64xbf16> to vector<7x64xbf16>
        %c7 = arith.constant 7 : index
        %c0_42 = arith.constant 0 : index
        %c0_43 = arith.constant 0 : index
        %62 = vector.load %arg2[%c7, %c0_42, %c0_43] : memref<9x64x128xbf16, #tpu.memory_space<vmem>>, vector<1x64x128xbf16>
        %63 = vector.shape_cast %62 : vector<1x64x128xbf16> to vector<64x128xbf16>
        %cst_44 = arith.constant dense<0.000000e+00> : vector<7x128xf32>
        %64 = tpu.matmul %61, %63, %cst_44 {dimension_numbers = #tpu.dot_dimension_numbers<[1], [0], [0], [1], [0, 0, 1, 1], [], []>} : vector<7x64xbf16>, vector<64x128xbf16>, vector<7x128xf32> -> vector<7x128xf32>
        %65 = arith.addf %60, %64 : vector<7x128xf32>
        %66 = vector.extract_strided_slice %55 {offsets = [2, 0], sizes = [7, 64], strides = [1, 1]} : vector<9x64xbf16> to vector<7x64xbf16>
        %c8 = arith.constant 8 : index
        %c0_45 = arith.constant 0 : index
        %c0_46 = arith.constant 0 : index
        %67 = vector.load %arg2[%c8, %c0_45, %c0_46] : memref<9x64x128xbf16, #tpu.memory_space<vmem>>, vector<1x64x128xbf16>
        %68 = vector.shape_cast %67 : vector<1x64x128xbf16> to vector<64x128xbf16>
        %cst_47 = arith.constant dense<0.000000e+00> : vector<7x128xf32>
        %69 = tpu.matmul %66, %68, %cst_47 {dimension_numbers = #tpu.dot_dimension_numbers<[1], [0], [0], [1], [0, 0, 1, 1], [], []>} : vector<7x64xbf16>, vector<64x128xbf16>, vector<7x128xf32> -> vector<7x128xf32>
        %70 = arith.addf %65, %69 : vector<7x128xf32>
        %cst_48 = arith.constant 0.000000e+00 : f32
        %71 = vector.broadcast %cst_48 : f32 to vector<7x128xf32>
        %72 = arith.addi %3, %9 : i32
        %c0_i32_49 = arith.constant 0 : i32
        %73 = arith.addi %72, %c0_i32_49 : i32
        %74 = arith.index_cast %73 : i32 to index
        %c0_50 = arith.constant 0 : index
        %c0_51 = arith.constant 0 : index
        %75 = vector.load %arg1[%74, %c0_50, %c0_51] : memref<18x9x64xbf16, #tpu.memory_space<vmem>>, vector<1x9x64xbf16>
        %76 = vector.shape_cast %75 : vector<1x9x64xbf16> to vector<9x64xbf16>
        %77 = vector.extract_strided_slice %76 {offsets = [0, 0], sizes = [7, 64], strides = [1, 1]} : vector<9x64xbf16> to vector<7x64xbf16>
        %c0_52 = arith.constant 0 : index
        %c0_53 = arith.constant 0 : index
        %c0_54 = arith.constant 0 : index
        %78 = vector.load %arg2[%c0_52, %c0_53, %c0_54] : memref<9x64x128xbf16, #tpu.memory_space<vmem>>, vector<1x64x128xbf16>
        %79 = vector.shape_cast %78 : vector<1x64x128xbf16> to vector<64x128xbf16>
        %cst_55 = arith.constant dense<0.000000e+00> : vector<7x128xf32>
        %80 = tpu.matmul %77, %79, %cst_55 {dimension_numbers = #tpu.dot_dimension_numbers<[1], [0], [0], [1], [0, 0, 1, 1], [], []>} : vector<7x64xbf16>, vector<64x128xbf16>, vector<7x128xf32> -> vector<7x128xf32>
        %81 = arith.addf %71, %80 : vector<7x128xf32>
        %82 = vector.extract_strided_slice %76 {offsets = [1, 0], sizes = [7, 64], strides = [1, 1]} : vector<9x64xbf16> to vector<7x64xbf16>
        %c1_56 = arith.constant 1 : index
        %c0_57 = arith.constant 0 : index
        %c0_58 = arith.constant 0 : index
        %83 = vector.load %arg2[%c1_56, %c0_57, %c0_58] : memref<9x64x128xbf16, #tpu.memory_space<vmem>>, vector<1x64x128xbf16>
        %84 = vector.shape_cast %83 : vector<1x64x128xbf16> to vector<64x128xbf16>
        %cst_59 = arith.constant dense<0.000000e+00> : vector<7x128xf32>
        %85 = tpu.matmul %82, %84, %cst_59 {dimension_numbers = #tpu.dot_dimension_numbers<[1], [0], [0], [1], [0, 0, 1, 1], [], []>} : vector<7x64xbf16>, vector<64x128xbf16>, vector<7x128xf32> -> vector<7x128xf32>
        %86 = arith.addf %81, %85 : vector<7x128xf32>
        %87 = vector.extract_strided_slice %76 {offsets = [2, 0], sizes = [7, 64], strides = [1, 1]} : vector<9x64xbf16> to vector<7x64xbf16>
        %c2_60 = arith.constant 2 : index
        %c0_61 = arith.constant 0 : index
        %c0_62 = arith.constant 0 : index
        %88 = vector.load %arg2[%c2_60, %c0_61, %c0_62] : memref<9x64x128xbf16, #tpu.memory_space<vmem>>, vector<1x64x128xbf16>
        %89 = vector.shape_cast %88 : vector<1x64x128xbf16> to vector<64x128xbf16>
        %cst_63 = arith.constant dense<0.000000e+00> : vector<7x128xf32>
        %90 = tpu.matmul %87, %89, %cst_63 {dimension_numbers = #tpu.dot_dimension_numbers<[1], [0], [0], [1], [0, 0, 1, 1], [], []>} : vector<7x64xbf16>, vector<64x128xbf16>, vector<7x128xf32> -> vector<7x128xf32>
        %91 = arith.addf %86, %90 : vector<7x128xf32>
        %92 = arith.addi %3, %9 : i32
        %c1_i32_64 = arith.constant 1 : i32
        %93 = arith.addi %92, %c1_i32_64 : i32
        %94 = arith.index_cast %93 : i32 to index
        %c0_65 = arith.constant 0 : index
        %c0_66 = arith.constant 0 : index
        %95 = vector.load %arg1[%94, %c0_65, %c0_66] : memref<18x9x64xbf16, #tpu.memory_space<vmem>>, vector<1x9x64xbf16>
        %96 = vector.shape_cast %95 : vector<1x9x64xbf16> to vector<9x64xbf16>
        %97 = vector.extract_strided_slice %96 {offsets = [0, 0], sizes = [7, 64], strides = [1, 1]} : vector<9x64xbf16> to vector<7x64xbf16>
        %c3_67 = arith.constant 3 : index
        %c0_68 = arith.constant 0 : index
        %c0_69 = arith.constant 0 : index
        %98 = vector.load %arg2[%c3_67, %c0_68, %c0_69] : memref<9x64x128xbf16, #tpu.memory_space<vmem>>, vector<1x64x128xbf16>
        %99 = vector.shape_cast %98 : vector<1x64x128xbf16> to vector<64x128xbf16>
        %cst_70 = arith.constant dense<0.000000e+00> : vector<7x128xf32>
        %100 = tpu.matmul %97, %99, %cst_70 {dimension_numbers = #tpu.dot_dimension_numbers<[1], [0], [0], [1], [0, 0, 1, 1], [], []>} : vector<7x64xbf16>, vector<64x128xbf16>, vector<7x128xf32> -> vector<7x128xf32>
        %101 = arith.addf %91, %100 : vector<7x128xf32>
        %102 = vector.extract_strided_slice %96 {offsets = [1, 0], sizes = [7, 64], strides = [1, 1]} : vector<9x64xbf16> to vector<7x64xbf16>
        %c4_71 = arith.constant 4 : index
        %c0_72 = arith.constant 0 : index
        %c0_73 = arith.constant 0 : index
        %103 = vector.load %arg2[%c4_71, %c0_72, %c0_73] : memref<9x64x128xbf16, #tpu.memory_space<vmem>>, vector<1x64x128xbf16>
        %104 = vector.shape_cast %103 : vector<1x64x128xbf16> to vector<64x128xbf16>
        %cst_74 = arith.constant dense<0.000000e+00> : vector<7x128xf32>
        %105 = tpu.matmul %102, %104, %cst_74 {dimension_numbers = #tpu.dot_dimension_numbers<[1], [0], [0], [1], [0, 0, 1, 1], [], []>} : vector<7x64xbf16>, vector<64x128xbf16>, vector<7x128xf32> -> vector<7x128xf32>
        %106 = arith.addf %101, %105 : vector<7x128xf32>
        %107 = vector.extract_strided_slice %96 {offsets = [2, 0], sizes = [7, 64], strides = [1, 1]} : vector<9x64xbf16> to vector<7x64xbf16>
        %c5_75 = arith.constant 5 : index
        %c0_76 = arith.constant 0 : index
        %c0_77 = arith.constant 0 : index
        %108 = vector.load %arg2[%c5_75, %c0_76, %c0_77] : memref<9x64x128xbf16, #tpu.memory_space<vmem>>, vector<1x64x128xbf16>
        %109 = vector.shape_cast %108 : vector<1x64x128xbf16> to vector<64x128xbf16>
        %cst_78 = arith.constant dense<0.000000e+00> : vector<7x128xf32>
        %110 = tpu.matmul %107, %109, %cst_78 {dimension_numbers = #tpu.dot_dimension_numbers<[1], [0], [0], [1], [0, 0, 1, 1], [], []>} : vector<7x64xbf16>, vector<64x128xbf16>, vector<7x128xf32> -> vector<7x128xf32>
        %111 = arith.addf %106, %110 : vector<7x128xf32>
        %112 = arith.addi %3, %9 : i32
        %c2_i32_79 = arith.constant 2 : i32
        %113 = arith.addi %112, %c2_i32_79 : i32
        %114 = arith.index_cast %113 : i32 to index
        %c0_80 = arith.constant 0 : index
        %c0_81 = arith.constant 0 : index
        %115 = vector.load %arg1[%114, %c0_80, %c0_81] : memref<18x9x64xbf16, #tpu.memory_space<vmem>>, vector<1x9x64xbf16>
        %116 = vector.shape_cast %115 : vector<1x9x64xbf16> to vector<9x64xbf16>
        %117 = vector.extract_strided_slice %116 {offsets = [0, 0], sizes = [7, 64], strides = [1, 1]} : vector<9x64xbf16> to vector<7x64xbf16>
        %c6_82 = arith.constant 6 : index
        %c0_83 = arith.constant 0 : index
        %c0_84 = arith.constant 0 : index
        %118 = vector.load %arg2[%c6_82, %c0_83, %c0_84] : memref<9x64x128xbf16, #tpu.memory_space<vmem>>, vector<1x64x128xbf16>
        %119 = vector.shape_cast %118 : vector<1x64x128xbf16> to vector<64x128xbf16>
        %cst_85 = arith.constant dense<0.000000e+00> : vector<7x128xf32>
        %120 = tpu.matmul %117, %119, %cst_85 {dimension_numbers = #tpu.dot_dimension_numbers<[1], [0], [0], [1], [0, 0, 1, 1], [], []>} : vector<7x64xbf16>, vector<64x128xbf16>, vector<7x128xf32> -> vector<7x128xf32>
        %121 = arith.addf %111, %120 : vector<7x128xf32>
        %122 = vector.extract_strided_slice %116 {offsets = [1, 0], sizes = [7, 64], strides = [1, 1]} : vector<9x64xbf16> to vector<7x64xbf16>
        %c7_86 = arith.constant 7 : index
        %c0_87 = arith.constant 0 : index
        %c0_88 = arith.constant 0 : index
        %123 = vector.load %arg2[%c7_86, %c0_87, %c0_88] : memref<9x64x128xbf16, #tpu.memory_space<vmem>>, vector<1x64x128xbf16>
        %124 = vector.shape_cast %123 : vector<1x64x128xbf16> to vector<64x128xbf16>
        %cst_89 = arith.constant dense<0.000000e+00> : vector<7x128xf32>
        %125 = tpu.matmul %122, %124, %cst_89 {dimension_numbers = #tpu.dot_dimension_numbers<[1], [0], [0], [1], [0, 0, 1, 1], [], []>} : vector<7x64xbf16>, vector<64x128xbf16>, vector<7x128xf32> -> vector<7x128xf32>
        %126 = arith.addf %121, %125 : vector<7x128xf32>
        %127 = vector.extract_strided_slice %116 {offsets = [2, 0], sizes = [7, 64], strides = [1, 1]} : vector<9x64xbf16> to vector<7x64xbf16>
        %c8_90 = arith.constant 8 : index
        %c0_91 = arith.constant 0 : index
        %c0_92 = arith.constant 0 : index
        %128 = vector.load %arg2[%c8_90, %c0_91, %c0_92] : memref<9x64x128xbf16, #tpu.memory_space<vmem>>, vector<1x64x128xbf16>
        %129 = vector.shape_cast %128 : vector<1x64x128xbf16> to vector<64x128xbf16>
        %cst_93 = arith.constant dense<0.000000e+00> : vector<7x128xf32>
        %130 = tpu.matmul %127, %129, %cst_93 {dimension_numbers = #tpu.dot_dimension_numbers<[1], [0], [0], [1], [0, 0, 1, 1], [], []>} : vector<7x64xbf16>, vector<64x128xbf16>, vector<7x128xf32> -> vector<7x128xf32>
        %131 = arith.addf %126, %130 : vector<7x128xf32>
        %132 = arith.maximumf %70, %131 : vector<7x128xf32>
        %c1_94 = arith.constant 1 : index
        %c0_95 = arith.constant 0 : index
        %133 = vector.load %arg5[%c1_94, %c0_95] : memref<8x128xf32, #tpu.memory_space<vmem>>, vector<7x128xf32>
        tpu.vector_store %arg5[%c1_94, %c0_95], %132 {strides = array<i32>} : memref<8x128xf32, #tpu.memory_space<vmem>>, vector<7x128xf32>,
        %c0_96 = arith.constant 0 : index
        %c0_97 = arith.constant 0 : index
        %134 = tpu.strided_load %arg5[%c0_96, %c0_97] {strides = array<i32: 2, 1>} : memref<8x128xf32, #tpu.memory_space<vmem>>, vector<4x128xf32>
        %c1_98 = arith.constant 1 : index
        %c0_99 = arith.constant 0 : index
        %135 = tpu.strided_load %arg5[%c1_98, %c0_99] {strides = array<i32: 2, 1>} : memref<8x128xf32, #tpu.memory_space<vmem>>, vector<4x128xf32>
        %136 = arith.maximumf %134, %135 : vector<4x128xf32>
        %c0_100 = arith.constant 0 : index
        %c0_101 = arith.constant 0 : index
        %137 = vector.load %arg3[%c0_100, %c0_101] : memref<1x128xf32, #tpu.memory_space<vmem>>, vector<1x128xf32>
        %138 = vector.broadcast %137 : vector<1x128xf32> to vector<4x128xf32>
        %139 = arith.addf %136, %138 : vector<4x128xf32>
        %cst_102 = arith.constant 0.000000e+00 : f32
        %140 = vector.broadcast %cst_102 : f32 to vector<4x128xf32>
        %141 = arith.maximumf %139, %140 : vector<4x128xf32>
        %142 = arith.truncf %141 : vector<4x128xf32> to vector<4x128xbf16>
        %143 = arith.addi %4, %arg7 : i32
        %144 = arith.index_cast %143 : i32 to index
        %c0_103 = arith.constant 0 : index
        %c0_104 = arith.constant 0 : index
        %145 = vector.load %arg4[%144, %c0_103, %c0_104] : memref<8x4x128xbf16, #tpu.memory_space<vmem>>, vector<1x4x128xbf16>
        %146 = vector.shape_cast %145 : vector<1x4x128xbf16> to vector<4x128xbf16>
        %147 = vector.shape_cast %142 : vector<4x128xbf16> to vector<1x4x128xbf16>
        tpu.vector_store %arg4[%144, %c0_103, %c0_104], %147 {strides = array<i32>} : memref<8x4x128xbf16, #tpu.memory_space<vmem>>, vector<1x4x128xbf16>,
      }
      %c4_i32_5 = arith.constant 4 : i32
    }
    %c2_i32_1 = arith.constant 2 : i32
    return
  }
  func.func @transform_0(%arg0: i32) -> (i32, i32, i32) {
    %c0_i32 = arith.constant 0 : i32
    %c0_i32_0 = arith.constant 0 : i32
    %c0_i32_1 = arith.constant 0 : i32
    return %arg0, %c0_i32, %c0_i32_0 : i32, i32, i32
  }
  func.func @transform_1(%arg0: i32) -> (i32, i32, i32) {
    %c0_i32 = arith.constant 0 : i32
    %c0_i32_0 = arith.constant 0 : i32
    %c0_i32_1 = arith.constant 0 : i32
    %c0_i32_2 = arith.constant 0 : i32
    return %c0_i32, %c0_i32_0, %c0_i32_1 : i32, i32, i32
  }
  func.func @transform_2(%arg0: i32) -> (i32, i32) {
    %c0_i32 = arith.constant 0 : i32
    %c0_i32_0 = arith.constant 0 : i32
    %c0_i32_1 = arith.constant 0 : i32
    return %c0_i32, %c0_i32_0 : i32, i32
  }
  func.func @transform_3(%arg0: i32) -> (i32, i32, i32) {
    %c0_i32 = arith.constant 0 : i32
    %c0_i32_0 = arith.constant 0 : i32
    %c0_i32_1 = arith.constant 0 : i32
    return %arg0, %c0_i32, %c0_i32_0 : i32, i32, i32
  }
}

module attributes {stable_mosaic.version = 11 : i64} {
  func.func @_mlp_kernel(%arg0: i32, %arg1: memref<8x2048xbf16, #tpu.memory_space<vmem>>, %arg2: memref<2048x640xbf16, #tpu.memory_space<vmem>>, %arg3: memref<1x640xf32, #tpu.memory_space<vmem>>, %arg4: memref<640x128xbf16, #tpu.memory_space<vmem>>, %arg5: memref<1x128xf32, #tpu.memory_space<vmem>>, %arg6: memref<8x128xf32, #tpu.memory_space<vmem>>) attributes {dimension_semantics = [#tpu.dimension_semantics<parallel>], iteration_bounds = array<i64: 1>, scalar_prefetch = 0 : i64, scratch_operands = 0 : i64, tpu.core_type = #tpu.core_type<tc>, window_params = [{transform_indices = @transform_0, window_bounds = array<i64: 8, 2048>}, {pipeline_mode = #tpu.pipeline_mode<synchronous>, transform_indices = @transform_1, window_bounds = array<i64: 2048, 640>}, {pipeline_mode = #tpu.pipeline_mode<synchronous>, transform_indices = @transform_2, window_bounds = array<i64: 1, 640>}, {pipeline_mode = #tpu.pipeline_mode<synchronous>, transform_indices = @transform_3, window_bounds = array<i64: 640, 128>}, {pipeline_mode = #tpu.pipeline_mode<synchronous>, transform_indices = @transform_4, window_bounds = array<i64: 1, 128>}, {transform_indices = @transform_5, window_bounds = array<i64: 8, 128>}]} {
    %c0 = arith.constant 0 : index
    %c0_0 = arith.constant 0 : index
    %0 = vector.load %arg1[%c0, %c0_0] : memref<8x2048xbf16, #tpu.memory_space<vmem>>, vector<8x2048xbf16>
    %c0_1 = arith.constant 0 : index
    %c0_2 = arith.constant 0 : index
    %1 = vector.load %arg2[%c0_1, %c0_2] : memref<2048x640xbf16, #tpu.memory_space<vmem>>, vector<2048x640xbf16>
    %cst = arith.constant dense<0.000000e+00> : vector<8x640xf32>
    %2 = tpu.matmul %0, %1, %cst {dimension_numbers = #tpu.dot_dimension_numbers<[1], [0], [0], [1], [0, 0, 1, 1], [], []>} : vector<8x2048xbf16>, vector<2048x640xbf16>, vector<8x640xf32> -> vector<8x640xf32>
    %c0_3 = arith.constant 0 : index
    %c0_4 = arith.constant 0 : index
    %3 = vector.load %arg3[%c0_3, %c0_4] : memref<1x640xf32, #tpu.memory_space<vmem>>, vector<1x640xf32>
    %4 = vector.broadcast %3 : vector<1x640xf32> to vector<8x640xf32>
    %5 = arith.addf %2, %4 : vector<8x640xf32>
    %cst_5 = arith.constant 0.000000e+00 : f32
    %6 = vector.broadcast %cst_5 : f32 to vector<8x640xf32>
    %7 = arith.maximumf %5, %6 : vector<8x640xf32>
    %8 = arith.truncf %7 : vector<8x640xf32> to vector<8x640xbf16>
    %c0_6 = arith.constant 0 : index
    %c0_7 = arith.constant 0 : index
    %9 = vector.load %arg4[%c0_6, %c0_7] : memref<640x128xbf16, #tpu.memory_space<vmem>>, vector<640x128xbf16>
    %cst_8 = arith.constant dense<0.000000e+00> : vector<8x128xf32>
    %10 = tpu.matmul %8, %9, %cst_8 {dimension_numbers = #tpu.dot_dimension_numbers<[1], [0], [0], [1], [0, 0, 1, 1], [], []>} : vector<8x640xbf16>, vector<640x128xbf16>, vector<8x128xf32> -> vector<8x128xf32>
    %c0_9 = arith.constant 0 : index
    %c0_10 = arith.constant 0 : index
    %11 = vector.load %arg5[%c0_9, %c0_10] : memref<1x128xf32, #tpu.memory_space<vmem>>, vector<1x128xf32>
    %12 = vector.broadcast %11 : vector<1x128xf32> to vector<8x128xf32>
    %13 = arith.addf %10, %12 : vector<8x128xf32>
    %c0_11 = arith.constant 0 : index
    %c0_12 = arith.constant 0 : index
    %14 = vector.load %arg6[%c0_11, %c0_12] : memref<8x128xf32, #tpu.memory_space<vmem>>, vector<8x128xf32>
    tpu.vector_store %arg6[%c0_11, %c0_12], %13 {strides = array<i32>} : memref<8x128xf32, #tpu.memory_space<vmem>>, vector<8x128xf32>,
    return
  }
  func.func @transform_0(%arg0: i32) -> (i32, i32) {
    %c0_i32 = arith.constant 0 : i32
    %c0_i32_0 = arith.constant 0 : i32
    return %arg0, %c0_i32 : i32, i32
  }
  func.func @transform_1(%arg0: i32) -> (i32, i32) {
    %c0_i32 = arith.constant 0 : i32
    %c0_i32_0 = arith.constant 0 : i32
    %c0_i32_1 = arith.constant 0 : i32
    return %c0_i32, %c0_i32_0 : i32, i32
  }
  func.func @transform_2(%arg0: i32) -> (i32, i32) {
    %c0_i32 = arith.constant 0 : i32
    %c0_i32_0 = arith.constant 0 : i32
    %c0_i32_1 = arith.constant 0 : i32
    return %c0_i32, %c0_i32_0 : i32, i32
  }
  func.func @transform_3(%arg0: i32) -> (i32, i32) {
    %c0_i32 = arith.constant 0 : i32
    %c0_i32_0 = arith.constant 0 : i32
    %c0_i32_1 = arith.constant 0 : i32
    return %c0_i32, %c0_i32_0 : i32, i32
  }
  func.func @transform_4(%arg0: i32) -> (i32, i32) {
    %c0_i32 = arith.constant 0 : i32
    %c0_i32_0 = arith.constant 0 : i32
    %c0_i32_1 = arith.constant 0 : i32
    return %c0_i32, %c0_i32_0 : i32, i32
  }
  func.func @transform_5(%arg0: i32) -> (i32, i32) {
    %c0_i32 = arith.constant 0 : i32
    %c0_i32_0 = arith.constant 0 : i32
    return %arg0, %c0_i32 : i32, i32
  }
}

</mosaic_0001>

<llo_original>
// kernel: cnn_forward.4
$region0: #{cnn_forward.4}
  #allocation0 [shape = 'u32[]', space=smem, size = 0x4, offset = 0x4, fixed_abs, tag = 'smem constant byte address 0x4 - core index']
  #allocation1 [shape = 'u32[144,128]{1,0:T(1,128)}', space=vmem, size = 0x12000, scoped, tag = 'internal scratch']
  #allocation2 [shape = 'f32[28,32]{1,0:T(8,128)}', space=vmem, size = 0x4000, scoped, tag = 'scratch operand']
  %s0 = inlined_call_operand.vmem [shape: f32[60,30,1], index: 0, kind: input, shape index: {}]
  %s1 = inlined_call_operand.hbm [shape: f32[9,1,32], index: 1, kind: input, shape index: {}]
  %s2 = inlined_call_operand.hbm [shape: f32[1,32], index: 2, kind: input, shape index: {}]
  %s3 = inlined_call_operand.vmem [shape: bf16[28,14,32], index: 3, kind: output, shape index: {}]
  %s4 = sld [smem:[#allocation0]]
  $region44: #{cnn_forward.4} parent=0
    _
  %s6 = ssub.s32 1, %s4
  %s7 = scalar_select 0, %s6, %s4
  $region1: #{cnn_forward.4} parent=0
    #allocation3 [shape = 'u8[4608]{0}', space=vmem, size = 0x1400, scoped, tag = 'input window, operand 1, single buffered']
    #allocation4 [shape = 's32[1]{0}', space=sflag, size = 0x4, scoped, tag = 'scoped memory for cnn_forward.4']
    #allocation5 [shape = 'u8[512]{0}', space=vmem, size = 0x400, scoped, tag = 'input window, operand 2, single buffered']
    #allocation6 [shape = 's32[1]{0}', space=sflag, size = 0x4, scoped, tag = 'scoped memory for cnn_forward.4']
    %8 = vsyncpa [#allocation4], 0
    %9 = vsyncpa [#allocation6], 0
    // Predicated region
    $region2: #{cnn_forward.4} parent=1 // pred_check
      _
    $region3: #{cnn_forward.4} parent=1 // pred_check_branch
      %11 = sbr.rel (0) target = $region5
    $region4: #{cnn_forward.4} parent=1 // pred_region
      _
    $region5: #{cnn_forward.4} parent=1 // pred_fallthru
      _
    // Predicated region
    $region6: #{cnn_forward.4} parent=1 // pred_check
      _
    $region7: #{cnn_forward.4} parent=1 // pred_check_branch
      %13 = sbr.rel (0) target = $region9
    $region8: #{cnn_forward.4} parent=1 // pred_region
      %s15 = ssub.s32 144, 144
      %16 = vsyncadd [#allocation4], %s15
      %s17 = sshll.u32 [#allocation3], 4
      %s18 = int_to_ptr.vmem [resolvable:$true] %s17
      %23 = dma.hbm_to_vmem [thread:$0]  %s1, 144, %s18, [#allocation4], 16, 16, 1
    $region9: #{cnn_forward.4} parent=1 // pred_fallthru
      _
    // Predicated region
    $region10: #{cnn_forward.4} parent=1 // pred_check
      _
    $region11: #{cnn_forward.4} parent=1 // pred_check_branch
      %25 = sbr.rel (0) target = $region13
    $region12: #{cnn_forward.4} parent=1 // pred_region
      %s27 = ssub.s32 16, 16
      %28 = vsyncadd [#allocation6], %s27
      %s30 = sshll.u32 [#allocation5], 4
      %s31 = int_to_ptr.vmem [resolvable:$true] %s30
      %33 = dma.hbm_to_vmem [thread:$0]  %s2, 16, %s31, [#allocation6]
    $region13: #{cnn_forward.4} parent=1 // pred_fallthru
      _
    // Predicated region
    $region14: #{cnn_forward.4} parent=1 // pred_check
      _
    $region15: #{cnn_forward.4} parent=1 // pred_check_branch
      %35 = sbr.rel (0) target = $region17
    $region16: #{cnn_forward.4} parent=1 // pred_region
      %36 = dma.done [#allocation4], 144
    $region17: #{cnn_forward.4} parent=1 // pred_fallthru
      _
    // Predicated region
    $region18: #{cnn_forward.4} parent=1 // pred_check
      _
    $region19: #{cnn_forward.4} parent=1 // pred_check_branch
      %38 = sbr.rel (0) target = $region21
    $region20: #{cnn_forward.4} parent=1 // pred_region
      %39 = dma.done [#allocation6], 16
    $region21: #{cnn_forward.4} parent=1 // pred_fallthru
      _
    loop: start=0, step=1, limit=2
    $region22: #{cnn_forward.4} parent=1 // loop_pre_header
      _
    $region23: #{cnn_forward.4} parent=1 // loop_header
      %s41 = sphi 0, %s45
      %p42 = scmp.ge.s32.totalorder %s41, 2
    $region24: #{cnn_forward.4} parent=1 // loop_header_branch
      %44 = sbr.rel (%p42) target = $region28
    $region25: #{cnn_forward.4} parent=1 // loop_body
      %s46 = smul.u32 %s41, 30
      %s47 = smul.u32 %s41, 14
      loop: start=0, step=1, limit=14
      $region29: #{cnn_forward.4} parent=25 // loop_pre_header
        _
      $region30: #{cnn_forward.4} parent=25 // loop_header
        %s49 = sphi 0, %s53
        %p50 = scmp.ge.s32.totalorder %s49, 14
      $region31: #{cnn_forward.4} parent=25 // loop_header_branch
        %52 = sbr.rel (%p50) target = $region35
      $region32: #{cnn_forward.4} parent=25 // loop_body
        %s54 = smul.u32 %s49, 2
        %s55 = sadd.s32 %s54, 1
        %s56 = sadd.s32 %s46, %s54
        %s57 = smul.u32 %s56, 32
        %s58 = scalar_lea.vmem %s0, %s57
        %v59 = vld [vmem:[%s58] sm:$0xff]
        %v60 = vld [vmem:[%s58 + $0x8] sm:$0xff]
        %v61 = vld [vmem:[%s58 + $0x10] sm:$0xff]
        %v62 = vld [vmem:[%s58 + $0x18] sm:$0x3f]
        %v63 = vld [vmem:[#allocation3] sm:$0x1]
        %65 = vset.pattern.permute.xlu0 0
        %66 = vperm.xlu0 %65, %v59
        %v67 = vpop.permute.xlu0 %66
        %70 = vset.pattern.permute.xlu0 0
        %71 = vperm.xlu0 %70, %v60
        %v72 = vpop.permute.xlu0 %71
        %75 = vset.pattern.permute.xlu0 0
        %76 = vperm.xlu0 %75, %v61
        %v77 = vpop.permute.xlu0 %76
        %80 = vset.pattern.permute.xlu0 0
        %81 = vperm.xlu0 %80, %v62
        %v82 = vpop.permute.xlu0 %81
        %v85 = vlaneseq
        %v86 = vshrl.u32 %v85, 7
        %v87 = vsub.s32 0, %v86
        %v88 = vrot.slane %v63, %v87
        %v90 = vmul.f32 %v67, %v88
        %v91 = vmul.f32 %v72, %v88
        %v92 = vmul.f32 %v77, %v88
        %v93 = vmul.f32 %v82, %v88
        %v94 = vadd.f32 %v90, 0.0
        %v95 = vadd.f32 %v91, 0.0
        %v96 = vadd.f32 %v92, 0.0
        %v97 = vadd.f32 %v93, 0.0
        %s98 = scalar_lea.vmem [#allocation3], 1
        %v99 = vld [vmem:[%s98] sm:$0x1]
        %v101 = vlaneseq
        %v102 = vshrl.u32 %v101, 7
        %v103 = vsub.s32 0, %v102
        %v104 = vrot.slane %v99, %v103
        %v106 = vmul.f32 %v67, %v104
        %v107 = vmul.f32 %v72, %v104
        %v108 = vmul.f32 %v77, %v104
        %v109 = vmul.f32 %v82, %v104
        %vm114 = vcmask 1046528
        %v115 = vrot.slane %v106, 1
        %v116 = vrot.slane %v107, 1
        %v117 = vsel %vm114, %v115, %v116
        %v118 = vrot.slane %v108, 1
        %v119 = vsel %vm114, %v116, %v118
        %v120 = vrot.slane %v109, 1
        %v121 = vsel %vm114, %v118, %v120
        %v126 = vadd.f32 %v94, %v117
        %v127 = vadd.f32 %v95, %v119
        %v128 = vadd.f32 %v96, %v121
        %v129 = vadd.f32 %v97, %v120
        %s130 = scalar_lea.vmem [#allocation3], 2
        %v131 = vld [vmem:[%s130] sm:$0x1]
        %v133 = vlaneseq
        %v134 = vshrl.u32 %v133, 7
        %v135 = vsub.s32 0, %v134
        %v136 = vrot.slane %v131, %v135
        %v138 = vmul.f32 %v67, %v136
        %v139 = vmul.f32 %v72, %v136
        %v140 = vmul.f32 %v77, %v136
        %v141 = vmul.f32 %v82, %v136
        %vm146 = vcmask 1045504
        %v147 = vrot.slane %v138, 2
        %v148 = vrot.slane %v139, 2
        %v149 = vsel %vm146, %v147, %v148
        %v150 = vrot.slane %v140, 2
        %v151 = vsel %vm146, %v148, %v150
        %v152 = vrot.slane %v141, 2
        %v153 = vsel %vm146, %v150, %v152
        %v158 = vadd.f32 %v126, %v149
        %v159 = vadd.f32 %v127, %v151
        %v160 = vadd.f32 %v128, %v153
        %v161 = vadd.f32 %v129, %v152
        %s162 = sadd.s32 %s56, 1
        %s163 = smul.u32 %s162, 32
        %s164 = scalar_lea.vmem %s0, %s163
        %v165 = vld [vmem:[%s164] sm:$0xff]
        %v166 = vld [vmem:[%s164 + $0x8] sm:$0xff]
        %v167 = vld [vmem:[%s164 + $0x10] sm:$0xff]
        %v168 = vld [vmem:[%s164 + $0x18] sm:$0x3f]
        %s169 = scalar_lea.vmem [#allocation3], 3
        %v170 = vld [vmem:[%s169] sm:$0x1]
        %172 = vset.pattern.permute.xlu0 0
        %173 = vperm.xlu0 %172, %v165
        %v174 = vpop.permute.xlu0 %173
        %177 = vset.pattern.permute.xlu0 0
        %178 = vperm.xlu0 %177, %v166
        %v179 = vpop.permute.xlu0 %178
        %182 = vset.pattern.permute.xlu0 0
        %183 = vperm.xlu0 %182, %v167
        %v184 = vpop.permute.xlu0 %183
        %187 = vset.pattern.permute.xlu0 0
        %188 = vperm.xlu0 %187, %v168
        %v189 = vpop.permute.xlu0 %188
        %v192 = vlaneseq
        %v193 = vshrl.u32 %v192, 7
        %v194 = vsub.s32 0, %v193
        %v195 = vrot.slane %v170, %v194
        %v197 = vmul.f32 %v174, %v195
        %v198 = vmul.f32 %v179, %v195
        %v199 = vmul.f32 %v184, %v195
        %v200 = vmul.f32 %v189, %v195
        %v201 = vadd.f32 %v158, %v197
        %v202 = vadd.f32 %v159, %v198
        %v203 = vadd.f32 %v160, %v199
        %v204 = vadd.f32 %v161, %v200
        %s205 = scalar_lea.vmem [#allocation3], 4
        %v206 = vld [vmem:[%s205] sm:$0x1]
        %v208 = vlaneseq
        %v209 = vshrl.u32 %v208, 7
        %v210 = vsub.s32 0, %v209
        %v211 = vrot.slane %v206, %v210
        %v213 = vmul.f32 %v174, %v211
        %v214 = vmul.f32 %v179, %v211
        %v215 = vmul.f32 %v184, %v211
        %v216 = vmul.f32 %v189, %v211
        %v221 = vrot.slane %v213, 1
        %v222 = vrot.slane %v214, 1
        %v223 = vsel %vm114, %v221, %v222
        %v224 = vrot.slane %v215, 1
        %v225 = vsel %vm114, %v222, %v224
        %v226 = vrot.slane %v216, 1
        %v227 = vsel %vm114, %v224, %v226
        %v232 = vadd.f32 %v201, %v223
        %v233 = vadd.f32 %v202, %v225
        %v234 = vadd.f32 %v203, %v227
        %v235 = vadd.f32 %v204, %v226
        %s236 = scalar_lea.vmem [#allocation3], 5
        %v237 = vld [vmem:[%s236] sm:$0x1]
        %v239 = vlaneseq
        %v240 = vshrl.u32 %v239, 7
        %v241 = vsub.s32 0, %v240
        %v242 = vrot.slane %v237, %v241
        %v244 = vmul.f32 %v174, %v242
        %v245 = vmul.f32 %v179, %v242
        %v246 = vmul.f32 %v184, %v242
        %v247 = vmul.f32 %v189, %v242
        %v252 = vrot.slane %v244, 2
        %v253 = vrot.slane %v245, 2
        %v254 = vsel %vm146, %v252, %v253
        %v255 = vrot.slane %v246, 2
        %v256 = vsel %vm146, %v253, %v255
        %v257 = vrot.slane %v247, 2
        %v258 = vsel %vm146, %v255, %v257
        %v263 = vadd.f32 %v232, %v254
        %v264 = vadd.f32 %v233, %v256
        %v265 = vadd.f32 %v234, %v258
        %v266 = vadd.f32 %v235, %v257
        %s267 = sadd.s32 %s56, 2
        %s268 = smul.u32 %s267, 32
        %s269 = scalar_lea.vmem %s0, %s268
        %v270 = vld [vmem:[%s269] sm:$0xff]
        %v271 = vld [vmem:[%s269 + $0x8] sm:$0xff]
        %v272 = vld [vmem:[%s269 + $0x10] sm:$0xff]
        %v273 = vld [vmem:[%s269 + $0x18] sm:$0x3f]
        %s274 = scalar_lea.vmem [#allocation3], 6
        %v275 = vld [vmem:[%s274] sm:$0x1]
        %277 = vset.pattern.permute.xlu0 0
        %278 = vperm.xlu0 %277, %v270
        %v279 = vpop.permute.xlu0 %278
        %282 = vset.pattern.permute.xlu0 0
        %283 = vperm.xlu0 %282, %v271
        %v284 = vpop.permute.xlu0 %283
        %287 = vset.pattern.permute.xlu0 0
        %288 = vperm.xlu0 %287, %v272
        %v289 = vpop.permute.xlu0 %288
        %292 = vset.pattern.permute.xlu0 0
        %293 = vperm.xlu0 %292, %v273
        %v294 = vpop.permute.xlu0 %293
        %v297 = vlaneseq
        %v298 = vshrl.u32 %v297, 7
        %v299 = vsub.s32 0, %v298
        %v300 = vrot.slane %v275, %v299
        %v302 = vmul.f32 %v279, %v300
        %v303 = vmul.f32 %v284, %v300
        %v304 = vmul.f32 %v289, %v300
        %v305 = vmul.f32 %v294, %v300
        %v306 = vadd.f32 %v263, %v302
        %v307 = vadd.f32 %v264, %v303
        %v308 = vadd.f32 %v265, %v304
        %v309 = vadd.f32 %v266, %v305
        %s310 = scalar_lea.vmem [#allocation3], 7
        %v311 = vld [vmem:[%s310] sm:$0x1]
        %v313 = vlaneseq
        %v314 = vshrl.u32 %v313, 7
        %v315 = vsub.s32 0, %v314
        %v316 = vrot.slane %v311, %v315
        %v318 = vmul.f32 %v279, %v316
        %v319 = vmul.f32 %v284, %v316
        %v320 = vmul.f32 %v289, %v316
        %v321 = vmul.f32 %v294, %v316
        %v326 = vrot.slane %v318, 1
        %v327 = vrot.slane %v319, 1
        %v328 = vsel %vm114, %v326, %v327
        %v329 = vrot.slane %v320, 1
        %v330 = vsel %vm114, %v327, %v329
        %v331 = vrot.slane %v321, 1
        %v332 = vsel %vm114, %v329, %v331
        %v337 = vadd.f32 %v306, %v328
        %v338 = vadd.f32 %v307, %v330
        %v339 = vadd.f32 %v308, %v332
        %v340 = vadd.f32 %v309, %v331
        %s341 = scalar_lea.vmem [#allocation3], 8
        %v342 = vld [vmem:[%s341] sm:$0x1]
        %v344 = vlaneseq
        %v345 = vshrl.u32 %v344, 7
        %v346 = vsub.s32 0, %v345
        %v347 = vrot.slane %v342, %v346
        %v349 = vmul.f32 %v279, %v347
        %v350 = vmul.f32 %v284, %v347
        %v351 = vmul.f32 %v289, %v347
        %v352 = vmul.f32 %v294, %v347
        %v357 = vrot.slane %v349, 2
        %v358 = vrot.slane %v350, 2
        %v359 = vsel %vm146, %v357, %v358
        %v360 = vrot.slane %v351, 2
        %v361 = vsel %vm146, %v358, %v360
        %v362 = vrot.slane %v352, 2
        %v363 = vsel %vm146, %v360, %v362
        %v368 = vadd.f32 %v337, %v359
        %v369 = vadd.f32 %v338, %v361
        %v370 = vadd.f32 %v339, %v363
        %v371 = vadd.f32 %v340, %v362
        %s372 = sadd.s32 %s46, %s55
        %s373 = smul.u32 %s372, 32
        %s374 = scalar_lea.vmem %s0, %s373
        %v375 = vld [vmem:[%s374] sm:$0xff]
        %v376 = vld [vmem:[%s374 + $0x8] sm:$0xff]
        %v377 = vld [vmem:[%s374 + $0x10] sm:$0xff]
        %v378 = vld [vmem:[%s374 + $0x18] sm:$0x3f]
        %380 = vset.pattern.permute.xlu0 0
        %381 = vperm.xlu0 %380, %v375
        %v382 = vpop.permute.xlu0 %381
        %385 = vset.pattern.permute.xlu0 0
        %386 = vperm.xlu0 %385, %v376
        %v387 = vpop.permute.xlu0 %386
        %390 = vset.pattern.permute.xlu0 0
        %391 = vperm.xlu0 %390, %v377
        %v392 = vpop.permute.xlu0 %391
        %395 = vset.pattern.permute.xlu0 0
        %396 = vperm.xlu0 %395, %v378
        %v397 = vpop.permute.xlu0 %396
        %v399 = vmul.f32 %v382, %v88
        %v400 = vmul.f32 %v387, %v88
        %v401 = vmul.f32 %v392, %v88
        %v402 = vmul.f32 %v397, %v88
        %v403 = vadd.f32 %v399, 0.0
        %v404 = vadd.f32 %v400, 0.0
        %v405 = vadd.f32 %v401, 0.0
        %v406 = vadd.f32 %v402, 0.0
        %v407 = vmul.f32 %v382, %v104
        %v408 = vmul.f32 %v387, %v104
        %v409 = vmul.f32 %v392, %v104
        %v410 = vmul.f32 %v397, %v104
        %v415 = vrot.slane %v407, 1
        %v416 = vrot.slane %v408, 1
        %v417 = vsel %vm114, %v415, %v416
        %v418 = vrot.slane %v409, 1
        %v419 = vsel %vm114, %v416, %v418
        %v420 = vrot.slane %v410, 1
        %v421 = vsel %vm114, %v418, %v420
        %v426 = vadd.f32 %v403, %v417
        %v427 = vadd.f32 %v404, %v419
        %v428 = vadd.f32 %v405, %v421
        %v429 = vadd.f32 %v406, %v420
        %v430 = vmul.f32 %v382, %v136
        %v431 = vmul.f32 %v387, %v136
        %v432 = vmul.f32 %v392, %v136
        %v433 = vmul.f32 %v397, %v136
        %v438 = vrot.slane %v430, 2
        %v439 = vrot.slane %v431, 2
        %v440 = vsel %vm146, %v438, %v439
        %v441 = vrot.slane %v432, 2
        %v442 = vsel %vm146, %v439, %v441
        %v443 = vrot.slane %v433, 2
        %v444 = vsel %vm146, %v441, %v443
        %v449 = vadd.f32 %v426, %v440
        %v450 = vadd.f32 %v427, %v442
        %v451 = vadd.f32 %v428, %v444
        %v452 = vadd.f32 %v429, %v443
        %s453 = sadd.s32 %s372, 1
        %s454 = smul.u32 %s453, 32
        %s455 = scalar_lea.vmem %s0, %s454
        %v456 = vld [vmem:[%s455] sm:$0xff]
        %v457 = vld [vmem:[%s455 + $0x8] sm:$0xff]
        %v458 = vld [vmem:[%s455 + $0x10] sm:$0xff]
        %v459 = vld [vmem:[%s455 + $0x18] sm:$0x3f]
        %461 = vset.pattern.permute.xlu0 0
        %462 = vperm.xlu0 %461, %v456
        %v463 = vpop.permute.xlu0 %462
        %466 = vset.pattern.permute.xlu0 0
        %467 = vperm.xlu0 %466, %v457
        %v468 = vpop.permute.xlu0 %467
        %471 = vset.pattern.permute.xlu0 0
        %472 = vperm.xlu0 %471, %v458
        %v473 = vpop.permute.xlu0 %472
        %476 = vset.pattern.permute.xlu0 0
        %477 = vperm.xlu0 %476, %v459
        %v478 = vpop.permute.xlu0 %477
        %v480 = vmul.f32 %v463, %v195
        %v481 = vmul.f32 %v468, %v195
        %v482 = vmul.f32 %v473, %v195
        %v483 = vmul.f32 %v478, %v195
        %v484 = vadd.f32 %v449, %v480
        %v485 = vadd.f32 %v450, %v481
        %v486 = vadd.f32 %v451, %v482
        %v487 = vadd.f32 %v452, %v483
        %v488 = vmul.f32 %v463, %v211
        %v489 = vmul.f32 %v468, %v211
        %v490 = vmul.f32 %v473, %v211
        %v491 = vmul.f32 %v478, %v211
        %v496 = vrot.slane %v488, 1
        %v497 = vrot.slane %v489, 1
        %v498 = vsel %vm114, %v496, %v497
        %v499 = vrot.slane %v490, 1
        %v500 = vsel %vm114, %v497, %v499
        %v501 = vrot.slane %v491, 1
        %v502 = vsel %vm114, %v499, %v501
        %v507 = vadd.f32 %v484, %v498
        %v508 = vadd.f32 %v485, %v500
        %v509 = vadd.f32 %v486, %v502
        %v510 = vadd.f32 %v487, %v501
        %v511 = vmul.f32 %v463, %v242
        %v512 = vmul.f32 %v468, %v242
        %v513 = vmul.f32 %v473, %v242
        %v514 = vmul.f32 %v478, %v242
        %v519 = vrot.slane %v511, 2
        %v520 = vrot.slane %v512, 2
        %v521 = vsel %vm146, %v519, %v520
        %v522 = vrot.slane %v513, 2
        %v523 = vsel %vm146, %v520, %v522
        %v524 = vrot.slane %v514, 2
        %v525 = vsel %vm146, %v522, %v524
        %v530 = vadd.f32 %v507, %v521
        %v531 = vadd.f32 %v508, %v523
        %v532 = vadd.f32 %v509, %v525
        %v533 = vadd.f32 %v510, %v524
        %s534 = sadd.s32 %s372, 2
        %s535 = smul.u32 %s534, 32
        %s536 = scalar_lea.vmem %s0, %s535
        %v537 = vld [vmem:[%s536] sm:$0xff]
        %v538 = vld [vmem:[%s536 + $0x8] sm:$0xff]
        %v539 = vld [vmem:[%s536 + $0x10] sm:$0xff]
        %v540 = vld [vmem:[%s536 + $0x18] sm:$0x3f]
        %542 = vset.pattern.permute.xlu0 0
        %543 = vperm.xlu0 %542, %v537
        %v544 = vpop.permute.xlu0 %543
        %547 = vset.pattern.permute.xlu0 0
        %548 = vperm.xlu0 %547, %v538
        %v549 = vpop.permute.xlu0 %548
        %552 = vset.pattern.permute.xlu0 0
        %553 = vperm.xlu0 %552, %v539
        %v554 = vpop.permute.xlu0 %553
        %557 = vset.pattern.permute.xlu0 0
        %558 = vperm.xlu0 %557, %v540
        %v559 = vpop.permute.xlu0 %558
        %v561 = vmul.f32 %v544, %v300
        %v562 = vmul.f32 %v549, %v300
        %v563 = vmul.f32 %v554, %v300
        %v564 = vmul.f32 %v559, %v300
        %v565 = vadd.f32 %v530, %v561
        %v566 = vadd.f32 %v531, %v562
        %v567 = vadd.f32 %v532, %v563
        %v568 = vadd.f32 %v533, %v564
        %v569 = vmul.f32 %v544, %v316
        %v570 = vmul.f32 %v549, %v316
        %v571 = vmul.f32 %v554, %v316
        %v572 = vmul.f32 %v559, %v316
        %v577 = vrot.slane %v569, 1
        %v578 = vrot.slane %v570, 1
        %v579 = vsel %vm114, %v577, %v578
        %v580 = vrot.slane %v571, 1
        %v581 = vsel %vm114, %v578, %v580
        %v582 = vrot.slane %v572, 1
        %v583 = vsel %vm114, %v580, %v582
        %v588 = vadd.f32 %v565, %v579
        %v589 = vadd.f32 %v566, %v581
        %v590 = vadd.f32 %v567, %v583
        %v591 = vadd.f32 %v568, %v582
        %v592 = vmul.f32 %v544, %v347
        %v593 = vmul.f32 %v549, %v347
        %v594 = vmul.f32 %v554, %v347
        %v595 = vmul.f32 %v559, %v347
        %v600 = vrot.slane %v592, 2
        %v601 = vrot.slane %v593, 2
        %v602 = vsel %vm146, %v600, %v601
        %v603 = vrot.slane %v594, 2
        %v604 = vsel %vm146, %v601, %v603
        %v605 = vrot.slane %v595, 2
        %v606 = vsel %vm146, %v603, %v605
        %v611 = vadd.f32 %v588, %v602
        %v612 = vadd.f32 %v589, %v604
        %v613 = vadd.f32 %v590, %v606
        %v614 = vadd.f32 %v591, %v605
        %v615 = vmax.f32 %v368, %v611
        %v616 = vmax.f32 %v369, %v612
        %v617 = vmax.f32 %v370, %v613
        %v618 = vmax.f32 %v371, %v614
        %vm619 = vcmask 261120
        %620 = vst.msk [vmem:[#allocation2] sm:$0xff] %vm619, %v615
        %621 = vst.msk [vmem:[#allocation2 + $0x8] sm:$0xff] %vm619, %v616
        %622 = vst.msk [vmem:[#allocation2 + $0x10] sm:$0xff] %vm619, %v617
        %vm623 = vcmask 257024
        %624 = vst.msk [vmem:[#allocation2 + $0x18] sm:$0xf] %vm623, %v618
        %v625 = vld [vmem:[#allocation2] ss:$2 sm:$0xff]
        %s626 = scalar_lea.vmem [#allocation2], 16
        %v627 = vld [vmem:[%s626] ss:$2 sm:$0x3f]
        %s628 = scalar_lea.vmem [#allocation2], 1
        %v629 = vld [vmem:[%s628] ss:$2 sm:$0xff]
        %s630 = scalar_lea.vmem [#allocation2], 17
        %v631 = vld [vmem:[%s630] ss:$2 sm:$0x3f]
        %v632 = vmax.f32 %v625, %v629
        %v633 = vmax.f32 %v627, %v631
        %v634 = vld [vmem:[#allocation5] sm:$0x1]
        %v636 = vlaneseq
        %v637 = vshrl.u32 %v636, 7
        %v638 = vsub.s32 0, %v637
        %v639 = vrot.slane %v634, %v638
        %v641 = vadd.f32 %v632, %v639
        %v642 = vadd.f32 %v633, %v639
        %v643 = vmax.f32 %v641, 0.0
        %v644 = vmax.f32 %v642, 0.0
        %v645 = vpack.c.bf16 %v644, %v643
        %s646 = sadd.s32 %s47, %s49
        %v648 = vunpack.c.l.b16 %v645
        %v649 = vunpack.c.h.b16 %v645
        %v650 = vpack.c.b16 %v648, %v648
        %v651 = vpack.c.b16 %v649, %v649
        %s654 = smul.u32 %s646, 2
        %s655 = smul.addr %s654, 4
        %s656 = scalar_lea.vmem %s3, %s655
        %657 = vst.msk [vmem:[%s656] sm:$0xf] %vm623, %v650
        %vm658 = vcmask 256000
        %659 = vst.msk [vmem:[%s656 + $0x4] sm:$0x7] %vm658, %v651
      $region33: #{cnn_forward.4} parent=25 // loop_footer
        %s53 = sadd.s32 1, %s49
      $region34: #{cnn_forward.4} parent=25 // loop_footer_branch
        %48 = sbr.rel target = $region30
      $region35: #{cnn_forward.4} parent=25 // loop_exit
        _
    $region26: #{cnn_forward.4} parent=1 // loop_footer
      %s45 = sadd.s32 1, %s41
    $region27: #{cnn_forward.4} parent=1 // loop_footer_branch
      %40 = sbr.rel target = $region23
    $region28: #{cnn_forward.4} parent=1 // loop_exit
      _
    // Predicated region
    $region36: #{cnn_forward.4} parent=1 // pred_check
      _
    $region37: #{cnn_forward.4} parent=1 // pred_check_branch
      %661 = sbr.rel (0) target = $region39
    $region38: #{cnn_forward.4} parent=1 // pred_region
      _
    $region39: #{cnn_forward.4} parent=1 // pred_fallthru
      _
    // Predicated region
    $region40: #{cnn_forward.4} parent=1 // pred_check
      _
    $region41: #{cnn_forward.4} parent=1 // pred_check_branch
      %663 = sbr.rel (0) target = $region43
    $region42: #{cnn_forward.4} parent=1 // pred_region
      _
    $region43: #{cnn_forward.4} parent=1 // pred_fallthru
      _
    %664 = vsyncpa [#allocation4], 1
    %665 = vsyncpa [#allocation6], 1

// kernel: cnn_forward.5
$region0: #{cnn_forward.5}
  #allocation0 [shape = 'u32[]', space=smem, size = 0x4, offset = 0x4, fixed_abs, tag = 'smem constant byte address 0x4 - core index']
  #allocation1 [shape = 'u32[144,128]{1,0:T(1,128)}', space=vmem, size = 0x12000, scoped, tag = 'internal scratch']
  #allocation2 [shape = 'f32[14,64]{1,0:T(8,128)}', space=vmem, size = 0x2000, scoped, tag = 'scratch operand']
  %s0 = inlined_call_operand.vmem [shape: bf16[32,16,32], index: 0, kind: input, shape index: {}]
  %s1 = inlined_call_operand.hbm [shape: bf16[9,32,64], index: 1, kind: input, shape index: {}]
  %s2 = inlined_call_operand.hbm [shape: f32[1,64], index: 2, kind: input, shape index: {}]
  %s3 = inlined_call_operand.vmem [shape: bf16[14,7,64], index: 3, kind: output, shape index: {}]
  %s4 = sld [smem:[#allocation0]]
  $region44: #{cnn_forward.5} parent=0
    _
  %s6 = ssub.s32 1, %s4
  %s7 = scalar_select 0, %s6, %s4
  $region1: #{cnn_forward.5} parent=0
    #allocation3 [shape = 'u8[73728]{0}', space=vmem, size = 0x12000, scoped, tag = 'input window, operand 1, single buffered']
    #allocation4 [shape = 's32[1]{0}', space=sflag, size = 0x4, scoped, tag = 'scoped memory for cnn_forward.5']
    #allocation5 [shape = 'u8[512]{0}', space=vmem, size = 0x400, scoped, tag = 'input window, operand 2, single buffered']
    #allocation6 [shape = 's32[1]{0}', space=sflag, size = 0x4, scoped, tag = 'scoped memory for cnn_forward.5']
    %8 = vsyncpa [#allocation4], 0
    %9 = vsyncpa [#allocation6], 0
    // Predicated region
    $region2: #{cnn_forward.5} parent=1 // pred_check
      _
    $region3: #{cnn_forward.5} parent=1 // pred_check_branch
      %11 = sbr.rel (0) target = $region5
    $region4: #{cnn_forward.5} parent=1 // pred_region
      _
    $region5: #{cnn_forward.5} parent=1 // pred_fallthru
      _
    // Predicated region
    $region6: #{cnn_forward.5} parent=1 // pred_check
      _
    $region7: #{cnn_forward.5} parent=1 // pred_check_branch
      %13 = sbr.rel (0) target = $region9
    $region8: #{cnn_forward.5} parent=1 // pred_region
      %s15 = ssub.s32 2304, 2304
      %16 = vsyncadd [#allocation4], %s15
      %s17 = sshll.u32 [#allocation3], 4
      %s18 = int_to_ptr.vmem [resolvable:$true] %s17
      %23 = dma.hbm_to_vmem [thread:$0]  %s1, 2304, %s18, [#allocation4], 64, 64, 4
    $region9: #{cnn_forward.5} parent=1 // pred_fallthru
      _
    // Predicated region
    $region10: #{cnn_forward.5} parent=1 // pred_check
      _
    $region11: #{cnn_forward.5} parent=1 // pred_check_branch
      %25 = sbr.rel (0) target = $region13
    $region12: #{cnn_forward.5} parent=1 // pred_region
      %s27 = ssub.s32 16, 16
      %28 = vsyncadd [#allocation6], %s27
      %s30 = sshll.u32 [#allocation5], 4
      %s31 = int_to_ptr.vmem [resolvable:$true] %s30
      %33 = dma.hbm_to_vmem [thread:$0]  %s2, 16, %s31, [#allocation6]
    $region13: #{cnn_forward.5} parent=1 // pred_fallthru
      _
    // Predicated region
    $region14: #{cnn_forward.5} parent=1 // pred_check
      _
    $region15: #{cnn_forward.5} parent=1 // pred_check_branch
      %35 = sbr.rel (0) target = $region17
    $region16: #{cnn_forward.5} parent=1 // pred_region
      %36 = dma.done [#allocation4], 2304
    $region17: #{cnn_forward.5} parent=1 // pred_fallthru
      _
    // Predicated region
    $region18: #{cnn_forward.5} parent=1 // pred_check
      _
    $region19: #{cnn_forward.5} parent=1 // pred_check_branch
      %38 = sbr.rel (0) target = $region21
    $region20: #{cnn_forward.5} parent=1 // pred_region
      %39 = dma.done [#allocation6], 16
    $region21: #{cnn_forward.5} parent=1 // pred_fallthru
      _
    loop: start=0, step=1, limit=2
    $region22: #{cnn_forward.5} parent=1 // loop_pre_header
      _
    $region23: #{cnn_forward.5} parent=1 // loop_header
      %s42 = sphi 0, %s46
      %p43 = scmp.ge.s32.totalorder %s42, 2
    $region24: #{cnn_forward.5} parent=1 // loop_header_branch
      %45 = sbr.rel (%p43) target = $region28
    $region25: #{cnn_forward.5} parent=1 // loop_body
      %s47 = smul.u32 %s42, 16
      %s48 = smul.u32 %s42, 7
      loop: start=0, step=1, limit=7
      $region29: #{cnn_forward.5} parent=25 // loop_pre_header
        _
      $region30: #{cnn_forward.5} parent=25 // loop_header
        %s50 = sphi 0, %s54
        %p51 = scmp.ge.s32.totalorder %s50, 7
      $region31: #{cnn_forward.5} parent=25 // loop_header_branch
        %53 = sbr.rel (%p51) target = $region35
      $region32: #{cnn_forward.5} parent=25 // loop_body
        %s55 = smul.u32 %s50, 2
        %s56 = sadd.s32 %s55, 1
        %s57 = sadd.s32 %s47, %s55
        %s58 = smul.u32 %s57, 2
        %s59 = smul.addr %s58, 4
        %s60 = scalar_lea.vmem %s0, %s59
        %v61 = vld [vmem:[%s60] sm:$0xf]
        %v62 = vld [vmem:[%s60 + $0x4] sm:$0xf]
        %v63 = vld [vmem:[#allocation3] sm:$0xf]
        %v64 = vld [vmem:[#allocation3 + $0x4] sm:$0xf]
        %v65 = vld [vmem:[#allocation3 + $0x8] sm:$0xf]
        %v66 = vld [vmem:[#allocation3 + $0xc] sm:$0xf]
        %s67 = scalar_lea.vmem [#allocation3], 16
        %v68 = vld [vmem:[%s67] sm:$0xf]
        %v69 = vld [vmem:[%s67 + $0x4] sm:$0xf]
        %v70 = vld [vmem:[%s67 + $0x8] sm:$0xf]
        %v71 = vld [vmem:[%s67 + $0xc] sm:$0xf]
        %v74 = vunpack.c.l.b16 %v61
        %v75 = vunpack.c.l.b16 %v62
        %v76 = vpack.c.b16 %v75, %v74
        %v78 = vshrl.u32 %v76, 16
        %v80 = vshll.u32 %v76, 16
        %v82 = vrot.slane %v80, 1
        %v83 = vor.u32 %v78, %v82
        %v88 = vunpack.c.l.b16 %v68
        %v89 = vunpack.c.l.b16 %v69
        %v90 = vunpack.c.l.b16 %v70
        %v91 = vunpack.c.l.b16 %v71
        %v92 = vpack.c.b16 %v89, %v88
        %v93 = vpack.c.b16 %v91, %v90
        %vm96 = vcmask 261120
        %v98 = vsel %vm96, %v83, 0
        %100 = vmatprep.subr.bf16.mxu0 0
        %101 = vmatpush1.bf16.msra.mxu0 %v92
        %102 = vmatprep.subr.bf16.mxu0 0
        %103 = vmatpush1.bf16.msra.mxu0 %v93
        %104 = vmatprep.subr.bf16.mxu0 0
        %105 = vmatpush1.bf16.msra.mxu0 0
        %106 = vmatprep.subr.bf16.mxu0 0
        %107 = vmatpush1.bf16.msra.mxu0 0
        %108 = vmatprep.subr.bf16.mxu0 0
        %109 = vmatpush1.bf16.msra.mxu0 0
        %110 = vmatprep.subr.bf16.mxu0 0
        %111 = vmatpush1.bf16.msra.mxu0 0
        %112 = vmatprep.subr.bf16.mxu0 0
        %113 = vmatpush1.bf16.msra.mxu0 0
        %114 = vmatprep.subr.bf16.mxu0 0
        %115 = vmatpush1.bf16.msra.mxu0 0
        %116 = vmatprep.subr.bf16.mxu0 0
        %117 = vmatpush1.bf16.msra.mxu0 0
        %118 = vmatprep.subr.bf16.mxu0 0
        %119 = vmatpush1.bf16.msra.mxu0 0
        %120 = vmatprep.subr.bf16.mxu0 0
        %121 = vmatpush1.bf16.msra.mxu0 0
        %122 = vmatprep.subr.bf16.mxu0 0
        %123 = vmatpush1.bf16.msra.mxu0 0
        %124 = vmatprep.subr.bf16.mxu0 0
        %125 = vmatpush1.bf16.msra.mxu0 0
        %126 = vmatprep.subr.bf16.mxu0 0
        %127 = vmatpush1.bf16.msra.mxu0 0
        %128 = vmatprep.subr.bf16.mxu0 0
        %129 = vmatpush1.bf16.msra.mxu0 0
        %130 = vmatprep.subr.bf16.mxu0 0
        %131 = vmatpush1.bf16.msra.mxu0 0
        %132 = vmatprep.mubr.bf16.mxu0 0
        %133 = vmatmul.mubr.bf16.gmra.mrb[0].mxu0 %v98
        %v134 = vpop.f32.mrb[0].mxu0
        %v135 = vadd.f32 0.0, %v134
        %v136 = vpop.f32.mrb[0].mxu0
        %v137 = vpop.f32.mrb[0].mxu0
        %v138 = vadd.f32 0.0, %v137
        %v139 = vpop.f32.mrb[0].mxu0
        %140 = vdwg.mxu0
        %v145 = vunpack.c.l.b16 %v63
        %v146 = vunpack.c.l.b16 %v64
        %v147 = vunpack.c.l.b16 %v65
        %v148 = vunpack.c.l.b16 %v66
        %v149 = vpack.c.b16 %v146, %v145
        %v150 = vpack.c.b16 %v148, %v147
        %v153 = vsel %vm96, %v76, 0
        %155 = vmatprep.subr.bf16.mxu0 0
        %156 = vmatpush1.bf16.msra.mxu0 %v149
        %157 = vmatprep.subr.bf16.mxu0 0
        %158 = vmatpush1.bf16.msra.mxu0 %v150
        %159 = vmatprep.subr.bf16.mxu0 0
        %160 = vmatpush1.bf16.msra.mxu0 0
        %161 = vmatprep.subr.bf16.mxu0 0
        %162 = vmatpush1.bf16.msra.mxu0 0
        %163 = vmatprep.subr.bf16.mxu0 0
        %164 = vmatpush1.bf16.msra.mxu0 0
        %165 = vmatprep.subr.bf16.mxu0 0
        %166 = vmatpush1.bf16.msra.mxu0 0
        %167 = vmatprep.subr.bf16.mxu0 0
        %168 = vmatpush1.bf16.msra.mxu0 0
        %169 = vmatprep.subr.bf16.mxu0 0
        %170 = vmatpush1.bf16.msra.mxu0 0
        %171 = vmatprep.subr.bf16.mxu0 0
        %172 = vmatpush1.bf16.msra.mxu0 0
        %173 = vmatprep.subr.bf16.mxu0 0
        %174 = vmatpush1.bf16.msra.mxu0 0
        %175 = vmatprep.subr.bf16.mxu0 0
        %176 = vmatpush1.bf16.msra.mxu0 0
        %177 = vmatprep.subr.bf16.mxu0 0
        %178 = vmatpush1.bf16.msra.mxu0 0
        %179 = vmatprep.subr.bf16.mxu0 0
        %180 = vmatpush1.bf16.msra.mxu0 0
        %181 = vmatprep.subr.bf16.mxu0 0
        %182 = vmatpush1.bf16.msra.mxu0 0
        %183 = vmatprep.subr.bf16.mxu0 0
        %184 = vmatpush1.bf16.msra.mxu0 0
        %185 = vmatprep.subr.bf16.mxu0 0
        %186 = vmatpush1.bf16.msra.mxu0 0
        %187 = vmatprep.mubr.bf16.mxu0 0
        %188 = vmatmul.mubr.bf16.gmra.mrb[0].mxu0 %v153
        %v189 = vpop.f32.mrb[0].mxu0
        %v190 = vadd.f32 %v135, %v189
        %v191 = vpop.f32.mrb[0].mxu0
        %v192 = vpop.f32.mrb[0].mxu0
        %v193 = vadd.f32 %v138, %v192
        %v194 = vpop.f32.mrb[0].mxu0
        %195 = vdwg.mxu0
        %s196 = scalar_lea.vmem [#allocation3], 32
        %v197 = vld [vmem:[%s196] sm:$0xf]
        %v198 = vld [vmem:[%s196 + $0x4] sm:$0xf]
        %v199 = vld [vmem:[%s196 + $0x8] sm:$0xf]
        %v200 = vld [vmem:[%s196 + $0xc] sm:$0xf]
        %v201 = vrot.slane %v76, 1
        %v206 = vunpack.c.l.b16 %v197
        %v207 = vunpack.c.l.b16 %v198
        %v208 = vunpack.c.l.b16 %v199
        %v209 = vunpack.c.l.b16 %v200
        %v210 = vpack.c.b16 %v207, %v206
        %v211 = vpack.c.b16 %v209, %v208
        %v215 = vsel %vm96, %v201, 0
        %217 = vmatprep.subr.bf16.mxu0 0
        %218 = vmatpush1.bf16.msra.mxu0 %v210
        %219 = vmatprep.subr.bf16.mxu0 0
        %220 = vmatpush1.bf16.msra.mxu0 %v211
        %221 = vmatprep.subr.bf16.mxu0 0
        %222 = vmatpush1.bf16.msra.mxu0 0
        %223 = vmatprep.subr.bf16.mxu0 0
        %224 = vmatpush1.bf16.msra.mxu0 0
        %225 = vmatprep.subr.bf16.mxu0 0
        %226 = vmatpush1.bf16.msra.mxu0 0
        %227 = vmatprep.subr.bf16.mxu0 0
        %228 = vmatpush1.bf16.msra.mxu0 0
        %229 = vmatprep.subr.bf16.mxu0 0
        %230 = vmatpush1.bf16.msra.mxu0 0
        %231 = vmatprep.subr.bf16.mxu0 0
        %232 = vmatpush1.bf16.msra.mxu0 0
        %233 = vmatprep.subr.bf16.mxu0 0
        %234 = vmatpush1.bf16.msra.mxu0 0
        %235 = vmatprep.subr.bf16.mxu0 0
        %236 = vmatpush1.bf16.msra.mxu0 0
        %237 = vmatprep.subr.bf16.mxu0 0
        %238 = vmatpush1.bf16.msra.mxu0 0
        %239 = vmatprep.subr.bf16.mxu0 0
        %240 = vmatpush1.bf16.msra.mxu0 0
        %241 = vmatprep.subr.bf16.mxu0 0
        %242 = vmatpush1.bf16.msra.mxu0 0
        %243 = vmatprep.subr.bf16.mxu0 0
        %244 = vmatpush1.bf16.msra.mxu0 0
        %245 = vmatprep.subr.bf16.mxu0 0
        %246 = vmatpush1.bf16.msra.mxu0 0
        %247 = vmatprep.subr.bf16.mxu0 0
        %248 = vmatpush1.bf16.msra.mxu0 0
        %249 = vmatprep.mubr.bf16.mxu0 0
        %250 = vmatmul.mubr.bf16.gmra.mrb[0].mxu0 %v215
        %v251 = vpop.f32.mrb[0].mxu0
        %v252 = vadd.f32 0.0, %v251
        %v253 = vpop.f32.mrb[0].mxu0
        %v254 = vpop.f32.mrb[0].mxu0
        %v255 = vadd.f32 0.0, %v254
        %v256 = vpop.f32.mrb[0].mxu0
        %257 = vdwg.mxu0
        %v258 = vadd.f32 %v190, %v252
        %v259 = vadd.f32 %v193, %v255
        %s260 = sadd.s32 %s57, 1
        %s261 = smul.u32 %s260, 2
        %s262 = smul.addr %s261, 4
        %s263 = scalar_lea.vmem %s0, %s262
        %v264 = vld [vmem:[%s263] sm:$0xf]
        %v265 = vld [vmem:[%s263 + $0x4] sm:$0xf]
        %s266 = scalar_lea.vmem [#allocation3], 48
        %v267 = vld [vmem:[%s266] sm:$0xf]
        %v268 = vld [vmem:[%s266 + $0x4] sm:$0xf]
        %v269 = vld [vmem:[%s266 + $0x8] sm:$0xf]
        %v270 = vld [vmem:[%s266 + $0xc] sm:$0xf]
        %v273 = vunpack.c.l.b16 %v264
        %v274 = vunpack.c.l.b16 %v265
        %v275 = vpack.c.b16 %v274, %v273
        %v280 = vunpack.c.l.b16 %v267
        %v281 = vunpack.c.l.b16 %v268
        %v282 = vunpack.c.l.b16 %v269
        %v283 = vunpack.c.l.b16 %v270
        %v284 = vpack.c.b16 %v281, %v280
        %v285 = vpack.c.b16 %v283, %v282
        %v289 = vsel %vm96, %v275, 0
        %291 = vmatprep.subr.bf16.mxu0 0
        %292 = vmatpush1.bf16.msra.mxu0 %v284
        %293 = vmatprep.subr.bf16.mxu0 0
        %294 = vmatpush1.bf16.msra.mxu0 %v285
        %295 = vmatprep.subr.bf16.mxu0 0
        %296 = vmatpush1.bf16.msra.mxu0 0
        %297 = vmatprep.subr.bf16.mxu0 0
        %298 = vmatpush1.bf16.msra.mxu0 0
        %299 = vmatprep.subr.bf16.mxu0 0
        %300 = vmatpush1.bf16.msra.mxu0 0
        %301 = vmatprep.subr.bf16.mxu0 0
        %302 = vmatpush1.bf16.msra.mxu0 0
        %303 = vmatprep.subr.bf16.mxu0 0
        %304 = vmatpush1.bf16.msra.mxu0 0
        %305 = vmatprep.subr.bf16.mxu0 0
        %306 = vmatpush1.bf16.msra.mxu0 0
        %307 = vmatprep.subr.bf16.mxu0 0
        %308 = vmatpush1.bf16.msra.mxu0 0
        %309 = vmatprep.subr.bf16.mxu0 0
        %310 = vmatpush1.bf16.msra.mxu0 0
        %311 = vmatprep.subr.bf16.mxu0 0
        %312 = vmatpush1.bf16.msra.mxu0 0
        %313 = vmatprep.subr.bf16.mxu0 0
        %314 = vmatpush1.bf16.msra.mxu0 0
        %315 = vmatprep.subr.bf16.mxu0 0
        %316 = vmatpush1.bf16.msra.mxu0 0
        %317 = vmatprep.subr.bf16.mxu0 0
        %318 = vmatpush1.bf16.msra.mxu0 0
        %319 = vmatprep.subr.bf16.mxu0 0
        %320 = vmatpush1.bf16.msra.mxu0 0
        %321 = vmatprep.subr.bf16.mxu0 0
        %322 = vmatpush1.bf16.msra.mxu0 0
        %323 = vmatprep.mubr.bf16.mxu0 0
        %324 = vmatmul.mubr.bf16.gmra.mrb[0].mxu0 %v289
        %v325 = vpop.f32.mrb[0].mxu0
        %v326 = vadd.f32 0.0, %v325
        %v327 = vpop.f32.mrb[0].mxu0
        %v328 = vpop.f32.mrb[0].mxu0
        %v329 = vadd.f32 0.0, %v328
        %v330 = vpop.f32.mrb[0].mxu0
        %331 = vdwg.mxu0
        %v332 = vadd.f32 %v258, %v326
        %v333 = vadd.f32 %v259, %v329
        %s334 = scalar_lea.vmem [#allocation3], 64
        %v335 = vld [vmem:[%s334] sm:$0xf]
        %v336 = vld [vmem:[%s334 + $0x4] sm:$0xf]
        %v337 = vld [vmem:[%s334 + $0x8] sm:$0xf]
        %v338 = vld [vmem:[%s334 + $0xc] sm:$0xf]
        %v339 = vshrl.u32 %v275, 16
        %v341 = vshll.u32 %v275, 16
        %v343 = vrot.slane %v341, 1
        %v344 = vor.u32 %v339, %v343
        %v349 = vunpack.c.l.b16 %v335
        %v350 = vunpack.c.l.b16 %v336
        %v351 = vunpack.c.l.b16 %v337
        %v352 = vunpack.c.l.b16 %v338
        %v353 = vpack.c.b16 %v350, %v349
        %v354 = vpack.c.b16 %v352, %v351
        %v358 = vsel %vm96, %v344, 0
        %360 = vmatprep.subr.bf16.mxu0 0
        %361 = vmatpush1.bf16.msra.mxu0 %v353
        %362 = vmatprep.subr.bf16.mxu0 0
        %363 = vmatpush1.bf16.msra.mxu0 %v354
        %364 = vmatprep.subr.bf16.mxu0 0
        %365 = vmatpush1.bf16.msra.mxu0 0
        %366 = vmatprep.subr.bf16.mxu0 0
        %367 = vmatpush1.bf16.msra.mxu0 0
        %368 = vmatprep.subr.bf16.mxu0 0
        %369 = vmatpush1.bf16.msra.mxu0 0
        %370 = vmatprep.subr.bf16.mxu0 0
        %371 = vmatpush1.bf16.msra.mxu0 0
        %372 = vmatprep.subr.bf16.mxu0 0
        %373 = vmatpush1.bf16.msra.mxu0 0
        %374 = vmatprep.subr.bf16.mxu0 0
        %375 = vmatpush1.bf16.msra.mxu0 0
        %376 = vmatprep.subr.bf16.mxu0 0
        %377 = vmatpush1.bf16.msra.mxu0 0
        %378 = vmatprep.subr.bf16.mxu0 0
        %379 = vmatpush1.bf16.msra.mxu0 0
        %380 = vmatprep.subr.bf16.mxu0 0
        %381 = vmatpush1.bf16.msra.mxu0 0
        %382 = vmatprep.subr.bf16.mxu0 0
        %383 = vmatpush1.bf16.msra.mxu0 0
        %384 = vmatprep.subr.bf16.mxu0 0
        %385 = vmatpush1.bf16.msra.mxu0 0
        %386 = vmatprep.subr.bf16.mxu0 0
        %387 = vmatpush1.bf16.msra.mxu0 0
        %388 = vmatprep.subr.bf16.mxu0 0
        %389 = vmatpush1.bf16.msra.mxu0 0
        %390 = vmatprep.subr.bf16.mxu0 0
        %391 = vmatpush1.bf16.msra.mxu0 0
        %392 = vmatprep.mubr.bf16.mxu0 0
        %393 = vmatmul.mubr.bf16.gmra.mrb[0].mxu0 %v358
        %v394 = vpop.f32.mrb[0].mxu0
        %v395 = vadd.f32 0.0, %v394
        %v396 = vpop.f32.mrb[0].mxu0
        %v397 = vpop.f32.mrb[0].mxu0
        %v398 = vadd.f32 0.0, %v397
        %v399 = vpop.f32.mrb[0].mxu0
        %400 = vdwg.mxu0
        %v401 = vadd.f32 %v332, %v395
        %v402 = vadd.f32 %v333, %v398
        %s403 = scalar_lea.vmem [#allocation3], 80
        %v404 = vld [vmem:[%s403] sm:$0xf]
        %v405 = vld [vmem:[%s403 + $0x4] sm:$0xf]
        %v406 = vld [vmem:[%s403 + $0x8] sm:$0xf]
        %v407 = vld [vmem:[%s403 + $0xc] sm:$0xf]
        %v408 = vrot.slane %v275, 1
        %v413 = vunpack.c.l.b16 %v404
        %v414 = vunpack.c.l.b16 %v405
        %v415 = vunpack.c.l.b16 %v406
        %v416 = vunpack.c.l.b16 %v407
        %v417 = vpack.c.b16 %v414, %v413
        %v418 = vpack.c.b16 %v416, %v415
        %v422 = vsel %vm96, %v408, 0
        %424 = vmatprep.subr.bf16.mxu0 0
        %425 = vmatpush1.bf16.msra.mxu0 %v417
        %426 = vmatprep.subr.bf16.mxu0 0
        %427 = vmatpush1.bf16.msra.mxu0 %v418
        %428 = vmatprep.subr.bf16.mxu0 0
        %429 = vmatpush1.bf16.msra.mxu0 0
        %430 = vmatprep.subr.bf16.mxu0 0
        %431 = vmatpush1.bf16.msra.mxu0 0
        %432 = vmatprep.subr.bf16.mxu0 0
        %433 = vmatpush1.bf16.msra.mxu0 0
        %434 = vmatprep.subr.bf16.mxu0 0
        %435 = vmatpush1.bf16.msra.mxu0 0
        %436 = vmatprep.subr.bf16.mxu0 0
        %437 = vmatpush1.bf16.msra.mxu0 0
        %438 = vmatprep.subr.bf16.mxu0 0
        %439 = vmatpush1.bf16.msra.mxu0 0
        %440 = vmatprep.subr.bf16.mxu0 0
        %441 = vmatpush1.bf16.msra.mxu0 0
        %442 = vmatprep.subr.bf16.mxu0 0
        %443 = vmatpush1.bf16.msra.mxu0 0
        %444 = vmatprep.subr.bf16.mxu0 0
        %445 = vmatpush1.bf16.msra.mxu0 0
        %446 = vmatprep.subr.bf16.mxu0 0
        %447 = vmatpush1.bf16.msra.mxu0 0
        %448 = vmatprep.subr.bf16.mxu0 0
        %449 = vmatpush1.bf16.msra.mxu0 0
        %450 = vmatprep.subr.bf16.mxu0 0
        %451 = vmatpush1.bf16.msra.mxu0 0
        %452 = vmatprep.subr.bf16.mxu0 0
        %453 = vmatpush1.bf16.msra.mxu0 0
        %454 = vmatprep.subr.bf16.mxu0 0
        %455 = vmatpush1.bf16.msra.mxu0 0
        %456 = vmatprep.mubr.bf16.mxu0 0
        %457 = vmatmul.mubr.bf16.gmra.mrb[0].mxu0 %v422
        %v458 = vpop.f32.mrb[0].mxu0
        %v459 = vadd.f32 0.0, %v458
        %v460 = vpop.f32.mrb[0].mxu0
        %v461 = vpop.f32.mrb[0].mxu0
        %v462 = vadd.f32 0.0, %v461
        %v463 = vpop.f32.mrb[0].mxu0
        %464 = vdwg.mxu0
        %v465 = vadd.f32 %v401, %v459
        %v466 = vadd.f32 %v402, %v462
        %s467 = sadd.s32 %s57, 2
        %s468 = smul.u32 %s467, 2
        %s469 = smul.addr %s468, 4
        %s470 = scalar_lea.vmem %s0, %s469
        %v471 = vld [vmem:[%s470] sm:$0xf]
        %v472 = vld [vmem:[%s470 + $0x4] sm:$0xf]
        %s473 = scalar_lea.vmem [#allocation3], 96
        %v474 = vld [vmem:[%s473] sm:$0xf]
        %v475 = vld [vmem:[%s473 + $0x4] sm:$0xf]
        %v476 = vld [vmem:[%s473 + $0x8] sm:$0xf]
        %v477 = vld [vmem:[%s473 + $0xc] sm:$0xf]
        %v480 = vunpack.c.l.b16 %v471
        %v481 = vunpack.c.l.b16 %v472
        %v482 = vpack.c.b16 %v481, %v480
        %v487 = vunpack.c.l.b16 %v474
        %v488 = vunpack.c.l.b16 %v475
        %v489 = vunpack.c.l.b16 %v476
        %v490 = vunpack.c.l.b16 %v477
        %v491 = vpack.c.b16 %v488, %v487
        %v492 = vpack.c.b16 %v490, %v489
        %v496 = vsel %vm96, %v482, 0
        %498 = vmatprep.subr.bf16.mxu0 0
        %499 = vmatpush1.bf16.msra.mxu0 %v491
        %500 = vmatprep.subr.bf16.mxu0 0
        %501 = vmatpush1.bf16.msra.mxu0 %v492
        %502 = vmatprep.subr.bf16.mxu0 0
        %503 = vmatpush1.bf16.msra.mxu0 0
        %504 = vmatprep.subr.bf16.mxu0 0
        %505 = vmatpush1.bf16.msra.mxu0 0
        %506 = vmatprep.subr.bf16.mxu0 0
        %507 = vmatpush1.bf16.msra.mxu0 0
        %508 = vmatprep.subr.bf16.mxu0 0
        %509 = vmatpush1.bf16.msra.mxu0 0
        %510 = vmatprep.subr.bf16.mxu0 0
        %511 = vmatpush1.bf16.msra.mxu0 0
        %512 = vmatprep.subr.bf16.mxu0 0
        %513 = vmatpush1.bf16.msra.mxu0 0
        %514 = vmatprep.subr.bf16.mxu0 0
        %515 = vmatpush1.bf16.msra.mxu0 0
        %516 = vmatprep.subr.bf16.mxu0 0
        %517 = vmatpush1.bf16.msra.mxu0 0
        %518 = vmatprep.subr.bf16.mxu0 0
        %519 = vmatpush1.bf16.msra.mxu0 0
        %520 = vmatprep.subr.bf16.mxu0 0
        %521 = vmatpush1.bf16.msra.mxu0 0
        %522 = vmatprep.subr.bf16.mxu0 0
        %523 = vmatpush1.bf16.msra.mxu0 0
        %524 = vmatprep.subr.bf16.mxu0 0
        %525 = vmatpush1.bf16.msra.mxu0 0
        %526 = vmatprep.subr.bf16.mxu0 0
        %527 = vmatpush1.bf16.msra.mxu0 0
        %528 = vmatprep.subr.bf16.mxu0 0
        %529 = vmatpush1.bf16.msra.mxu0 0
        %530 = vmatprep.mubr.bf16.mxu0 0
        %531 = vmatmul.mubr.bf16.gmra.mrb[0].mxu0 %v496
        %v532 = vpop.f32.mrb[0].mxu0
        %v533 = vadd.f32 0.0, %v532
        %v534 = vpop.f32.mrb[0].mxu0
        %v535 = vpop.f32.mrb[0].mxu0
        %v536 = vadd.f32 0.0, %v535
        %v537 = vpop.f32.mrb[0].mxu0
        %538 = vdwg.mxu0
        %v539 = vadd.f32 %v465, %v533
        %v540 = vadd.f32 %v466, %v536
        %s541 = scalar_lea.vmem [#allocation3], 112
        %v542 = vld [vmem:[%s541] sm:$0xf]
        %v543 = vld [vmem:[%s541 + $0x4] sm:$0xf]
        %v544 = vld [vmem:[%s541 + $0x8] sm:$0xf]
        %v545 = vld [vmem:[%s541 + $0xc] sm:$0xf]
        %v546 = vshrl.u32 %v482, 16
        %v548 = vshll.u32 %v482, 16
        %v550 = vrot.slane %v548, 1
        %v551 = vor.u32 %v546, %v550
        %v556 = vunpack.c.l.b16 %v542
        %v557 = vunpack.c.l.b16 %v543
        %v558 = vunpack.c.l.b16 %v544
        %v559 = vunpack.c.l.b16 %v545
        %v560 = vpack.c.b16 %v557, %v556
        %v561 = vpack.c.b16 %v559, %v558
        %v565 = vsel %vm96, %v551, 0
        %567 = vmatprep.subr.bf16.mxu0 0
        %568 = vmatpush1.bf16.msra.mxu0 %v560
        %569 = vmatprep.subr.bf16.mxu0 0
        %570 = vmatpush1.bf16.msra.mxu0 %v561
        %571 = vmatprep.subr.bf16.mxu0 0
        %572 = vmatpush1.bf16.msra.mxu0 0
        %573 = vmatprep.subr.bf16.mxu0 0
        %574 = vmatpush1.bf16.msra.mxu0 0
        %575 = vmatprep.subr.bf16.mxu0 0
        %576 = vmatpush1.bf16.msra.mxu0 0
        %577 = vmatprep.subr.bf16.mxu0 0
        %578 = vmatpush1.bf16.msra.mxu0 0
        %579 = vmatprep.subr.bf16.mxu0 0
        %580 = vmatpush1.bf16.msra.mxu0 0
        %581 = vmatprep.subr.bf16.mxu0 0
        %582 = vmatpush1.bf16.msra.mxu0 0
        %583 = vmatprep.subr.bf16.mxu0 0
        %584 = vmatpush1.bf16.msra.mxu0 0
        %585 = vmatprep.subr.bf16.mxu0 0
        %586 = vmatpush1.bf16.msra.mxu0 0
        %587 = vmatprep.subr.bf16.mxu0 0
        %588 = vmatpush1.bf16.msra.mxu0 0
        %589 = vmatprep.subr.bf16.mxu0 0
        %590 = vmatpush1.bf16.msra.mxu0 0
        %591 = vmatprep.subr.bf16.mxu0 0
        %592 = vmatpush1.bf16.msra.mxu0 0
        %593 = vmatprep.subr.bf16.mxu0 0
        %594 = vmatpush1.bf16.msra.mxu0 0
        %595 = vmatprep.subr.bf16.mxu0 0
        %596 = vmatpush1.bf16.msra.mxu0 0
        %597 = vmatprep.subr.bf16.mxu0 0
        %598 = vmatpush1.bf16.msra.mxu0 0
        %599 = vmatprep.mubr.bf16.mxu0 0
        %600 = vmatmul.mubr.bf16.gmra.mrb[0].mxu0 %v565
        %v601 = vpop.f32.mrb[0].mxu0
        %v602 = vadd.f32 0.0, %v601
        %v603 = vpop.f32.mrb[0].mxu0
        %v604 = vpop.f32.mrb[0].mxu0
        %v605 = vadd.f32 0.0, %v604
        %v606 = vpop.f32.mrb[0].mxu0
        %607 = vdwg.mxu0
        %v608 = vadd.f32 %v539, %v602
        %v609 = vadd.f32 %v540, %v605
        %s610 = scalar_lea.vmem [#allocation3], 128
        %v611 = vld [vmem:[%s610] sm:$0xf]
        %v612 = vld [vmem:[%s610 + $0x4] sm:$0xf]
        %v613 = vld [vmem:[%s610 + $0x8] sm:$0xf]
        %v614 = vld [vmem:[%s610 + $0xc] sm:$0xf]
        %v615 = vrot.slane %v482, 1
        %v620 = vunpack.c.l.b16 %v611
        %v621 = vunpack.c.l.b16 %v612
        %v622 = vunpack.c.l.b16 %v613
        %v623 = vunpack.c.l.b16 %v614
        %v624 = vpack.c.b16 %v621, %v620
        %v625 = vpack.c.b16 %v623, %v622
        %v629 = vsel %vm96, %v615, 0
        %631 = vmatprep.subr.bf16.mxu0 0
        %632 = vmatpush1.bf16.msra.mxu0 %v624
        %633 = vmatprep.subr.bf16.mxu0 0
        %634 = vmatpush1.bf16.msra.mxu0 %v625
        %635 = vmatprep.subr.bf16.mxu0 0
        %636 = vmatpush1.bf16.msra.mxu0 0
        %637 = vmatprep.subr.bf16.mxu0 0
        %638 = vmatpush1.bf16.msra.mxu0 0
        %639 = vmatprep.subr.bf16.mxu0 0
        %640 = vmatpush1.bf16.msra.mxu0 0
        %641 = vmatprep.subr.bf16.mxu0 0
        %642 = vmatpush1.bf16.msra.mxu0 0
        %643 = vmatprep.subr.bf16.mxu0 0
        %644 = vmatpush1.bf16.msra.mxu0 0
        %645 = vmatprep.subr.bf16.mxu0 0
        %646 = vmatpush1.bf16.msra.mxu0 0
        %647 = vmatprep.subr.bf16.mxu0 0
        %648 = vmatpush1.bf16.msra.mxu0 0
        %649 = vmatprep.subr.bf16.mxu0 0
        %650 = vmatpush1.bf16.msra.mxu0 0
        %651 = vmatprep.subr.bf16.mxu0 0
        %652 = vmatpush1.bf16.msra.mxu0 0
        %653 = vmatprep.subr.bf16.mxu0 0
        %654 = vmatpush1.bf16.msra.mxu0 0
        %655 = vmatprep.subr.bf16.mxu0 0
        %656 = vmatpush1.bf16.msra.mxu0 0
        %657 = vmatprep.subr.bf16.mxu0 0
        %658 = vmatpush1.bf16.msra.mxu0 0
        %659 = vmatprep.subr.bf16.mxu0 0
        %660 = vmatpush1.bf16.msra.mxu0 0
        %661 = vmatprep.subr.bf16.mxu0 0
        %662 = vmatpush1.bf16.msra.mxu0 0
        %663 = vmatprep.mubr.bf16.mxu0 0
        %664 = vmatmul.mubr.bf16.gmra.mrb[0].mxu0 %v629
        %v665 = vpop.f32.mrb[0].mxu0
        %v666 = vadd.f32 0.0, %v665
        %v667 = vpop.f32.mrb[0].mxu0
        %v668 = vpop.f32.mrb[0].mxu0
        %v669 = vadd.f32 0.0, %v668
        %v670 = vpop.f32.mrb[0].mxu0
        %671 = vdwg.mxu0
        %v672 = vadd.f32 %v608, %v666
        %v673 = vadd.f32 %v609, %v669
        %s674 = sadd.s32 %s47, %s56
        %s675 = smul.u32 %s674, 2
        %s676 = smul.addr %s675, 4
        %s677 = scalar_lea.vmem %s0, %s676
        %v678 = vld [vmem:[%s677] sm:$0xf]
        %v679 = vld [vmem:[%s677 + $0x4] sm:$0xf]
        %v682 = vunpack.c.l.b16 %v678
        %v683 = vunpack.c.l.b16 %v679
        %v684 = vpack.c.b16 %v683, %v682
        %v686 = vshrl.u32 %v684, 16
        %v688 = vshll.u32 %v684, 16
        %v690 = vrot.slane %v688, 1
        %v691 = vor.u32 %v686, %v690
        %v693 = vsel %vm96, %v691, 0
        %695 = vmatprep.subr.bf16.mxu0 0
        %696 = vmatpush1.bf16.msra.mxu0 %v92
        %697 = vmatprep.subr.bf16.mxu0 0
        %698 = vmatpush1.bf16.msra.mxu0 %v93
        %699 = vmatprep.subr.bf16.mxu0 0
        %700 = vmatpush1.bf16.msra.mxu0 0
        %701 = vmatprep.subr.bf16.mxu0 0
        %702 = vmatpush1.bf16.msra.mxu0 0
        %703 = vmatprep.subr.bf16.mxu0 0
        %704 = vmatpush1.bf16.msra.mxu0 0
        %705 = vmatprep.subr.bf16.mxu0 0
        %706 = vmatpush1.bf16.msra.mxu0 0
        %707 = vmatprep.subr.bf16.mxu0 0
        %708 = vmatpush1.bf16.msra.mxu0 0
        %709 = vmatprep.subr.bf16.mxu0 0
        %710 = vmatpush1.bf16.msra.mxu0 0
        %711 = vmatprep.subr.bf16.mxu0 0
        %712 = vmatpush1.bf16.msra.mxu0 0
        %713 = vmatprep.subr.bf16.mxu0 0
        %714 = vmatpush1.bf16.msra.mxu0 0
        %715 = vmatprep.subr.bf16.mxu0 0
        %716 = vmatpush1.bf16.msra.mxu0 0
        %717 = vmatprep.subr.bf16.mxu0 0
        %718 = vmatpush1.bf16.msra.mxu0 0
        %719 = vmatprep.subr.bf16.mxu0 0
        %720 = vmatpush1.bf16.msra.mxu0 0
        %721 = vmatprep.subr.bf16.mxu0 0
        %722 = vmatpush1.bf16.msra.mxu0 0
        %723 = vmatprep.subr.bf16.mxu0 0
        %724 = vmatpush1.bf16.msra.mxu0 0
        %725 = vmatprep.subr.bf16.mxu0 0
        %726 = vmatpush1.bf16.msra.mxu0 0
        %727 = vmatprep.mubr.bf16.mxu0 0
        %728 = vmatmul.mubr.bf16.gmra.mrb[0].mxu0 %v693
        %v729 = vpop.f32.mrb[0].mxu0
        %v730 = vadd.f32 0.0, %v729
        %v731 = vpop.f32.mrb[0].mxu0
        %v732 = vpop.f32.mrb[0].mxu0
        %v733 = vadd.f32 0.0, %v732
        %v734 = vpop.f32.mrb[0].mxu0
        %735 = vdwg.mxu0
        %v736 = vsel %vm96, %v684, 0
        %738 = vmatprep.subr.bf16.mxu0 0
        %739 = vmatpush1.bf16.msra.mxu0 %v149
        %740 = vmatprep.subr.bf16.mxu0 0
        %741 = vmatpush1.bf16.msra.mxu0 %v150
        %742 = vmatprep.subr.bf16.mxu0 0
        %743 = vmatpush1.bf16.msra.mxu0 0
        %744 = vmatprep.subr.bf16.mxu0 0
        %745 = vmatpush1.bf16.msra.mxu0 0
        %746 = vmatprep.subr.bf16.mxu0 0
        %747 = vmatpush1.bf16.msra.mxu0 0
        %748 = vmatprep.subr.bf16.mxu0 0
        %749 = vmatpush1.bf16.msra.mxu0 0
        %750 = vmatprep.subr.bf16.mxu0 0
        %751 = vmatpush1.bf16.msra.mxu0 0
        %752 = vmatprep.subr.bf16.mxu0 0
        %753 = vmatpush1.bf16.msra.mxu0 0
        %754 = vmatprep.subr.bf16.mxu0 0
        %755 = vmatpush1.bf16.msra.mxu0 0
        %756 = vmatprep.subr.bf16.mxu0 0
        %757 = vmatpush1.bf16.msra.mxu0 0
        %758 = vmatprep.subr.bf16.mxu0 0
        %759 = vmatpush1.bf16.msra.mxu0 0
        %760 = vmatprep.subr.bf16.mxu0 0
        %761 = vmatpush1.bf16.msra.mxu0 0
        %762 = vmatprep.subr.bf16.mxu0 0
        %763 = vmatpush1.bf16.msra.mxu0 0
        %764 = vmatprep.subr.bf16.mxu0 0
        %765 = vmatpush1.bf16.msra.mxu0 0
        %766 = vmatprep.subr.bf16.mxu0 0
        %767 = vmatpush1.bf16.msra.mxu0 0
        %768 = vmatprep.subr.bf16.mxu0 0
        %769 = vmatpush1.bf16.msra.mxu0 0
        %770 = vmatprep.mubr.bf16.mxu0 0
        %771 = vmatmul.mubr.bf16.gmra.mrb[0].mxu0 %v736
        %v772 = vpop.f32.mrb[0].mxu0
        %v773 = vadd.f32 %v730, %v772
        %v774 = vpop.f32.mrb[0].mxu0
        %v775 = vpop.f32.mrb[0].mxu0
        %v776 = vadd.f32 %v733, %v775
        %v777 = vpop.f32.mrb[0].mxu0
        %778 = vdwg.mxu0
        %v779 = vrot.slane %v684, 1
        %v781 = vsel %vm96, %v779, 0
        %783 = vmatprep.subr.bf16.mxu0 0
        %784 = vmatpush1.bf16.msra.mxu0 %v210
        %785 = vmatprep.subr.bf16.mxu0 0
        %786 = vmatpush1.bf16.msra.mxu0 %v211
        %787 = vmatprep.subr.bf16.mxu0 0
        %788 = vmatpush1.bf16.msra.mxu0 0
        %789 = vmatprep.subr.bf16.mxu0 0
        %790 = vmatpush1.bf16.msra.mxu0 0
        %791 = vmatprep.subr.bf16.mxu0 0
        %792 = vmatpush1.bf16.msra.mxu0 0
        %793 = vmatprep.subr.bf16.mxu0 0
        %794 = vmatpush1.bf16.msra.mxu0 0
        %795 = vmatprep.subr.bf16.mxu0 0
        %796 = vmatpush1.bf16.msra.mxu0 0
        %797 = vmatprep.subr.bf16.mxu0 0
        %798 = vmatpush1.bf16.msra.mxu0 0
        %799 = vmatprep.subr.bf16.mxu0 0
        %800 = vmatpush1.bf16.msra.mxu0 0
        %801 = vmatprep.subr.bf16.mxu0 0
        %802 = vmatpush1.bf16.msra.mxu0 0
        %803 = vmatprep.subr.bf16.mxu0 0
        %804 = vmatpush1.bf16.msra.mxu0 0
        %805 = vmatprep.subr.bf16.mxu0 0
        %806 = vmatpush1.bf16.msra.mxu0 0
        %807 = vmatprep.subr.bf16.mxu0 0
        %808 = vmatpush1.bf16.msra.mxu0 0
        %809 = vmatprep.subr.bf16.mxu0 0
        %810 = vmatpush1.bf16.msra.mxu0 0
        %811 = vmatprep.subr.bf16.mxu0 0
        %812 = vmatpush1.bf16.msra.mxu0 0
        %813 = vmatprep.subr.bf16.mxu0 0
        %814 = vmatpush1.bf16.msra.mxu0 0
        %815 = vmatprep.mubr.bf16.mxu0 0
        %816 = vmatmul.mubr.bf16.gmra.mrb[0].mxu0 %v781
        %v817 = vpop.f32.mrb[0].mxu0
        %v818 = vadd.f32 0.0, %v817
        %v819 = vpop.f32.mrb[0].mxu0
        %v820 = vpop.f32.mrb[0].mxu0
        %v821 = vadd.f32 0.0, %v820
        %v822 = vpop.f32.mrb[0].mxu0
        %823 = vdwg.mxu0
        %v824 = vadd.f32 %v773, %v818
        %v825 = vadd.f32 %v776, %v821
        %s826 = sadd.s32 %s674, 1
        %s827 = smul.u32 %s826, 2
        %s828 = smul.addr %s827, 4
        %s829 = scalar_lea.vmem %s0, %s828
        %v830 = vld [vmem:[%s829] sm:$0xf]
        %v831 = vld [vmem:[%s829 + $0x4] sm:$0xf]
        %v834 = vunpack.c.l.b16 %v830
        %v835 = vunpack.c.l.b16 %v831
        %v836 = vpack.c.b16 %v835, %v834
        %v838 = vsel %vm96, %v836, 0
        %840 = vmatprep.subr.bf16.mxu0 0
        %841 = vmatpush1.bf16.msra.mxu0 %v284
        %842 = vmatprep.subr.bf16.mxu0 0
        %843 = vmatpush1.bf16.msra.mxu0 %v285
        %844 = vmatprep.subr.bf16.mxu0 0
        %845 = vmatpush1.bf16.msra.mxu0 0
        %846 = vmatprep.subr.bf16.mxu0 0
        %847 = vmatpush1.bf16.msra.mxu0 0
        %848 = vmatprep.subr.bf16.mxu0 0
        %849 = vmatpush1.bf16.msra.mxu0 0
        %850 = vmatprep.subr.bf16.mxu0 0
        %851 = vmatpush1.bf16.msra.mxu0 0
        %852 = vmatprep.subr.bf16.mxu0 0
        %853 = vmatpush1.bf16.msra.mxu0 0
        %854 = vmatprep.subr.bf16.mxu0 0
        %855 = vmatpush1.bf16.msra.mxu0 0
        %856 = vmatprep.subr.bf16.mxu0 0
        %857 = vmatpush1.bf16.msra.mxu0 0
        %858 = vmatprep.subr.bf16.mxu0 0
        %859 = vmatpush1.bf16.msra.mxu0 0
        %860 = vmatprep.subr.bf16.mxu0 0
        %861 = vmatpush1.bf16.msra.mxu0 0
        %862 = vmatprep.subr.bf16.mxu0 0
        %863 = vmatpush1.bf16.msra.mxu0 0
        %864 = vmatprep.subr.bf16.mxu0 0
        %865 = vmatpush1.bf16.msra.mxu0 0
        %866 = vmatprep.subr.bf16.mxu0 0
        %867 = vmatpush1.bf16.msra.mxu0 0
        %868 = vmatprep.subr.bf16.mxu0 0
        %869 = vmatpush1.bf16.msra.mxu0 0
        %870 = vmatprep.subr.bf16.mxu0 0
        %871 = vmatpush1.bf16.msra.mxu0 0
        %872 = vmatprep.mubr.bf16.mxu0 0
        %873 = vmatmul.mubr.bf16.gmra.mrb[0].mxu0 %v838
        %v874 = vpop.f32.mrb[0].mxu0
        %v875 = vadd.f32 0.0, %v874
        %v876 = vpop.f32.mrb[0].mxu0
        %v877 = vpop.f32.mrb[0].mxu0
        %v878 = vadd.f32 0.0, %v877
        %v879 = vpop.f32.mrb[0].mxu0
        %880 = vdwg.mxu0
        %v881 = vadd.f32 %v824, %v875
        %v882 = vadd.f32 %v825, %v878
        %v883 = vshrl.u32 %v836, 16
        %v885 = vshll.u32 %v836, 16
        %v887 = vrot.slane %v885, 1
        %v888 = vor.u32 %v883, %v887
        %v890 = vsel %vm96, %v888, 0
        %892 = vmatprep.subr.bf16.mxu0 0
        %893 = vmatpush1.bf16.msra.mxu0 %v353
        %894 = vmatprep.subr.bf16.mxu0 0
        %895 = vmatpush1.bf16.msra.mxu0 %v354
        %896 = vmatprep.subr.bf16.mxu0 0
        %897 = vmatpush1.bf16.msra.mxu0 0
        %898 = vmatprep.subr.bf16.mxu0 0
        %899 = vmatpush1.bf16.msra.mxu0 0
        %900 = vmatprep.subr.bf16.mxu0 0
        %901 = vmatpush1.bf16.msra.mxu0 0
        %902 = vmatprep.subr.bf16.mxu0 0
        %903 = vmatpush1.bf16.msra.mxu0 0
        %904 = vmatprep.subr.bf16.mxu0 0
        %905 = vmatpush1.bf16.msra.mxu0 0
        %906 = vmatprep.subr.bf16.mxu0 0
        %907 = vmatpush1.bf16.msra.mxu0 0
        %908 = vmatprep.subr.bf16.mxu0 0
        %909 = vmatpush1.bf16.msra.mxu0 0
        %910 = vmatprep.subr.bf16.mxu0 0
        %911 = vmatpush1.bf16.msra.mxu0 0
        %912 = vmatprep.subr.bf16.mxu0 0
        %913 = vmatpush1.bf16.msra.mxu0 0
        %914 = vmatprep.subr.bf16.mxu0 0
        %915 = vmatpush1.bf16.msra.mxu0 0
        %916 = vmatprep.subr.bf16.mxu0 0
        %917 = vmatpush1.bf16.msra.mxu0 0
        %918 = vmatprep.subr.bf16.mxu0 0
        %919 = vmatpush1.bf16.msra.mxu0 0
        %920 = vmatprep.subr.bf16.mxu0 0
        %921 = vmatpush1.bf16.msra.mxu0 0
        %922 = vmatprep.subr.bf16.mxu0 0
        %923 = vmatpush1.bf16.msra.mxu0 0
        %924 = vmatprep.mubr.bf16.mxu0 0
        %925 = vmatmul.mubr.bf16.gmra.mrb[0].mxu0 %v890
        %v926 = vpop.f32.mrb[0].mxu0
        %v927 = vadd.f32 0.0, %v926
        %v928 = vpop.f32.mrb[0].mxu0
        %v929 = vpop.f32.mrb[0].mxu0
        %v930 = vadd.f32 0.0, %v929
        %v931 = vpop.f32.mrb[0].mxu0
        %932 = vdwg.mxu0
        %v933 = vadd.f32 %v881, %v927
        %v934 = vadd.f32 %v882, %v930
        %v935 = vrot.slane %v836, 1
        %v937 = vsel %vm96, %v935, 0
        %939 = vmatprep.subr.bf16.mxu0 0
        %940 = vmatpush1.bf16.msra.mxu0 %v417
        %941 = vmatprep.subr.bf16.mxu0 0
        %942 = vmatpush1.bf16.msra.mxu0 %v418
        %943 = vmatprep.subr.bf16.mxu0 0
        %944 = vmatpush1.bf16.msra.mxu0 0
        %945 = vmatprep.subr.bf16.mxu0 0
        %946 = vmatpush1.bf16.msra.mxu0 0
        %947 = vmatprep.subr.bf16.mxu0 0
        %948 = vmatpush1.bf16.msra.mxu0 0
        %949 = vmatprep.subr.bf16.mxu0 0
        %950 = vmatpush1.bf16.msra.mxu0 0
        %951 = vmatprep.subr.bf16.mxu0 0
        %952 = vmatpush1.bf16.msra.mxu0 0
        %953 = vmatprep.subr.bf16.mxu0 0
        %954 = vmatpush1.bf16.msra.mxu0 0
        %955 = vmatprep.subr.bf16.mxu0 0
        %956 = vmatpush1.bf16.msra.mxu0 0
        %957 = vmatprep.subr.bf16.mxu0 0
        %958 = vmatpush1.bf16.msra.mxu0 0
        %959 = vmatprep.subr.bf16.mxu0 0
        %960 = vmatpush1.bf16.msra.mxu0 0
        %961 = vmatprep.subr.bf16.mxu0 0
        %962 = vmatpush1.bf16.msra.mxu0 0
        %963 = vmatprep.subr.bf16.mxu0 0
        %964 = vmatpush1.bf16.msra.mxu0 0
        %965 = vmatprep.subr.bf16.mxu0 0
        %966 = vmatpush1.bf16.msra.mxu0 0
        %967 = vmatprep.subr.bf16.mxu0 0
        %968 = vmatpush1.bf16.msra.mxu0 0
        %969 = vmatprep.subr.bf16.mxu0 0
        %970 = vmatpush1.bf16.msra.mxu0 0
        %971 = vmatprep.mubr.bf16.mxu0 0
        %972 = vmatmul.mubr.bf16.gmra.mrb[0].mxu0 %v937
        %v973 = vpop.f32.mrb[0].mxu0
        %v974 = vadd.f32 0.0, %v973
        %v975 = vpop.f32.mrb[0].mxu0
        %v976 = vpop.f32.mrb[0].mxu0
        %v977 = vadd.f32 0.0, %v976
        %v978 = vpop.f32.mrb[0].mxu0
        %979 = vdwg.mxu0
        %v980 = vadd.f32 %v933, %v974
        %v981 = vadd.f32 %v934, %v977
        %s982 = sadd.s32 %s674, 2
        %s983 = smul.u32 %s982, 2
        %s984 = smul.addr %s983, 4
        %s985 = scalar_lea.vmem %s0, %s984
        %v986 = vld [vmem:[%s985] sm:$0xf]
        %v987 = vld [vmem:[%s985 + $0x4] sm:$0xf]
        %v990 = vunpack.c.l.b16 %v986
        %v991 = vunpack.c.l.b16 %v987
        %v992 = vpack.c.b16 %v991, %v990
        %v994 = vsel %vm96, %v992, 0
        %996 = vmatprep.subr.bf16.mxu0 0
        %997 = vmatpush1.bf16.msra.mxu0 %v491
        %998 = vmatprep.subr.bf16.mxu0 0
        %999 = vmatpush1.bf16.msra.mxu0 %v492
        %1000 = vmatprep.subr.bf16.mxu0 0
        %1001 = vmatpush1.bf16.msra.mxu0 0
        %1002 = vmatprep.subr.bf16.mxu0 0
        %1003 = vmatpush1.bf16.msra.mxu0 0
        %1004 = vmatprep.subr.bf16.mxu0 0
        %1005 = vmatpush1.bf16.msra.mxu0 0
        %1006 = vmatprep.subr.bf16.mxu0 0
        %1007 = vmatpush1.bf16.msra.mxu0 0
        %1008 = vmatprep.subr.bf16.mxu0 0
        %1009 = vmatpush1.bf16.msra.mxu0 0
        %1010 = vmatprep.subr.bf16.mxu0 0
        %1011 = vmatpush1.bf16.msra.mxu0 0
        %1012 = vmatprep.subr.bf16.mxu0 0
        %1013 = vmatpush1.bf16.msra.mxu0 0
        %1014 = vmatprep.subr.bf16.mxu0 0
        %1015 = vmatpush1.bf16.msra.mxu0 0
        %1016 = vmatprep.subr.bf16.mxu0 0
        %1017 = vmatpush1.bf16.msra.mxu0 0
        %1018 = vmatprep.subr.bf16.mxu0 0
        %1019 = vmatpush1.bf16.msra.mxu0 0
        %1020 = vmatprep.subr.bf16.mxu0 0
        %1021 = vmatpush1.bf16.msra.mxu0 0
        %1022 = vmatprep.subr.bf16.mxu0 0
        %1023 = vmatpush1.bf16.msra.mxu0 0
        %1024 = vmatprep.subr.bf16.mxu0 0
        %1025 = vmatpush1.bf16.msra.mxu0 0
        %1026 = vmatprep.subr.bf16.mxu0 0
        %1027 = vmatpush1.bf16.msra.mxu0 0
        %1028 = vmatprep.mubr.bf16.mxu0 0
        %1029 = vmatmul.mubr.bf16.gmra.mrb[0].mxu0 %v994
        %v1030 = vpop.f32.mrb[0].mxu0
        %v1031 = vadd.f32 0.0, %v1030
        %v1032 = vpop.f32.mrb[0].mxu0
        %v1033 = vpop.f32.mrb[0].mxu0
        %v1034 = vadd.f32 0.0, %v1033
        %v1035 = vpop.f32.mrb[0].mxu0
        %1036 = vdwg.mxu0
        %v1037 = vadd.f32 %v980, %v1031
        %v1038 = vadd.f32 %v981, %v1034
        %v1039 = vshrl.u32 %v992, 16
        %v1041 = vshll.u32 %v992, 16
        %v1043 = vrot.slane %v1041, 1
        %v1044 = vor.u32 %v1039, %v1043
        %v1046 = vsel %vm96, %v1044, 0
        %1048 = vmatprep.subr.bf16.mxu0 0
        %1049 = vmatpush1.bf16.msra.mxu0 %v560
        %1050 = vmatprep.subr.bf16.mxu0 0
        %1051 = vmatpush1.bf16.msra.mxu0 %v561
        %1052 = vmatprep.subr.bf16.mxu0 0
        %1053 = vmatpush1.bf16.msra.mxu0 0
        %1054 = vmatprep.subr.bf16.mxu0 0
        %1055 = vmatpush1.bf16.msra.mxu0 0
        %1056 = vmatprep.subr.bf16.mxu0 0
        %1057 = vmatpush1.bf16.msra.mxu0 0
        %1058 = vmatprep.subr.bf16.mxu0 0
        %1059 = vmatpush1.bf16.msra.mxu0 0
        %1060 = vmatprep.subr.bf16.mxu0 0
        %1061 = vmatpush1.bf16.msra.mxu0 0
        %1062 = vmatprep.subr.bf16.mxu0 0
        %1063 = vmatpush1.bf16.msra.mxu0 0
        %1064 = vmatprep.subr.bf16.mxu0 0
        %1065 = vmatpush1.bf16.msra.mxu0 0
        %1066 = vmatprep.subr.bf16.mxu0 0
        %1067 = vmatpush1.bf16.msra.mxu0 0
        %1068 = vmatprep.subr.bf16.mxu0 0
        %1069 = vmatpush1.bf16.msra.mxu0 0
        %1070 = vmatprep.subr.bf16.mxu0 0
        %1071 = vmatpush1.bf16.msra.mxu0 0
        %1072 = vmatprep.subr.bf16.mxu0 0
        %1073 = vmatpush1.bf16.msra.mxu0 0
        %1074 = vmatprep.subr.bf16.mxu0 0
        %1075 = vmatpush1.bf16.msra.mxu0 0
        %1076 = vmatprep.subr.bf16.mxu0 0
        %1077 = vmatpush1.bf16.msra.mxu0 0
        %1078 = vmatprep.subr.bf16.mxu0 0
        %1079 = vmatpush1.bf16.msra.mxu0 0
        %1080 = vmatprep.mubr.bf16.mxu0 0
        %1081 = vmatmul.mubr.bf16.gmra.mrb[0].mxu0 %v1046
        %v1082 = vpop.f32.mrb[0].mxu0
        %v1083 = vadd.f32 0.0, %v1082
        %v1084 = vpop.f32.mrb[0].mxu0
        %v1085 = vpop.f32.mrb[0].mxu0
        %v1086 = vadd.f32 0.0, %v1085
        %v1087 = vpop.f32.mrb[0].mxu0
        %1088 = vdwg.mxu0
        %v1089 = vadd.f32 %v1037, %v1083
        %v1090 = vadd.f32 %v1038, %v1086
        %v1091 = vrot.slane %v992, 1
        %v1093 = vsel %vm96, %v1091, 0
        %1095 = vmatprep.subr.bf16.mxu0 0
        %1096 = vmatpush1.bf16.msra.mxu0 %v624
        %1097 = vmatprep.subr.bf16.mxu0 0
        %1098 = vmatpush1.bf16.msra.mxu0 %v625
        %1099 = vmatprep.subr.bf16.mxu0 0
        %1100 = vmatpush1.bf16.msra.mxu0 0
        %1101 = vmatprep.subr.bf16.mxu0 0
        %1102 = vmatpush1.bf16.msra.mxu0 0
        %1103 = vmatprep.subr.bf16.mxu0 0
        %1104 = vmatpush1.bf16.msra.mxu0 0
        %1105 = vmatprep.subr.bf16.mxu0 0
        %1106 = vmatpush1.bf16.msra.mxu0 0
        %1107 = vmatprep.subr.bf16.mxu0 0
        %1108 = vmatpush1.bf16.msra.mxu0 0
        %1109 = vmatprep.subr.bf16.mxu0 0
        %1110 = vmatpush1.bf16.msra.mxu0 0
        %1111 = vmatprep.subr.bf16.mxu0 0
        %1112 = vmatpush1.bf16.msra.mxu0 0
        %1113 = vmatprep.subr.bf16.mxu0 0
        %1114 = vmatpush1.bf16.msra.mxu0 0
        %1115 = vmatprep.subr.bf16.mxu0 0
        %1116 = vmatpush1.bf16.msra.mxu0 0
        %1117 = vmatprep.subr.bf16.mxu0 0
        %1118 = vmatpush1.bf16.msra.mxu0 0
        %1119 = vmatprep.subr.bf16.mxu0 0
        %1120 = vmatpush1.bf16.msra.mxu0 0
        %1121 = vmatprep.subr.bf16.mxu0 0
        %1122 = vmatpush1.bf16.msra.mxu0 0
        %1123 = vmatprep.subr.bf16.mxu0 0
        %1124 = vmatpush1.bf16.msra.mxu0 0
        %1125 = vmatprep.subr.bf16.mxu0 0
        %1126 = vmatpush1.bf16.msra.mxu0 0
        %1127 = vmatprep.mubr.bf16.mxu0 0
        %1128 = vmatmul.mubr.bf16.gmra.mrb[0].mxu0 %v1093
        %v1129 = vpop.f32.mrb[0].mxu0
        %v1130 = vadd.f32 0.0, %v1129
        %v1131 = vpop.f32.mrb[0].mxu0
        %v1132 = vpop.f32.mrb[0].mxu0
        %v1133 = vadd.f32 0.0, %v1132
        %v1134 = vpop.f32.mrb[0].mxu0
        %1135 = vdwg.mxu0
        %v1136 = vadd.f32 %v1089, %v1130
        %v1137 = vadd.f32 %v1090, %v1133
        %v1138 = vmax.f32 %v672, %v1136
        %v1139 = vmax.f32 %v673, %v1137
        %vm1140 = vcmask 523264
        %1141 = vst.msk [vmem:[#allocation2] sm:$0xff] %vm1140, %v1138
        %vm1142 = vcmask 521216
        %1143 = vst.msk [vmem:[#allocation2 + $0x8] sm:$0x3f] %vm1142, %v1139
        %v1144 = vld [vmem:[#allocation2] ss:$2 sm:$0x7f]
        %s1145 = scalar_lea.vmem [#allocation2], 1
        %v1146 = vld [vmem:[%s1145] ss:$2 sm:$0x7f]
        %v1147 = vmax.f32 %v1144, %v1146
        %v1148 = vld [vmem:[#allocation5] sm:$0x1]
        %v1150 = vlaneseq
        %v1151 = vshrl.u32 %v1150, 7
        %v1152 = vsub.s32 0, %v1151
        %v1153 = vrot.slane %v1148, %v1152
        %v1155 = vadd.f32 %v1147, %v1153
        %v1156 = vmax.f32 %v1155, 0.0
        %v1157 = vpack.c.bf16 %v1156, %v1156
        %s1158 = sadd.s32 %s48, %s50
        %s1159 = smul.addr %s1158, 4
        %s1160 = scalar_lea.vmem %s3, %s1159
        %vm1161 = vcmask 519168
        %vm1162 = vsmask.f32 3328
        %vm1163 = vmand %vm1161, %vm1162
        %v1164 = vld [vmem:[%s1160] sm:$0xf]
        %v1165 = vsel %vm1163, %v1157, %v1164
        %1166 = vst [vmem:[%s1160] sm:$0xf] %v1165
      $region33: #{cnn_forward.5} parent=25 // loop_footer
        %s54 = sadd.s32 1, %s50
      $region34: #{cnn_forward.5} parent=25 // loop_footer_branch
        %49 = sbr.rel target = $region30
      $region35: #{cnn_forward.5} parent=25 // loop_exit
        _
    $region26: #{cnn_forward.5} parent=1 // loop_footer
      %s46 = sadd.s32 1, %s42
    $region27: #{cnn_forward.5} parent=1 // loop_footer_branch
      %41 = sbr.rel target = $region23
    $region28: #{cnn_forward.5} parent=1 // loop_exit
      _
    // Predicated region
    $region36: #{cnn_forward.5} parent=1 // pred_check
      _
    $region37: #{cnn_forward.5} parent=1 // pred_check_branch
      %1168 = sbr.rel (0) target = $region39
    $region38: #{cnn_forward.5} parent=1 // pred_region
      _
    $region39: #{cnn_forward.5} parent=1 // pred_fallthru
      _
    // Predicated region
    $region40: #{cnn_forward.5} parent=1 // pred_check
      _
    $region41: #{cnn_forward.5} parent=1 // pred_check_branch
      %1170 = sbr.rel (0) target = $region43
    $region42: #{cnn_forward.5} parent=1 // pred_region
      _
    $region43: #{cnn_forward.5} parent=1 // pred_fallthru
      _
    %1171 = vsyncpa [#allocation4], 1
    %1172 = vsyncpa [#allocation6], 1

// kernel: cnn_forward.6
$region0: #{cnn_forward.6}
  #allocation0 [shape = 'u32[]', space=smem, size = 0x4, offset = 0x4, fixed_abs, tag = 'smem constant byte address 0x4 - core index']
  #allocation1 [shape = 'u32[144,128]{1,0:T(1,128)}', space=vmem, size = 0x12000, scoped, tag = 'internal scratch']
  #allocation2 [shape = 'f32[8,128]{1,0:T(8,128)}', space=vmem, size = 0x1000, scoped, tag = 'scratch operand']
  %s0 = inlined_call_operand.vmem [shape: bf16[18,9,64], index: 0, kind: input, shape index: {}]
  %s1 = inlined_call_operand.hbm [shape: bf16[9,64,128], index: 1, kind: input, shape index: {}]
  %s2 = inlined_call_operand.vmem [shape: f32[1,128], index: 2, kind: input, shape index: {}]
  %s3 = inlined_call_operand.vmem [shape: bf16[8,4,128], index: 3, kind: output, shape index: {}]
  %s4 = sld [smem:[#allocation0]]
  $region40: #{cnn_forward.6} parent=0
    _
  %s6 = ssub.s32 1, %s4
  %s7 = scalar_select 0, %s6, %s4
  $region1: #{cnn_forward.6} parent=0
    #allocation3 [shape = 'u8[147456]{0}', space=vmem, size = 0x24000, scoped, tag = 'input window, operand 1, single buffered']
    #allocation4 [shape = 's32[1]{0}', space=sflag, size = 0x4, scoped, tag = 'scoped memory for cnn_forward.6']
    %8 = vsyncpa [#allocation4], 0
    // Predicated region
    $region2: #{cnn_forward.6} parent=1 // pred_check
      _
    $region3: #{cnn_forward.6} parent=1 // pred_check_branch
      %10 = sbr.rel (0) target = $region5
    $region4: #{cnn_forward.6} parent=1 // pred_region
      _
    $region5: #{cnn_forward.6} parent=1 // pred_fallthru
      _
    // Predicated region
    $region6: #{cnn_forward.6} parent=1 // pred_check
      _
    $region7: #{cnn_forward.6} parent=1 // pred_check_branch
      %12 = sbr.rel (0) target = $region9
    $region8: #{cnn_forward.6} parent=1 // pred_region
      %s14 = ssub.s32 4608, 4608
      %15 = vsyncadd [#allocation4], %s14
      %s16 = sshll.u32 [#allocation3], 4
      %s17 = int_to_ptr.vmem [resolvable:$true] %s16
      %22 = dma.hbm_to_vmem [thread:$0]  %s1, 4608, %s17, [#allocation4], 64, 64, 4
    $region9: #{cnn_forward.6} parent=1 // pred_fallthru
      _
    // Predicated region
    $region10: #{cnn_forward.6} parent=1 // pred_check
      _
    $region11: #{cnn_forward.6} parent=1 // pred_check_branch
      %24 = sbr.rel (0) target = $region13
    $region12: #{cnn_forward.6} parent=1 // pred_region
      _
    $region13: #{cnn_forward.6} parent=1 // pred_fallthru
      _
    // Predicated region
    $region14: #{cnn_forward.6} parent=1 // pred_check
      _
    $region15: #{cnn_forward.6} parent=1 // pred_check_branch
      %26 = sbr.rel (0) target = $region17
    $region16: #{cnn_forward.6} parent=1 // pred_region
      %27 = dma.done [#allocation4], 4608
    $region17: #{cnn_forward.6} parent=1 // pred_fallthru
      _
    %29 = vst [vmem:[#allocation2] sm:$0x1] -1e+30
    loop: start=0, step=1, limit=2
    $region18: #{cnn_forward.6} parent=1 // loop_pre_header
      _
    $region19: #{cnn_forward.6} parent=1 // loop_header
      %s31 = sphi 0, %s35
      %p32 = scmp.ge.s32.totalorder %s31, 2
    $region20: #{cnn_forward.6} parent=1 // loop_header_branch
      %34 = sbr.rel (%p32) target = $region24
    $region21: #{cnn_forward.6} parent=1 // loop_body
      %s36 = smul.u32 %s31, 9
      %s37 = smul.u32 %s31, 4
      loop: start=0, step=1, limit=4
      $region25: #{cnn_forward.6} parent=21 // loop_pre_header
        _
      $region26: #{cnn_forward.6} parent=21 // loop_header
        %s39 = sphi 0, %s43
        %p40 = scmp.ge.s32.totalorder %s39, 4
      $region27: #{cnn_forward.6} parent=21 // loop_header_branch
        %42 = sbr.rel (%p40) target = $region31
      $region28: #{cnn_forward.6} parent=21 // loop_body
        %s44 = smul.u32 %s39, 2
        %s45 = ssub.s32 %s44, 1
        %p46 = scmp.gt.s32.totalorder %s45, 0
        %s47 = scalar_select %p46, %s45, 0
        %s48 = sadd.s32 %s36, %s47
        %s49 = smul.u32 %s48, 2
        %s50 = smul.addr %s49, 4
        %s51 = scalar_lea.vmem %s0, %s50
        %v52 = vld [vmem:[%s51] sm:$0xf]
        %v53 = vld [vmem:[%s51 + $0x4] sm:$0x1]
        %v54 = vld [vmem:[#allocation3] sm:$0xf]
        %v55 = vld [vmem:[#allocation3 + $0x4] sm:$0xf]
        %v56 = vld [vmem:[#allocation3 + $0x8] sm:$0xf]
        %v57 = vld [vmem:[#allocation3 + $0xc] sm:$0xf]
        %v58 = vld [vmem:[#allocation3 + $0x10] sm:$0xf]
        %v59 = vld [vmem:[#allocation3 + $0x14] sm:$0xf]
        %v60 = vld [vmem:[#allocation3 + $0x18] sm:$0xf]
        %v61 = vld [vmem:[#allocation3 + $0x1c] sm:$0xf]
        %s62 = scalar_lea.vmem [#allocation3], 32
        %v63 = vld [vmem:[%s62] sm:$0xf]
        %v64 = vld [vmem:[%s62 + $0x4] sm:$0xf]
        %v65 = vld [vmem:[%s62 + $0x8] sm:$0xf]
        %v66 = vld [vmem:[%s62 + $0xc] sm:$0xf]
        %v67 = vld [vmem:[%s62 + $0x10] sm:$0xf]
        %v68 = vld [vmem:[%s62 + $0x14] sm:$0xf]
        %v69 = vld [vmem:[%s62 + $0x18] sm:$0xf]
        %v70 = vld [vmem:[%s62 + $0x1c] sm:$0xf]
        %v72 = vunpack.c.l.b16 %v52
        %v73 = vpack.c.b16 %v72, %v72
        %v75 = vshrl.u32 %v73, 16
        %v77 = vshll.u32 %v73, 16
        %v79 = vrot.slane %v77, 1
        %v80 = vor.u32 %v75, %v79
        %v89 = vunpack.c.l.b16 %v63
        %v90 = vunpack.c.l.b16 %v64
        %v91 = vunpack.c.l.b16 %v65
        %v92 = vunpack.c.l.b16 %v66
        %v93 = vunpack.c.l.b16 %v67
        %v94 = vunpack.c.l.b16 %v68
        %v95 = vunpack.c.l.b16 %v69
        %v96 = vunpack.c.l.b16 %v70
        %v97 = vpack.c.b16 %v90, %v89
        %v98 = vpack.c.b16 %v92, %v91
        %v99 = vpack.c.b16 %v94, %v93
        %v100 = vpack.c.b16 %v96, %v95
        %vm105 = vcmask 523264
        %v107 = vsel %vm105, %v80, 0
        %109 = vmatprep.subr.bf16.mxu0 0
        %110 = vmatpush1.bf16.msra.mxu0 %v97
        %111 = vmatprep.subr.bf16.mxu0 0
        %112 = vmatpush1.bf16.msra.mxu0 %v98
        %113 = vmatprep.subr.bf16.mxu0 0
        %114 = vmatpush1.bf16.msra.mxu0 %v99
        %115 = vmatprep.subr.bf16.mxu0 0
        %116 = vmatpush1.bf16.msra.mxu0 %v100
        %117 = vmatprep.subr.bf16.mxu0 0
        %118 = vmatpush1.bf16.msra.mxu0 0
        %119 = vmatprep.subr.bf16.mxu0 0
        %120 = vmatpush1.bf16.msra.mxu0 0
        %121 = vmatprep.subr.bf16.mxu0 0
        %122 = vmatpush1.bf16.msra.mxu0 0
        %123 = vmatprep.subr.bf16.mxu0 0
        %124 = vmatpush1.bf16.msra.mxu0 0
        %125 = vmatprep.subr.bf16.mxu0 0
        %126 = vmatpush1.bf16.msra.mxu0 0
        %127 = vmatprep.subr.bf16.mxu0 0
        %128 = vmatpush1.bf16.msra.mxu0 0
        %129 = vmatprep.subr.bf16.mxu0 0
        %130 = vmatpush1.bf16.msra.mxu0 0
        %131 = vmatprep.subr.bf16.mxu0 0
        %132 = vmatpush1.bf16.msra.mxu0 0
        %133 = vmatprep.subr.bf16.mxu0 0
        %134 = vmatpush1.bf16.msra.mxu0 0
        %135 = vmatprep.subr.bf16.mxu0 0
        %136 = vmatpush1.bf16.msra.mxu0 0
        %137 = vmatprep.subr.bf16.mxu0 0
        %138 = vmatpush1.bf16.msra.mxu0 0
        %139 = vmatprep.subr.bf16.mxu0 0
        %140 = vmatpush1.bf16.msra.mxu0 0
        %141 = vmatprep.mubr.bf16.mxu0 0
        %142 = vmatmul.mubr.bf16.gmra.mrb[0].mxu0 %v107
        %v143 = vpop.f32.mrb[0].mxu0
        %v144 = vadd.f32 0.0, %v143
        %v145 = vpop.f32.mrb[0].mxu0
        %v146 = vpop.f32.mrb[0].mxu0
        %v147 = vpop.f32.mrb[0].mxu0
        %148 = vdwg.mxu0
        %v157 = vunpack.c.l.b16 %v54
        %v158 = vunpack.c.l.b16 %v55
        %v159 = vunpack.c.l.b16 %v56
        %v160 = vunpack.c.l.b16 %v57
        %v161 = vunpack.c.l.b16 %v58
        %v162 = vunpack.c.l.b16 %v59
        %v163 = vunpack.c.l.b16 %v60
        %v164 = vunpack.c.l.b16 %v61
        %v165 = vpack.c.b16 %v158, %v157
        %v166 = vpack.c.b16 %v160, %v159
        %v167 = vpack.c.b16 %v162, %v161
        %v168 = vpack.c.b16 %v164, %v163
        %v174 = vsel %vm105, %v52, 0
        %176 = vmatprep.subr.bf16.mxu0 0
        %177 = vmatpush1.bf16.msra.mxu0 %v165
        %178 = vmatprep.subr.bf16.mxu0 0
        %179 = vmatpush1.bf16.msra.mxu0 %v166
        %180 = vmatprep.subr.bf16.mxu0 0
        %181 = vmatpush1.bf16.msra.mxu0 %v167
        %182 = vmatprep.subr.bf16.mxu0 0
        %183 = vmatpush1.bf16.msra.mxu0 %v168
        %184 = vmatprep.subr.bf16.mxu0 0
        %185 = vmatpush1.bf16.msra.mxu0 0
        %186 = vmatprep.subr.bf16.mxu0 0
        %187 = vmatpush1.bf16.msra.mxu0 0
        %188 = vmatprep.subr.bf16.mxu0 0
        %189 = vmatpush1.bf16.msra.mxu0 0
        %190 = vmatprep.subr.bf16.mxu0 0
        %191 = vmatpush1.bf16.msra.mxu0 0
        %192 = vmatprep.subr.bf16.mxu0 0
        %193 = vmatpush1.bf16.msra.mxu0 0
        %194 = vmatprep.subr.bf16.mxu0 0
        %195 = vmatpush1.bf16.msra.mxu0 0
        %196 = vmatprep.subr.bf16.mxu0 0
        %197 = vmatpush1.bf16.msra.mxu0 0
        %198 = vmatprep.subr.bf16.mxu0 0
        %199 = vmatpush1.bf16.msra.mxu0 0
        %200 = vmatprep.subr.bf16.mxu0 0
        %201 = vmatpush1.bf16.msra.mxu0 0
        %202 = vmatprep.subr.bf16.mxu0 0
        %203 = vmatpush1.bf16.msra.mxu0 0
        %204 = vmatprep.subr.bf16.mxu0 0
        %205 = vmatpush1.bf16.msra.mxu0 0
        %206 = vmatprep.subr.bf16.mxu0 0
        %207 = vmatpush1.bf16.msra.mxu0 0
        %208 = vmatprep.mubr.bf16.mxu0 0
        %209 = vmatmul.mubr.bf16.gmra.mrb[0].mxu0 %v174
        %v210 = vpop.f32.mrb[0].mxu0
        %v211 = vadd.f32 %v144, %v210
        %v212 = vpop.f32.mrb[0].mxu0
        %v213 = vpop.f32.mrb[0].mxu0
        %v214 = vpop.f32.mrb[0].mxu0
        %215 = vdwg.mxu0
        %s216 = scalar_lea.vmem [#allocation3], 64
        %v217 = vld [vmem:[%s216] sm:$0xf]
        %v218 = vld [vmem:[%s216 + $0x4] sm:$0xf]
        %v219 = vld [vmem:[%s216 + $0x8] sm:$0xf]
        %v220 = vld [vmem:[%s216 + $0xc] sm:$0xf]
        %v221 = vld [vmem:[%s216 + $0x10] sm:$0xf]
        %v222 = vld [vmem:[%s216 + $0x14] sm:$0xf]
        %v223 = vld [vmem:[%s216 + $0x18] sm:$0xf]
        %v224 = vld [vmem:[%s216 + $0x1c] sm:$0xf]
        %v226 = vunpack.c.l.b16 %v53
        %v227 = vpack.c.b16 %v226, %v72
        %v228 = vrot.slane %v227, 1
        %v237 = vunpack.c.l.b16 %v217
        %v238 = vunpack.c.l.b16 %v218
        %v239 = vunpack.c.l.b16 %v219
        %v240 = vunpack.c.l.b16 %v220
        %v241 = vunpack.c.l.b16 %v221
        %v242 = vunpack.c.l.b16 %v222
        %v243 = vunpack.c.l.b16 %v223
        %v244 = vunpack.c.l.b16 %v224
        %v245 = vpack.c.b16 %v238, %v237
        %v246 = vpack.c.b16 %v240, %v239
        %v247 = vpack.c.b16 %v242, %v241
        %v248 = vpack.c.b16 %v244, %v243
        %v254 = vsel %vm105, %v228, 0
        %256 = vmatprep.subr.bf16.mxu0 0
        %257 = vmatpush1.bf16.msra.mxu0 %v245
        %258 = vmatprep.subr.bf16.mxu0 0
        %259 = vmatpush1.bf16.msra.mxu0 %v246
        %260 = vmatprep.subr.bf16.mxu0 0
        %261 = vmatpush1.bf16.msra.mxu0 %v247
        %262 = vmatprep.subr.bf16.mxu0 0
        %263 = vmatpush1.bf16.msra.mxu0 %v248
        %264 = vmatprep.subr.bf16.mxu0 0
        %265 = vmatpush1.bf16.msra.mxu0 0
        %266 = vmatprep.subr.bf16.mxu0 0
        %267 = vmatpush1.bf16.msra.mxu0 0
        %268 = vmatprep.subr.bf16.mxu0 0
        %269 = vmatpush1.bf16.msra.mxu0 0
        %270 = vmatprep.subr.bf16.mxu0 0
        %271 = vmatpush1.bf16.msra.mxu0 0
        %272 = vmatprep.subr.bf16.mxu0 0
        %273 = vmatpush1.bf16.msra.mxu0 0
        %274 = vmatprep.subr.bf16.mxu0 0
        %275 = vmatpush1.bf16.msra.mxu0 0
        %276 = vmatprep.subr.bf16.mxu0 0
        %277 = vmatpush1.bf16.msra.mxu0 0
        %278 = vmatprep.subr.bf16.mxu0 0
        %279 = vmatpush1.bf16.msra.mxu0 0
        %280 = vmatprep.subr.bf16.mxu0 0
        %281 = vmatpush1.bf16.msra.mxu0 0
        %282 = vmatprep.subr.bf16.mxu0 0
        %283 = vmatpush1.bf16.msra.mxu0 0
        %284 = vmatprep.subr.bf16.mxu0 0
        %285 = vmatpush1.bf16.msra.mxu0 0
        %286 = vmatprep.subr.bf16.mxu0 0
        %287 = vmatpush1.bf16.msra.mxu0 0
        %288 = vmatprep.mubr.bf16.mxu0 0
        %289 = vmatmul.mubr.bf16.gmra.mrb[0].mxu0 %v254
        %v290 = vpop.f32.mrb[0].mxu0
        %v291 = vadd.f32 0.0, %v290
        %v292 = vpop.f32.mrb[0].mxu0
        %v293 = vpop.f32.mrb[0].mxu0
        %v294 = vpop.f32.mrb[0].mxu0
        %295 = vdwg.mxu0
        %v296 = vadd.f32 %v211, %v291
        %s297 = sadd.s32 %s48, 1
        %s298 = smul.u32 %s297, 2
        %s299 = smul.addr %s298, 4
        %s300 = scalar_lea.vmem %s0, %s299
        %v301 = vld [vmem:[%s300] sm:$0xf]
        %v302 = vld [vmem:[%s300 + $0x4] sm:$0x1]
        %s303 = scalar_lea.vmem [#allocation3], 96
        %v304 = vld [vmem:[%s303] sm:$0xf]
        %v305 = vld [vmem:[%s303 + $0x4] sm:$0xf]
        %v306 = vld [vmem:[%s303 + $0x8] sm:$0xf]
        %v307 = vld [vmem:[%s303 + $0xc] sm:$0xf]
        %v308 = vld [vmem:[%s303 + $0x10] sm:$0xf]
        %v309 = vld [vmem:[%s303 + $0x14] sm:$0xf]
        %v310 = vld [vmem:[%s303 + $0x18] sm:$0xf]
        %v311 = vld [vmem:[%s303 + $0x1c] sm:$0xf]
        %v320 = vunpack.c.l.b16 %v304
        %v321 = vunpack.c.l.b16 %v305
        %v322 = vunpack.c.l.b16 %v306
        %v323 = vunpack.c.l.b16 %v307
        %v324 = vunpack.c.l.b16 %v308
        %v325 = vunpack.c.l.b16 %v309
        %v326 = vunpack.c.l.b16 %v310
        %v327 = vunpack.c.l.b16 %v311
        %v328 = vpack.c.b16 %v321, %v320
        %v329 = vpack.c.b16 %v323, %v322
        %v330 = vpack.c.b16 %v325, %v324
        %v331 = vpack.c.b16 %v327, %v326
        %v337 = vsel %vm105, %v301, 0
        %339 = vmatprep.subr.bf16.mxu0 0
        %340 = vmatpush1.bf16.msra.mxu0 %v328
        %341 = vmatprep.subr.bf16.mxu0 0
        %342 = vmatpush1.bf16.msra.mxu0 %v329
        %343 = vmatprep.subr.bf16.mxu0 0
        %344 = vmatpush1.bf16.msra.mxu0 %v330
        %345 = vmatprep.subr.bf16.mxu0 0
        %346 = vmatpush1.bf16.msra.mxu0 %v331
        %347 = vmatprep.subr.bf16.mxu0 0
        %348 = vmatpush1.bf16.msra.mxu0 0
        %349 = vmatprep.subr.bf16.mxu0 0
        %350 = vmatpush1.bf16.msra.mxu0 0
        %351 = vmatprep.subr.bf16.mxu0 0
        %352 = vmatpush1.bf16.msra.mxu0 0
        %353 = vmatprep.subr.bf16.mxu0 0
        %354 = vmatpush1.bf16.msra.mxu0 0
        %355 = vmatprep.subr.bf16.mxu0 0
        %356 = vmatpush1.bf16.msra.mxu0 0
        %357 = vmatprep.subr.bf16.mxu0 0
        %358 = vmatpush1.bf16.msra.mxu0 0
        %359 = vmatprep.subr.bf16.mxu0 0
        %360 = vmatpush1.bf16.msra.mxu0 0
        %361 = vmatprep.subr.bf16.mxu0 0
        %362 = vmatpush1.bf16.msra.mxu0 0
        %363 = vmatprep.subr.bf16.mxu0 0
        %364 = vmatpush1.bf16.msra.mxu0 0
        %365 = vmatprep.subr.bf16.mxu0 0
        %366 = vmatpush1.bf16.msra.mxu0 0
        %367 = vmatprep.subr.bf16.mxu0 0
        %368 = vmatpush1.bf16.msra.mxu0 0
        %369 = vmatprep.subr.bf16.mxu0 0
        %370 = vmatpush1.bf16.msra.mxu0 0
        %371 = vmatprep.mubr.bf16.mxu0 0
        %372 = vmatmul.mubr.bf16.gmra.mrb[0].mxu0 %v337
        %v373 = vpop.f32.mrb[0].mxu0
        %v374 = vadd.f32 0.0, %v373
        %v375 = vpop.f32.mrb[0].mxu0
        %v376 = vpop.f32.mrb[0].mxu0
        %v377 = vpop.f32.mrb[0].mxu0
        %378 = vdwg.mxu0
        %v379 = vadd.f32 %v296, %v374
        %s380 = scalar_lea.vmem [#allocation3], 128
        %v381 = vld [vmem:[%s380] sm:$0xf]
        %v382 = vld [vmem:[%s380 + $0x4] sm:$0xf]
        %v383 = vld [vmem:[%s380 + $0x8] sm:$0xf]
        %v384 = vld [vmem:[%s380 + $0xc] sm:$0xf]
        %v385 = vld [vmem:[%s380 + $0x10] sm:$0xf]
        %v386 = vld [vmem:[%s380 + $0x14] sm:$0xf]
        %v387 = vld [vmem:[%s380 + $0x18] sm:$0xf]
        %v388 = vld [vmem:[%s380 + $0x1c] sm:$0xf]
        %v390 = vunpack.c.l.b16 %v301
        %v391 = vpack.c.b16 %v390, %v390
        %v393 = vshrl.u32 %v391, 16
        %v395 = vshll.u32 %v391, 16
        %v397 = vrot.slane %v395, 1
        %v398 = vor.u32 %v393, %v397
        %v407 = vunpack.c.l.b16 %v381
        %v408 = vunpack.c.l.b16 %v382
        %v409 = vunpack.c.l.b16 %v383
        %v410 = vunpack.c.l.b16 %v384
        %v411 = vunpack.c.l.b16 %v385
        %v412 = vunpack.c.l.b16 %v386
        %v413 = vunpack.c.l.b16 %v387
        %v414 = vunpack.c.l.b16 %v388
        %v415 = vpack.c.b16 %v408, %v407
        %v416 = vpack.c.b16 %v410, %v409
        %v417 = vpack.c.b16 %v412, %v411
        %v418 = vpack.c.b16 %v414, %v413
        %v424 = vsel %vm105, %v398, 0
        %426 = vmatprep.subr.bf16.mxu0 0
        %427 = vmatpush1.bf16.msra.mxu0 %v415
        %428 = vmatprep.subr.bf16.mxu0 0
        %429 = vmatpush1.bf16.msra.mxu0 %v416
        %430 = vmatprep.subr.bf16.mxu0 0
        %431 = vmatpush1.bf16.msra.mxu0 %v417
        %432 = vmatprep.subr.bf16.mxu0 0
        %433 = vmatpush1.bf16.msra.mxu0 %v418
        %434 = vmatprep.subr.bf16.mxu0 0
        %435 = vmatpush1.bf16.msra.mxu0 0
        %436 = vmatprep.subr.bf16.mxu0 0
        %437 = vmatpush1.bf16.msra.mxu0 0
        %438 = vmatprep.subr.bf16.mxu0 0
        %439 = vmatpush1.bf16.msra.mxu0 0
        %440 = vmatprep.subr.bf16.mxu0 0
        %441 = vmatpush1.bf16.msra.mxu0 0
        %442 = vmatprep.subr.bf16.mxu0 0
        %443 = vmatpush1.bf16.msra.mxu0 0
        %444 = vmatprep.subr.bf16.mxu0 0
        %445 = vmatpush1.bf16.msra.mxu0 0
        %446 = vmatprep.subr.bf16.mxu0 0
        %447 = vmatpush1.bf16.msra.mxu0 0
        %448 = vmatprep.subr.bf16.mxu0 0
        %449 = vmatpush1.bf16.msra.mxu0 0
        %450 = vmatprep.subr.bf16.mxu0 0
        %451 = vmatpush1.bf16.msra.mxu0 0
        %452 = vmatprep.subr.bf16.mxu0 0
        %453 = vmatpush1.bf16.msra.mxu0 0
        %454 = vmatprep.subr.bf16.mxu0 0
        %455 = vmatpush1.bf16.msra.mxu0 0
        %456 = vmatprep.subr.bf16.mxu0 0
        %457 = vmatpush1.bf16.msra.mxu0 0
        %458 = vmatprep.mubr.bf16.mxu0 0
        %459 = vmatmul.mubr.bf16.gmra.mrb[0].mxu0 %v424
        %v460 = vpop.f32.mrb[0].mxu0
        %v461 = vadd.f32 0.0, %v460
        %v462 = vpop.f32.mrb[0].mxu0
        %v463 = vpop.f32.mrb[0].mxu0
        %v464 = vpop.f32.mrb[0].mxu0
        %465 = vdwg.mxu0
        %v466 = vadd.f32 %v379, %v461
        %s467 = scalar_lea.vmem [#allocation3], 160
        %v468 = vld [vmem:[%s467] sm:$0xf]
        %v469 = vld [vmem:[%s467 + $0x4] sm:$0xf]
        %v470 = vld [vmem:[%s467 + $0x8] sm:$0xf]
        %v471 = vld [vmem:[%s467 + $0xc] sm:$0xf]
        %v472 = vld [vmem:[%s467 + $0x10] sm:$0xf]
        %v473 = vld [vmem:[%s467 + $0x14] sm:$0xf]
        %v474 = vld [vmem:[%s467 + $0x18] sm:$0xf]
        %v475 = vld [vmem:[%s467 + $0x1c] sm:$0xf]
        %v477 = vunpack.c.l.b16 %v302
        %v478 = vpack.c.b16 %v477, %v390
        %v479 = vrot.slane %v478, 1
        %v488 = vunpack.c.l.b16 %v468
        %v489 = vunpack.c.l.b16 %v469
        %v490 = vunpack.c.l.b16 %v470
        %v491 = vunpack.c.l.b16 %v471
        %v492 = vunpack.c.l.b16 %v472
        %v493 = vunpack.c.l.b16 %v473
        %v494 = vunpack.c.l.b16 %v474
        %v495 = vunpack.c.l.b16 %v475
        %v496 = vpack.c.b16 %v489, %v488
        %v497 = vpack.c.b16 %v491, %v490
        %v498 = vpack.c.b16 %v493, %v492
        %v499 = vpack.c.b16 %v495, %v494
        %v505 = vsel %vm105, %v479, 0
        %507 = vmatprep.subr.bf16.mxu0 0
        %508 = vmatpush1.bf16.msra.mxu0 %v496
        %509 = vmatprep.subr.bf16.mxu0 0
        %510 = vmatpush1.bf16.msra.mxu0 %v497
        %511 = vmatprep.subr.bf16.mxu0 0
        %512 = vmatpush1.bf16.msra.mxu0 %v498
        %513 = vmatprep.subr.bf16.mxu0 0
        %514 = vmatpush1.bf16.msra.mxu0 %v499
        %515 = vmatprep.subr.bf16.mxu0 0
        %516 = vmatpush1.bf16.msra.mxu0 0
        %517 = vmatprep.subr.bf16.mxu0 0
        %518 = vmatpush1.bf16.msra.mxu0 0
        %519 = vmatprep.subr.bf16.mxu0 0
        %520 = vmatpush1.bf16.msra.mxu0 0
        %521 = vmatprep.subr.bf16.mxu0 0
        %522 = vmatpush1.bf16.msra.mxu0 0
        %523 = vmatprep.subr.bf16.mxu0 0
        %524 = vmatpush1.bf16.msra.mxu0 0
        %525 = vmatprep.subr.bf16.mxu0 0
        %526 = vmatpush1.bf16.msra.mxu0 0
        %527 = vmatprep.subr.bf16.mxu0 0
        %528 = vmatpush1.bf16.msra.mxu0 0
        %529 = vmatprep.subr.bf16.mxu0 0
        %530 = vmatpush1.bf16.msra.mxu0 0
        %531 = vmatprep.subr.bf16.mxu0 0
        %532 = vmatpush1.bf16.msra.mxu0 0
        %533 = vmatprep.subr.bf16.mxu0 0
        %534 = vmatpush1.bf16.msra.mxu0 0
        %535 = vmatprep.subr.bf16.mxu0 0
        %536 = vmatpush1.bf16.msra.mxu0 0
        %537 = vmatprep.subr.bf16.mxu0 0
        %538 = vmatpush1.bf16.msra.mxu0 0
        %539 = vmatprep.mubr.bf16.mxu0 0
        %540 = vmatmul.mubr.bf16.gmra.mrb[0].mxu0 %v505
        %v541 = vpop.f32.mrb[0].mxu0
        %v542 = vadd.f32 0.0, %v541
        %v543 = vpop.f32.mrb[0].mxu0
        %v544 = vpop.f32.mrb[0].mxu0
        %v545 = vpop.f32.mrb[0].mxu0
        %546 = vdwg.mxu0
        %v547 = vadd.f32 %v466, %v542
        %s548 = sadd.s32 %s48, 2
        %s549 = smul.u32 %s548, 2
        %s550 = smul.addr %s549, 4
        %s551 = scalar_lea.vmem %s0, %s550
        %v552 = vld [vmem:[%s551] sm:$0xf]
        %v553 = vld [vmem:[%s551 + $0x4] sm:$0x1]
        %s554 = scalar_lea.vmem [#allocation3], 192
        %v555 = vld [vmem:[%s554] sm:$0xf]
        %v556 = vld [vmem:[%s554 + $0x4] sm:$0xf]
        %v557 = vld [vmem:[%s554 + $0x8] sm:$0xf]
        %v558 = vld [vmem:[%s554 + $0xc] sm:$0xf]
        %v559 = vld [vmem:[%s554 + $0x10] sm:$0xf]
        %v560 = vld [vmem:[%s554 + $0x14] sm:$0xf]
        %v561 = vld [vmem:[%s554 + $0x18] sm:$0xf]
        %v562 = vld [vmem:[%s554 + $0x1c] sm:$0xf]
        %v571 = vunpack.c.l.b16 %v555
        %v572 = vunpack.c.l.b16 %v556
        %v573 = vunpack.c.l.b16 %v557
        %v574 = vunpack.c.l.b16 %v558
        %v575 = vunpack.c.l.b16 %v559
        %v576 = vunpack.c.l.b16 %v560
        %v577 = vunpack.c.l.b16 %v561
        %v578 = vunpack.c.l.b16 %v562
        %v579 = vpack.c.b16 %v572, %v571
        %v580 = vpack.c.b16 %v574, %v573
        %v581 = vpack.c.b16 %v576, %v575
        %v582 = vpack.c.b16 %v578, %v577
        %v588 = vsel %vm105, %v552, 0
        %590 = vmatprep.subr.bf16.mxu0 0
        %591 = vmatpush1.bf16.msra.mxu0 %v579
        %592 = vmatprep.subr.bf16.mxu0 0
        %593 = vmatpush1.bf16.msra.mxu0 %v580
        %594 = vmatprep.subr.bf16.mxu0 0
        %595 = vmatpush1.bf16.msra.mxu0 %v581
        %596 = vmatprep.subr.bf16.mxu0 0
        %597 = vmatpush1.bf16.msra.mxu0 %v582
        %598 = vmatprep.subr.bf16.mxu0 0
        %599 = vmatpush1.bf16.msra.mxu0 0
        %600 = vmatprep.subr.bf16.mxu0 0
        %601 = vmatpush1.bf16.msra.mxu0 0
        %602 = vmatprep.subr.bf16.mxu0 0
        %603 = vmatpush1.bf16.msra.mxu0 0
        %604 = vmatprep.subr.bf16.mxu0 0
        %605 = vmatpush1.bf16.msra.mxu0 0
        %606 = vmatprep.subr.bf16.mxu0 0
        %607 = vmatpush1.bf16.msra.mxu0 0
        %608 = vmatprep.subr.bf16.mxu0 0
        %609 = vmatpush1.bf16.msra.mxu0 0
        %610 = vmatprep.subr.bf16.mxu0 0
        %611 = vmatpush1.bf16.msra.mxu0 0
        %612 = vmatprep.subr.bf16.mxu0 0
        %613 = vmatpush1.bf16.msra.mxu0 0
        %614 = vmatprep.subr.bf16.mxu0 0
        %615 = vmatpush1.bf16.msra.mxu0 0
        %616 = vmatprep.subr.bf16.mxu0 0
        %617 = vmatpush1.bf16.msra.mxu0 0
        %618 = vmatprep.subr.bf16.mxu0 0
        %619 = vmatpush1.bf16.msra.mxu0 0
        %620 = vmatprep.subr.bf16.mxu0 0
        %621 = vmatpush1.bf16.msra.mxu0 0
        %622 = vmatprep.mubr.bf16.mxu0 0
        %623 = vmatmul.mubr.bf16.gmra.mrb[0].mxu0 %v588
        %v624 = vpop.f32.mrb[0].mxu0
        %v625 = vadd.f32 0.0, %v624
        %v626 = vpop.f32.mrb[0].mxu0
        %v627 = vpop.f32.mrb[0].mxu0
        %v628 = vpop.f32.mrb[0].mxu0
        %629 = vdwg.mxu0
        %v630 = vadd.f32 %v547, %v625
        %s631 = scalar_lea.vmem [#allocation3], 224
        %v632 = vld [vmem:[%s631] sm:$0xf]
        %v633 = vld [vmem:[%s631 + $0x4] sm:$0xf]
        %v634 = vld [vmem:[%s631 + $0x8] sm:$0xf]
        %v635 = vld [vmem:[%s631 + $0xc] sm:$0xf]
        %v636 = vld [vmem:[%s631 + $0x10] sm:$0xf]
        %v637 = vld [vmem:[%s631 + $0x14] sm:$0xf]
        %v638 = vld [vmem:[%s631 + $0x18] sm:$0xf]
        %v639 = vld [vmem:[%s631 + $0x1c] sm:$0xf]
        %v641 = vunpack.c.l.b16 %v552
        %v642 = vpack.c.b16 %v641, %v641
        %v644 = vshrl.u32 %v642, 16
        %v646 = vshll.u32 %v642, 16
        %v648 = vrot.slane %v646, 1
        %v649 = vor.u32 %v644, %v648
        %v658 = vunpack.c.l.b16 %v632
        %v659 = vunpack.c.l.b16 %v633
        %v660 = vunpack.c.l.b16 %v634
        %v661 = vunpack.c.l.b16 %v635
        %v662 = vunpack.c.l.b16 %v636
        %v663 = vunpack.c.l.b16 %v637
        %v664 = vunpack.c.l.b16 %v638
        %v665 = vunpack.c.l.b16 %v639
        %v666 = vpack.c.b16 %v659, %v658
        %v667 = vpack.c.b16 %v661, %v660
        %v668 = vpack.c.b16 %v663, %v662
        %v669 = vpack.c.b16 %v665, %v664
        %v675 = vsel %vm105, %v649, 0
        %677 = vmatprep.subr.bf16.mxu0 0
        %678 = vmatpush1.bf16.msra.mxu0 %v666
        %679 = vmatprep.subr.bf16.mxu0 0
        %680 = vmatpush1.bf16.msra.mxu0 %v667
        %681 = vmatprep.subr.bf16.mxu0 0
        %682 = vmatpush1.bf16.msra.mxu0 %v668
        %683 = vmatprep.subr.bf16.mxu0 0
        %684 = vmatpush1.bf16.msra.mxu0 %v669
        %685 = vmatprep.subr.bf16.mxu0 0
        %686 = vmatpush1.bf16.msra.mxu0 0
        %687 = vmatprep.subr.bf16.mxu0 0
        %688 = vmatpush1.bf16.msra.mxu0 0
        %689 = vmatprep.subr.bf16.mxu0 0
        %690 = vmatpush1.bf16.msra.mxu0 0
        %691 = vmatprep.subr.bf16.mxu0 0
        %692 = vmatpush1.bf16.msra.mxu0 0
        %693 = vmatprep.subr.bf16.mxu0 0
        %694 = vmatpush1.bf16.msra.mxu0 0
        %695 = vmatprep.subr.bf16.mxu0 0
        %696 = vmatpush1.bf16.msra.mxu0 0
        %697 = vmatprep.subr.bf16.mxu0 0
        %698 = vmatpush1.bf16.msra.mxu0 0
        %699 = vmatprep.subr.bf16.mxu0 0
        %700 = vmatpush1.bf16.msra.mxu0 0
        %701 = vmatprep.subr.bf16.mxu0 0
        %702 = vmatpush1.bf16.msra.mxu0 0
        %703 = vmatprep.subr.bf16.mxu0 0
        %704 = vmatpush1.bf16.msra.mxu0 0
        %705 = vmatprep.subr.bf16.mxu0 0
        %706 = vmatpush1.bf16.msra.mxu0 0
        %707 = vmatprep.subr.bf16.mxu0 0
        %708 = vmatpush1.bf16.msra.mxu0 0
        %709 = vmatprep.mubr.bf16.mxu0 0
        %710 = vmatmul.mubr.bf16.gmra.mrb[0].mxu0 %v675
        %v711 = vpop.f32.mrb[0].mxu0
        %v712 = vadd.f32 0.0, %v711
        %v713 = vpop.f32.mrb[0].mxu0
        %v714 = vpop.f32.mrb[0].mxu0
        %v715 = vpop.f32.mrb[0].mxu0
        %716 = vdwg.mxu0
        %v717 = vadd.f32 %v630, %v712
        %s718 = scalar_lea.vmem [#allocation3], 256
        %v719 = vld [vmem:[%s718] sm:$0xf]
        %v720 = vld [vmem:[%s718 + $0x4] sm:$0xf]
        %v721 = vld [vmem:[%s718 + $0x8] sm:$0xf]
        %v722 = vld [vmem:[%s718 + $0xc] sm:$0xf]
        %v723 = vld [vmem:[%s718 + $0x10] sm:$0xf]
        %v724 = vld [vmem:[%s718 + $0x14] sm:$0xf]
        %v725 = vld [vmem:[%s718 + $0x18] sm:$0xf]
        %v726 = vld [vmem:[%s718 + $0x1c] sm:$0xf]
        %v728 = vunpack.c.l.b16 %v553
        %v729 = vpack.c.b16 %v728, %v641
        %v730 = vrot.slane %v729, 1
        %v739 = vunpack.c.l.b16 %v719
        %v740 = vunpack.c.l.b16 %v720
        %v741 = vunpack.c.l.b16 %v721
        %v742 = vunpack.c.l.b16 %v722
        %v743 = vunpack.c.l.b16 %v723
        %v744 = vunpack.c.l.b16 %v724
        %v745 = vunpack.c.l.b16 %v725
        %v746 = vunpack.c.l.b16 %v726
        %v747 = vpack.c.b16 %v740, %v739
        %v748 = vpack.c.b16 %v742, %v741
        %v749 = vpack.c.b16 %v744, %v743
        %v750 = vpack.c.b16 %v746, %v745
        %v756 = vsel %vm105, %v730, 0
        %758 = vmatprep.subr.bf16.mxu0 0
        %759 = vmatpush1.bf16.msra.mxu0 %v747
        %760 = vmatprep.subr.bf16.mxu0 0
        %761 = vmatpush1.bf16.msra.mxu0 %v748
        %762 = vmatprep.subr.bf16.mxu0 0
        %763 = vmatpush1.bf16.msra.mxu0 %v749
        %764 = vmatprep.subr.bf16.mxu0 0
        %765 = vmatpush1.bf16.msra.mxu0 %v750
        %766 = vmatprep.subr.bf16.mxu0 0
        %767 = vmatpush1.bf16.msra.mxu0 0
        %768 = vmatprep.subr.bf16.mxu0 0
        %769 = vmatpush1.bf16.msra.mxu0 0
        %770 = vmatprep.subr.bf16.mxu0 0
        %771 = vmatpush1.bf16.msra.mxu0 0
        %772 = vmatprep.subr.bf16.mxu0 0
        %773 = vmatpush1.bf16.msra.mxu0 0
        %774 = vmatprep.subr.bf16.mxu0 0
        %775 = vmatpush1.bf16.msra.mxu0 0
        %776 = vmatprep.subr.bf16.mxu0 0
        %777 = vmatpush1.bf16.msra.mxu0 0
        %778 = vmatprep.subr.bf16.mxu0 0
        %779 = vmatpush1.bf16.msra.mxu0 0
        %780 = vmatprep.subr.bf16.mxu0 0
        %781 = vmatpush1.bf16.msra.mxu0 0
        %782 = vmatprep.subr.bf16.mxu0 0
        %783 = vmatpush1.bf16.msra.mxu0 0
        %784 = vmatprep.subr.bf16.mxu0 0
        %785 = vmatpush1.bf16.msra.mxu0 0
        %786 = vmatprep.subr.bf16.mxu0 0
        %787 = vmatpush1.bf16.msra.mxu0 0
        %788 = vmatprep.subr.bf16.mxu0 0
        %789 = vmatpush1.bf16.msra.mxu0 0
        %790 = vmatprep.mubr.bf16.mxu0 0
        %791 = vmatmul.mubr.bf16.gmra.mrb[0].mxu0 %v756
        %v792 = vpop.f32.mrb[0].mxu0
        %v793 = vadd.f32 0.0, %v792
        %v794 = vpop.f32.mrb[0].mxu0
        %v795 = vpop.f32.mrb[0].mxu0
        %v796 = vpop.f32.mrb[0].mxu0
        %797 = vdwg.mxu0
        %v798 = vadd.f32 %v717, %v793
        %s799 = sadd.s32 %s36, %s44
        %s800 = smul.u32 %s799, 2
        %s801 = smul.addr %s800, 4
        %s802 = scalar_lea.vmem %s0, %s801
        %v803 = vld [vmem:[%s802] sm:$0xf]
        %v804 = vld [vmem:[%s802 + $0x4] sm:$0x1]
        %v806 = vunpack.c.l.b16 %v803
        %v807 = vpack.c.b16 %v806, %v806
        %v809 = vshrl.u32 %v807, 16
        %v811 = vshll.u32 %v807, 16
        %v813 = vrot.slane %v811, 1
        %v814 = vor.u32 %v809, %v813
        %v816 = vsel %vm105, %v814, 0
        %818 = vmatprep.subr.bf16.mxu0 0
        %819 = vmatpush1.bf16.msra.mxu0 %v97
        %820 = vmatprep.subr.bf16.mxu0 0
        %821 = vmatpush1.bf16.msra.mxu0 %v98
        %822 = vmatprep.subr.bf16.mxu0 0
        %823 = vmatpush1.bf16.msra.mxu0 %v99
        %824 = vmatprep.subr.bf16.mxu0 0
        %825 = vmatpush1.bf16.msra.mxu0 %v100
        %826 = vmatprep.subr.bf16.mxu0 0
        %827 = vmatpush1.bf16.msra.mxu0 0
        %828 = vmatprep.subr.bf16.mxu0 0
        %829 = vmatpush1.bf16.msra.mxu0 0
        %830 = vmatprep.subr.bf16.mxu0 0
        %831 = vmatpush1.bf16.msra.mxu0 0
        %832 = vmatprep.subr.bf16.mxu0 0
        %833 = vmatpush1.bf16.msra.mxu0 0
        %834 = vmatprep.subr.bf16.mxu0 0
        %835 = vmatpush1.bf16.msra.mxu0 0
        %836 = vmatprep.subr.bf16.mxu0 0
        %837 = vmatpush1.bf16.msra.mxu0 0
        %838 = vmatprep.subr.bf16.mxu0 0
        %839 = vmatpush1.bf16.msra.mxu0 0
        %840 = vmatprep.subr.bf16.mxu0 0
        %841 = vmatpush1.bf16.msra.mxu0 0
        %842 = vmatprep.subr.bf16.mxu0 0
        %843 = vmatpush1.bf16.msra.mxu0 0
        %844 = vmatprep.subr.bf16.mxu0 0
        %845 = vmatpush1.bf16.msra.mxu0 0
        %846 = vmatprep.subr.bf16.mxu0 0
        %847 = vmatpush1.bf16.msra.mxu0 0
        %848 = vmatprep.subr.bf16.mxu0 0
        %849 = vmatpush1.bf16.msra.mxu0 0
        %850 = vmatprep.mubr.bf16.mxu0 0
        %851 = vmatmul.mubr.bf16.gmra.mrb[0].mxu0 %v816
        %v852 = vpop.f32.mrb[0].mxu0
        %v853 = vadd.f32 0.0, %v852
        %v854 = vpop.f32.mrb[0].mxu0
        %v855 = vpop.f32.mrb[0].mxu0
        %v856 = vpop.f32.mrb[0].mxu0
        %857 = vdwg.mxu0
        %v859 = vsel %vm105, %v803, 0
        %861 = vmatprep.subr.bf16.mxu0 0
        %862 = vmatpush1.bf16.msra.mxu0 %v165
        %863 = vmatprep.subr.bf16.mxu0 0
        %864 = vmatpush1.bf16.msra.mxu0 %v166
        %865 = vmatprep.subr.bf16.mxu0 0
        %866 = vmatpush1.bf16.msra.mxu0 %v167
        %867 = vmatprep.subr.bf16.mxu0 0
        %868 = vmatpush1.bf16.msra.mxu0 %v168
        %869 = vmatprep.subr.bf16.mxu0 0
        %870 = vmatpush1.bf16.msra.mxu0 0
        %871 = vmatprep.subr.bf16.mxu0 0
        %872 = vmatpush1.bf16.msra.mxu0 0
        %873 = vmatprep.subr.bf16.mxu0 0
        %874 = vmatpush1.bf16.msra.mxu0 0
        %875 = vmatprep.subr.bf16.mxu0 0
        %876 = vmatpush1.bf16.msra.mxu0 0
        %877 = vmatprep.subr.bf16.mxu0 0
        %878 = vmatpush1.bf16.msra.mxu0 0
        %879 = vmatprep.subr.bf16.mxu0 0
        %880 = vmatpush1.bf16.msra.mxu0 0
        %881 = vmatprep.subr.bf16.mxu0 0
        %882 = vmatpush1.bf16.msra.mxu0 0
        %883 = vmatprep.subr.bf16.mxu0 0
        %884 = vmatpush1.bf16.msra.mxu0 0
        %885 = vmatprep.subr.bf16.mxu0 0
        %886 = vmatpush1.bf16.msra.mxu0 0
        %887 = vmatprep.subr.bf16.mxu0 0
        %888 = vmatpush1.bf16.msra.mxu0 0
        %889 = vmatprep.subr.bf16.mxu0 0
        %890 = vmatpush1.bf16.msra.mxu0 0
        %891 = vmatprep.subr.bf16.mxu0 0
        %892 = vmatpush1.bf16.msra.mxu0 0
        %893 = vmatprep.mubr.bf16.mxu0 0
        %894 = vmatmul.mubr.bf16.gmra.mrb[0].mxu0 %v859
        %v895 = vpop.f32.mrb[0].mxu0
        %v896 = vadd.f32 %v853, %v895
        %v897 = vpop.f32.mrb[0].mxu0
        %v898 = vpop.f32.mrb[0].mxu0
        %v899 = vpop.f32.mrb[0].mxu0
        %900 = vdwg.mxu0
        %v902 = vunpack.c.l.b16 %v804
        %v903 = vpack.c.b16 %v902, %v806
        %v904 = vrot.slane %v903, 1
        %v906 = vsel %vm105, %v904, 0
        %908 = vmatprep.subr.bf16.mxu0 0
        %909 = vmatpush1.bf16.msra.mxu0 %v245
        %910 = vmatprep.subr.bf16.mxu0 0
        %911 = vmatpush1.bf16.msra.mxu0 %v246
        %912 = vmatprep.subr.bf16.mxu0 0
        %913 = vmatpush1.bf16.msra.mxu0 %v247
        %914 = vmatprep.subr.bf16.mxu0 0
        %915 = vmatpush1.bf16.msra.mxu0 %v248
        %916 = vmatprep.subr.bf16.mxu0 0
        %917 = vmatpush1.bf16.msra.mxu0 0
        %918 = vmatprep.subr.bf16.mxu0 0
        %919 = vmatpush1.bf16.msra.mxu0 0
        %920 = vmatprep.subr.bf16.mxu0 0
        %921 = vmatpush1.bf16.msra.mxu0 0
        %922 = vmatprep.subr.bf16.mxu0 0
        %923 = vmatpush1.bf16.msra.mxu0 0
        %924 = vmatprep.subr.bf16.mxu0 0
        %925 = vmatpush1.bf16.msra.mxu0 0
        %926 = vmatprep.subr.bf16.mxu0 0
        %927 = vmatpush1.bf16.msra.mxu0 0
        %928 = vmatprep.subr.bf16.mxu0 0
        %929 = vmatpush1.bf16.msra.mxu0 0
        %930 = vmatprep.subr.bf16.mxu0 0
        %931 = vmatpush1.bf16.msra.mxu0 0
        %932 = vmatprep.subr.bf16.mxu0 0
        %933 = vmatpush1.bf16.msra.mxu0 0
        %934 = vmatprep.subr.bf16.mxu0 0
        %935 = vmatpush1.bf16.msra.mxu0 0
        %936 = vmatprep.subr.bf16.mxu0 0
        %937 = vmatpush1.bf16.msra.mxu0 0
        %938 = vmatprep.subr.bf16.mxu0 0
        %939 = vmatpush1.bf16.msra.mxu0 0
        %940 = vmatprep.mubr.bf16.mxu0 0
        %941 = vmatmul.mubr.bf16.gmra.mrb[0].mxu0 %v906
        %v942 = vpop.f32.mrb[0].mxu0
        %v943 = vadd.f32 0.0, %v942
        %v944 = vpop.f32.mrb[0].mxu0
        %v945 = vpop.f32.mrb[0].mxu0
        %v946 = vpop.f32.mrb[0].mxu0
        %947 = vdwg.mxu0
        %v948 = vadd.f32 %v896, %v943
        %s949 = sadd.s32 %s799, 1
        %s950 = smul.u32 %s949, 2
        %s951 = smul.addr %s950, 4
        %s952 = scalar_lea.vmem %s0, %s951
        %v953 = vld [vmem:[%s952] sm:$0xf]
        %v954 = vld [vmem:[%s952 + $0x4] sm:$0x1]
        %v956 = vsel %vm105, %v953, 0
        %958 = vmatprep.subr.bf16.mxu0 0
        %959 = vmatpush1.bf16.msra.mxu0 %v328
        %960 = vmatprep.subr.bf16.mxu0 0
        %961 = vmatpush1.bf16.msra.mxu0 %v329
        %962 = vmatprep.subr.bf16.mxu0 0
        %963 = vmatpush1.bf16.msra.mxu0 %v330
        %964 = vmatprep.subr.bf16.mxu0 0
        %965 = vmatpush1.bf16.msra.mxu0 %v331
        %966 = vmatprep.subr.bf16.mxu0 0
        %967 = vmatpush1.bf16.msra.mxu0 0
        %968 = vmatprep.subr.bf16.mxu0 0
        %969 = vmatpush1.bf16.msra.mxu0 0
        %970 = vmatprep.subr.bf16.mxu0 0
        %971 = vmatpush1.bf16.msra.mxu0 0
        %972 = vmatprep.subr.bf16.mxu0 0
        %973 = vmatpush1.bf16.msra.mxu0 0
        %974 = vmatprep.subr.bf16.mxu0 0
        %975 = vmatpush1.bf16.msra.mxu0 0
        %976 = vmatprep.subr.bf16.mxu0 0
        %977 = vmatpush1.bf16.msra.mxu0 0
        %978 = vmatprep.subr.bf16.mxu0 0
        %979 = vmatpush1.bf16.msra.mxu0 0
        %980 = vmatprep.subr.bf16.mxu0 0
        %981 = vmatpush1.bf16.msra.mxu0 0
        %982 = vmatprep.subr.bf16.mxu0 0
        %983 = vmatpush1.bf16.msra.mxu0 0
        %984 = vmatprep.subr.bf16.mxu0 0
        %985 = vmatpush1.bf16.msra.mxu0 0
        %986 = vmatprep.subr.bf16.mxu0 0
        %987 = vmatpush1.bf16.msra.mxu0 0
        %988 = vmatprep.subr.bf16.mxu0 0
        %989 = vmatpush1.bf16.msra.mxu0 0
        %990 = vmatprep.mubr.bf16.mxu0 0
        %991 = vmatmul.mubr.bf16.gmra.mrb[0].mxu0 %v956
        %v992 = vpop.f32.mrb[0].mxu0
        %v993 = vadd.f32 0.0, %v992
        %v994 = vpop.f32.mrb[0].mxu0
        %v995 = vpop.f32.mrb[0].mxu0
        %v996 = vpop.f32.mrb[0].mxu0
        %997 = vdwg.mxu0
        %v998 = vadd.f32 %v948, %v993
        %v1000 = vunpack.c.l.b16 %v953
        %v1001 = vpack.c.b16 %v1000, %v1000
        %v1003 = vshrl.u32 %v1001, 16
        %v1005 = vshll.u32 %v1001, 16
        %v1007 = vrot.slane %v1005, 1
        %v1008 = vor.u32 %v1003, %v1007
        %v1010 = vsel %vm105, %v1008, 0
        %1012 = vmatprep.subr.bf16.mxu0 0
        %1013 = vmatpush1.bf16.msra.mxu0 %v415
        %1014 = vmatprep.subr.bf16.mxu0 0
        %1015 = vmatpush1.bf16.msra.mxu0 %v416
        %1016 = vmatprep.subr.bf16.mxu0 0
        %1017 = vmatpush1.bf16.msra.mxu0 %v417
        %1018 = vmatprep.subr.bf16.mxu0 0
        %1019 = vmatpush1.bf16.msra.mxu0 %v418
        %1020 = vmatprep.subr.bf16.mxu0 0
        %1021 = vmatpush1.bf16.msra.mxu0 0
        %1022 = vmatprep.subr.bf16.mxu0 0
        %1023 = vmatpush1.bf16.msra.mxu0 0
        %1024 = vmatprep.subr.bf16.mxu0 0
        %1025 = vmatpush1.bf16.msra.mxu0 0
        %1026 = vmatprep.subr.bf16.mxu0 0
        %1027 = vmatpush1.bf16.msra.mxu0 0
        %1028 = vmatprep.subr.bf16.mxu0 0
        %1029 = vmatpush1.bf16.msra.mxu0 0
        %1030 = vmatprep.subr.bf16.mxu0 0
        %1031 = vmatpush1.bf16.msra.mxu0 0
        %1032 = vmatprep.subr.bf16.mxu0 0
        %1033 = vmatpush1.bf16.msra.mxu0 0
        %1034 = vmatprep.subr.bf16.mxu0 0
        %1035 = vmatpush1.bf16.msra.mxu0 0
        %1036 = vmatprep.subr.bf16.mxu0 0
        %1037 = vmatpush1.bf16.msra.mxu0 0
        %1038 = vmatprep.subr.bf16.mxu0 0
        %1039 = vmatpush1.bf16.msra.mxu0 0
        %1040 = vmatprep.subr.bf16.mxu0 0
        %1041 = vmatpush1.bf16.msra.mxu0 0
        %1042 = vmatprep.subr.bf16.mxu0 0
        %1043 = vmatpush1.bf16.msra.mxu0 0
        %1044 = vmatprep.mubr.bf16.mxu0 0
        %1045 = vmatmul.mubr.bf16.gmra.mrb[0].mxu0 %v1010
        %v1046 = vpop.f32.mrb[0].mxu0
        %v1047 = vadd.f32 0.0, %v1046
        %v1048 = vpop.f32.mrb[0].mxu0
        %v1049 = vpop.f32.mrb[0].mxu0
        %v1050 = vpop.f32.mrb[0].mxu0
        %1051 = vdwg.mxu0
        %v1052 = vadd.f32 %v998, %v1047
        %v1054 = vunpack.c.l.b16 %v954
        %v1055 = vpack.c.b16 %v1054, %v1000
        %v1056 = vrot.slane %v1055, 1
        %v1058 = vsel %vm105, %v1056, 0
        %1060 = vmatprep.subr.bf16.mxu0 0
        %1061 = vmatpush1.bf16.msra.mxu0 %v496
        %1062 = vmatprep.subr.bf16.mxu0 0
        %1063 = vmatpush1.bf16.msra.mxu0 %v497
        %1064 = vmatprep.subr.bf16.mxu0 0
        %1065 = vmatpush1.bf16.msra.mxu0 %v498
        %1066 = vmatprep.subr.bf16.mxu0 0
        %1067 = vmatpush1.bf16.msra.mxu0 %v499
        %1068 = vmatprep.subr.bf16.mxu0 0
        %1069 = vmatpush1.bf16.msra.mxu0 0
        %1070 = vmatprep.subr.bf16.mxu0 0
        %1071 = vmatpush1.bf16.msra.mxu0 0
        %1072 = vmatprep.subr.bf16.mxu0 0
        %1073 = vmatpush1.bf16.msra.mxu0 0
        %1074 = vmatprep.subr.bf16.mxu0 0
        %1075 = vmatpush1.bf16.msra.mxu0 0
        %1076 = vmatprep.subr.bf16.mxu0 0
        %1077 = vmatpush1.bf16.msra.mxu0 0
        %1078 = vmatprep.subr.bf16.mxu0 0
        %1079 = vmatpush1.bf16.msra.mxu0 0
        %1080 = vmatprep.subr.bf16.mxu0 0
        %1081 = vmatpush1.bf16.msra.mxu0 0
        %1082 = vmatprep.subr.bf16.mxu0 0
        %1083 = vmatpush1.bf16.msra.mxu0 0
        %1084 = vmatprep.subr.bf16.mxu0 0
        %1085 = vmatpush1.bf16.msra.mxu0 0
        %1086 = vmatprep.subr.bf16.mxu0 0
        %1087 = vmatpush1.bf16.msra.mxu0 0
        %1088 = vmatprep.subr.bf16.mxu0 0
        %1089 = vmatpush1.bf16.msra.mxu0 0
        %1090 = vmatprep.subr.bf16.mxu0 0
        %1091 = vmatpush1.bf16.msra.mxu0 0
        %1092 = vmatprep.mubr.bf16.mxu0 0
        %1093 = vmatmul.mubr.bf16.gmra.mrb[0].mxu0 %v1058
        %v1094 = vpop.f32.mrb[0].mxu0
        %v1095 = vadd.f32 0.0, %v1094
        %v1096 = vpop.f32.mrb[0].mxu0
        %v1097 = vpop.f32.mrb[0].mxu0
        %v1098 = vpop.f32.mrb[0].mxu0
        %1099 = vdwg.mxu0
        %v1100 = vadd.f32 %v1052, %v1095
        %s1101 = sadd.s32 %s799, 2
        %s1102 = smul.u32 %s1101, 2
        %s1103 = smul.addr %s1102, 4
        %s1104 = scalar_lea.vmem %s0, %s1103
        %v1105 = vld [vmem:[%s1104] sm:$0xf]
        %v1106 = vld [vmem:[%s1104 + $0x4] sm:$0x1]
        %v1108 = vsel %vm105, %v1105, 0
        %1110 = vmatprep.subr.bf16.mxu0 0
        %1111 = vmatpush1.bf16.msra.mxu0 %v579
        %1112 = vmatprep.subr.bf16.mxu0 0
        %1113 = vmatpush1.bf16.msra.mxu0 %v580
        %1114 = vmatprep.subr.bf16.mxu0 0
        %1115 = vmatpush1.bf16.msra.mxu0 %v581
        %1116 = vmatprep.subr.bf16.mxu0 0
        %1117 = vmatpush1.bf16.msra.mxu0 %v582
        %1118 = vmatprep.subr.bf16.mxu0 0
        %1119 = vmatpush1.bf16.msra.mxu0 0
        %1120 = vmatprep.subr.bf16.mxu0 0
        %1121 = vmatpush1.bf16.msra.mxu0 0
        %1122 = vmatprep.subr.bf16.mxu0 0
        %1123 = vmatpush1.bf16.msra.mxu0 0
        %1124 = vmatprep.subr.bf16.mxu0 0
        %1125 = vmatpush1.bf16.msra.mxu0 0
        %1126 = vmatprep.subr.bf16.mxu0 0
        %1127 = vmatpush1.bf16.msra.mxu0 0
        %1128 = vmatprep.subr.bf16.mxu0 0
        %1129 = vmatpush1.bf16.msra.mxu0 0
        %1130 = vmatprep.subr.bf16.mxu0 0
        %1131 = vmatpush1.bf16.msra.mxu0 0
        %1132 = vmatprep.subr.bf16.mxu0 0
        %1133 = vmatpush1.bf16.msra.mxu0 0
        %1134 = vmatprep.subr.bf16.mxu0 0
        %1135 = vmatpush1.bf16.msra.mxu0 0
        %1136 = vmatprep.subr.bf16.mxu0 0
        %1137 = vmatpush1.bf16.msra.mxu0 0
        %1138 = vmatprep.subr.bf16.mxu0 0
        %1139 = vmatpush1.bf16.msra.mxu0 0
        %1140 = vmatprep.subr.bf16.mxu0 0
        %1141 = vmatpush1.bf16.msra.mxu0 0
        %1142 = vmatprep.mubr.bf16.mxu0 0
        %1143 = vmatmul.mubr.bf16.gmra.mrb[0].mxu0 %v1108
        %v1144 = vpop.f32.mrb[0].mxu0
        %v1145 = vadd.f32 0.0, %v1144
        %v1146 = vpop.f32.mrb[0].mxu0
        %v1147 = vpop.f32.mrb[0].mxu0
        %v1148 = vpop.f32.mrb[0].mxu0
        %1149 = vdwg.mxu0
        %v1150 = vadd.f32 %v1100, %v1145
        %v1152 = vunpack.c.l.b16 %v1105
        %v1153 = vpack.c.b16 %v1152, %v1152
        %v1155 = vshrl.u32 %v1153, 16
        %v1157 = vshll.u32 %v1153, 16
        %v1159 = vrot.slane %v1157, 1
        %v1160 = vor.u32 %v1155, %v1159
        %v1162 = vsel %vm105, %v1160, 0
        %1164 = vmatprep.subr.bf16.mxu0 0
        %1165 = vmatpush1.bf16.msra.mxu0 %v666
        %1166 = vmatprep.subr.bf16.mxu0 0
        %1167 = vmatpush1.bf16.msra.mxu0 %v667
        %1168 = vmatprep.subr.bf16.mxu0 0
        %1169 = vmatpush1.bf16.msra.mxu0 %v668
        %1170 = vmatprep.subr.bf16.mxu0 0
        %1171 = vmatpush1.bf16.msra.mxu0 %v669
        %1172 = vmatprep.subr.bf16.mxu0 0
        %1173 = vmatpush1.bf16.msra.mxu0 0
        %1174 = vmatprep.subr.bf16.mxu0 0
        %1175 = vmatpush1.bf16.msra.mxu0 0
        %1176 = vmatprep.subr.bf16.mxu0 0
        %1177 = vmatpush1.bf16.msra.mxu0 0
        %1178 = vmatprep.subr.bf16.mxu0 0
        %1179 = vmatpush1.bf16.msra.mxu0 0
        %1180 = vmatprep.subr.bf16.mxu0 0
        %1181 = vmatpush1.bf16.msra.mxu0 0
        %1182 = vmatprep.subr.bf16.mxu0 0
        %1183 = vmatpush1.bf16.msra.mxu0 0
        %1184 = vmatprep.subr.bf16.mxu0 0
        %1185 = vmatpush1.bf16.msra.mxu0 0
        %1186 = vmatprep.subr.bf16.mxu0 0
        %1187 = vmatpush1.bf16.msra.mxu0 0
        %1188 = vmatprep.subr.bf16.mxu0 0
        %1189 = vmatpush1.bf16.msra.mxu0 0
        %1190 = vmatprep.subr.bf16.mxu0 0
        %1191 = vmatpush1.bf16.msra.mxu0 0
        %1192 = vmatprep.subr.bf16.mxu0 0
        %1193 = vmatpush1.bf16.msra.mxu0 0
        %1194 = vmatprep.subr.bf16.mxu0 0
        %1195 = vmatpush1.bf16.msra.mxu0 0
        %1196 = vmatprep.mubr.bf16.mxu0 0
        %1197 = vmatmul.mubr.bf16.gmra.mrb[0].mxu0 %v1162
        %v1198 = vpop.f32.mrb[0].mxu0
        %v1199 = vadd.f32 0.0, %v1198
        %v1200 = vpop.f32.mrb[0].mxu0
        %v1201 = vpop.f32.mrb[0].mxu0
        %v1202 = vpop.f32.mrb[0].mxu0
        %1203 = vdwg.mxu0
        %v1204 = vadd.f32 %v1150, %v1199
        %v1206 = vunpack.c.l.b16 %v1106
        %v1207 = vpack.c.b16 %v1206, %v1152
        %v1208 = vrot.slane %v1207, 1
        %v1210 = vsel %vm105, %v1208, 0
        %1212 = vmatprep.subr.bf16.mxu0 0
        %1213 = vmatpush1.bf16.msra.mxu0 %v747
        %1214 = vmatprep.subr.bf16.mxu0 0
        %1215 = vmatpush1.bf16.msra.mxu0 %v748
        %1216 = vmatprep.subr.bf16.mxu0 0
        %1217 = vmatpush1.bf16.msra.mxu0 %v749
        %1218 = vmatprep.subr.bf16.mxu0 0
        %1219 = vmatpush1.bf16.msra.mxu0 %v750
        %1220 = vmatprep.subr.bf16.mxu0 0
        %1221 = vmatpush1.bf16.msra.mxu0 0
        %1222 = vmatprep.subr.bf16.mxu0 0
        %1223 = vmatpush1.bf16.msra.mxu0 0
        %1224 = vmatprep.subr.bf16.mxu0 0
        %1225 = vmatpush1.bf16.msra.mxu0 0
        %1226 = vmatprep.subr.bf16.mxu0 0
        %1227 = vmatpush1.bf16.msra.mxu0 0
        %1228 = vmatprep.subr.bf16.mxu0 0
        %1229 = vmatpush1.bf16.msra.mxu0 0
        %1230 = vmatprep.subr.bf16.mxu0 0
        %1231 = vmatpush1.bf16.msra.mxu0 0
        %1232 = vmatprep.subr.bf16.mxu0 0
        %1233 = vmatpush1.bf16.msra.mxu0 0
        %1234 = vmatprep.subr.bf16.mxu0 0
        %1235 = vmatpush1.bf16.msra.mxu0 0
        %1236 = vmatprep.subr.bf16.mxu0 0
        %1237 = vmatpush1.bf16.msra.mxu0 0
        %1238 = vmatprep.subr.bf16.mxu0 0
        %1239 = vmatpush1.bf16.msra.mxu0 0
        %1240 = vmatprep.subr.bf16.mxu0 0
        %1241 = vmatpush1.bf16.msra.mxu0 0
        %1242 = vmatprep.subr.bf16.mxu0 0
        %1243 = vmatpush1.bf16.msra.mxu0 0
        %1244 = vmatprep.mubr.bf16.mxu0 0
        %1245 = vmatmul.mubr.bf16.gmra.mrb[0].mxu0 %v1210
        %v1246 = vpop.f32.mrb[0].mxu0
        %v1247 = vadd.f32 0.0, %v1246
        %v1248 = vpop.f32.mrb[0].mxu0
        %v1249 = vpop.f32.mrb[0].mxu0
        %v1250 = vpop.f32.mrb[0].mxu0
        %1251 = vdwg.mxu0
        %v1252 = vadd.f32 %v1204, %v1247
        %v1253 = vmax.f32 %v798, %v1252
        %1254 = vst [vmem:[#allocation2 + $0x1] sm:$0x7f] %v1253
        %v1255 = vld [vmem:[#allocation2] ss:$2 sm:$0xf]
        %s1256 = scalar_lea.vmem [#allocation2], 1
        %v1257 = vld [vmem:[%s1256] ss:$2 sm:$0xf]
        %v1258 = vmax.f32 %v1255, %v1257
        %v1259 = vld [vmem:[%s2] sm:$0x1]
        %v1261 = vlaneseq
        %v1262 = vshrl.u32 %v1261, 7
        %v1263 = vsub.s32 0, %v1262
        %v1264 = vrot.slane %v1259, %v1263
        %v1266 = vadd.f32 %v1258, %v1264
        %v1267 = vmax.f32 %v1266, 0.0
        %v1268 = vpack.c.bf16 %v1267, %v1267
        %s1269 = sadd.s32 %s37, %s39
        %s1270 = smul.addr %s1269, 2
        %s1271 = scalar_lea.vmem %s3, %s1270
        %1272 = vst [vmem:[%s1271] sm:$0x3] %v1268
      $region29: #{cnn_forward.6} parent=21 // loop_footer
        %s43 = sadd.s32 1, %s39
      $region30: #{cnn_forward.6} parent=21 // loop_footer_branch
        %38 = sbr.rel target = $region26
      $region31: #{cnn_forward.6} parent=21 // loop_exit
        _
    $region22: #{cnn_forward.6} parent=1 // loop_footer
      %s35 = sadd.s32 1, %s31
    $region23: #{cnn_forward.6} parent=1 // loop_footer_branch
      %30 = sbr.rel target = $region19
    $region24: #{cnn_forward.6} parent=1 // loop_exit
      _
    // Predicated region
    $region32: #{cnn_forward.6} parent=1 // pred_check
      _
    $region33: #{cnn_forward.6} parent=1 // pred_check_branch
      %1274 = sbr.rel (0) target = $region35
    $region34: #{cnn_forward.6} parent=1 // pred_region
      _
    $region35: #{cnn_forward.6} parent=1 // pred_fallthru
      _
    // Predicated region
    $region36: #{cnn_forward.6} parent=1 // pred_check
      _
    $region37: #{cnn_forward.6} parent=1 // pred_check_branch
      %1276 = sbr.rel (0) target = $region39
    $region38: #{cnn_forward.6} parent=1 // pred_region
      _
    $region39: #{cnn_forward.6} parent=1 // pred_fallthru
      _
    %1277 = vsyncpa [#allocation4], 1

// kernel: cnn_forward.7
$region0: #{cnn_forward.7}
  #allocation0 [shape = 'u32[]', space=smem, size = 0x4, offset = 0x4, fixed_abs, tag = 'smem constant byte address 0x4 - core index']
  #allocation1 [shape = 'u32[144,128]{1,0:T(1,128)}', space=vmem, size = 0x12000, scoped, tag = 'internal scratch']
  %s0 = inlined_call_operand.vmem [shape: bf16[8,2048], index: 0, kind: input, shape index: {}]
  %s1 = inlined_call_operand.vmem [shape: bf16[2048,640], index: 1, kind: input, shape index: {}]
  %s2 = inlined_call_operand.vmem [shape: f32[1,640], index: 2, kind: input, shape index: {}]
  %s3 = inlined_call_operand.vmem [shape: bf16[640,128], index: 3, kind: input, shape index: {}]
  %s4 = inlined_call_operand.vmem [shape: f32[1,128], index: 4, kind: input, shape index: {}]
  %s5 = inlined_call_operand.vmem [shape: f32[8,128], index: 5, kind: output, shape index: {}]
  %s6 = sld [smem:[#allocation0]]
  $region30: #{cnn_forward.7} parent=0
    _
  %s8 = ssub.s32 1, %s6
  %s9 = scalar_select 0, %s8, %s6
  // Predicated region
  $region2: #{cnn_forward.7} parent=0 // pred_check
    _
  $region3: #{cnn_forward.7} parent=0 // pred_check_branch
    %11 = sbr.rel (0) target = $region5
  $region4: #{cnn_forward.7} parent=0 // pred_region
    _
  $region5: #{cnn_forward.7} parent=0 // pred_fallthru
    _
  // Predicated region
  $region6: #{cnn_forward.7} parent=0 // pred_check
    _
  $region7: #{cnn_forward.7} parent=0 // pred_check_branch
    %13 = sbr.rel (0) target = $region9
  $region8: #{cnn_forward.7} parent=0 // pred_region
    _
  $region9: #{cnn_forward.7} parent=0 // pred_fallthru
    _
  // Predicated region
  $region10: #{cnn_forward.7} parent=0 // pred_check
    _
  $region11: #{cnn_forward.7} parent=0 // pred_check_branch
    %15 = sbr.rel (0) target = $region13
  $region12: #{cnn_forward.7} parent=0 // pred_region
    _
  $region13: #{cnn_forward.7} parent=0 // pred_fallthru
    _
  // Predicated region
  $region14: #{cnn_forward.7} parent=0 // pred_check
    _
  $region15: #{cnn_forward.7} parent=0 // pred_check_branch
    %17 = sbr.rel (0) target = $region17
  $region16: #{cnn_forward.7} parent=0 // pred_region
    _
  $region17: #{cnn_forward.7} parent=0 // pred_fallthru
    _
  // Predicated region
  $region18: #{cnn_forward.7} parent=0 // pred_check
    _
  $region19: #{cnn_forward.7} parent=0 // pred_check_branch
    %19 = sbr.rel (0) target = $region21
  $region20: #{cnn_forward.7} parent=0 // pred_region
    _
  $region21: #{cnn_forward.7} parent=0 // pred_fallthru
    _
  %v21 = vld [vmem:[%s0] sm:$0xff]
  %v22 = vld [vmem:[%s0 + $0x8] sm:$0xff]
  %v23 = vld [vmem:[%s0 + $0x10] sm:$0xff]
  %v24 = vld [vmem:[%s0 + $0x18] sm:$0xff]
  %v25 = vld [vmem:[%s0 + $0x20] sm:$0xff]
  %v26 = vld [vmem:[%s0 + $0x28] sm:$0xff]
  %v27 = vld [vmem:[%s0 + $0x30] sm:$0xff]
  %v28 = vld [vmem:[%s0 + $0x38] sm:$0xff]
  %v29 = vld [vmem:[%s1] sm:$0xff]
  %v30 = vld [vmem:[%s1 + $0x8] sm:$0xff]
  %v31 = vld [vmem:[%s1 + $0x10] sm:$0xf]
  %v32 = vld [vmem:[%s1 + $0x14] sm:$0xff]
  %v33 = vld [vmem:[%s1 + $0x1c] sm:$0xff]
  %v34 = vld [vmem:[%s1 + $0x24] sm:$0xf]
  %v35 = vld [vmem:[%s1 + $0x28] sm:$0xff]
  %v36 = vld [vmem:[%s1 + $0x30] sm:$0xff]
  %v37 = vld [vmem:[%s1 + $0x38] sm:$0xf]
  %v38 = vld [vmem:[%s1 + $0x3c] sm:$0xff]
  %v39 = vld [vmem:[%s1 + $0x44] sm:$0xff]
  %v40 = vld [vmem:[%s1 + $0x4c] sm:$0xf]
  %v41 = vld [vmem:[%s1 + $0x50] sm:$0xff]
  %v42 = vld [vmem:[%s1 + $0x58] sm:$0xff]
  %v43 = vld [vmem:[%s1 + $0x60] sm:$0xf]
  %v44 = vld [vmem:[%s1 + $0x64] sm:$0xff]
  %v45 = vld [vmem:[%s1 + $0x6c] sm:$0xff]
  %v46 = vld [vmem:[%s1 + $0x74] sm:$0xf]
  %v47 = vld [vmem:[%s1 + $0x78] sm:$0xff]
  %v48 = vld [vmem:[%s1 + $0x80] sm:$0xff]
  %v49 = vld [vmem:[%s1 + $0x88] sm:$0xf]
  %v50 = vld [vmem:[%s1 + $0x8c] sm:$0xff]
  %v51 = vld [vmem:[%s1 + $0x94] sm:$0xff]
  %v52 = vld [vmem:[%s1 + $0x9c] sm:$0xf]
  %v53 = vld [vmem:[%s1 + $0xa0] sm:$0xff]
  %v54 = vld [vmem:[%s1 + $0xa8] sm:$0xff]
  %v55 = vld [vmem:[%s1 + $0xb0] sm:$0xf]
  %v56 = vld [vmem:[%s1 + $0xb4] sm:$0xff]
  %v57 = vld [vmem:[%s1 + $0xbc] sm:$0xff]
  %v58 = vld [vmem:[%s1 + $0xc4] sm:$0xf]
  %v59 = vld [vmem:[%s1 + $0xc8] sm:$0xff]
  %v60 = vld [vmem:[%s1 + $0xd0] sm:$0xff]
  %v61 = vld [vmem:[%s1 + $0xd8] sm:$0xf]
  %v62 = vld [vmem:[%s1 + $0xdc] sm:$0xff]
  %v63 = vld [vmem:[%s1 + $0xe4] sm:$0xff]
  %v64 = vld [vmem:[%s1 + $0xec] sm:$0xf]
  %v65 = vld [vmem:[%s1 + $0xf0] sm:$0xff]
  %v66 = vld [vmem:[%s1 + $0xf8] sm:$0xff]
  %v67 = vld [vmem:[%s1 + $0x100] sm:$0xf]
  %v68 = vld [vmem:[%s1 + $0x104] sm:$0xff]
  %v69 = vld [vmem:[%s1 + $0x10c] sm:$0xff]
  %v70 = vld [vmem:[%s1 + $0x114] sm:$0xf]
  %v71 = vld [vmem:[%s1 + $0x118] sm:$0xff]
  %v72 = vld [vmem:[%s1 + $0x120] sm:$0xff]
  %v73 = vld [vmem:[%s1 + $0x128] sm:$0xf]
  %v74 = vld [vmem:[%s1 + $0x12c] sm:$0xff]
  %v75 = vld [vmem:[%s1 + $0x134] sm:$0xff]
  %v76 = vld [vmem:[%s1 + $0x13c] sm:$0xf]
  %v77 = vld [vmem:[%s1 + $0x140] sm:$0xff]
  %v78 = vld [vmem:[%s1 + $0x148] sm:$0xff]
  %v79 = vld [vmem:[%s1 + $0x150] sm:$0xf]
  %v80 = vld [vmem:[%s1 + $0x154] sm:$0xff]
  %v81 = vld [vmem:[%s1 + $0x15c] sm:$0xff]
  %v82 = vld [vmem:[%s1 + $0x164] sm:$0xf]
  %v83 = vld [vmem:[%s1 + $0x168] sm:$0xff]
  %v84 = vld [vmem:[%s1 + $0x170] sm:$0xff]
  %v85 = vld [vmem:[%s1 + $0x178] sm:$0xf]
  %v86 = vld [vmem:[%s1 + $0x17c] sm:$0xff]
  %v87 = vld [vmem:[%s1 + $0x184] sm:$0xff]
  %v88 = vld [vmem:[%s1 + $0x18c] sm:$0xf]
  %v89 = vld [vmem:[%s1 + $0x190] sm:$0xff]
  %v90 = vld [vmem:[%s1 + $0x198] sm:$0xff]
  %v91 = vld [vmem:[%s1 + $0x1a0] sm:$0xf]
  %v92 = vld [vmem:[%s1 + $0x1a4] sm:$0xff]
  %v93 = vld [vmem:[%s1 + $0x1ac] sm:$0xff]
  %v94 = vld [vmem:[%s1 + $0x1b4] sm:$0xf]
  %v95 = vld [vmem:[%s1 + $0x1b8] sm:$0xff]
  %v96 = vld [vmem:[%s1 + $0x1c0] sm:$0xff]
  %v97 = vld [vmem:[%s1 + $0x1c8] sm:$0xf]
  %v98 = vld [vmem:[%s1 + $0x1cc] sm:$0xff]
  %v99 = vld [vmem:[%s1 + $0x1d4] sm:$0xff]
  %v100 = vld [vmem:[%s1 + $0x1dc] sm:$0xf]
  %v101 = vld [vmem:[%s1 + $0x1e0] sm:$0xff]
  %v102 = vld [vmem:[%s1 + $0x1e8] sm:$0xff]
  %v103 = vld [vmem:[%s1 + $0x1f0] sm:$0xf]
  %v104 = vld [vmem:[%s1 + $0x1f4] sm:$0xff]
  %v105 = vld [vmem:[%s1 + $0x1fc] sm:$0xff]
  %v106 = vld [vmem:[%s1 + $0x204] sm:$0xf]
  %v107 = vld [vmem:[%s1 + $0x208] sm:$0xff]
  %v108 = vld [vmem:[%s1 + $0x210] sm:$0xff]
  %v109 = vld [vmem:[%s1 + $0x218] sm:$0xf]
  %v110 = vld [vmem:[%s1 + $0x21c] sm:$0xff]
  %v111 = vld [vmem:[%s1 + $0x224] sm:$0xff]
  %v112 = vld [vmem:[%s1 + $0x22c] sm:$0xf]
  %v113 = vld [vmem:[%s1 + $0x230] sm:$0xff]
  %v114 = vld [vmem:[%s1 + $0x238] sm:$0xff]
  %v115 = vld [vmem:[%s1 + $0x240] sm:$0xf]
  %v116 = vld [vmem:[%s1 + $0x244] sm:$0xff]
  %v117 = vld [vmem:[%s1 + $0x24c] sm:$0xff]
  %v118 = vld [vmem:[%s1 + $0x254] sm:$0xf]
  %v119 = vld [vmem:[%s1 + $0x258] sm:$0xff]
  %v120 = vld [vmem:[%s1 + $0x260] sm:$0xff]
  %v121 = vld [vmem:[%s1 + $0x268] sm:$0xf]
  %v122 = vld [vmem:[%s1 + $0x26c] sm:$0xff]
  %v123 = vld [vmem:[%s1 + $0x274] sm:$0xff]
  %v124 = vld [vmem:[%s1 + $0x27c] sm:$0xf]
  %v125 = vld [vmem:[%s1 + $0x280] sm:$0xff]
  %v126 = vld [vmem:[%s1 + $0x288] sm:$0xff]
  %v127 = vld [vmem:[%s1 + $0x290] sm:$0xf]
  %v128 = vld [vmem:[%s1 + $0x294] sm:$0xff]
  %v129 = vld [vmem:[%s1 + $0x29c] sm:$0xff]
  %v130 = vld [vmem:[%s1 + $0x2a4] sm:$0xf]
  %v131 = vld [vmem:[%s1 + $0x2a8] sm:$0xff]
  %v132 = vld [vmem:[%s1 + $0x2b0] sm:$0xff]
  %v133 = vld [vmem:[%s1 + $0x2b8] sm:$0xf]
  %v134 = vld [vmem:[%s1 + $0x2bc] sm:$0xff]
  %v135 = vld [vmem:[%s1 + $0x2c4] sm:$0xff]
  %v136 = vld [vmem:[%s1 + $0x2cc] sm:$0xf]
  %v137 = vld [vmem:[%s1 + $0x2d0] sm:$0xff]
  %v138 = vld [vmem:[%s1 + $0x2d8] sm:$0xff]
  %v139 = vld [vmem:[%s1 + $0x2e0] sm:$0xf]
  %v140 = vld [vmem:[%s1 + $0x2e4] sm:$0xff]
  %v141 = vld [vmem:[%s1 + $0x2ec] sm:$0xff]
  %v142 = vld [vmem:[%s1 + $0x2f4] sm:$0xf]
  %v143 = vld [vmem:[%s1 + $0x2f8] sm:$0xff]
  %v144 = vld [vmem:[%s1 + $0x300] sm:$0xff]
  %v145 = vld [vmem:[%s1 + $0x308] sm:$0xf]
  %v146 = vld [vmem:[%s1 + $0x30c] sm:$0xff]
  %v147 = vld [vmem:[%s1 + $0x314] sm:$0xff]
  %v148 = vld [vmem:[%s1 + $0x31c] sm:$0xf]
  %v149 = vld [vmem:[%s1 + $0x320] sm:$0xff]
  %v150 = vld [vmem:[%s1 + $0x328] sm:$0xff]
  %v151 = vld [vmem:[%s1 + $0x330] sm:$0xf]
  %v152 = vld [vmem:[%s1 + $0x334] sm:$0xff]
  %v153 = vld [vmem:[%s1 + $0x33c] sm:$0xff]
  %v154 = vld [vmem:[%s1 + $0x344] sm:$0xf]
  %v155 = vld [vmem:[%s1 + $0x348] sm:$0xff]
  %v156 = vld [vmem:[%s1 + $0x350] sm:$0xff]
  %v157 = vld [vmem:[%s1 + $0x358] sm:$0xf]
  %v158 = vld [vmem:[%s1 + $0x35c] sm:$0xff]
  %v159 = vld [vmem:[%s1 + $0x364] sm:$0xff]
  %v160 = vld [vmem:[%s1 + $0x36c] sm:$0xf]
  %v161 = vld [vmem:[%s1 + $0x370] sm:$0xff]
  %v162 = vld [vmem:[%s1 + $0x378] sm:$0xff]
  %v163 = vld [vmem:[%s1 + $0x380] sm:$0xf]
  %v164 = vld [vmem:[%s1 + $0x384] sm:$0xff]
  %v165 = vld [vmem:[%s1 + $0x38c] sm:$0xff]
  %v166 = vld [vmem:[%s1 + $0x394] sm:$0xf]
  %v167 = vld [vmem:[%s1 + $0x398] sm:$0xff]
  %v168 = vld [vmem:[%s1 + $0x3a0] sm:$0xff]
  %v169 = vld [vmem:[%s1 + $0x3a8] sm:$0xf]
  %v170 = vld [vmem:[%s1 + $0x3ac] sm:$0xff]
  %v171 = vld [vmem:[%s1 + $0x3b4] sm:$0xff]
  %v172 = vld [vmem:[%s1 + $0x3bc] sm:$0xf]
  %v173 = vld [vmem:[%s1 + $0x3c0] sm:$0xff]
  %v174 = vld [vmem:[%s1 + $0x3c8] sm:$0xff]
  %v175 = vld [vmem:[%s1 + $0x3d0] sm:$0xf]
  %v176 = vld [vmem:[%s1 + $0x3d4] sm:$0xff]
  %v177 = vld [vmem:[%s1 + $0x3dc] sm:$0xff]
  %v178 = vld [vmem:[%s1 + $0x3e4] sm:$0xf]
  %v179 = vld [vmem:[%s1 + $0x3e8] sm:$0xff]
  %v180 = vld [vmem:[%s1 + $0x3f0] sm:$0xff]
  %v181 = vld [vmem:[%s1 + $0x3f8] sm:$0xf]
  %v182 = vld [vmem:[%s1 + $0x3fc] sm:$0xff]
  %v183 = vld [vmem:[%s1 + $0x404] sm:$0xff]
  %v184 = vld [vmem:[%s1 + $0x40c] sm:$0xf]
  %v185 = vld [vmem:[%s1 + $0x410] sm:$0xff]
  %v186 = vld [vmem:[%s1 + $0x418] sm:$0xff]
  %v187 = vld [vmem:[%s1 + $0x420] sm:$0xf]
  %v188 = vld [vmem:[%s1 + $0x424] sm:$0xff]
  %v189 = vld [vmem:[%s1 + $0x42c] sm:$0xff]
  %v190 = vld [vmem:[%s1 + $0x434] sm:$0xf]
  %v191 = vld [vmem:[%s1 + $0x438] sm:$0xff]
  %v192 = vld [vmem:[%s1 + $0x440] sm:$0xff]
  %v193 = vld [vmem:[%s1 + $0x448] sm:$0xf]
  %v194 = vld [vmem:[%s1 + $0x44c] sm:$0xff]
  %v195 = vld [vmem:[%s1 + $0x454] sm:$0xff]
  %v196 = vld [vmem:[%s1 + $0x45c] sm:$0xf]
  %v197 = vld [vmem:[%s1 + $0x460] sm:$0xff]
  %v198 = vld [vmem:[%s1 + $0x468] sm:$0xff]
  %v199 = vld [vmem:[%s1 + $0x470] sm:$0xf]
  %v200 = vld [vmem:[%s1 + $0x474] sm:$0xff]
  %v201 = vld [vmem:[%s1 + $0x47c] sm:$0xff]
  %v202 = vld [vmem:[%s1 + $0x484] sm:$0xf]
  %v203 = vld [vmem:[%s1 + $0x488] sm:$0xff]
  %v204 = vld [vmem:[%s1 + $0x490] sm:$0xff]
  %v205 = vld [vmem:[%s1 + $0x498] sm:$0xf]
  %v206 = vld [vmem:[%s1 + $0x49c] sm:$0xff]
  %v207 = vld [vmem:[%s1 + $0x4a4] sm:$0xff]
  %v208 = vld [vmem:[%s1 + $0x4ac] sm:$0xf]
  %v209 = vld [vmem:[%s1 + $0x4b0] sm:$0xff]
  %v210 = vld [vmem:[%s1 + $0x4b8] sm:$0xff]
  %v211 = vld [vmem:[%s1 + $0x4c0] sm:$0xf]
  %v212 = vld [vmem:[%s1 + $0x4c4] sm:$0xff]
  %v213 = vld [vmem:[%s1 + $0x4cc] sm:$0xff]
  %v214 = vld [vmem:[%s1 + $0x4d4] sm:$0xf]
  %v215 = vld [vmem:[%s1 + $0x4d8] sm:$0xff]
  %v216 = vld [vmem:[%s1 + $0x4e0] sm:$0xff]
  %v217 = vld [vmem:[%s1 + $0x4e8] sm:$0xf]
  %v218 = vld [vmem:[%s1 + $0x4ec] sm:$0xff]
  %v219 = vld [vmem:[%s1 + $0x4f4] sm:$0xff]
  %v220 = vld [vmem:[%s1 + $0x4fc] sm:$0xf]
  %v221 = vld [vmem:[%s1 + $0x500] sm:$0xff]
  %v222 = vld [vmem:[%s1 + $0x508] sm:$0xff]
  %v223 = vld [vmem:[%s1 + $0x510] sm:$0xf]
  %v224 = vld [vmem:[%s1 + $0x514] sm:$0xff]
  %v225 = vld [vmem:[%s1 + $0x51c] sm:$0xff]
  %v226 = vld [vmem:[%s1 + $0x524] sm:$0xf]
  %v227 = vld [vmem:[%s1 + $0x528] sm:$0xff]
  %v228 = vld [vmem:[%s1 + $0x530] sm:$0xff]
  %v229 = vld [vmem:[%s1 + $0x538] sm:$0xf]
  %v230 = vld [vmem:[%s1 + $0x53c] sm:$0xff]
  %v231 = vld [vmem:[%s1 + $0x544] sm:$0xff]
  %v232 = vld [vmem:[%s1 + $0x54c] sm:$0xf]
  %v233 = vld [vmem:[%s1 + $0x550] sm:$0xff]
  %v234 = vld [vmem:[%s1 + $0x558] sm:$0xff]
  %v235 = vld [vmem:[%s1 + $0x560] sm:$0xf]
  %v236 = vld [vmem:[%s1 + $0x564] sm:$0xff]
  %v237 = vld [vmem:[%s1 + $0x56c] sm:$0xff]
  %v238 = vld [vmem:[%s1 + $0x574] sm:$0xf]
  %v239 = vld [vmem:[%s1 + $0x578] sm:$0xff]
  %v240 = vld [vmem:[%s1 + $0x580] sm:$0xff]
  %v241 = vld [vmem:[%s1 + $0x588] sm:$0xf]
  %v242 = vld [vmem:[%s1 + $0x58c] sm:$0xff]
  %v243 = vld [vmem:[%s1 + $0x594] sm:$0xff]
  %v244 = vld [vmem:[%s1 + $0x59c] sm:$0xf]
  %v245 = vld [vmem:[%s1 + $0x5a0] sm:$0xff]
  %v246 = vld [vmem:[%s1 + $0x5a8] sm:$0xff]
  %v247 = vld [vmem:[%s1 + $0x5b0] sm:$0xf]
  %v248 = vld [vmem:[%s1 + $0x5b4] sm:$0xff]
  %v249 = vld [vmem:[%s1 + $0x5bc] sm:$0xff]
  %v250 = vld [vmem:[%s1 + $0x5c4] sm:$0xf]
  %v251 = vld [vmem:[%s1 + $0x5c8] sm:$0xff]
  %v252 = vld [vmem:[%s1 + $0x5d0] sm:$0xff]
  %v253 = vld [vmem:[%s1 + $0x5d8] sm:$0xf]
  %v254 = vld [vmem:[%s1 + $0x5dc] sm:$0xff]
  %v255 = vld [vmem:[%s1 + $0x5e4] sm:$0xff]
  %v256 = vld [vmem:[%s1 + $0x5ec] sm:$0xf]
  %v257 = vld [vmem:[%s1 + $0x5f0] sm:$0xff]
  %v258 = vld [vmem:[%s1 + $0x5f8] sm:$0xff]
  %v259 = vld [vmem:[%s1 + $0x600] sm:$0xf]
  %v260 = vld [vmem:[%s1 + $0x604] sm:$0xff]
  %v261 = vld [vmem:[%s1 + $0x60c] sm:$0xff]
  %v262 = vld [vmem:[%s1 + $0x614] sm:$0xf]
  %v263 = vld [vmem:[%s1 + $0x618] sm:$0xff]
  %v264 = vld [vmem:[%s1 + $0x620] sm:$0xff]
  %v265 = vld [vmem:[%s1 + $0x628] sm:$0xf]
  %v266 = vld [vmem:[%s1 + $0x62c] sm:$0xff]
  %v267 = vld [vmem:[%s1 + $0x634] sm:$0xff]
  %v268 = vld [vmem:[%s1 + $0x63c] sm:$0xf]
  %v269 = vld [vmem:[%s1 + $0x640] sm:$0xff]
  %v270 = vld [vmem:[%s1 + $0x648] sm:$0xff]
  %v271 = vld [vmem:[%s1 + $0x650] sm:$0xf]
  %v272 = vld [vmem:[%s1 + $0x654] sm:$0xff]
  %v273 = vld [vmem:[%s1 + $0x65c] sm:$0xff]
  %v274 = vld [vmem:[%s1 + $0x664] sm:$0xf]
  %v275 = vld [vmem:[%s1 + $0x668] sm:$0xff]
  %v276 = vld [vmem:[%s1 + $0x670] sm:$0xff]
  %v277 = vld [vmem:[%s1 + $0x678] sm:$0xf]
  %v278 = vld [vmem:[%s1 + $0x67c] sm:$0xff]
  %v279 = vld [vmem:[%s1 + $0x684] sm:$0xff]
  %v280 = vld [vmem:[%s1 + $0x68c] sm:$0xf]
  %v281 = vld [vmem:[%s1 + $0x690] sm:$0xff]
  %v282 = vld [vmem:[%s1 + $0x698] sm:$0xff]
  %v283 = vld [vmem:[%s1 + $0x6a0] sm:$0xf]
  %v284 = vld [vmem:[%s1 + $0x6a4] sm:$0xff]
  %v285 = vld [vmem:[%s1 + $0x6ac] sm:$0xff]
  %v286 = vld [vmem:[%s1 + $0x6b4] sm:$0xf]
  %v287 = vld [vmem:[%s1 + $0x6b8] sm:$0xff]
  %v288 = vld [vmem:[%s1 + $0x6c0] sm:$0xff]
  %v289 = vld [vmem:[%s1 + $0x6c8] sm:$0xf]
  %v290 = vld [vmem:[%s1 + $0x6cc] sm:$0xff]
  %v291 = vld [vmem:[%s1 + $0x6d4] sm:$0xff]
  %v292 = vld [vmem:[%s1 + $0x6dc] sm:$0xf]
  %v293 = vld [vmem:[%s1 + $0x6e0] sm:$0xff]
  %v294 = vld [vmem:[%s1 + $0x6e8] sm:$0xff]
  %v295 = vld [vmem:[%s1 + $0x6f0] sm:$0xf]
  %v296 = vld [vmem:[%s1 + $0x6f4] sm:$0xff]
  %v297 = vld [vmem:[%s1 + $0x6fc] sm:$0xff]
  %v298 = vld [vmem:[%s1 + $0x704] sm:$0xf]
  %v299 = vld [vmem:[%s1 + $0x708] sm:$0xff]
  %v300 = vld [vmem:[%s1 + $0x710] sm:$0xff]
  %v301 = vld [vmem:[%s1 + $0x718] sm:$0xf]
  %v302 = vld [vmem:[%s1 + $0x71c] sm:$0xff]
  %v303 = vld [vmem:[%s1 + $0x724] sm:$0xff]
  %v304 = vld [vmem:[%s1 + $0x72c] sm:$0xf]
  %v305 = vld [vmem:[%s1 + $0x730] sm:$0xff]
  %v306 = vld [vmem:[%s1 + $0x738] sm:$0xff]
  %v307 = vld [vmem:[%s1 + $0x740] sm:$0xf]
  %v308 = vld [vmem:[%s1 + $0x744] sm:$0xff]
  %v309 = vld [vmem:[%s1 + $0x74c] sm:$0xff]
  %v310 = vld [vmem:[%s1 + $0x754] sm:$0xf]
  %v311 = vld [vmem:[%s1 + $0x758] sm:$0xff]
  %v312 = vld [vmem:[%s1 + $0x760] sm:$0xff]
  %v313 = vld [vmem:[%s1 + $0x768] sm:$0xf]
  %v314 = vld [vmem:[%s1 + $0x76c] sm:$0xff]
  %v315 = vld [vmem:[%s1 + $0x774] sm:$0xff]
  %v316 = vld [vmem:[%s1 + $0x77c] sm:$0xf]
  %v317 = vld [vmem:[%s1 + $0x780] sm:$0xff]
  %v318 = vld [vmem:[%s1 + $0x788] sm:$0xff]
  %v319 = vld [vmem:[%s1 + $0x790] sm:$0xf]
  %v320 = vld [vmem:[%s1 + $0x794] sm:$0xff]
  %v321 = vld [vmem:[%s1 + $0x79c] sm:$0xff]
  %v322 = vld [vmem:[%s1 + $0x7a4] sm:$0xf]
  %v323 = vld [vmem:[%s1 + $0x7a8] sm:$0xff]
  %v324 = vld [vmem:[%s1 + $0x7b0] sm:$0xff]
  %v325 = vld [vmem:[%s1 + $0x7b8] sm:$0xf]
  %v326 = vld [vmem:[%s1 + $0x7bc] sm:$0xff]
  %v327 = vld [vmem:[%s1 + $0x7c4] sm:$0xff]
  %v328 = vld [vmem:[%s1 + $0x7cc] sm:$0xf]
  %v329 = vld [vmem:[%s1 + $0x7d0] sm:$0xff]
  %v330 = vld [vmem:[%s1 + $0x7d8] sm:$0xff]
  %v331 = vld [vmem:[%s1 + $0x7e0] sm:$0xf]
  %v332 = vld [vmem:[%s1 + $0x7e4] sm:$0xff]
  %v333 = vld [vmem:[%s1 + $0x7ec] sm:$0xff]
  %v334 = vld [vmem:[%s1 + $0x7f4] sm:$0xf]
  %v335 = vld [vmem:[%s1 + $0x7f8] sm:$0xff]
  %v336 = vld [vmem:[%s1 + $0x800] sm:$0xff]
  %v337 = vld [vmem:[%s1 + $0x808] sm:$0xf]
  %v338 = vld [vmem:[%s1 + $0x80c] sm:$0xff]
  %v339 = vld [vmem:[%s1 + $0x814] sm:$0xff]
  %v340 = vld [vmem:[%s1 + $0x81c] sm:$0xf]
  %v341 = vld [vmem:[%s1 + $0x820] sm:$0xff]
  %v342 = vld [vmem:[%s1 + $0x828] sm:$0xff]
  %v343 = vld [vmem:[%s1 + $0x830] sm:$0xf]
  %v344 = vld [vmem:[%s1 + $0x834] sm:$0xff]
  %v345 = vld [vmem:[%s1 + $0x83c] sm:$0xff]
  %v346 = vld [vmem:[%s1 + $0x844] sm:$0xf]
  %v347 = vld [vmem:[%s1 + $0x848] sm:$0xff]
  %v348 = vld [vmem:[%s1 + $0x850] sm:$0xff]
  %v349 = vld [vmem:[%s1 + $0x858] sm:$0xf]
  %v350 = vld [vmem:[%s1 + $0x85c] sm:$0xff]
  %v351 = vld [vmem:[%s1 + $0x864] sm:$0xff]
  %v352 = vld [vmem:[%s1 + $0x86c] sm:$0xf]
  %v353 = vld [vmem:[%s1 + $0x870] sm:$0xff]
  %v354 = vld [vmem:[%s1 + $0x878] sm:$0xff]
  %v355 = vld [vmem:[%s1 + $0x880] sm:$0xf]
  %v356 = vld [vmem:[%s1 + $0x884] sm:$0xff]
  %v357 = vld [vmem:[%s1 + $0x88c] sm:$0xff]
  %v358 = vld [vmem:[%s1 + $0x894] sm:$0xf]
  %v359 = vld [vmem:[%s1 + $0x898] sm:$0xff]
  %v360 = vld [vmem:[%s1 + $0x8a0] sm:$0xff]
  %v361 = vld [vmem:[%s1 + $0x8a8] sm:$0xf]
  %v362 = vld [vmem:[%s1 + $0x8ac] sm:$0xff]
  %v363 = vld [vmem:[%s1 + $0x8b4] sm:$0xff]
  %v364 = vld [vmem:[%s1 + $0x8bc] sm:$0xf]
  %v365 = vld [vmem:[%s1 + $0x8c0] sm:$0xff]
  %v366 = vld [vmem:[%s1 + $0x8c8] sm:$0xff]
  %v367 = vld [vmem:[%s1 + $0x8d0] sm:$0xf]
  %v368 = vld [vmem:[%s1 + $0x8d4] sm:$0xff]
  %v369 = vld [vmem:[%s1 + $0x8dc] sm:$0xff]
  %v370 = vld [vmem:[%s1 + $0x8e4] sm:$0xf]
  %v371 = vld [vmem:[%s1 + $0x8e8] sm:$0xff]
  %v372 = vld [vmem:[%s1 + $0x8f0] sm:$0xff]
  %v373 = vld [vmem:[%s1 + $0x8f8] sm:$0xf]
  %v374 = vld [vmem:[%s1 + $0x8fc] sm:$0xff]
  %v375 = vld [vmem:[%s1 + $0x904] sm:$0xff]
  %v376 = vld [vmem:[%s1 + $0x90c] sm:$0xf]
  %v377 = vld [vmem:[%s1 + $0x910] sm:$0xff]
  %v378 = vld [vmem:[%s1 + $0x918] sm:$0xff]
  %v379 = vld [vmem:[%s1 + $0x920] sm:$0xf]
  %v380 = vld [vmem:[%s1 + $0x924] sm:$0xff]
  %v381 = vld [vmem:[%s1 + $0x92c] sm:$0xff]
  %v382 = vld [vmem:[%s1 + $0x934] sm:$0xf]
  %v383 = vld [vmem:[%s1 + $0x938] sm:$0xff]
  %v384 = vld [vmem:[%s1 + $0x940] sm:$0xff]
  %v385 = vld [vmem:[%s1 + $0x948] sm:$0xf]
  %v386 = vld [vmem:[%s1 + $0x94c] sm:$0xff]
  %v387 = vld [vmem:[%s1 + $0x954] sm:$0xff]
  %v388 = vld [vmem:[%s1 + $0x95c] sm:$0xf]
  %v389 = vld [vmem:[%s1 + $0x960] sm:$0xff]
  %v390 = vld [vmem:[%s1 + $0x968] sm:$0xff]
  %v391 = vld [vmem:[%s1 + $0x970] sm:$0xf]
  %v392 = vld [vmem:[%s1 + $0x974] sm:$0xff]
  %v393 = vld [vmem:[%s1 + $0x97c] sm:$0xff]
  %v394 = vld [vmem:[%s1 + $0x984] sm:$0xf]
  %v395 = vld [vmem:[%s1 + $0x988] sm:$0xff]
  %v396 = vld [vmem:[%s1 + $0x990] sm:$0xff]
  %v397 = vld [vmem:[%s1 + $0x998] sm:$0xf]
  %v398 = vld [vmem:[%s1 + $0x99c] sm:$0xff]
  %v399 = vld [vmem:[%s1 + $0x9a4] sm:$0xff]
  %v400 = vld [vmem:[%s1 + $0x9ac] sm:$0xf]
  %v401 = vld [vmem:[%s1 + $0x9b0] sm:$0xff]
  %v402 = vld [vmem:[%s1 + $0x9b8] sm:$0xff]
  %v403 = vld [vmem:[%s1 + $0x9c0] sm:$0xf]
  %v404 = vld [vmem:[%s1 + $0x9c4] sm:$0xff]
  %v405 = vld [vmem:[%s1 + $0x9cc] sm:$0xff]
  %v406 = vld [vmem:[%s1 + $0x9d4] sm:$0xf]
  %v407 = vld [vmem:[%s1 + $0x9d8] sm:$0xff]
  %v408 = vld [vmem:[%s1 + $0x9e0] sm:$0xff]
  %v409 = vld [vmem:[%s1 + $0x9e8] sm:$0xf]
  %v410 = vld [vmem:[%s1 + $0x9ec] sm:$0xff]
  %v411 = vld [vmem:[%s1 + $0x9f4] sm:$0xff]
  %v412 = vld [vmem:[%s1 + $0x9fc] sm:$0xf]
  %v413 = vld [vmem:[%s1 + $0xa00] sm:$0xff]
  %v414 = vld [vmem:[%s1 + $0xa08] sm:$0xff]
  %v415 = vld [vmem:[%s1 + $0xa10] sm:$0xf]
  %v416 = vld [vmem:[%s1 + $0xa14] sm:$0xff]
  %v417 = vld [vmem:[%s1 + $0xa1c] sm:$0xff]
  %v418 = vld [vmem:[%s1 + $0xa24] sm:$0xf]
  %v419 = vld [vmem:[%s1 + $0xa28] sm:$0xff]
  %v420 = vld [vmem:[%s1 + $0xa30] sm:$0xff]
  %v421 = vld [vmem:[%s1 + $0xa38] sm:$0xf]
  %v422 = vld [vmem:[%s1 + $0xa3c] sm:$0xff]
  %v423 = vld [vmem:[%s1 + $0xa44] sm:$0xff]
  %v424 = vld [vmem:[%s1 + $0xa4c] sm:$0xf]
  %v425 = vld [vmem:[%s1 + $0xa50] sm:$0xff]
  %v426 = vld [vmem:[%s1 + $0xa58] sm:$0xff]
  %v427 = vld [vmem:[%s1 + $0xa60] sm:$0xf]
  %v428 = vld [vmem:[%s1 + $0xa64] sm:$0xff]
  %v429 = vld [vmem:[%s1 + $0xa6c] sm:$0xff]
  %v430 = vld [vmem:[%s1 + $0xa74] sm:$0xf]
  %v431 = vld [vmem:[%s1 + $0xa78] sm:$0xff]
  %v432 = vld [vmem:[%s1 + $0xa80] sm:$0xff]
  %v433 = vld [vmem:[%s1 + $0xa88] sm:$0xf]
  %v434 = vld [vmem:[%s1 + $0xa8c] sm:$0xff]
  %v435 = vld [vmem:[%s1 + $0xa94] sm:$0xff]
  %v436 = vld [vmem:[%s1 + $0xa9c] sm:$0xf]
  %v437 = vld [vmem:[%s1 + $0xaa0] sm:$0xff]
  %v438 = vld [vmem:[%s1 + $0xaa8] sm:$0xff]
  %v439 = vld [vmem:[%s1 + $0xab0] sm:$0xf]
  %v440 = vld [vmem:[%s1 + $0xab4] sm:$0xff]
  %v441 = vld [vmem:[%s1 + $0xabc] sm:$0xff]
  %v442 = vld [vmem:[%s1 + $0xac4] sm:$0xf]
  %v443 = vld [vmem:[%s1 + $0xac8] sm:$0xff]
  %v444 = vld [vmem:[%s1 + $0xad0] sm:$0xff]
  %v445 = vld [vmem:[%s1 + $0xad8] sm:$0xf]
  %v446 = vld [vmem:[%s1 + $0xadc] sm:$0xff]
  %v447 = vld [vmem:[%s1 + $0xae4] sm:$0xff]
  %v448 = vld [vmem:[%s1 + $0xaec] sm:$0xf]
  %v449 = vld [vmem:[%s1 + $0xaf0] sm:$0xff]
  %v450 = vld [vmem:[%s1 + $0xaf8] sm:$0xff]
  %v451 = vld [vmem:[%s1 + $0xb00] sm:$0xf]
  %v452 = vld [vmem:[%s1 + $0xb04] sm:$0xff]
  %v453 = vld [vmem:[%s1 + $0xb0c] sm:$0xff]
  %v454 = vld [vmem:[%s1 + $0xb14] sm:$0xf]
  %v455 = vld [vmem:[%s1 + $0xb18] sm:$0xff]
  %v456 = vld [vmem:[%s1 + $0xb20] sm:$0xff]
  %v457 = vld [vmem:[%s1 + $0xb28] sm:$0xf]
  %v458 = vld [vmem:[%s1 + $0xb2c] sm:$0xff]
  %v459 = vld [vmem:[%s1 + $0xb34] sm:$0xff]
  %v460 = vld [vmem:[%s1 + $0xb3c] sm:$0xf]
  %v461 = vld [vmem:[%s1 + $0xb40] sm:$0xff]
  %v462 = vld [vmem:[%s1 + $0xb48] sm:$0xff]
  %v463 = vld [vmem:[%s1 + $0xb50] sm:$0xf]
  %v464 = vld [vmem:[%s1 + $0xb54] sm:$0xff]
  %v465 = vld [vmem:[%s1 + $0xb5c] sm:$0xff]
  %v466 = vld [vmem:[%s1 + $0xb64] sm:$0xf]
  %v467 = vld [vmem:[%s1 + $0xb68] sm:$0xff]
  %v468 = vld [vmem:[%s1 + $0xb70] sm:$0xff]
  %v469 = vld [vmem:[%s1 + $0xb78] sm:$0xf]
  %v470 = vld [vmem:[%s1 + $0xb7c] sm:$0xff]
  %v471 = vld [vmem:[%s1 + $0xb84] sm:$0xff]
  %v472 = vld [vmem:[%s1 + $0xb8c] sm:$0xf]
  %v473 = vld [vmem:[%s1 + $0xb90] sm:$0xff]
  %v474 = vld [vmem:[%s1 + $0xb98] sm:$0xff]
  %v475 = vld [vmem:[%s1 + $0xba0] sm:$0xf]
  %v476 = vld [vmem:[%s1 + $0xba4] sm:$0xff]
  %v477 = vld [vmem:[%s1 + $0xbac] sm:$0xff]
  %v478 = vld [vmem:[%s1 + $0xbb4] sm:$0xf]
  %v479 = vld [vmem:[%s1 + $0xbb8] sm:$0xff]
  %v480 = vld [vmem:[%s1 + $0xbc0] sm:$0xff]
  %v481 = vld [vmem:[%s1 + $0xbc8] sm:$0xf]
  %v482 = vld [vmem:[%s1 + $0xbcc] sm:$0xff]
  %v483 = vld [vmem:[%s1 + $0xbd4] sm:$0xff]
  %v484 = vld [vmem:[%s1 + $0xbdc] sm:$0xf]
  %v485 = vld [vmem:[%s1 + $0xbe0] sm:$0xff]
  %v486 = vld [vmem:[%s1 + $0xbe8] sm:$0xff]
  %v487 = vld [vmem:[%s1 + $0xbf0] sm:$0xf]
  %v488 = vld [vmem:[%s1 + $0xbf4] sm:$0xff]
  %v489 = vld [vmem:[%s1 + $0xbfc] sm:$0xff]
  %v490 = vld [vmem:[%s1 + $0xc04] sm:$0xf]
  %v491 = vld [vmem:[%s1 + $0xc08] sm:$0xff]
  %v492 = vld [vmem:[%s1 + $0xc10] sm:$0xff]
  %v493 = vld [vmem:[%s1 + $0xc18] sm:$0xf]
  %v494 = vld [vmem:[%s1 + $0xc1c] sm:$0xff]
  %v495 = vld [vmem:[%s1 + $0xc24] sm:$0xff]
  %v496 = vld [vmem:[%s1 + $0xc2c] sm:$0xf]
  %v497 = vld [vmem:[%s1 + $0xc30] sm:$0xff]
  %v498 = vld [vmem:[%s1 + $0xc38] sm:$0xff]
  %v499 = vld [vmem:[%s1 + $0xc40] sm:$0xf]
  %v500 = vld [vmem:[%s1 + $0xc44] sm:$0xff]
  %v501 = vld [vmem:[%s1 + $0xc4c] sm:$0xff]
  %v502 = vld [vmem:[%s1 + $0xc54] sm:$0xf]
  %v503 = vld [vmem:[%s1 + $0xc58] sm:$0xff]
  %v504 = vld [vmem:[%s1 + $0xc60] sm:$0xff]
  %v505 = vld [vmem:[%s1 + $0xc68] sm:$0xf]
  %v506 = vld [vmem:[%s1 + $0xc6c] sm:$0xff]
  %v507 = vld [vmem:[%s1 + $0xc74] sm:$0xff]
  %v508 = vld [vmem:[%s1 + $0xc7c] sm:$0xf]
  %v509 = vld [vmem:[%s1 + $0xc80] sm:$0xff]
  %v510 = vld [vmem:[%s1 + $0xc88] sm:$0xff]
  %v511 = vld [vmem:[%s1 + $0xc90] sm:$0xf]
  %v512 = vld [vmem:[%s1 + $0xc94] sm:$0xff]
  %v513 = vld [vmem:[%s1 + $0xc9c] sm:$0xff]
  %v514 = vld [vmem:[%s1 + $0xca4] sm:$0xf]
  %v515 = vld [vmem:[%s1 + $0xca8] sm:$0xff]
  %v516 = vld [vmem:[%s1 + $0xcb0] sm:$0xff]
  %v517 = vld [vmem:[%s1 + $0xcb8] sm:$0xf]
  %v518 = vld [vmem:[%s1 + $0xcbc] sm:$0xff]
  %v519 = vld [vmem:[%s1 + $0xcc4] sm:$0xff]
  %v520 = vld [vmem:[%s1 + $0xccc] sm:$0xf]
  %v521 = vld [vmem:[%s1 + $0xcd0] sm:$0xff]
  %v522 = vld [vmem:[%s1 + $0xcd8] sm:$0xff]
  %v523 = vld [vmem:[%s1 + $0xce0] sm:$0xf]
  %v524 = vld [vmem:[%s1 + $0xce4] sm:$0xff]
  %v525 = vld [vmem:[%s1 + $0xcec] sm:$0xff]
  %v526 = vld [vmem:[%s1 + $0xcf4] sm:$0xf]
  %v527 = vld [vmem:[%s1 + $0xcf8] sm:$0xff]
  %v528 = vld [vmem:[%s1 + $0xd00] sm:$0xff]
  %v529 = vld [vmem:[%s1 + $0xd08] sm:$0xf]
  %v530 = vld [vmem:[%s1 + $0xd0c] sm:$0xff]
  %v531 = vld [vmem:[%s1 + $0xd14] sm:$0xff]
  %v532 = vld [vmem:[%s1 + $0xd1c] sm:$0xf]
  %v533 = vld [vmem:[%s1 + $0xd20] sm:$0xff]
  %v534 = vld [vmem:[%s1 + $0xd28] sm:$0xff]
  %v535 = vld [vmem:[%s1 + $0xd30] sm:$0xf]
  %v536 = vld [vmem:[%s1 + $0xd34] sm:$0xff]
  %v537 = vld [vmem:[%s1 + $0xd3c] sm:$0xff]
  %v538 = vld [vmem:[%s1 + $0xd44] sm:$0xf]
  %v539 = vld [vmem:[%s1 + $0xd48] sm:$0xff]
  %v540 = vld [vmem:[%s1 + $0xd50] sm:$0xff]
  %v541 = vld [vmem:[%s1 + $0xd58] sm:$0xf]
  %v542 = vld [vmem:[%s1 + $0xd5c] sm:$0xff]
  %v543 = vld [vmem:[%s1 + $0xd64] sm:$0xff]
  %v544 = vld [vmem:[%s1 + $0xd6c] sm:$0xf]
  %v545 = vld [vmem:[%s1 + $0xd70] sm:$0xff]
  %v546 = vld [vmem:[%s1 + $0xd78] sm:$0xff]
  %v547 = vld [vmem:[%s1 + $0xd80] sm:$0xf]
  %v548 = vld [vmem:[%s1 + $0xd84] sm:$0xff]
  %v549 = vld [vmem:[%s1 + $0xd8c] sm:$0xff]
  %v550 = vld [vmem:[%s1 + $0xd94] sm:$0xf]
  %v551 = vld [vmem:[%s1 + $0xd98] sm:$0xff]
  %v552 = vld [vmem:[%s1 + $0xda0] sm:$0xff]
  %v553 = vld [vmem:[%s1 + $0xda8] sm:$0xf]
  %v554 = vld [vmem:[%s1 + $0xdac] sm:$0xff]
  %v555 = vld [vmem:[%s1 + $0xdb4] sm:$0xff]
  %v556 = vld [vmem:[%s1 + $0xdbc] sm:$0xf]
  %v557 = vld [vmem:[%s1 + $0xdc0] sm:$0xff]
  %v558 = vld [vmem:[%s1 + $0xdc8] sm:$0xff]
  %v559 = vld [vmem:[%s1 + $0xdd0] sm:$0xf]
  %v560 = vld [vmem:[%s1 + $0xdd4] sm:$0xff]
  %v561 = vld [vmem:[%s1 + $0xddc] sm:$0xff]
  %v562 = vld [vmem:[%s1 + $0xde4] sm:$0xf]
  %v563 = vld [vmem:[%s1 + $0xde8] sm:$0xff]
  %v564 = vld [vmem:[%s1 + $0xdf0] sm:$0xff]
  %v565 = vld [vmem:[%s1 + $0xdf8] sm:$0xf]
  %v566 = vld [vmem:[%s1 + $0xdfc] sm:$0xff]
  %v567 = vld [vmem:[%s1 + $0xe04] sm:$0xff]
  %v568 = vld [vmem:[%s1 + $0xe0c] sm:$0xf]
  %v569 = vld [vmem:[%s1 + $0xe10] sm:$0xff]
  %v570 = vld [vmem:[%s1 + $0xe18] sm:$0xff]
  %v571 = vld [vmem:[%s1 + $0xe20] sm:$0xf]
  %v572 = vld [vmem:[%s1 + $0xe24] sm:$0xff]
  %v573 = vld [vmem:[%s1 + $0xe2c] sm:$0xff]
  %v574 = vld [vmem:[%s1 + $0xe34] sm:$0xf]
  %v575 = vld [vmem:[%s1 + $0xe38] sm:$0xff]
  %v576 = vld [vmem:[%s1 + $0xe40] sm:$0xff]
  %v577 = vld [vmem:[%s1 + $0xe48] sm:$0xf]
  %v578 = vld [vmem:[%s1 + $0xe4c] sm:$0xff]
  %v579 = vld [vmem:[%s1 + $0xe54] sm:$0xff]
  %v580 = vld [vmem:[%s1 + $0xe5c] sm:$0xf]
  %v581 = vld [vmem:[%s1 + $0xe60] sm:$0xff]
  %v582 = vld [vmem:[%s1 + $0xe68] sm:$0xff]
  %v583 = vld [vmem:[%s1 + $0xe70] sm:$0xf]
  %v584 = vld [vmem:[%s1 + $0xe74] sm:$0xff]
  %v585 = vld [vmem:[%s1 + $0xe7c] sm:$0xff]
  %v586 = vld [vmem:[%s1 + $0xe84] sm:$0xf]
  %v587 = vld [vmem:[%s1 + $0xe88] sm:$0xff]
  %v588 = vld [vmem:[%s1 + $0xe90] sm:$0xff]
  %v589 = vld [vmem:[%s1 + $0xe98] sm:$0xf]
  %v590 = vld [vmem:[%s1 + $0xe9c] sm:$0xff]
  %v591 = vld [vmem:[%s1 + $0xea4] sm:$0xff]
  %v592 = vld [vmem:[%s1 + $0xeac] sm:$0xf]
  %v593 = vld [vmem:[%s1 + $0xeb0] sm:$0xff]
  %v594 = vld [vmem:[%s1 + $0xeb8] sm:$0xff]
  %v595 = vld [vmem:[%s1 + $0xec0] sm:$0xf]
  %v596 = vld [vmem:[%s1 + $0xec4] sm:$0xff]
  %v597 = vld [vmem:[%s1 + $0xecc] sm:$0xff]
  %v598 = vld [vmem:[%s1 + $0xed4] sm:$0xf]
  %v599 = vld [vmem:[%s1 + $0xed8] sm:$0xff]
  %v600 = vld [vmem:[%s1 + $0xee0] sm:$0xff]
  %v601 = vld [vmem:[%s1 + $0xee8] sm:$0xf]
  %v602 = vld [vmem:[%s1 + $0xeec] sm:$0xff]
  %v603 = vld [vmem:[%s1 + $0xef4] sm:$0xff]
  %v604 = vld [vmem:[%s1 + $0xefc] sm:$0xf]
  %v605 = vld [vmem:[%s1 + $0xf00] sm:$0xff]
  %v606 = vld [vmem:[%s1 + $0xf08] sm:$0xff]
  %v607 = vld [vmem:[%s1 + $0xf10] sm:$0xf]
  %v608 = vld [vmem:[%s1 + $0xf14] sm:$0xff]
  %v609 = vld [vmem:[%s1 + $0xf1c] sm:$0xff]
  %v610 = vld [vmem:[%s1 + $0xf24] sm:$0xf]
  %v611 = vld [vmem:[%s1 + $0xf28] sm:$0xff]
  %v612 = vld [vmem:[%s1 + $0xf30] sm:$0xff]
  %v613 = vld [vmem:[%s1 + $0xf38] sm:$0xf]
  %v614 = vld [vmem:[%s1 + $0xf3c] sm:$0xff]
  %v615 = vld [vmem:[%s1 + $0xf44] sm:$0xff]
  %v616 = vld [vmem:[%s1 + $0xf4c] sm:$0xf]
  %v617 = vld [vmem:[%s1 + $0xf50] sm:$0xff]
  %v618 = vld [vmem:[%s1 + $0xf58] sm:$0xff]
  %v619 = vld [vmem:[%s1 + $0xf60] sm:$0xf]
  %v620 = vld [vmem:[%s1 + $0xf64] sm:$0xff]
  %v621 = vld [vmem:[%s1 + $0xf6c] sm:$0xff]
  %v622 = vld [vmem:[%s1 + $0xf74] sm:$0xf]
  %v623 = vld [vmem:[%s1 + $0xf78] sm:$0xff]
  %v624 = vld [vmem:[%s1 + $0xf80] sm:$0xff]
  %v625 = vld [vmem:[%s1 + $0xf88] sm:$0xf]
  %v626 = vld [vmem:[%s1 + $0xf8c] sm:$0xff]
  %v627 = vld [vmem:[%s1 + $0xf94] sm:$0xff]
  %v628 = vld [vmem:[%s1 + $0xf9c] sm:$0xf]
  %v629 = vld [vmem:[%s1 + $0xfa0] sm:$0xff]
  %v630 = vld [vmem:[%s1 + $0xfa8] sm:$0xff]
  %v631 = vld [vmem:[%s1 + $0xfb0] sm:$0xf]
  %v632 = vld [vmem:[%s1 + $0xfb4] sm:$0xff]
  %v633 = vld [vmem:[%s1 + $0xfbc] sm:$0xff]
  %v634 = vld [vmem:[%s1 + $0xfc4] sm:$0xf]
  %v635 = vld [vmem:[%s1 + $0xfc8] sm:$0xff]
  %v636 = vld [vmem:[%s1 + $0xfd0] sm:$0xff]
  %v637 = vld [vmem:[%s1 + $0xfd8] sm:$0xf]
  %v638 = vld [vmem:[%s1 + $0xfdc] sm:$0xff]
  %v639 = vld [vmem:[%s1 + $0xfe4] sm:$0xff]
  %v640 = vld [vmem:[%s1 + $0xfec] sm:$0xf]
  %v641 = vld [vmem:[%s1 + $0xff0] sm:$0xff]
  %v642 = vld [vmem:[%s1 + $0xff8] sm:$0xff]
  %v643 = vld [vmem:[%s1 + $0x1000] sm:$0xf]
  %v644 = vld [vmem:[%s1 + $0x1004] sm:$0xff]
  %v645 = vld [vmem:[%s1 + $0x100c] sm:$0xff]
  %v646 = vld [vmem:[%s1 + $0x1014] sm:$0xf]
  %v647 = vld [vmem:[%s1 + $0x1018] sm:$0xff]
  %v648 = vld [vmem:[%s1 + $0x1020] sm:$0xff]
  %v649 = vld [vmem:[%s1 + $0x1028] sm:$0xf]
  %v650 = vld [vmem:[%s1 + $0x102c] sm:$0xff]
  %v651 = vld [vmem:[%s1 + $0x1034] sm:$0xff]
  %v652 = vld [vmem:[%s1 + $0x103c] sm:$0xf]
  %v653 = vld [vmem:[%s1 + $0x1040] sm:$0xff]
  %v654 = vld [vmem:[%s1 + $0x1048] sm:$0xff]
  %v655 = vld [vmem:[%s1 + $0x1050] sm:$0xf]
  %v656 = vld [vmem:[%s1 + $0x1054] sm:$0xff]
  %v657 = vld [vmem:[%s1 + $0x105c] sm:$0xff]
  %v658 = vld [vmem:[%s1 + $0x1064] sm:$0xf]
  %v659 = vld [vmem:[%s1 + $0x1068] sm:$0xff]
  %v660 = vld [vmem:[%s1 + $0x1070] sm:$0xff]
  %v661 = vld [vmem:[%s1 + $0x1078] sm:$0xf]
  %v662 = vld [vmem:[%s1 + $0x107c] sm:$0xff]
  %v663 = vld [vmem:[%s1 + $0x1084] sm:$0xff]
  %v664 = vld [vmem:[%s1 + $0x108c] sm:$0xf]
  %v665 = vld [vmem:[%s1 + $0x1090] sm:$0xff]
  %v666 = vld [vmem:[%s1 + $0x1098] sm:$0xff]
  %v667 = vld [vmem:[%s1 + $0x10a0] sm:$0xf]
  %v668 = vld [vmem:[%s1 + $0x10a4] sm:$0xff]
  %v669 = vld [vmem:[%s1 + $0x10ac] sm:$0xff]
  %v670 = vld [vmem:[%s1 + $0x10b4] sm:$0xf]
  %v671 = vld [vmem:[%s1 + $0x10b8] sm:$0xff]
  %v672 = vld [vmem:[%s1 + $0x10c0] sm:$0xff]
  %v673 = vld [vmem:[%s1 + $0x10c8] sm:$0xf]
  %v674 = vld [vmem:[%s1 + $0x10cc] sm:$0xff]
  %v675 = vld [vmem:[%s1 + $0x10d4] sm:$0xff]
  %v676 = vld [vmem:[%s1 + $0x10dc] sm:$0xf]
  %v677 = vld [vmem:[%s1 + $0x10e0] sm:$0xff]
  %v678 = vld [vmem:[%s1 + $0x10e8] sm:$0xff]
  %v679 = vld [vmem:[%s1 + $0x10f0] sm:$0xf]
  %v680 = vld [vmem:[%s1 + $0x10f4] sm:$0xff]
  %v681 = vld [vmem:[%s1 + $0x10fc] sm:$0xff]
  %v682 = vld [vmem:[%s1 + $0x1104] sm:$0xf]
  %v683 = vld [vmem:[%s1 + $0x1108] sm:$0xff]
  %v684 = vld [vmem:[%s1 + $0x1110] sm:$0xff]
  %v685 = vld [vmem:[%s1 + $0x1118] sm:$0xf]
  %v686 = vld [vmem:[%s1 + $0x111c] sm:$0xff]
  %v687 = vld [vmem:[%s1 + $0x1124] sm:$0xff]
  %v688 = vld [vmem:[%s1 + $0x112c] sm:$0xf]
  %v689 = vld [vmem:[%s1 + $0x1130] sm:$0xff]
  %v690 = vld [vmem:[%s1 + $0x1138] sm:$0xff]
  %v691 = vld [vmem:[%s1 + $0x1140] sm:$0xf]
  %v692 = vld [vmem:[%s1 + $0x1144] sm:$0xff]
  %v693 = vld [vmem:[%s1 + $0x114c] sm:$0xff]
  %v694 = vld [vmem:[%s1 + $0x1154] sm:$0xf]
  %v695 = vld [vmem:[%s1 + $0x1158] sm:$0xff]
  %v696 = vld [vmem:[%s1 + $0x1160] sm:$0xff]
  %v697 = vld [vmem:[%s1 + $0x1168] sm:$0xf]
  %v698 = vld [vmem:[%s1 + $0x116c] sm:$0xff]
  %v699 = vld [vmem:[%s1 + $0x1174] sm:$0xff]
  %v700 = vld [vmem:[%s1 + $0x117c] sm:$0xf]
  %v701 = vld [vmem:[%s1 + $0x1180] sm:$0xff]
  %v702 = vld [vmem:[%s1 + $0x1188] sm:$0xff]
  %v703 = vld [vmem:[%s1 + $0x1190] sm:$0xf]
  %v704 = vld [vmem:[%s1 + $0x1194] sm:$0xff]
  %v705 = vld [vmem:[%s1 + $0x119c] sm:$0xff]
  %v706 = vld [vmem:[%s1 + $0x11a4] sm:$0xf]
  %v707 = vld [vmem:[%s1 + $0x11a8] sm:$0xff]
  %v708 = vld [vmem:[%s1 + $0x11b0] sm:$0xff]
  %v709 = vld [vmem:[%s1 + $0x11b8] sm:$0xf]
  %v710 = vld [vmem:[%s1 + $0x11bc] sm:$0xff]
  %v711 = vld [vmem:[%s1 + $0x11c4] sm:$0xff]
  %v712 = vld [vmem:[%s1 + $0x11cc] sm:$0xf]
  %v713 = vld [vmem:[%s1 + $0x11d0] sm:$0xff]
  %v714 = vld [vmem:[%s1 + $0x11d8] sm:$0xff]
  %v715 = vld [vmem:[%s1 + $0x11e0] sm:$0xf]
  %v716 = vld [vmem:[%s1 + $0x11e4] sm:$0xff]
  %v717 = vld [vmem:[%s1 + $0x11ec] sm:$0xff]
  %v718 = vld [vmem:[%s1 + $0x11f4] sm:$0xf]
  %v719 = vld [vmem:[%s1 + $0x11f8] sm:$0xff]
  %v720 = vld [vmem:[%s1 + $0x1200] sm:$0xff]
  %v721 = vld [vmem:[%s1 + $0x1208] sm:$0xf]
  %v722 = vld [vmem:[%s1 + $0x120c] sm:$0xff]
  %v723 = vld [vmem:[%s1 + $0x1214] sm:$0xff]
  %v724 = vld [vmem:[%s1 + $0x121c] sm:$0xf]
  %v725 = vld [vmem:[%s1 + $0x1220] sm:$0xff]
  %v726 = vld [vmem:[%s1 + $0x1228] sm:$0xff]
  %v727 = vld [vmem:[%s1 + $0x1230] sm:$0xf]
  %v728 = vld [vmem:[%s1 + $0x1234] sm:$0xff]
  %v729 = vld [vmem:[%s1 + $0x123c] sm:$0xff]
  %v730 = vld [vmem:[%s1 + $0x1244] sm:$0xf]
  %v731 = vld [vmem:[%s1 + $0x1248] sm:$0xff]
  %v732 = vld [vmem:[%s1 + $0x1250] sm:$0xff]
  %v733 = vld [vmem:[%s1 + $0x1258] sm:$0xf]
  %v734 = vld [vmem:[%s1 + $0x125c] sm:$0xff]
  %v735 = vld [vmem:[%s1 + $0x1264] sm:$0xff]
  %v736 = vld [vmem:[%s1 + $0x126c] sm:$0xf]
  %v737 = vld [vmem:[%s1 + $0x1270] sm:$0xff]
  %v738 = vld [vmem:[%s1 + $0x1278] sm:$0xff]
  %v739 = vld [vmem:[%s1 + $0x1280] sm:$0xf]
  %v740 = vld [vmem:[%s1 + $0x1284] sm:$0xff]
  %v741 = vld [vmem:[%s1 + $0x128c] sm:$0xff]
  %v742 = vld [vmem:[%s1 + $0x1294] sm:$0xf]
  %v743 = vld [vmem:[%s1 + $0x1298] sm:$0xff]
  %v744 = vld [vmem:[%s1 + $0x12a0] sm:$0xff]
  %v745 = vld [vmem:[%s1 + $0x12a8] sm:$0xf]
  %v746 = vld [vmem:[%s1 + $0x12ac] sm:$0xff]
  %v747 = vld [vmem:[%s1 + $0x12b4] sm:$0xff]
  %v748 = vld [vmem:[%s1 + $0x12bc] sm:$0xf]
  %v749 = vld [vmem:[%s1 + $0x12c0] sm:$0xff]
  %v750 = vld [vmem:[%s1 + $0x12c8] sm:$0xff]
  %v751 = vld [vmem:[%s1 + $0x12d0] sm:$0xf]
  %v752 = vld [vmem:[%s1 + $0x12d4] sm:$0xff]
  %v753 = vld [vmem:[%s1 + $0x12dc] sm:$0xff]
  %v754 = vld [vmem:[%s1 + $0x12e4] sm:$0xf]
  %v755 = vld [vmem:[%s1 + $0x12e8] sm:$0xff]
  %v756 = vld [vmem:[%s1 + $0x12f0] sm:$0xff]
  %v757 = vld [vmem:[%s1 + $0x12f8] sm:$0xf]
  %v758 = vld [vmem:[%s1 + $0x12fc] sm:$0xff]
  %v759 = vld [vmem:[%s1 + $0x1304] sm:$0xff]
  %v760 = vld [vmem:[%s1 + $0x130c] sm:$0xf]
  %v761 = vld [vmem:[%s1 + $0x1310] sm:$0xff]
  %v762 = vld [vmem:[%s1 + $0x1318] sm:$0xff]
  %v763 = vld [vmem:[%s1 + $0x1320] sm:$0xf]
  %v764 = vld [vmem:[%s1 + $0x1324] sm:$0xff]
  %v765 = vld [vmem:[%s1 + $0x132c] sm:$0xff]
  %v766 = vld [vmem:[%s1 + $0x1334] sm:$0xf]
  %v767 = vld [vmem:[%s1 + $0x1338] sm:$0xff]
  %v768 = vld [vmem:[%s1 + $0x1340] sm:$0xff]
  %v769 = vld [vmem:[%s1 + $0x1348] sm:$0xf]
  %v770 = vld [vmem:[%s1 + $0x134c] sm:$0xff]
  %v771 = vld [vmem:[%s1 + $0x1354] sm:$0xff]
  %v772 = vld [vmem:[%s1 + $0x135c] sm:$0xf]
  %v773 = vld [vmem:[%s1 + $0x1360] sm:$0xff]
  %v774 = vld [vmem:[%s1 + $0x1368] sm:$0xff]
  %v775 = vld [vmem:[%s1 + $0x1370] sm:$0xf]
  %v776 = vld [vmem:[%s1 + $0x1374] sm:$0xff]
  %v777 = vld [vmem:[%s1 + $0x137c] sm:$0xff]
  %v778 = vld [vmem:[%s1 + $0x1384] sm:$0xf]
  %v779 = vld [vmem:[%s1 + $0x1388] sm:$0xff]
  %v780 = vld [vmem:[%s1 + $0x1390] sm:$0xff]
  %v781 = vld [vmem:[%s1 + $0x1398] sm:$0xf]
  %v782 = vld [vmem:[%s1 + $0x139c] sm:$0xff]
  %v783 = vld [vmem:[%s1 + $0x13a4] sm:$0xff]
  %v784 = vld [vmem:[%s1 + $0x13ac] sm:$0xf]
  %v785 = vld [vmem:[%s1 + $0x13b0] sm:$0xff]
  %v786 = vld [vmem:[%s1 + $0x13b8] sm:$0xff]
  %v787 = vld [vmem:[%s1 + $0x13c0] sm:$0xf]
  %v788 = vld [vmem:[%s1 + $0x13c4] sm:$0xff]
  %v789 = vld [vmem:[%s1 + $0x13cc] sm:$0xff]
  %v790 = vld [vmem:[%s1 + $0x13d4] sm:$0xf]
  %v791 = vld [vmem:[%s1 + $0x13d8] sm:$0xff]
  %v792 = vld [vmem:[%s1 + $0x13e0] sm:$0xff]
  %v793 = vld [vmem:[%s1 + $0x13e8] sm:$0xf]
  %v794 = vld [vmem:[%s1 + $0x13ec] sm:$0xff]
  %v795 = vld [vmem:[%s1 + $0x13f4] sm:$0xff]
  %v796 = vld [vmem:[%s1 + $0x13fc] sm:$0xf]
  %v797 = vld [vmem:[%s2] sm:$0x1f]
  %v799 = vlaneseq
  %v800 = vshrl.u32 %v799, 7
  %v801 = vsub.s32 0, %v800
  %v802 = vrot.slane %v797, %v801
  %v803 = vlaneseq
  %v804 = vshrl.u32 %v803, 7
  %v805 = vsub.s32 1, %v804
  %v806 = vrot.slane %v797, %v805
  %v807 = vlaneseq
  %v808 = vshrl.u32 %v807, 7
  %v809 = vsub.s32 2, %v808
  %v810 = vrot.slane %v797, %v809
  %v811 = vlaneseq
  %v812 = vshrl.u32 %v811, 7
  %v813 = vsub.s32 3, %v812
  %v814 = vrot.slane %v797, %v813
  %v815 = vlaneseq
  %v816 = vshrl.u32 %v815, 7
  %v817 = vsub.s32 4, %v816
  %v818 = vrot.slane %v797, %v817
  %v832 = vunpack.c.l.b16 %v21
  %v833 = vunpack.c.h.b16 %v21
  %v834 = vunpack.c.l.b16 %v22
  %v835 = vunpack.c.h.b16 %v22
  %v836 = vunpack.c.l.b16 %v23
  %v837 = vunpack.c.h.b16 %v23
  %v838 = vunpack.c.l.b16 %v24
  %v839 = vunpack.c.h.b16 %v24
  %v840 = vunpack.c.l.b16 %v25
  %v841 = vunpack.c.h.b16 %v25
  %v842 = vunpack.c.l.b16 %v26
  %v843 = vunpack.c.h.b16 %v26
  %v844 = vunpack.c.l.b16 %v27
  %v845 = vunpack.c.h.b16 %v27
  %v846 = vunpack.c.l.b16 %v28
  %v847 = vunpack.c.h.b16 %v28
  %v848 = vpack.c.b16 %v832, %v832
  %v849 = vpack.c.b16 %v833, %v833
  %v850 = vpack.c.b16 %v834, %v834
  %v851 = vpack.c.b16 %v835, %v835
  %v852 = vpack.c.b16 %v836, %v836
  %v853 = vpack.c.b16 %v837, %v837
  %v854 = vpack.c.b16 %v838, %v838
  %v855 = vpack.c.b16 %v839, %v839
  %v856 = vpack.c.b16 %v840, %v840
  %v857 = vpack.c.b16 %v841, %v841
  %v858 = vpack.c.b16 %v842, %v842
  %v859 = vpack.c.b16 %v843, %v843
  %v860 = vpack.c.b16 %v844, %v844
  %v861 = vpack.c.b16 %v845, %v845
  %v862 = vpack.c.b16 %v846, %v846
  %v863 = vpack.c.b16 %v847, %v847
  %v1648 = vunpack.c.l.b16 %v29
  %v1649 = vunpack.c.h.b16 %v29
  %v1650 = vunpack.c.l.b16 %v30
  %v1651 = vunpack.c.h.b16 %v30
  %v1652 = vunpack.c.l.b16 %v31
  %v1653 = vunpack.c.l.b16 %v32
  %v1654 = vunpack.c.h.b16 %v32
  %v1655 = vunpack.c.l.b16 %v33
  %v1656 = vunpack.c.h.b16 %v33
  %v1657 = vunpack.c.l.b16 %v34
  %v1658 = vunpack.c.l.b16 %v35
  %v1659 = vunpack.c.h.b16 %v35
  %v1660 = vunpack.c.l.b16 %v36
  %v1661 = vunpack.c.h.b16 %v36
  %v1662 = vunpack.c.l.b16 %v37
  %v1663 = vunpack.c.l.b16 %v38
  %v1664 = vunpack.c.h.b16 %v38
  %v1665 = vunpack.c.l.b16 %v39
  %v1666 = vunpack.c.h.b16 %v39
  %v1667 = vunpack.c.l.b16 %v40
  %v1668 = vunpack.c.l.b16 %v41
  %v1669 = vunpack.c.h.b16 %v41
  %v1670 = vunpack.c.l.b16 %v42
  %v1671 = vunpack.c.h.b16 %v42
  %v1672 = vunpack.c.l.b16 %v43
  %v1673 = vunpack.c.l.b16 %v44
  %v1674 = vunpack.c.h.b16 %v44
  %v1675 = vunpack.c.l.b16 %v45
  %v1676 = vunpack.c.h.b16 %v45
  %v1677 = vunpack.c.l.b16 %v46
  %v1678 = vunpack.c.l.b16 %v47
  %v1679 = vunpack.c.h.b16 %v47
  %v1680 = vunpack.c.l.b16 %v48
  %v1681 = vunpack.c.h.b16 %v48
  %v1682 = vunpack.c.l.b16 %v49
  %v1683 = vunpack.c.l.b16 %v50
  %v1684 = vunpack.c.h.b16 %v50
  %v1685 = vunpack.c.l.b16 %v51
  %v1686 = vunpack.c.h.b16 %v51
  %v1687 = vunpack.c.l.b16 %v52
  %v1688 = vunpack.c.l.b16 %v53
  %v1689 = vunpack.c.h.b16 %v53
  %v1690 = vunpack.c.l.b16 %v54
  %v1691 = vunpack.c.h.b16 %v54
  %v1692 = vunpack.c.l.b16 %v55
  %v1693 = vunpack.c.l.b16 %v56
  %v1694 = vunpack.c.h.b16 %v56
  %v1695 = vunpack.c.l.b16 %v57
  %v1696 = vunpack.c.h.b16 %v57
  %v1697 = vunpack.c.l.b16 %v58
  %v1698 = vunpack.c.l.b16 %v59
  %v1699 = vunpack.c.h.b16 %v59
  %v1700 = vunpack.c.l.b16 %v60
  %v1701 = vunpack.c.h.b16 %v60
  %v1702 = vunpack.c.l.b16 %v61
  %v1703 = vunpack.c.l.b16 %v62
  %v1704 = vunpack.c.h.b16 %v62
  %v1705 = vunpack.c.l.b16 %v63
  %v1706 = vunpack.c.h.b16 %v63
  %v1707 = vunpack.c.l.b16 %v64
  %v1708 = vunpack.c.l.b16 %v65
  %v1709 = vunpack.c.h.b16 %v65
  %v1710 = vunpack.c.l.b16 %v66
  %v1711 = vunpack.c.h.b16 %v66
  %v1712 = vunpack.c.l.b16 %v67
  %v1713 = vunpack.c.l.b16 %v68
  %v1714 = vunpack.c.h.b16 %v68
  %v1715 = vunpack.c.l.b16 %v69
  %v1716 = vunpack.c.h.b16 %v69
  %v1717 = vunpack.c.l.b16 %v70
  %v1718 = vunpack.c.l.b16 %v71
  %v1719 = vunpack.c.h.b16 %v71
  %v1720 = vunpack.c.l.b16 %v72
  %v1721 = vunpack.c.h.b16 %v72
  %v1722 = vunpack.c.l.b16 %v73
  %v1723 = vunpack.c.l.b16 %v74
  %v1724 = vunpack.c.h.b16 %v74
  %v1725 = vunpack.c.l.b16 %v75
  %v1726 = vunpack.c.h.b16 %v75
  %v1727 = vunpack.c.l.b16 %v76
  %v1728 = vunpack.c.l.b16 %v77
  %v1729 = vunpack.c.h.b16 %v77
  %v1730 = vunpack.c.l.b16 %v78
  %v1731 = vunpack.c.h.b16 %v78
  %v1732 = vunpack.c.l.b16 %v79
  %v1733 = vunpack.c.l.b16 %v80
  %v1734 = vunpack.c.h.b16 %v80
  %v1735 = vunpack.c.l.b16 %v81
  %v1736 = vunpack.c.h.b16 %v81
  %v1737 = vunpack.c.l.b16 %v82
  %v1738 = vunpack.c.l.b16 %v83
  %v1739 = vunpack.c.h.b16 %v83
  %v1740 = vunpack.c.l.b16 %v84
  %v1741 = vunpack.c.h.b16 %v84
  %v1742 = vunpack.c.l.b16 %v85
  %v1743 = vunpack.c.l.b16 %v86
  %v1744 = vunpack.c.h.b16 %v86
  %v1745 = vunpack.c.l.b16 %v87
  %v1746 = vunpack.c.h.b16 %v87
  %v1747 = vunpack.c.l.b16 %v88
  %v1748 = vunpack.c.l.b16 %v89
  %v1749 = vunpack.c.h.b16 %v89
  %v1750 = vunpack.c.l.b16 %v90
  %v1751 = vunpack.c.h.b16 %v90
  %v1752 = vunpack.c.l.b16 %v91
  %v1753 = vunpack.c.l.b16 %v92
  %v1754 = vunpack.c.h.b16 %v92
  %v1755 = vunpack.c.l.b16 %v93
  %v1756 = vunpack.c.h.b16 %v93
  %v1757 = vunpack.c.l.b16 %v94
  %v1758 = vunpack.c.l.b16 %v95
  %v1759 = vunpack.c.h.b16 %v95
  %v1760 = vunpack.c.l.b16 %v96
  %v1761 = vunpack.c.h.b16 %v96
  %v1762 = vunpack.c.l.b16 %v97
  %v1763 = vunpack.c.l.b16 %v98
  %v1764 = vunpack.c.h.b16 %v98
  %v1765 = vunpack.c.l.b16 %v99
  %v1766 = vunpack.c.h.b16 %v99
  %v1767 = vunpack.c.l.b16 %v100
  %v1768 = vunpack.c.l.b16 %v101
  %v1769 = vunpack.c.h.b16 %v101
  %v1770 = vunpack.c.l.b16 %v102
  %v1771 = vunpack.c.h.b16 %v102
  %v1772 = vunpack.c.l.b16 %v103
  %v1773 = vunpack.c.l.b16 %v104
  %v1774 = vunpack.c.h.b16 %v104
  %v1775 = vunpack.c.l.b16 %v105
  %v1776 = vunpack.c.h.b16 %v105
  %v1777 = vunpack.c.l.b16 %v106
  %v1778 = vunpack.c.l.b16 %v107
  %v1779 = vunpack.c.h.b16 %v107
  %v1780 = vunpack.c.l.b16 %v108
  %v1781 = vunpack.c.h.b16 %v108
  %v1782 = vunpack.c.l.b16 %v109
  %v1783 = vunpack.c.l.b16 %v110
  %v1784 = vunpack.c.h.b16 %v110
  %v1785 = vunpack.c.l.b16 %v111
  %v1786 = vunpack.c.h.b16 %v111
  %v1787 = vunpack.c.l.b16 %v112
  %v1788 = vunpack.c.l.b16 %v113
  %v1789 = vunpack.c.h.b16 %v113
  %v1790 = vunpack.c.l.b16 %v114
  %v1791 = vunpack.c.h.b16 %v114
  %v1792 = vunpack.c.l.b16 %v115
  %v1793 = vunpack.c.l.b16 %v116
  %v1794 = vunpack.c.h.b16 %v116
  %v1795 = vunpack.c.l.b16 %v117
  %v1796 = vunpack.c.h.b16 %v117
  %v1797 = vunpack.c.l.b16 %v118
  %v1798 = vunpack.c.l.b16 %v119
  %v1799 = vunpack.c.h.b16 %v119
  %v1800 = vunpack.c.l.b16 %v120
  %v1801 = vunpack.c.h.b16 %v120
  %v1802 = vunpack.c.l.b16 %v121
  %v1803 = vunpack.c.l.b16 %v122
  %v1804 = vunpack.c.h.b16 %v122
  %v1805 = vunpack.c.l.b16 %v123
  %v1806 = vunpack.c.h.b16 %v123
  %v1807 = vunpack.c.l.b16 %v124
  %v1808 = vunpack.c.l.b16 %v125
  %v1809 = vunpack.c.h.b16 %v125
  %v1810 = vunpack.c.l.b16 %v126
  %v1811 = vunpack.c.h.b16 %v126
  %v1812 = vunpack.c.l.b16 %v127
  %v1813 = vunpack.c.l.b16 %v128
  %v1814 = vunpack.c.h.b16 %v128
  %v1815 = vunpack.c.l.b16 %v129
  %v1816 = vunpack.c.h.b16 %v129
  %v1817 = vunpack.c.l.b16 %v130
  %v1818 = vunpack.c.l.b16 %v131
  %v1819 = vunpack.c.h.b16 %v131
  %v1820 = vunpack.c.l.b16 %v132
  %v1821 = vunpack.c.h.b16 %v132
  %v1822 = vunpack.c.l.b16 %v133
  %v1823 = vunpack.c.l.b16 %v134
  %v1824 = vunpack.c.h.b16 %v134
  %v1825 = vunpack.c.l.b16 %v135
  %v1826 = vunpack.c.h.b16 %v135
  %v1827 = vunpack.c.l.b16 %v136
  %v1828 = vunpack.c.l.b16 %v137
  %v1829 = vunpack.c.h.b16 %v137
  %v1830 = vunpack.c.l.b16 %v138
  %v1831 = vunpack.c.h.b16 %v138
  %v1832 = vunpack.c.l.b16 %v139
  %v1833 = vunpack.c.l.b16 %v140
  %v1834 = vunpack.c.h.b16 %v140
  %v1835 = vunpack.c.l.b16 %v141
  %v1836 = vunpack.c.h.b16 %v141
  %v1837 = vunpack.c.l.b16 %v142
  %v1838 = vunpack.c.l.b16 %v143
  %v1839 = vunpack.c.h.b16 %v143
  %v1840 = vunpack.c.l.b16 %v144
  %v1841 = vunpack.c.h.b16 %v144
  %v1842 = vunpack.c.l.b16 %v145
  %v1843 = vunpack.c.l.b16 %v146
  %v1844 = vunpack.c.h.b16 %v146
  %v1845 = vunpack.c.l.b16 %v147
  %v1846 = vunpack.c.h.b16 %v147
  %v1847 = vunpack.c.l.b16 %v148
  %v1848 = vunpack.c.l.b16 %v149
  %v1849 = vunpack.c.h.b16 %v149
  %v1850 = vunpack.c.l.b16 %v150
  %v1851 = vunpack.c.h.b16 %v150
  %v1852 = vunpack.c.l.b16 %v151
  %v1853 = vunpack.c.l.b16 %v152
  %v1854 = vunpack.c.h.b16 %v152
  %v1855 = vunpack.c.l.b16 %v153
  %v1856 = vunpack.c.h.b16 %v153
  %v1857 = vunpack.c.l.b16 %v154
  %v1858 = vunpack.c.l.b16 %v155
  %v1859 = vunpack.c.h.b16 %v155
  %v1860 = vunpack.c.l.b16 %v156
  %v1861 = vunpack.c.h.b16 %v156
  %v1862 = vunpack.c.l.b16 %v157
  %v1863 = vunpack.c.l.b16 %v158
  %v1864 = vunpack.c.h.b16 %v158
  %v1865 = vunpack.c.l.b16 %v159
  %v1866 = vunpack.c.h.b16 %v159
  %v1867 = vunpack.c.l.b16 %v160
  %v1868 = vunpack.c.l.b16 %v161
  %v1869 = vunpack.c.h.b16 %v161
  %v1870 = vunpack.c.l.b16 %v162
  %v1871 = vunpack.c.h.b16 %v162
  %v1872 = vunpack.c.l.b16 %v163
  %v1873 = vunpack.c.l.b16 %v164
  %v1874 = vunpack.c.h.b16 %v164
  %v1875 = vunpack.c.l.b16 %v165
  %v1876 = vunpack.c.h.b16 %v165
  %v1877 = vunpack.c.l.b16 %v166
  %v1878 = vunpack.c.l.b16 %v167
  %v1879 = vunpack.c.h.b16 %v167
  %v1880 = vunpack.c.l.b16 %v168
  %v1881 = vunpack.c.h.b16 %v168
  %v1882 = vunpack.c.l.b16 %v169
  %v1883 = vunpack.c.l.b16 %v170
  %v1884 = vunpack.c.h.b16 %v170
  %v1885 = vunpack.c.l.b16 %v171
  %v1886 = vunpack.c.h.b16 %v171
  %v1887 = vunpack.c.l.b16 %v172
  %v1888 = vunpack.c.l.b16 %v173
  %v1889 = vunpack.c.h.b16 %v173
  %v1890 = vunpack.c.l.b16 %v174
  %v1891 = vunpack.c.h.b16 %v174
  %v1892 = vunpack.c.l.b16 %v175
  %v1893 = vunpack.c.l.b16 %v176
  %v1894 = vunpack.c.h.b16 %v176
  %v1895 = vunpack.c.l.b16 %v177
  %v1896 = vunpack.c.h.b16 %v177
  %v1897 = vunpack.c.l.b16 %v178
  %v1898 = vunpack.c.l.b16 %v179
  %v1899 = vunpack.c.h.b16 %v179
  %v1900 = vunpack.c.l.b16 %v180
  %v1901 = vunpack.c.h.b16 %v180
  %v1902 = vunpack.c.l.b16 %v181
  %v1903 = vunpack.c.l.b16 %v182
  %v1904 = vunpack.c.h.b16 %v182
  %v1905 = vunpack.c.l.b16 %v183
  %v1906 = vunpack.c.h.b16 %v183
  %v1907 = vunpack.c.l.b16 %v184
  %v1908 = vunpack.c.l.b16 %v185
  %v1909 = vunpack.c.h.b16 %v185
  %v1910 = vunpack.c.l.b16 %v186
  %v1911 = vunpack.c.h.b16 %v186
  %v1912 = vunpack.c.l.b16 %v187
  %v1913 = vunpack.c.l.b16 %v188
  %v1914 = vunpack.c.h.b16 %v188
  %v1915 = vunpack.c.l.b16 %v189
  %v1916 = vunpack.c.h.b16 %v189
  %v1917 = vunpack.c.l.b16 %v190
  %v1918 = vunpack.c.l.b16 %v191
  %v1919 = vunpack.c.h.b16 %v191
  %v1920 = vunpack.c.l.b16 %v192
  %v1921 = vunpack.c.h.b16 %v192
  %v1922 = vunpack.c.l.b16 %v193
  %v1923 = vunpack.c.l.b16 %v194
  %v1924 = vunpack.c.h.b16 %v194
  %v1925 = vunpack.c.l.b16 %v195
  %v1926 = vunpack.c.h.b16 %v195
  %v1927 = vunpack.c.l.b16 %v196
  %v1928 = vunpack.c.l.b16 %v197
  %v1929 = vunpack.c.h.b16 %v197
  %v1930 = vunpack.c.l.b16 %v198
  %v1931 = vunpack.c.h.b16 %v198
  %v1932 = vunpack.c.l.b16 %v199
  %v1933 = vunpack.c.l.b16 %v200
  %v1934 = vunpack.c.h.b16 %v200
  %v1935 = vunpack.c.l.b16 %v201
  %v1936 = vunpack.c.h.b16 %v201
  %v1937 = vunpack.c.l.b16 %v202
  %v1938 = vunpack.c.l.b16 %v203
  %v1939 = vunpack.c.h.b16 %v203
  %v1940 = vunpack.c.l.b16 %v204
  %v1941 = vunpack.c.h.b16 %v204
  %v1942 = vunpack.c.l.b16 %v205
  %v1943 = vunpack.c.l.b16 %v206
  %v1944 = vunpack.c.h.b16 %v206
  %v1945 = vunpack.c.l.b16 %v207
  %v1946 = vunpack.c.h.b16 %v207
  %v1947 = vunpack.c.l.b16 %v208
  %v1948 = vunpack.c.l.b16 %v209
  %v1949 = vunpack.c.h.b16 %v209
  %v1950 = vunpack.c.l.b16 %v210
  %v1951 = vunpack.c.h.b16 %v210
  %v1952 = vunpack.c.l.b16 %v211
  %v1953 = vunpack.c.l.b16 %v212
  %v1954 = vunpack.c.h.b16 %v212
  %v1955 = vunpack.c.l.b16 %v213
  %v1956 = vunpack.c.h.b16 %v213
  %v1957 = vunpack.c.l.b16 %v214
  %v1958 = vunpack.c.l.b16 %v215
  %v1959 = vunpack.c.h.b16 %v215
  %v1960 = vunpack.c.l.b16 %v216
  %v1961 = vunpack.c.h.b16 %v216
  %v1962 = vunpack.c.l.b16 %v217
  %v1963 = vunpack.c.l.b16 %v218
  %v1964 = vunpack.c.h.b16 %v218
  %v1965 = vunpack.c.l.b16 %v219
  %v1966 = vunpack.c.h.b16 %v219
  %v1967 = vunpack.c.l.b16 %v220
  %v1968 = vunpack.c.l.b16 %v221
  %v1969 = vunpack.c.h.b16 %v221
  %v1970 = vunpack.c.l.b16 %v222
  %v1971 = vunpack.c.h.b16 %v222
  %v1972 = vunpack.c.l.b16 %v223
  %v1973 = vunpack.c.l.b16 %v224
  %v1974 = vunpack.c.h.b16 %v224
  %v1975 = vunpack.c.l.b16 %v225
  %v1976 = vunpack.c.h.b16 %v225
  %v1977 = vunpack.c.l.b16 %v226
  %v1978 = vunpack.c.l.b16 %v227
  %v1979 = vunpack.c.h.b16 %v227
  %v1980 = vunpack.c.l.b16 %v228
  %v1981 = vunpack.c.h.b16 %v228
  %v1982 = vunpack.c.l.b16 %v229
  %v1983 = vunpack.c.l.b16 %v230
  %v1984 = vunpack.c.h.b16 %v230
  %v1985 = vunpack.c.l.b16 %v231
  %v1986 = vunpack.c.h.b16 %v231
  %v1987 = vunpack.c.l.b16 %v232
  %v1988 = vunpack.c.l.b16 %v233
  %v1989 = vunpack.c.h.b16 %v233
  %v1990 = vunpack.c.l.b16 %v234
  %v1991 = vunpack.c.h.b16 %v234
  %v1992 = vunpack.c.l.b16 %v235
  %v1993 = vunpack.c.l.b16 %v236
  %v1994 = vunpack.c.h.b16 %v236
  %v1995 = vunpack.c.l.b16 %v237
  %v1996 = vunpack.c.h.b16 %v237
  %v1997 = vunpack.c.l.b16 %v238
  %v1998 = vunpack.c.l.b16 %v239
  %v1999 = vunpack.c.h.b16 %v239
  %v2000 = vunpack.c.l.b16 %v240
  %v2001 = vunpack.c.h.b16 %v240
  %v2002 = vunpack.c.l.b16 %v241
  %v2003 = vunpack.c.l.b16 %v242
  %v2004 = vunpack.c.h.b16 %v242
  %v2005 = vunpack.c.l.b16 %v243
  %v2006 = vunpack.c.h.b16 %v243
  %v2007 = vunpack.c.l.b16 %v244
  %v2008 = vunpack.c.l.b16 %v245
  %v2009 = vunpack.c.h.b16 %v245
  %v2010 = vunpack.c.l.b16 %v246
  %v2011 = vunpack.c.h.b16 %v246
  %v2012 = vunpack.c.l.b16 %v247
  %v2013 = vunpack.c.l.b16 %v248
  %v2014 = vunpack.c.h.b16 %v248
  %v2015 = vunpack.c.l.b16 %v249
  %v2016 = vunpack.c.h.b16 %v249
  %v2017 = vunpack.c.l.b16 %v250
  %v2018 = vunpack.c.l.b16 %v251
  %v2019 = vunpack.c.h.b16 %v251
  %v2020 = vunpack.c.l.b16 %v252
  %v2021 = vunpack.c.h.b16 %v252
  %v2022 = vunpack.c.l.b16 %v253
  %v2023 = vunpack.c.l.b16 %v254
  %v2024 = vunpack.c.h.b16 %v254
  %v2025 = vunpack.c.l.b16 %v255
  %v2026 = vunpack.c.h.b16 %v255
  %v2027 = vunpack.c.l.b16 %v256
  %v2028 = vunpack.c.l.b16 %v257
  %v2029 = vunpack.c.h.b16 %v257
  %v2030 = vunpack.c.l.b16 %v258
  %v2031 = vunpack.c.h.b16 %v258
  %v2032 = vunpack.c.l.b16 %v259
  %v2033 = vunpack.c.l.b16 %v260
  %v2034 = vunpack.c.h.b16 %v260
  %v2035 = vunpack.c.l.b16 %v261
  %v2036 = vunpack.c.h.b16 %v261
  %v2037 = vunpack.c.l.b16 %v262
  %v2038 = vunpack.c.l.b16 %v263
  %v2039 = vunpack.c.h.b16 %v263
  %v2040 = vunpack.c.l.b16 %v264
  %v2041 = vunpack.c.h.b16 %v264
  %v2042 = vunpack.c.l.b16 %v265
  %v2043 = vunpack.c.l.b16 %v266
  %v2044 = vunpack.c.h.b16 %v266
  %v2045 = vunpack.c.l.b16 %v267
  %v2046 = vunpack.c.h.b16 %v267
  %v2047 = vunpack.c.l.b16 %v268
  %v2048 = vunpack.c.l.b16 %v269
  %v2049 = vunpack.c.h.b16 %v269
  %v2050 = vunpack.c.l.b16 %v270
  %v2051 = vunpack.c.h.b16 %v270
  %v2052 = vunpack.c.l.b16 %v271
  %v2053 = vunpack.c.l.b16 %v272
  %v2054 = vunpack.c.h.b16 %v272
  %v2055 = vunpack.c.l.b16 %v273
  %v2056 = vunpack.c.h.b16 %v273
  %v2057 = vunpack.c.l.b16 %v274
  %v2058 = vunpack.c.l.b16 %v275
  %v2059 = vunpack.c.h.b16 %v275
  %v2060 = vunpack.c.l.b16 %v276
  %v2061 = vunpack.c.h.b16 %v276
  %v2062 = vunpack.c.l.b16 %v277
  %v2063 = vunpack.c.l.b16 %v278
  %v2064 = vunpack.c.h.b16 %v278
  %v2065 = vunpack.c.l.b16 %v279
  %v2066 = vunpack.c.h.b16 %v279
  %v2067 = vunpack.c.l.b16 %v280
  %v2068 = vunpack.c.l.b16 %v281
  %v2069 = vunpack.c.h.b16 %v281
  %v2070 = vunpack.c.l.b16 %v282
  %v2071 = vunpack.c.h.b16 %v282
  %v2072 = vunpack.c.l.b16 %v283
  %v2073 = vunpack.c.l.b16 %v284
  %v2074 = vunpack.c.h.b16 %v284
  %v2075 = vunpack.c.l.b16 %v285
  %v2076 = vunpack.c.h.b16 %v285
  %v2077 = vunpack.c.l.b16 %v286
  %v2078 = vunpack.c.l.b16 %v287
  %v2079 = vunpack.c.h.b16 %v287
  %v2080 = vunpack.c.l.b16 %v288
  %v2081 = vunpack.c.h.b16 %v288
  %v2082 = vunpack.c.l.b16 %v289
  %v2083 = vunpack.c.l.b16 %v290
  %v2084 = vunpack.c.h.b16 %v290
  %v2085 = vunpack.c.l.b16 %v291
  %v2086 = vunpack.c.h.b16 %v291
  %v2087 = vunpack.c.l.b16 %v292
  %v2088 = vunpack.c.l.b16 %v293
  %v2089 = vunpack.c.h.b16 %v293
  %v2090 = vunpack.c.l.b16 %v294
  %v2091 = vunpack.c.h.b16 %v294
  %v2092 = vunpack.c.l.b16 %v295
  %v2093 = vunpack.c.l.b16 %v296
  %v2094 = vunpack.c.h.b16 %v296
  %v2095 = vunpack.c.l.b16 %v297
  %v2096 = vunpack.c.h.b16 %v297
  %v2097 = vunpack.c.l.b16 %v298
  %v2098 = vunpack.c.l.b16 %v299
  %v2099 = vunpack.c.h.b16 %v299
  %v2100 = vunpack.c.l.b16 %v300
  %v2101 = vunpack.c.h.b16 %v300
  %v2102 = vunpack.c.l.b16 %v301
  %v2103 = vunpack.c.l.b16 %v302
  %v2104 = vunpack.c.h.b16 %v302
  %v2105 = vunpack.c.l.b16 %v303
  %v2106 = vunpack.c.h.b16 %v303
  %v2107 = vunpack.c.l.b16 %v304
  %v2108 = vunpack.c.l.b16 %v305
  %v2109 = vunpack.c.h.b16 %v305
  %v2110 = vunpack.c.l.b16 %v306
  %v2111 = vunpack.c.h.b16 %v306
  %v2112 = vunpack.c.l.b16 %v307
  %v2113 = vunpack.c.l.b16 %v308
  %v2114 = vunpack.c.h.b16 %v308
  %v2115 = vunpack.c.l.b16 %v309
  %v2116 = vunpack.c.h.b16 %v309
  %v2117 = vunpack.c.l.b16 %v310
  %v2118 = vunpack.c.l.b16 %v311
  %v2119 = vunpack.c.h.b16 %v311
  %v2120 = vunpack.c.l.b16 %v312
  %v2121 = vunpack.c.h.b16 %v312
  %v2122 = vunpack.c.l.b16 %v313
  %v2123 = vunpack.c.l.b16 %v314
  %v2124 = vunpack.c.h.b16 %v314
  %v2125 = vunpack.c.l.b16 %v315
  %v2126 = vunpack.c.h.b16 %v315
  %v2127 = vunpack.c.l.b16 %v316
  %v2128 = vunpack.c.l.b16 %v317
  %v2129 = vunpack.c.h.b16 %v317
  %v2130 = vunpack.c.l.b16 %v318
  %v2131 = vunpack.c.h.b16 %v318
  %v2132 = vunpack.c.l.b16 %v319
  %v2133 = vunpack.c.l.b16 %v320
  %v2134 = vunpack.c.h.b16 %v320
  %v2135 = vunpack.c.l.b16 %v321
  %v2136 = vunpack.c.h.b16 %v321
  %v2137 = vunpack.c.l.b16 %v322
  %v2138 = vunpack.c.l.b16 %v323
  %v2139 = vunpack.c.h.b16 %v323
  %v2140 = vunpack.c.l.b16 %v324
  %v2141 = vunpack.c.h.b16 %v324
  %v2142 = vunpack.c.l.b16 %v325
  %v2143 = vunpack.c.l.b16 %v326
  %v2144 = vunpack.c.h.b16 %v326
  %v2145 = vunpack.c.l.b16 %v327
  %v2146 = vunpack.c.h.b16 %v327
  %v2147 = vunpack.c.l.b16 %v328
  %v2148 = vunpack.c.l.b16 %v329
  %v2149 = vunpack.c.h.b16 %v329
  %v2150 = vunpack.c.l.b16 %v330
  %v2151 = vunpack.c.h.b16 %v330
  %v2152 = vunpack.c.l.b16 %v331
  %v2153 = vunpack.c.l.b16 %v332
  %v2154 = vunpack.c.h.b16 %v332
  %v2155 = vunpack.c.l.b16 %v333
  %v2156 = vunpack.c.h.b16 %v333
  %v2157 = vunpack.c.l.b16 %v334
  %v2158 = vunpack.c.l.b16 %v335
  %v2159 = vunpack.c.h.b16 %v335
  %v2160 = vunpack.c.l.b16 %v336
  %v2161 = vunpack.c.h.b16 %v336
  %v2162 = vunpack.c.l.b16 %v337
  %v2163 = vunpack.c.l.b16 %v338
  %v2164 = vunpack.c.h.b16 %v338
  %v2165 = vunpack.c.l.b16 %v339
  %v2166 = vunpack.c.h.b16 %v339
  %v2167 = vunpack.c.l.b16 %v340
  %v2168 = vunpack.c.l.b16 %v341
  %v2169 = vunpack.c.h.b16 %v341
  %v2170 = vunpack.c.l.b16 %v342
  %v2171 = vunpack.c.h.b16 %v342
  %v2172 = vunpack.c.l.b16 %v343
  %v2173 = vunpack.c.l.b16 %v344
  %v2174 = vunpack.c.h.b16 %v344
  %v2175 = vunpack.c.l.b16 %v345
  %v2176 = vunpack.c.h.b16 %v345
  %v2177 = vunpack.c.l.b16 %v346
  %v2178 = vunpack.c.l.b16 %v347
  %v2179 = vunpack.c.h.b16 %v347
  %v2180 = vunpack.c.l.b16 %v348
  %v2181 = vunpack.c.h.b16 %v348
  %v2182 = vunpack.c.l.b16 %v349
  %v2183 = vunpack.c.l.b16 %v350
  %v2184 = vunpack.c.h.b16 %v350
  %v2185 = vunpack.c.l.b16 %v351
  %v2186 = vunpack.c.h.b16 %v351
  %v2187 = vunpack.c.l.b16 %v352
  %v2188 = vunpack.c.l.b16 %v353
  %v2189 = vunpack.c.h.b16 %v353
  %v2190 = vunpack.c.l.b16 %v354
  %v2191 = vunpack.c.h.b16 %v354
  %v2192 = vunpack.c.l.b16 %v355
  %v2193 = vunpack.c.l.b16 %v356
  %v2194 = vunpack.c.h.b16 %v356
  %v2195 = vunpack.c.l.b16 %v357
  %v2196 = vunpack.c.h.b16 %v357
  %v2197 = vunpack.c.l.b16 %v358
  %v2198 = vunpack.c.l.b16 %v359
  %v2199 = vunpack.c.h.b16 %v359
  %v2200 = vunpack.c.l.b16 %v360
  %v2201 = vunpack.c.h.b16 %v360
  %v2202 = vunpack.c.l.b16 %v361
  %v2203 = vunpack.c.l.b16 %v362
  %v2204 = vunpack.c.h.b16 %v362
  %v2205 = vunpack.c.l.b16 %v363
  %v2206 = vunpack.c.h.b16 %v363
  %v2207 = vunpack.c.l.b16 %v364
  %v2208 = vunpack.c.l.b16 %v365
  %v2209 = vunpack.c.h.b16 %v365
  %v2210 = vunpack.c.l.b16 %v366
  %v2211 = vunpack.c.h.b16 %v366
  %v2212 = vunpack.c.l.b16 %v367
  %v2213 = vunpack.c.l.b16 %v368
  %v2214 = vunpack.c.h.b16 %v368
  %v2215 = vunpack.c.l.b16 %v369
  %v2216 = vunpack.c.h.b16 %v369
  %v2217 = vunpack.c.l.b16 %v370
  %v2218 = vunpack.c.l.b16 %v371
  %v2219 = vunpack.c.h.b16 %v371
  %v2220 = vunpack.c.l.b16 %v372
  %v2221 = vunpack.c.h.b16 %v372
  %v2222 = vunpack.c.l.b16 %v373
  %v2223 = vunpack.c.l.b16 %v374
  %v2224 = vunpack.c.h.b16 %v374
  %v2225 = vunpack.c.l.b16 %v375
  %v2226 = vunpack.c.h.b16 %v375
  %v2227 = vunpack.c.l.b16 %v376
  %v2228 = vunpack.c.l.b16 %v377
  %v2229 = vunpack.c.h.b16 %v377
  %v2230 = vunpack.c.l.b16 %v378
  %v2231 = vunpack.c.h.b16 %v378
  %v2232 = vunpack.c.l.b16 %v379
  %v2233 = vunpack.c.l.b16 %v380
  %v2234 = vunpack.c.h.b16 %v380
  %v2235 = vunpack.c.l.b16 %v381
  %v2236 = vunpack.c.h.b16 %v381
  %v2237 = vunpack.c.l.b16 %v382
  %v2238 = vunpack.c.l.b16 %v383
  %v2239 = vunpack.c.h.b16 %v383
  %v2240 = vunpack.c.l.b16 %v384
  %v2241 = vunpack.c.h.b16 %v384
  %v2242 = vunpack.c.l.b16 %v385
  %v2243 = vunpack.c.l.b16 %v386
  %v2244 = vunpack.c.h.b16 %v386
  %v2245 = vunpack.c.l.b16 %v387
  %v2246 = vunpack.c.h.b16 %v387
  %v2247 = vunpack.c.l.b16 %v388
  %v2248 = vunpack.c.l.b16 %v389
  %v2249 = vunpack.c.h.b16 %v389
  %v2250 = vunpack.c.l.b16 %v390
  %v2251 = vunpack.c.h.b16 %v390
  %v2252 = vunpack.c.l.b16 %v391
  %v2253 = vunpack.c.l.b16 %v392
  %v2254 = vunpack.c.h.b16 %v392
  %v2255 = vunpack.c.l.b16 %v393
  %v2256 = vunpack.c.h.b16 %v393
  %v2257 = vunpack.c.l.b16 %v394
  %v2258 = vunpack.c.l.b16 %v395
  %v2259 = vunpack.c.h.b16 %v395
  %v2260 = vunpack.c.l.b16 %v396
  %v2261 = vunpack.c.h.b16 %v396
  %v2262 = vunpack.c.l.b16 %v397
  %v2263 = vunpack.c.l.b16 %v398
  %v2264 = vunpack.c.h.b16 %v398
  %v2265 = vunpack.c.l.b16 %v399
  %v2266 = vunpack.c.h.b16 %v399
  %v2267 = vunpack.c.l.b16 %v400
  %v2268 = vunpack.c.l.b16 %v401
  %v2269 = vunpack.c.h.b16 %v401
  %v2270 = vunpack.c.l.b16 %v402
  %v2271 = vunpack.c.h.b16 %v402
  %v2272 = vunpack.c.l.b16 %v403
  %v2273 = vunpack.c.l.b16 %v404
  %v2274 = vunpack.c.h.b16 %v404
  %v2275 = vunpack.c.l.b16 %v405
  %v2276 = vunpack.c.h.b16 %v405
  %v2277 = vunpack.c.l.b16 %v406
  %v2278 = vunpack.c.l.b16 %v407
  %v2279 = vunpack.c.h.b16 %v407
  %v2280 = vunpack.c.l.b16 %v408
  %v2281 = vunpack.c.h.b16 %v408
  %v2282 = vunpack.c.l.b16 %v409
  %v2283 = vunpack.c.l.b16 %v410
  %v2284 = vunpack.c.h.b16 %v410
  %v2285 = vunpack.c.l.b16 %v411
  %v2286 = vunpack.c.h.b16 %v411
  %v2287 = vunpack.c.l.b16 %v412
  %v2288 = vunpack.c.l.b16 %v413
  %v2289 = vunpack.c.h.b16 %v413
  %v2290 = vunpack.c.l.b16 %v414
  %v2291 = vunpack.c.h.b16 %v414
  %v2292 = vunpack.c.l.b16 %v415
  %v2293 = vunpack.c.l.b16 %v416
  %v2294 = vunpack.c.h.b16 %v416
  %v2295 = vunpack.c.l.b16 %v417
  %v2296 = vunpack.c.h.b16 %v417
  %v2297 = vunpack.c.l.b16 %v418
  %v2298 = vunpack.c.l.b16 %v419
  %v2299 = vunpack.c.h.b16 %v419
  %v2300 = vunpack.c.l.b16 %v420
  %v2301 = vunpack.c.h.b16 %v420
  %v2302 = vunpack.c.l.b16 %v421
  %v2303 = vunpack.c.l.b16 %v422
  %v2304 = vunpack.c.h.b16 %v422
  %v2305 = vunpack.c.l.b16 %v423
  %v2306 = vunpack.c.h.b16 %v423
  %v2307 = vunpack.c.l.b16 %v424
  %v2308 = vunpack.c.l.b16 %v425
  %v2309 = vunpack.c.h.b16 %v425
  %v2310 = vunpack.c.l.b16 %v426
  %v2311 = vunpack.c.h.b16 %v426
  %v2312 = vunpack.c.l.b16 %v427
  %v2313 = vunpack.c.l.b16 %v428
  %v2314 = vunpack.c.h.b16 %v428
  %v2315 = vunpack.c.l.b16 %v429
  %v2316 = vunpack.c.h.b16 %v429
  %v2317 = vunpack.c.l.b16 %v430
  %v2318 = vunpack.c.l.b16 %v431
  %v2319 = vunpack.c.h.b16 %v431
  %v2320 = vunpack.c.l.b16 %v432
  %v2321 = vunpack.c.h.b16 %v432
  %v2322 = vunpack.c.l.b16 %v433
  %v2323 = vunpack.c.l.b16 %v434
  %v2324 = vunpack.c.h.b16 %v434
  %v2325 = vunpack.c.l.b16 %v435
  %v2326 = vunpack.c.h.b16 %v435
  %v2327 = vunpack.c.l.b16 %v436
  %v2328 = vunpack.c.l.b16 %v437
  %v2329 = vunpack.c.h.b16 %v437
  %v2330 = vunpack.c.l.b16 %v438
  %v2331 = vunpack.c.h.b16 %v438
  %v2332 = vunpack.c.l.b16 %v439
  %v2333 = vunpack.c.l.b16 %v440
  %v2334 = vunpack.c.h.b16 %v440
  %v2335 = vunpack.c.l.b16 %v441
  %v2336 = vunpack.c.h.b16 %v441
  %v2337 = vunpack.c.l.b16 %v442
  %v2338 = vunpack.c.l.b16 %v443
  %v2339 = vunpack.c.h.b16 %v443
  %v2340 = vunpack.c.l.b16 %v444
  %v2341 = vunpack.c.h.b16 %v444
  %v2342 = vunpack.c.l.b16 %v445
  %v2343 = vunpack.c.l.b16 %v446
  %v2344 = vunpack.c.h.b16 %v446
  %v2345 = vunpack.c.l.b16 %v447
  %v2346 = vunpack.c.h.b16 %v447
  %v2347 = vunpack.c.l.b16 %v448
  %v2348 = vunpack.c.l.b16 %v449
  %v2349 = vunpack.c.h.b16 %v449
  %v2350 = vunpack.c.l.b16 %v450
  %v2351 = vunpack.c.h.b16 %v450
  %v2352 = vunpack.c.l.b16 %v451
  %v2353 = vunpack.c.l.b16 %v452
  %v2354 = vunpack.c.h.b16 %v452
  %v2355 = vunpack.c.l.b16 %v453
  %v2356 = vunpack.c.h.b16 %v453
  %v2357 = vunpack.c.l.b16 %v454
  %v2358 = vunpack.c.l.b16 %v455
  %v2359 = vunpack.c.h.b16 %v455
  %v2360 = vunpack.c.l.b16 %v456
  %v2361 = vunpack.c.h.b16 %v456
  %v2362 = vunpack.c.l.b16 %v457
  %v2363 = vunpack.c.l.b16 %v458
  %v2364 = vunpack.c.h.b16 %v458
  %v2365 = vunpack.c.l.b16 %v459
  %v2366 = vunpack.c.h.b16 %v459
  %v2367 = vunpack.c.l.b16 %v460
  %v2368 = vunpack.c.l.b16 %v461
  %v2369 = vunpack.c.h.b16 %v461
  %v2370 = vunpack.c.l.b16 %v462
  %v2371 = vunpack.c.h.b16 %v462
  %v2372 = vunpack.c.l.b16 %v463
  %v2373 = vunpack.c.l.b16 %v464
  %v2374 = vunpack.c.h.b16 %v464
  %v2375 = vunpack.c.l.b16 %v465
  %v2376 = vunpack.c.h.b16 %v465
  %v2377 = vunpack.c.l.b16 %v466
  %v2378 = vunpack.c.l.b16 %v467
  %v2379 = vunpack.c.h.b16 %v467
  %v2380 = vunpack.c.l.b16 %v468
  %v2381 = vunpack.c.h.b16 %v468
  %v2382 = vunpack.c.l.b16 %v469
  %v2383 = vunpack.c.l.b16 %v470
  %v2384 = vunpack.c.h.b16 %v470
  %v2385 = vunpack.c.l.b16 %v471
  %v2386 = vunpack.c.h.b16 %v471
  %v2387 = vunpack.c.l.b16 %v472
  %v2388 = vunpack.c.l.b16 %v473
  %v2389 = vunpack.c.h.b16 %v473
  %v2390 = vunpack.c.l.b16 %v474
  %v2391 = vunpack.c.h.b16 %v474
  %v2392 = vunpack.c.l.b16 %v475
  %v2393 = vunpack.c.l.b16 %v476
  %v2394 = vunpack.c.h.b16 %v476
  %v2395 = vunpack.c.l.b16 %v477
  %v2396 = vunpack.c.h.b16 %v477
  %v2397 = vunpack.c.l.b16 %v478
  %v2398 = vunpack.c.l.b16 %v479
  %v2399 = vunpack.c.h.b16 %v479
  %v2400 = vunpack.c.l.b16 %v480
  %v2401 = vunpack.c.h.b16 %v480
  %v2402 = vunpack.c.l.b16 %v481
  %v2403 = vunpack.c.l.b16 %v482
  %v2404 = vunpack.c.h.b16 %v482
  %v2405 = vunpack.c.l.b16 %v483
  %v2406 = vunpack.c.h.b16 %v483
  %v2407 = vunpack.c.l.b16 %v484
  %v2408 = vunpack.c.l.b16 %v485
  %v2409 = vunpack.c.h.b16 %v485
  %v2410 = vunpack.c.l.b16 %v486
  %v2411 = vunpack.c.h.b16 %v486
  %v2412 = vunpack.c.l.b16 %v487
  %v2413 = vunpack.c.l.b16 %v488
  %v2414 = vunpack.c.h.b16 %v488
  %v2415 = vunpack.c.l.b16 %v489
  %v2416 = vunpack.c.h.b16 %v489
  %v2417 = vunpack.c.l.b16 %v490
  %v2418 = vunpack.c.l.b16 %v491
  %v2419 = vunpack.c.h.b16 %v491
  %v2420 = vunpack.c.l.b16 %v492
  %v2421 = vunpack.c.h.b16 %v492
  %v2422 = vunpack.c.l.b16 %v493
  %v2423 = vunpack.c.l.b16 %v494
  %v2424 = vunpack.c.h.b16 %v494
  %v2425 = vunpack.c.l.b16 %v495
  %v2426 = vunpack.c.h.b16 %v495
  %v2427 = vunpack.c.l.b16 %v496
  %v2428 = vunpack.c.l.b16 %v497
  %v2429 = vunpack.c.h.b16 %v497
  %v2430 = vunpack.c.l.b16 %v498
  %v2431 = vunpack.c.h.b16 %v498
  %v2432 = vunpack.c.l.b16 %v499
  %v2433 = vunpack.c.l.b16 %v500
  %v2434 = vunpack.c.h.b16 %v500
  %v2435 = vunpack.c.l.b16 %v501
  %v2436 = vunpack.c.h.b16 %v501
  %v2437 = vunpack.c.l.b16 %v502
  %v2438 = vunpack.c.l.b16 %v503
  %v2439 = vunpack.c.h.b16 %v503
  %v2440 = vunpack.c.l.b16 %v504
  %v2441 = vunpack.c.h.b16 %v504
  %v2442 = vunpack.c.l.b16 %v505
  %v2443 = vunpack.c.l.b16 %v506
  %v2444 = vunpack.c.h.b16 %v506
  %v2445 = vunpack.c.l.b16 %v507
  %v2446 = vunpack.c.h.b16 %v507
  %v2447 = vunpack.c.l.b16 %v508
  %v2448 = vunpack.c.l.b16 %v509
  %v2449 = vunpack.c.h.b16 %v509
  %v2450 = vunpack.c.l.b16 %v510
  %v2451 = vunpack.c.h.b16 %v510
  %v2452 = vunpack.c.l.b16 %v511
  %v2453 = vunpack.c.l.b16 %v512
  %v2454 = vunpack.c.h.b16 %v512
  %v2455 = vunpack.c.l.b16 %v513
  %v2456 = vunpack.c.h.b16 %v513
  %v2457 = vunpack.c.l.b16 %v514
  %v2458 = vunpack.c.l.b16 %v515
  %v2459 = vunpack.c.h.b16 %v515
  %v2460 = vunpack.c.l.b16 %v516
  %v2461 = vunpack.c.h.b16 %v516
  %v2462 = vunpack.c.l.b16 %v517
  %v2463 = vunpack.c.l.b16 %v518
  %v2464 = vunpack.c.h.b16 %v518
  %v2465 = vunpack.c.l.b16 %v519
  %v2466 = vunpack.c.h.b16 %v519
  %v2467 = vunpack.c.l.b16 %v520
  %v2468 = vunpack.c.l.b16 %v521
  %v2469 = vunpack.c.h.b16 %v521
  %v2470 = vunpack.c.l.b16 %v522
  %v2471 = vunpack.c.h.b16 %v522
  %v2472 = vunpack.c.l.b16 %v523
  %v2473 = vunpack.c.l.b16 %v524
  %v2474 = vunpack.c.h.b16 %v524
  %v2475 = vunpack.c.l.b16 %v525
  %v2476 = vunpack.c.h.b16 %v525
  %v2477 = vunpack.c.l.b16 %v526
  %v2478 = vunpack.c.l.b16 %v527
  %v2479 = vunpack.c.h.b16 %v527
  %v2480 = vunpack.c.l.b16 %v528
  %v2481 = vunpack.c.h.b16 %v528
  %v2482 = vunpack.c.l.b16 %v529
  %v2483 = vunpack.c.l.b16 %v530
  %v2484 = vunpack.c.h.b16 %v530
  %v2485 = vunpack.c.l.b16 %v531
  %v2486 = vunpack.c.h.b16 %v531
  %v2487 = vunpack.c.l.b16 %v532
  %v2488 = vunpack.c.l.b16 %v533
  %v2489 = vunpack.c.h.b16 %v533
  %v2490 = vunpack.c.l.b16 %v534
  %v2491 = vunpack.c.h.b16 %v534
  %v2492 = vunpack.c.l.b16 %v535
  %v2493 = vunpack.c.l.b16 %v536
  %v2494 = vunpack.c.h.b16 %v536
  %v2495 = vunpack.c.l.b16 %v537
  %v2496 = vunpack.c.h.b16 %v537
  %v2497 = vunpack.c.l.b16 %v538
  %v2498 = vunpack.c.l.b16 %v539
  %v2499 = vunpack.c.h.b16 %v539
  %v2500 = vunpack.c.l.b16 %v540
  %v2501 = vunpack.c.h.b16 %v540
  %v2502 = vunpack.c.l.b16 %v541
  %v2503 = vunpack.c.l.b16 %v542
  %v2504 = vunpack.c.h.b16 %v542
  %v2505 = vunpack.c.l.b16 %v543
  %v2506 = vunpack.c.h.b16 %v543
  %v2507 = vunpack.c.l.b16 %v544
  %v2508 = vunpack.c.l.b16 %v545
  %v2509 = vunpack.c.h.b16 %v545
  %v2510 = vunpack.c.l.b16 %v546
  %v2511 = vunpack.c.h.b16 %v546
  %v2512 = vunpack.c.l.b16 %v547
  %v2513 = vunpack.c.l.b16 %v548
  %v2514 = vunpack.c.h.b16 %v548
  %v2515 = vunpack.c.l.b16 %v549
  %v2516 = vunpack.c.h.b16 %v549
  %v2517 = vunpack.c.l.b16 %v550
  %v2518 = vunpack.c.l.b16 %v551
  %v2519 = vunpack.c.h.b16 %v551
  %v2520 = vunpack.c.l.b16 %v552
  %v2521 = vunpack.c.h.b16 %v552
  %v2522 = vunpack.c.l.b16 %v553
  %v2523 = vunpack.c.l.b16 %v554
  %v2524 = vunpack.c.h.b16 %v554
  %v2525 = vunpack.c.l.b16 %v555
  %v2526 = vunpack.c.h.b16 %v555
  %v2527 = vunpack.c.l.b16 %v556
  %v2528 = vunpack.c.l.b16 %v557
  %v2529 = vunpack.c.h.b16 %v557
  %v2530 = vunpack.c.l.b16 %v558
  %v2531 = vunpack.c.h.b16 %v558
  %v2532 = vunpack.c.l.b16 %v559
  %v2533 = vunpack.c.l.b16 %v560
  %v2534 = vunpack.c.h.b16 %v560
  %v2535 = vunpack.c.l.b16 %v561
  %v2536 = vunpack.c.h.b16 %v561
  %v2537 = vunpack.c.l.b16 %v562
  %v2538 = vunpack.c.l.b16 %v563
  %v2539 = vunpack.c.h.b16 %v563
  %v2540 = vunpack.c.l.b16 %v564
  %v2541 = vunpack.c.h.b16 %v564
  %v2542 = vunpack.c.l.b16 %v565
  %v2543 = vunpack.c.l.b16 %v566
  %v2544 = vunpack.c.h.b16 %v566
  %v2545 = vunpack.c.l.b16 %v567
  %v2546 = vunpack.c.h.b16 %v567
  %v2547 = vunpack.c.l.b16 %v568
  %v2548 = vunpack.c.l.b16 %v569
  %v2549 = vunpack.c.h.b16 %v569
  %v2550 = vunpack.c.l.b16 %v570
  %v2551 = vunpack.c.h.b16 %v570
  %v2552 = vunpack.c.l.b16 %v571
  %v2553 = vunpack.c.l.b16 %v572
  %v2554 = vunpack.c.h.b16 %v572
  %v2555 = vunpack.c.l.b16 %v573
  %v2556 = vunpack.c.h.b16 %v573
  %v2557 = vunpack.c.l.b16 %v574
  %v2558 = vunpack.c.l.b16 %v575
  %v2559 = vunpack.c.h.b16 %v575
  %v2560 = vunpack.c.l.b16 %v576
  %v2561 = vunpack.c.h.b16 %v576
  %v2562 = vunpack.c.l.b16 %v577
  %v2563 = vunpack.c.l.b16 %v578
  %v2564 = vunpack.c.h.b16 %v578
  %v2565 = vunpack.c.l.b16 %v579
  %v2566 = vunpack.c.h.b16 %v579
  %v2567 = vunpack.c.l.b16 %v580
  %v2568 = vunpack.c.l.b16 %v581
  %v2569 = vunpack.c.h.b16 %v581
  %v2570 = vunpack.c.l.b16 %v582
  %v2571 = vunpack.c.h.b16 %v582
  %v2572 = vunpack.c.l.b16 %v583
  %v2573 = vunpack.c.l.b16 %v584
  %v2574 = vunpack.c.h.b16 %v584
  %v2575 = vunpack.c.l.b16 %v585
  %v2576 = vunpack.c.h.b16 %v585
  %v2577 = vunpack.c.l.b16 %v586
  %v2578 = vunpack.c.l.b16 %v587
  %v2579 = vunpack.c.h.b16 %v587
  %v2580 = vunpack.c.l.b16 %v588
  %v2581 = vunpack.c.h.b16 %v588
  %v2582 = vunpack.c.l.b16 %v589
  %v2583 = vunpack.c.l.b16 %v590
  %v2584 = vunpack.c.h.b16 %v590
  %v2585 = vunpack.c.l.b16 %v591
  %v2586 = vunpack.c.h.b16 %v591
  %v2587 = vunpack.c.l.b16 %v592
  %v2588 = vunpack.c.l.b16 %v593
  %v2589 = vunpack.c.h.b16 %v593
  %v2590 = vunpack.c.l.b16 %v594
  %v2591 = vunpack.c.h.b16 %v594
  %v2592 = vunpack.c.l.b16 %v595
  %v2593 = vunpack.c.l.b16 %v596
  %v2594 = vunpack.c.h.b16 %v596
  %v2595 = vunpack.c.l.b16 %v597
  %v2596 = vunpack.c.h.b16 %v597
  %v2597 = vunpack.c.l.b16 %v598
  %v2598 = vunpack.c.l.b16 %v599
  %v2599 = vunpack.c.h.b16 %v599
  %v2600 = vunpack.c.l.b16 %v600
  %v2601 = vunpack.c.h.b16 %v600
  %v2602 = vunpack.c.l.b16 %v601
  %v2603 = vunpack.c.l.b16 %v602
  %v2604 = vunpack.c.h.b16 %v602
  %v2605 = vunpack.c.l.b16 %v603
  %v2606 = vunpack.c.h.b16 %v603
  %v2607 = vunpack.c.l.b16 %v604
  %v2608 = vunpack.c.l.b16 %v605
  %v2609 = vunpack.c.h.b16 %v605
  %v2610 = vunpack.c.l.b16 %v606
  %v2611 = vunpack.c.h.b16 %v606
  %v2612 = vunpack.c.l.b16 %v607
  %v2613 = vunpack.c.l.b16 %v608
  %v2614 = vunpack.c.h.b16 %v608
  %v2615 = vunpack.c.l.b16 %v609
  %v2616 = vunpack.c.h.b16 %v609
  %v2617 = vunpack.c.l.b16 %v610
  %v2618 = vunpack.c.l.b16 %v611
  %v2619 = vunpack.c.h.b16 %v611
  %v2620 = vunpack.c.l.b16 %v612
  %v2621 = vunpack.c.h.b16 %v612
  %v2622 = vunpack.c.l.b16 %v613
  %v2623 = vunpack.c.l.b16 %v614
  %v2624 = vunpack.c.h.b16 %v614
  %v2625 = vunpack.c.l.b16 %v615
  %v2626 = vunpack.c.h.b16 %v615
  %v2627 = vunpack.c.l.b16 %v616
  %v2628 = vunpack.c.l.b16 %v617
  %v2629 = vunpack.c.h.b16 %v617
  %v2630 = vunpack.c.l.b16 %v618
  %v2631 = vunpack.c.h.b16 %v618
  %v2632 = vunpack.c.l.b16 %v619
  %v2633 = vunpack.c.l.b16 %v620
  %v2634 = vunpack.c.h.b16 %v620
  %v2635 = vunpack.c.l.b16 %v621
  %v2636 = vunpack.c.h.b16 %v621
  %v2637 = vunpack.c.l.b16 %v622
  %v2638 = vunpack.c.l.b16 %v623
  %v2639 = vunpack.c.h.b16 %v623
  %v2640 = vunpack.c.l.b16 %v624
  %v2641 = vunpack.c.h.b16 %v624
  %v2642 = vunpack.c.l.b16 %v625
  %v2643 = vunpack.c.l.b16 %v626
  %v2644 = vunpack.c.h.b16 %v626
  %v2645 = vunpack.c.l.b16 %v627
  %v2646 = vunpack.c.h.b16 %v627
  %v2647 = vunpack.c.l.b16 %v628
  %v2648 = vunpack.c.l.b16 %v629
  %v2649 = vunpack.c.h.b16 %v629
  %v2650 = vunpack.c.l.b16 %v630
  %v2651 = vunpack.c.h.b16 %v630
  %v2652 = vunpack.c.l.b16 %v631
  %v2653 = vunpack.c.l.b16 %v632
  %v2654 = vunpack.c.h.b16 %v632
  %v2655 = vunpack.c.l.b16 %v633
  %v2656 = vunpack.c.h.b16 %v633
  %v2657 = vunpack.c.l.b16 %v634
  %v2658 = vunpack.c.l.b16 %v635
  %v2659 = vunpack.c.h.b16 %v635
  %v2660 = vunpack.c.l.b16 %v636
  %v2661 = vunpack.c.h.b16 %v636
  %v2662 = vunpack.c.l.b16 %v637
  %v2663 = vunpack.c.l.b16 %v638
  %v2664 = vunpack.c.h.b16 %v638
  %v2665 = vunpack.c.l.b16 %v639
  %v2666 = vunpack.c.h.b16 %v639
  %v2667 = vunpack.c.l.b16 %v640
  %v2668 = vunpack.c.l.b16 %v641
  %v2669 = vunpack.c.h.b16 %v641
  %v2670 = vunpack.c.l.b16 %v642
  %v2671 = vunpack.c.h.b16 %v642
  %v2672 = vunpack.c.l.b16 %v643
  %v2673 = vunpack.c.l.b16 %v644
  %v2674 = vunpack.c.h.b16 %v644
  %v2675 = vunpack.c.l.b16 %v645
  %v2676 = vunpack.c.h.b16 %v645
  %v2677 = vunpack.c.l.b16 %v646
  %v2678 = vunpack.c.l.b16 %v647
  %v2679 = vunpack.c.h.b16 %v647
  %v2680 = vunpack.c.l.b16 %v648
  %v2681 = vunpack.c.h.b16 %v648
  %v2682 = vunpack.c.l.b16 %v649
  %v2683 = vunpack.c.l.b16 %v650
  %v2684 = vunpack.c.h.b16 %v650
  %v2685 = vunpack.c.l.b16 %v651
  %v2686 = vunpack.c.h.b16 %v651
  %v2687 = vunpack.c.l.b16 %v652
  %v2688 = vunpack.c.l.b16 %v653
  %v2689 = vunpack.c.h.b16 %v653
  %v2690 = vunpack.c.l.b16 %v654
  %v2691 = vunpack.c.h.b16 %v654
  %v2692 = vunpack.c.l.b16 %v655
  %v2693 = vunpack.c.l.b16 %v656
  %v2694 = vunpack.c.h.b16 %v656
  %v2695 = vunpack.c.l.b16 %v657
  %v2696 = vunpack.c.h.b16 %v657
  %v2697 = vunpack.c.l.b16 %v658
  %v2698 = vunpack.c.l.b16 %v659
  %v2699 = vunpack.c.h.b16 %v659
  %v2700 = vunpack.c.l.b16 %v660
  %v2701 = vunpack.c.h.b16 %v660
  %v2702 = vunpack.c.l.b16 %v661
  %v2703 = vunpack.c.l.b16 %v662
  %v2704 = vunpack.c.h.b16 %v662
  %v2705 = vunpack.c.l.b16 %v663
  %v2706 = vunpack.c.h.b16 %v663
  %v2707 = vunpack.c.l.b16 %v664
  %v2708 = vunpack.c.l.b16 %v665
  %v2709 = vunpack.c.h.b16 %v665
  %v2710 = vunpack.c.l.b16 %v666
  %v2711 = vunpack.c.h.b16 %v666
  %v2712 = vunpack.c.l.b16 %v667
  %v2713 = vunpack.c.l.b16 %v668
  %v2714 = vunpack.c.h.b16 %v668
  %v2715 = vunpack.c.l.b16 %v669
  %v2716 = vunpack.c.h.b16 %v669
  %v2717 = vunpack.c.l.b16 %v670
  %v2718 = vunpack.c.l.b16 %v671
  %v2719 = vunpack.c.h.b16 %v671
  %v2720 = vunpack.c.l.b16 %v672
  %v2721 = vunpack.c.h.b16 %v672
  %v2722 = vunpack.c.l.b16 %v673
  %v2723 = vunpack.c.l.b16 %v674
  %v2724 = vunpack.c.h.b16 %v674
  %v2725 = vunpack.c.l.b16 %v675
  %v2726 = vunpack.c.h.b16 %v675
  %v2727 = vunpack.c.l.b16 %v676
  %v2728 = vunpack.c.l.b16 %v677
  %v2729 = vunpack.c.h.b16 %v677
  %v2730 = vunpack.c.l.b16 %v678
  %v2731 = vunpack.c.h.b16 %v678
  %v2732 = vunpack.c.l.b16 %v679
  %v2733 = vunpack.c.l.b16 %v680
  %v2734 = vunpack.c.h.b16 %v680
  %v2735 = vunpack.c.l.b16 %v681
  %v2736 = vunpack.c.h.b16 %v681
  %v2737 = vunpack.c.l.b16 %v682
  %v2738 = vunpack.c.l.b16 %v683
  %v2739 = vunpack.c.h.b16 %v683
  %v2740 = vunpack.c.l.b16 %v684
  %v2741 = vunpack.c.h.b16 %v684
  %v2742 = vunpack.c.l.b16 %v685
  %v2743 = vunpack.c.l.b16 %v686
  %v2744 = vunpack.c.h.b16 %v686
  %v2745 = vunpack.c.l.b16 %v687
  %v2746 = vunpack.c.h.b16 %v687
  %v2747 = vunpack.c.l.b16 %v688
  %v2748 = vunpack.c.l.b16 %v689
  %v2749 = vunpack.c.h.b16 %v689
  %v2750 = vunpack.c.l.b16 %v690
  %v2751 = vunpack.c.h.b16 %v690
  %v2752 = vunpack.c.l.b16 %v691
  %v2753 = vunpack.c.l.b16 %v692
  %v2754 = vunpack.c.h.b16 %v692
  %v2755 = vunpack.c.l.b16 %v693
  %v2756 = vunpack.c.h.b16 %v693
  %v2757 = vunpack.c.l.b16 %v694
  %v2758 = vunpack.c.l.b16 %v695
  %v2759 = vunpack.c.h.b16 %v695
  %v2760 = vunpack.c.l.b16 %v696
  %v2761 = vunpack.c.h.b16 %v696
  %v2762 = vunpack.c.l.b16 %v697
  %v2763 = vunpack.c.l.b16 %v698
  %v2764 = vunpack.c.h.b16 %v698
  %v2765 = vunpack.c.l.b16 %v699
  %v2766 = vunpack.c.h.b16 %v699
  %v2767 = vunpack.c.l.b16 %v700
  %v2768 = vunpack.c.l.b16 %v701
  %v2769 = vunpack.c.h.b16 %v701
  %v2770 = vunpack.c.l.b16 %v702
  %v2771 = vunpack.c.h.b16 %v702
  %v2772 = vunpack.c.l.b16 %v703
  %v2773 = vunpack.c.l.b16 %v704
  %v2774 = vunpack.c.h.b16 %v704
  %v2775 = vunpack.c.l.b16 %v705
  %v2776 = vunpack.c.h.b16 %v705
  %v2777 = vunpack.c.l.b16 %v706
  %v2778 = vunpack.c.l.b16 %v707
  %v2779 = vunpack.c.h.b16 %v707
  %v2780 = vunpack.c.l.b16 %v708
  %v2781 = vunpack.c.h.b16 %v708
  %v2782 = vunpack.c.l.b16 %v709
  %v2783 = vunpack.c.l.b16 %v710
  %v2784 = vunpack.c.h.b16 %v710
  %v2785 = vunpack.c.l.b16 %v711
  %v2786 = vunpack.c.h.b16 %v711
  %v2787 = vunpack.c.l.b16 %v712
  %v2788 = vunpack.c.l.b16 %v713
  %v2789 = vunpack.c.h.b16 %v713
  %v2790 = vunpack.c.l.b16 %v714
  %v2791 = vunpack.c.h.b16 %v714
  %v2792 = vunpack.c.l.b16 %v715
  %v2793 = vunpack.c.l.b16 %v716
  %v2794 = vunpack.c.h.b16 %v716
  %v2795 = vunpack.c.l.b16 %v717
  %v2796 = vunpack.c.h.b16 %v717
  %v2797 = vunpack.c.l.b16 %v718
  %v2798 = vunpack.c.l.b16 %v719
  %v2799 = vunpack.c.h.b16 %v719
  %v2800 = vunpack.c.l.b16 %v720
  %v2801 = vunpack.c.h.b16 %v720
  %v2802 = vunpack.c.l.b16 %v721
  %v2803 = vunpack.c.l.b16 %v722
  %v2804 = vunpack.c.h.b16 %v722
  %v2805 = vunpack.c.l.b16 %v723
  %v2806 = vunpack.c.h.b16 %v723
  %v2807 = vunpack.c.l.b16 %v724
  %v2808 = vunpack.c.l.b16 %v725
  %v2809 = vunpack.c.h.b16 %v725
  %v2810 = vunpack.c.l.b16 %v726
  %v2811 = vunpack.c.h.b16 %v726
  %v2812 = vunpack.c.l.b16 %v727
  %v2813 = vunpack.c.l.b16 %v728
  %v2814 = vunpack.c.h.b16 %v728
  %v2815 = vunpack.c.l.b16 %v729
  %v2816 = vunpack.c.h.b16 %v729
  %v2817 = vunpack.c.l.b16 %v730
  %v2818 = vunpack.c.l.b16 %v731
  %v2819 = vunpack.c.h.b16 %v731
  %v2820 = vunpack.c.l.b16 %v732
  %v2821 = vunpack.c.h.b16 %v732
  %v2822 = vunpack.c.l.b16 %v733
  %v2823 = vunpack.c.l.b16 %v734
  %v2824 = vunpack.c.h.b16 %v734
  %v2825 = vunpack.c.l.b16 %v735
  %v2826 = vunpack.c.h.b16 %v735
  %v2827 = vunpack.c.l.b16 %v736
  %v2828 = vunpack.c.l.b16 %v737
  %v2829 = vunpack.c.h.b16 %v737
  %v2830 = vunpack.c.l.b16 %v738
  %v2831 = vunpack.c.h.b16 %v738
  %v2832 = vunpack.c.l.b16 %v739
  %v2833 = vunpack.c.l.b16 %v740
  %v2834 = vunpack.c.h.b16 %v740
  %v2835 = vunpack.c.l.b16 %v741
  %v2836 = vunpack.c.h.b16 %v741
  %v2837 = vunpack.c.l.b16 %v742
  %v2838 = vunpack.c.l.b16 %v743
  %v2839 = vunpack.c.h.b16 %v743
  %v2840 = vunpack.c.l.b16 %v744
  %v2841 = vunpack.c.h.b16 %v744
  %v2842 = vunpack.c.l.b16 %v745
  %v2843 = vunpack.c.l.b16 %v746
  %v2844 = vunpack.c.h.b16 %v746
  %v2845 = vunpack.c.l.b16 %v747
  %v2846 = vunpack.c.h.b16 %v747
  %v2847 = vunpack.c.l.b16 %v748
  %v2848 = vunpack.c.l.b16 %v749
  %v2849 = vunpack.c.h.b16 %v749
  %v2850 = vunpack.c.l.b16 %v750
  %v2851 = vunpack.c.h.b16 %v750
  %v2852 = vunpack.c.l.b16 %v751
  %v2853 = vunpack.c.l.b16 %v752
  %v2854 = vunpack.c.h.b16 %v752
  %v2855 = vunpack.c.l.b16 %v753
  %v2856 = vunpack.c.h.b16 %v753
  %v2857 = vunpack.c.l.b16 %v754
  %v2858 = vunpack.c.l.b16 %v755
  %v2859 = vunpack.c.h.b16 %v755
  %v2860 = vunpack.c.l.b16 %v756
  %v2861 = vunpack.c.h.b16 %v756
  %v2862 = vunpack.c.l.b16 %v757
  %v2863 = vunpack.c.l.b16 %v758
  %v2864 = vunpack.c.h.b16 %v758
  %v2865 = vunpack.c.l.b16 %v759
  %v2866 = vunpack.c.h.b16 %v759
  %v2867 = vunpack.c.l.b16 %v760
  %v2868 = vunpack.c.l.b16 %v761
  %v2869 = vunpack.c.h.b16 %v761
  %v2870 = vunpack.c.l.b16 %v762
  %v2871 = vunpack.c.h.b16 %v762
  %v2872 = vunpack.c.l.b16 %v763
  %v2873 = vunpack.c.l.b16 %v764
  %v2874 = vunpack.c.h.b16 %v764
  %v2875 = vunpack.c.l.b16 %v765
  %v2876 = vunpack.c.h.b16 %v765
  %v2877 = vunpack.c.l.b16 %v766
  %v2878 = vunpack.c.l.b16 %v767
  %v2879 = vunpack.c.h.b16 %v767
  %v2880 = vunpack.c.l.b16 %v768
  %v2881 = vunpack.c.h.b16 %v768
  %v2882 = vunpack.c.l.b16 %v769
  %v2883 = vunpack.c.l.b16 %v770
  %v2884 = vunpack.c.h.b16 %v770
  %v2885 = vunpack.c.l.b16 %v771
  %v2886 = vunpack.c.h.b16 %v771
  %v2887 = vunpack.c.l.b16 %v772
  %v2888 = vunpack.c.l.b16 %v773
  %v2889 = vunpack.c.h.b16 %v773
  %v2890 = vunpack.c.l.b16 %v774
  %v2891 = vunpack.c.h.b16 %v774
  %v2892 = vunpack.c.l.b16 %v775
  %v2893 = vunpack.c.l.b16 %v776
  %v2894 = vunpack.c.h.b16 %v776
  %v2895 = vunpack.c.l.b16 %v777
  %v2896 = vunpack.c.h.b16 %v777
  %v2897 = vunpack.c.l.b16 %v778
  %v2898 = vunpack.c.l.b16 %v779
  %v2899 = vunpack.c.h.b16 %v779
  %v2900 = vunpack.c.l.b16 %v780
  %v2901 = vunpack.c.h.b16 %v780
  %v2902 = vunpack.c.l.b16 %v781
  %v2903 = vunpack.c.l.b16 %v782
  %v2904 = vunpack.c.h.b16 %v782
  %v2905 = vunpack.c.l.b16 %v783
  %v2906 = vunpack.c.h.b16 %v783
  %v2907 = vunpack.c.l.b16 %v784
  %v2908 = vunpack.c.l.b16 %v785
  %v2909 = vunpack.c.h.b16 %v785
  %v2910 = vunpack.c.l.b16 %v786
  %v2911 = vunpack.c.h.b16 %v786
  %v2912 = vunpack.c.l.b16 %v787
  %v2913 = vunpack.c.l.b16 %v788
  %v2914 = vunpack.c.h.b16 %v788
  %v2915 = vunpack.c.l.b16 %v789
  %v2916 = vunpack.c.h.b16 %v789
  %v2917 = vunpack.c.l.b16 %v790
  %v2918 = vunpack.c.l.b16 %v791
  %v2919 = vunpack.c.h.b16 %v791
  %v2920 = vunpack.c.l.b16 %v792
  %v2921 = vunpack.c.h.b16 %v792
  %v2922 = vunpack.c.l.b16 %v793
  %v2923 = vunpack.c.l.b16 %v794
  %v2924 = vunpack.c.h.b16 %v794
  %v2925 = vunpack.c.l.b16 %v795
  %v2926 = vunpack.c.h.b16 %v795
  %v2927 = vunpack.c.l.b16 %v796
  %v2928 = vpack.c.b16 %v1653, %v1648
  %v2929 = vpack.c.b16 %v1654, %v1649
  %v2930 = vpack.c.b16 %v1655, %v1650
  %v2931 = vpack.c.b16 %v1656, %v1651
  %v2932 = vpack.c.b16 %v1657, %v1652
  %v2933 = vpack.c.b16 %v1663, %v1658
  %v2934 = vpack.c.b16 %v1664, %v1659
  %v2935 = vpack.c.b16 %v1665, %v1660
  %v2936 = vpack.c.b16 %v1666, %v1661
  %v2937 = vpack.c.b16 %v1667, %v1662
  %v2938 = vpack.c.b16 %v1673, %v1668
  %v2939 = vpack.c.b16 %v1674, %v1669
  %v2940 = vpack.c.b16 %v1675, %v1670
  %v2941 = vpack.c.b16 %v1676, %v1671
  %v2942 = vpack.c.b16 %v1677, %v1672
  %v2943 = vpack.c.b16 %v1683, %v1678
  %v2944 = vpack.c.b16 %v1684, %v1679
  %v2945 = vpack.c.b16 %v1685, %v1680
  %v2946 = vpack.c.b16 %v1686, %v1681
  %v2947 = vpack.c.b16 %v1687, %v1682
  %v2948 = vpack.c.b16 %v1693, %v1688
  %v2949 = vpack.c.b16 %v1694, %v1689
  %v2950 = vpack.c.b16 %v1695, %v1690
  %v2951 = vpack.c.b16 %v1696, %v1691
  %v2952 = vpack.c.b16 %v1697, %v1692
  %v2953 = vpack.c.b16 %v1703, %v1698
  %v2954 = vpack.c.b16 %v1704, %v1699
  %v2955 = vpack.c.b16 %v1705, %v1700
  %v2956 = vpack.c.b16 %v1706, %v1701
  %v2957 = vpack.c.b16 %v1707, %v1702
  %v2958 = vpack.c.b16 %v1713, %v1708
  %v2959 = vpack.c.b16 %v1714, %v1709
  %v2960 = vpack.c.b16 %v1715, %v1710
  %v2961 = vpack.c.b16 %v1716, %v1711
  %v2962 = vpack.c.b16 %v1717, %v1712
  %v2963 = vpack.c.b16 %v1723, %v1718
  %v2964 = vpack.c.b16 %v1724, %v1719
  %v2965 = vpack.c.b16 %v1725, %v1720
  %v2966 = vpack.c.b16 %v1726, %v1721
  %v2967 = vpack.c.b16 %v1727, %v1722
  %v2968 = vpack.c.b16 %v1733, %v1728
  %v2969 = vpack.c.b16 %v1734, %v1729
  %v2970 = vpack.c.b16 %v1735, %v1730
  %v2971 = vpack.c.b16 %v1736, %v1731
  %v2972 = vpack.c.b16 %v1737, %v1732
  %v2973 = vpack.c.b16 %v1743, %v1738
  %v2974 = vpack.c.b16 %v1744, %v1739
  %v2975 = vpack.c.b16 %v1745, %v1740
  %v2976 = vpack.c.b16 %v1746, %v1741
  %v2977 = vpack.c.b16 %v1747, %v1742
  %v2978 = vpack.c.b16 %v1753, %v1748
  %v2979 = vpack.c.b16 %v1754, %v1749
  %v2980 = vpack.c.b16 %v1755, %v1750
  %v2981 = vpack.c.b16 %v1756, %v1751
  %v2982 = vpack.c.b16 %v1757, %v1752
  %v2983 = vpack.c.b16 %v1763, %v1758
  %v2984 = vpack.c.b16 %v1764, %v1759
  %v2985 = vpack.c.b16 %v1765, %v1760
  %v2986 = vpack.c.b16 %v1766, %v1761
  %v2987 = vpack.c.b16 %v1767, %v1762
  %v2988 = vpack.c.b16 %v1773, %v1768
  %v2989 = vpack.c.b16 %v1774, %v1769
  %v2990 = vpack.c.b16 %v1775, %v1770
  %v2991 = vpack.c.b16 %v1776, %v1771
  %v2992 = vpack.c.b16 %v1777, %v1772
  %v2993 = vpack.c.b16 %v1783, %v1778
  %v2994 = vpack.c.b16 %v1784, %v1779
  %v2995 = vpack.c.b16 %v1785, %v1780
  %v2996 = vpack.c.b16 %v1786, %v1781
  %v2997 = vpack.c.b16 %v1787, %v1782
  %v2998 = vpack.c.b16 %v1793, %v1788
  %v2999 = vpack.c.b16 %v1794, %v1789
  %v3000 = vpack.c.b16 %v1795, %v1790
  %v3001 = vpack.c.b16 %v1796, %v1791
  %v3002 = vpack.c.b16 %v1797, %v1792
  %v3003 = vpack.c.b16 %v1803, %v1798
  %v3004 = vpack.c.b16 %v1804, %v1799
  %v3005 = vpack.c.b16 %v1805, %v1800
  %v3006 = vpack.c.b16 %v1806, %v1801
  %v3007 = vpack.c.b16 %v1807, %v1802
  %v3008 = vpack.c.b16 %v1813, %v1808
  %v3009 = vpack.c.b16 %v1814, %v1809
  %v3010 = vpack.c.b16 %v1815, %v1810
  %v3011 = vpack.c.b16 %v1816, %v1811
  %v3012 = vpack.c.b16 %v1817, %v1812
  %v3013 = vpack.c.b16 %v1823, %v1818
  %v3014 = vpack.c.b16 %v1824, %v1819
  %v3015 = vpack.c.b16 %v1825, %v1820
  %v3016 = vpack.c.b16 %v1826, %v1821
  %v3017 = vpack.c.b16 %v1827, %v1822
  %v3018 = vpack.c.b16 %v1833, %v1828
  %v3019 = vpack.c.b16 %v1834, %v1829
  %v3020 = vpack.c.b16 %v1835, %v1830
  %v3021 = vpack.c.b16 %v1836, %v1831
  %v3022 = vpack.c.b16 %v1837, %v1832
  %v3023 = vpack.c.b16 %v1843, %v1838
  %v3024 = vpack.c.b16 %v1844, %v1839
  %v3025 = vpack.c.b16 %v1845, %v1840
  %v3026 = vpack.c.b16 %v1846, %v1841
  %v3027 = vpack.c.b16 %v1847, %v1842
  %v3028 = vpack.c.b16 %v1853, %v1848
  %v3029 = vpack.c.b16 %v1854, %v1849
  %v3030 = vpack.c.b16 %v1855, %v1850
  %v3031 = vpack.c.b16 %v1856, %v1851
  %v3032 = vpack.c.b16 %v1857, %v1852
  %v3033 = vpack.c.b16 %v1863, %v1858
  %v3034 = vpack.c.b16 %v1864, %v1859
  %v3035 = vpack.c.b16 %v1865, %v1860
  %v3036 = vpack.c.b16 %v1866, %v1861
  %v3037 = vpack.c.b16 %v1867, %v1862
  %v3038 = vpack.c.b16 %v1873, %v1868
  %v3039 = vpack.c.b16 %v1874, %v1869
  %v3040 = vpack.c.b16 %v1875, %v1870
  %v3041 = vpack.c.b16 %v1876, %v1871
  %v3042 = vpack.c.b16 %v1877, %v1872
  %v3043 = vpack.c.b16 %v1883, %v1878
  %v3044 = vpack.c.b16 %v1884, %v1879
  %v3045 = vpack.c.b16 %v1885, %v1880
  %v3046 = vpack.c.b16 %v1886, %v1881
  %v3047 = vpack.c.b16 %v1887, %v1882
  %v3048 = vpack.c.b16 %v1893, %v1888
  %v3049 = vpack.c.b16 %v1894, %v1889
  %v3050 = vpack.c.b16 %v1895, %v1890
  %v3051 = vpack.c.b16 %v1896, %v1891
  %v3052 = vpack.c.b16 %v1897, %v1892
  %v3053 = vpack.c.b16 %v1903, %v1898
  %v3054 = vpack.c.b16 %v1904, %v1899
  %v3055 = vpack.c.b16 %v1905, %v1900
  %v3056 = vpack.c.b16 %v1906, %v1901
  %v3057 = vpack.c.b16 %v1907, %v1902
  %v3058 = vpack.c.b16 %v1913, %v1908
  %v3059 = vpack.c.b16 %v1914, %v1909
  %v3060 = vpack.c.b16 %v1915, %v1910
  %v3061 = vpack.c.b16 %v1916, %v1911
  %v3062 = vpack.c.b16 %v1917, %v1912
  %v3063 = vpack.c.b16 %v1923, %v1918
  %v3064 = vpack.c.b16 %v1924, %v1919
  %v3065 = vpack.c.b16 %v1925, %v1920
  %v3066 = vpack.c.b16 %v1926, %v1921
  %v3067 = vpack.c.b16 %v1927, %v1922
  %v3068 = vpack.c.b16 %v1933, %v1928
  %v3069 = vpack.c.b16 %v1934, %v1929
  %v3070 = vpack.c.b16 %v1935, %v1930
  %v3071 = vpack.c.b16 %v1936, %v1931
  %v3072 = vpack.c.b16 %v1937, %v1932
  %v3073 = vpack.c.b16 %v1943, %v1938
  %v3074 = vpack.c.b16 %v1944, %v1939
  %v3075 = vpack.c.b16 %v1945, %v1940
  %v3076 = vpack.c.b16 %v1946, %v1941
  %v3077 = vpack.c.b16 %v1947, %v1942
  %v3078 = vpack.c.b16 %v1953, %v1948
  %v3079 = vpack.c.b16 %v1954, %v1949
  %v3080 = vpack.c.b16 %v1955, %v1950
  %v3081 = vpack.c.b16 %v1956, %v1951
  %v3082 = vpack.c.b16 %v1957, %v1952
  %v3083 = vpack.c.b16 %v1963, %v1958
  %v3084 = vpack.c.b16 %v1964, %v1959
  %v3085 = vpack.c.b16 %v1965, %v1960
  %v3086 = vpack.c.b16 %v1966, %v1961
  %v3087 = vpack.c.b16 %v1967, %v1962
  %v3088 = vpack.c.b16 %v1973, %v1968
  %v3089 = vpack.c.b16 %v1974, %v1969
  %v3090 = vpack.c.b16 %v1975, %v1970
  %v3091 = vpack.c.b16 %v1976, %v1971
  %v3092 = vpack.c.b16 %v1977, %v1972
  %v3093 = vpack.c.b16 %v1983, %v1978
  %v3094 = vpack.c.b16 %v1984, %v1979
  %v3095 = vpack.c.b16 %v1985, %v1980
  %v3096 = vpack.c.b16 %v1986, %v1981
  %v3097 = vpack.c.b16 %v1987, %v1982
  %v3098 = vpack.c.b16 %v1993, %v1988
  %v3099 = vpack.c.b16 %v1994, %v1989
  %v3100 = vpack.c.b16 %v1995, %v1990
  %v3101 = vpack.c.b16 %v1996, %v1991
  %v3102 = vpack.c.b16 %v1997, %v1992
  %v3103 = vpack.c.b16 %v2003, %v1998
  %v3104 = vpack.c.b16 %v2004, %v1999
  %v3105 = vpack.c.b16 %v2005, %v2000
  %v3106 = vpack.c.b16 %v2006, %v2001
  %v3107 = vpack.c.b16 %v2007, %v2002
  %v3108 = vpack.c.b16 %v2013, %v2008
  %v3109 = vpack.c.b16 %v2014, %v2009
  %v3110 = vpack.c.b16 %v2015, %v2010
  %v3111 = vpack.c.b16 %v2016, %v2011
  %v3112 = vpack.c.b16 %v2017, %v2012
  %v3113 = vpack.c.b16 %v2023, %v2018
  %v3114 = vpack.c.b16 %v2024, %v2019
  %v3115 = vpack.c.b16 %v2025, %v2020
  %v3116 = vpack.c.b16 %v2026, %v2021
  %v3117 = vpack.c.b16 %v2027, %v2022
  %v3118 = vpack.c.b16 %v2033, %v2028
  %v3119 = vpack.c.b16 %v2034, %v2029
  %v3120 = vpack.c.b16 %v2035, %v2030
  %v3121 = vpack.c.b16 %v2036, %v2031
  %v3122 = vpack.c.b16 %v2037, %v2032
  %v3123 = vpack.c.b16 %v2043, %v2038
  %v3124 = vpack.c.b16 %v2044, %v2039
  %v3125 = vpack.c.b16 %v2045, %v2040
  %v3126 = vpack.c.b16 %v2046, %v2041
  %v3127 = vpack.c.b16 %v2047, %v2042
  %v3128 = vpack.c.b16 %v2053, %v2048
  %v3129 = vpack.c.b16 %v2054, %v2049
  %v3130 = vpack.c.b16 %v2055, %v2050
  %v3131 = vpack.c.b16 %v2056, %v2051
  %v3132 = vpack.c.b16 %v2057, %v2052
  %v3133 = vpack.c.b16 %v2063, %v2058
  %v3134 = vpack.c.b16 %v2064, %v2059
  %v3135 = vpack.c.b16 %v2065, %v2060
  %v3136 = vpack.c.b16 %v2066, %v2061
  %v3137 = vpack.c.b16 %v2067, %v2062
  %v3138 = vpack.c.b16 %v2073, %v2068
  %v3139 = vpack.c.b16 %v2074, %v2069
  %v3140 = vpack.c.b16 %v2075, %v2070
  %v3141 = vpack.c.b16 %v2076, %v2071
  %v3142 = vpack.c.b16 %v2077, %v2072
  %v3143 = vpack.c.b16 %v2083, %v2078
  %v3144 = vpack.c.b16 %v2084, %v2079
  %v3145 = vpack.c.b16 %v2085, %v2080
  %v3146 = vpack.c.b16 %v2086, %v2081
  %v3147 = vpack.c.b16 %v2087, %v2082
  %v3148 = vpack.c.b16 %v2093, %v2088
  %v3149 = vpack.c.b16 %v2094, %v2089
  %v3150 = vpack.c.b16 %v2095, %v2090
  %v3151 = vpack.c.b16 %v2096, %v2091
  %v3152 = vpack.c.b16 %v2097, %v2092
  %v3153 = vpack.c.b16 %v2103, %v2098
  %v3154 = vpack.c.b16 %v2104, %v2099
  %v3155 = vpack.c.b16 %v2105, %v2100
  %v3156 = vpack.c.b16 %v2106, %v2101
  %v3157 = vpack.c.b16 %v2107, %v2102
  %v3158 = vpack.c.b16 %v2113, %v2108
  %v3159 = vpack.c.b16 %v2114, %v2109
  %v3160 = vpack.c.b16 %v2115, %v2110
  %v3161 = vpack.c.b16 %v2116, %v2111
  %v3162 = vpack.c.b16 %v2117, %v2112
  %v3163 = vpack.c.b16 %v2123, %v2118
  %v3164 = vpack.c.b16 %v2124, %v2119
  %v3165 = vpack.c.b16 %v2125, %v2120
  %v3166 = vpack.c.b16 %v2126, %v2121
  %v3167 = vpack.c.b16 %v2127, %v2122
  %v3168 = vpack.c.b16 %v2133, %v2128
  %v3169 = vpack.c.b16 %v2134, %v2129
  %v3170 = vpack.c.b16 %v2135, %v2130
  %v3171 = vpack.c.b16 %v2136, %v2131
  %v3172 = vpack.c.b16 %v2137, %v2132
  %v3173 = vpack.c.b16 %v2143, %v2138
  %v3174 = vpack.c.b16 %v2144, %v2139
  %v3175 = vpack.c.b16 %v2145, %v2140
  %v3176 = vpack.c.b16 %v2146, %v2141
  %v3177 = vpack.c.b16 %v2147, %v2142
  %v3178 = vpack.c.b16 %v2153, %v2148
  %v3179 = vpack.c.b16 %v2154, %v2149
  %v3180 = vpack.c.b16 %v2155, %v2150
  %v3181 = vpack.c.b16 %v2156, %v2151
  %v3182 = vpack.c.b16 %v2157, %v2152
  %v3183 = vpack.c.b16 %v2163, %v2158
  %v3184 = vpack.c.b16 %v2164, %v2159
  %v3185 = vpack.c.b16 %v2165, %v2160
  %v3186 = vpack.c.b16 %v2166, %v2161
  %v3187 = vpack.c.b16 %v2167, %v2162
  %v3188 = vpack.c.b16 %v2173, %v2168
  %v3189 = vpack.c.b16 %v2174, %v2169
  %v3190 = vpack.c.b16 %v2175, %v2170
  %v3191 = vpack.c.b16 %v2176, %v2171
  %v3192 = vpack.c.b16 %v2177, %v2172
  %v3193 = vpack.c.b16 %v2183, %v2178
  %v3194 = vpack.c.b16 %v2184, %v2179
  %v3195 = vpack.c.b16 %v2185, %v2180
  %v3196 = vpack.c.b16 %v2186, %v2181
  %v3197 = vpack.c.b16 %v2187, %v2182
  %v3198 = vpack.c.b16 %v2193, %v2188
  %v3199 = vpack.c.b16 %v2194, %v2189
  %v3200 = vpack.c.b16 %v2195, %v2190
  %v3201 = vpack.c.b16 %v2196, %v2191
  %v3202 = vpack.c.b16 %v2197, %v2192
  %v3203 = vpack.c.b16 %v2203, %v2198
  %v3204 = vpack.c.b16 %v2204, %v2199
  %v3205 = vpack.c.b16 %v2205, %v2200
  %v3206 = vpack.c.b16 %v2206, %v2201
  %v3207 = vpack.c.b16 %v2207, %v2202
  %v3208 = vpack.c.b16 %v2213, %v2208
  %v3209 = vpack.c.b16 %v2214, %v2209
  %v3210 = vpack.c.b16 %v2215, %v2210
  %v3211 = vpack.c.b16 %v2216, %v2211
  %v3212 = vpack.c.b16 %v2217, %v2212
  %v3213 = vpack.c.b16 %v2223, %v2218
  %v3214 = vpack.c.b16 %v2224, %v2219
  %v3215 = vpack.c.b16 %v2225, %v2220
  %v3216 = vpack.c.b16 %v2226, %v2221
  %v3217 = vpack.c.b16 %v2227, %v2222
  %v3218 = vpack.c.b16 %v2233, %v2228
  %v3219 = vpack.c.b16 %v2234, %v2229
  %v3220 = vpack.c.b16 %v2235, %v2230
  %v3221 = vpack.c.b16 %v2236, %v2231
  %v3222 = vpack.c.b16 %v2237, %v2232
  %v3223 = vpack.c.b16 %v2243, %v2238
  %v3224 = vpack.c.b16 %v2244, %v2239
  %v3225 = vpack.c.b16 %v2245, %v2240
  %v3226 = vpack.c.b16 %v2246, %v2241
  %v3227 = vpack.c.b16 %v2247, %v2242
  %v3228 = vpack.c.b16 %v2253, %v2248
  %v3229 = vpack.c.b16 %v2254, %v2249
  %v3230 = vpack.c.b16 %v2255, %v2250
  %v3231 = vpack.c.b16 %v2256, %v2251
  %v3232 = vpack.c.b16 %v2257, %v2252
  %v3233 = vpack.c.b16 %v2263, %v2258
  %v3234 = vpack.c.b16 %v2264, %v2259
  %v3235 = vpack.c.b16 %v2265, %v2260
  %v3236 = vpack.c.b16 %v2266, %v2261
  %v3237 = vpack.c.b16 %v2267, %v2262
  %v3238 = vpack.c.b16 %v2273, %v2268
  %v3239 = vpack.c.b16 %v2274, %v2269
  %v3240 = vpack.c.b16 %v2275, %v2270
  %v3241 = vpack.c.b16 %v2276, %v2271
  %v3242 = vpack.c.b16 %v2277, %v2272
  %v3243 = vpack.c.b16 %v2283, %v2278
  %v3244 = vpack.c.b16 %v2284, %v2279
  %v3245 = vpack.c.b16 %v2285, %v2280
  %v3246 = vpack.c.b16 %v2286, %v2281
  %v3247 = vpack.c.b16 %v2287, %v2282
  %v3248 = vpack.c.b16 %v2293, %v2288
  %v3249 = vpack.c.b16 %v2294, %v2289
  %v3250 = vpack.c.b16 %v2295, %v2290
  %v3251 = vpack.c.b16 %v2296, %v2291
  %v3252 = vpack.c.b16 %v2297, %v2292
  %v3253 = vpack.c.b16 %v2303, %v2298
  %v3254 = vpack.c.b16 %v2304, %v2299
  %v3255 = vpack.c.b16 %v2305, %v2300
  %v3256 = vpack.c.b16 %v2306, %v2301
  %v3257 = vpack.c.b16 %v2307, %v2302
  %v3258 = vpack.c.b16 %v2313, %v2308
  %v3259 = vpack.c.b16 %v2314, %v2309
  %v3260 = vpack.c.b16 %v2315, %v2310
  %v3261 = vpack.c.b16 %v2316, %v2311
  %v3262 = vpack.c.b16 %v2317, %v2312
  %v3263 = vpack.c.b16 %v2323, %v2318
  %v3264 = vpack.c.b16 %v2324, %v2319
  %v3265 = vpack.c.b16 %v2325, %v2320
  %v3266 = vpack.c.b16 %v2326, %v2321
  %v3267 = vpack.c.b16 %v2327, %v2322
  %v3268 = vpack.c.b16 %v2333, %v2328
  %v3269 = vpack.c.b16 %v2334, %v2329
  %v3270 = vpack.c.b16 %v2335, %v2330
  %v3271 = vpack.c.b16 %v2336, %v2331
  %v3272 = vpack.c.b16 %v2337, %v2332
  %v3273 = vpack.c.b16 %v2343, %v2338
  %v3274 = vpack.c.b16 %v2344, %v2339
  %v3275 = vpack.c.b16 %v2345, %v2340
  %v3276 = vpack.c.b16 %v2346, %v2341
  %v3277 = vpack.c.b16 %v2347, %v2342
  %v3278 = vpack.c.b16 %v2353, %v2348
  %v3279 = vpack.c.b16 %v2354, %v2349
  %v3280 = vpack.c.b16 %v2355, %v2350
  %v3281 = vpack.c.b16 %v2356, %v2351
  %v3282 = vpack.c.b16 %v2357, %v2352
  %v3283 = vpack.c.b16 %v2363, %v2358
  %v3284 = vpack.c.b16 %v2364, %v2359
  %v3285 = vpack.c.b16 %v2365, %v2360
  %v3286 = vpack.c.b16 %v2366, %v2361
  %v3287 = vpack.c.b16 %v2367, %v2362
  %v3288 = vpack.c.b16 %v2373, %v2368
  %v3289 = vpack.c.b16 %v2374, %v2369
  %v3290 = vpack.c.b16 %v2375, %v2370
  %v3291 = vpack.c.b16 %v2376, %v2371
  %v3292 = vpack.c.b16 %v2377, %v2372
  %v3293 = vpack.c.b16 %v2383, %v2378
  %v3294 = vpack.c.b16 %v2384, %v2379
  %v3295 = vpack.c.b16 %v2385, %v2380
  %v3296 = vpack.c.b16 %v2386, %v2381
  %v3297 = vpack.c.b16 %v2387, %v2382
  %v3298 = vpack.c.b16 %v2393, %v2388
  %v3299 = vpack.c.b16 %v2394, %v2389
  %v3300 = vpack.c.b16 %v2395, %v2390
  %v3301 = vpack.c.b16 %v2396, %v2391
  %v3302 = vpack.c.b16 %v2397, %v2392
  %v3303 = vpack.c.b16 %v2403, %v2398
  %v3304 = vpack.c.b16 %v2404, %v2399
  %v3305 = vpack.c.b16 %v2405, %v2400
  %v3306 = vpack.c.b16 %v2406, %v2401
  %v3307 = vpack.c.b16 %v2407, %v2402
  %v3308 = vpack.c.b16 %v2413, %v2408
  %v3309 = vpack.c.b16 %v2414, %v2409
  %v3310 = vpack.c.b16 %v2415, %v2410
  %v3311 = vpack.c.b16 %v2416, %v2411
  %v3312 = vpack.c.b16 %v2417, %v2412
  %v3313 = vpack.c.b16 %v2423, %v2418
  %v3314 = vpack.c.b16 %v2424, %v2419
  %v3315 = vpack.c.b16 %v2425, %v2420
  %v3316 = vpack.c.b16 %v2426, %v2421
  %v3317 = vpack.c.b16 %v2427, %v2422
  %v3318 = vpack.c.b16 %v2433, %v2428
  %v3319 = vpack.c.b16 %v2434, %v2429
  %v3320 = vpack.c.b16 %v2435, %v2430
  %v3321 = vpack.c.b16 %v2436, %v2431
  %v3322 = vpack.c.b16 %v2437, %v2432
  %v3323 = vpack.c.b16 %v2443, %v2438
  %v3324 = vpack.c.b16 %v2444, %v2439
  %v3325 = vpack.c.b16 %v2445, %v2440
  %v3326 = vpack.c.b16 %v2446, %v2441
  %v3327 = vpack.c.b16 %v2447, %v2442
  %v3328 = vpack.c.b16 %v2453, %v2448
  %v3329 = vpack.c.b16 %v2454, %v2449
  %v3330 = vpack.c.b16 %v2455, %v2450
  %v3331 = vpack.c.b16 %v2456, %v2451
  %v3332 = vpack.c.b16 %v2457, %v2452
  %v3333 = vpack.c.b16 %v2463, %v2458
  %v3334 = vpack.c.b16 %v2464, %v2459
  %v3335 = vpack.c.b16 %v2465, %v2460
  %v3336 = vpack.c.b16 %v2466, %v2461
  %v3337 = vpack.c.b16 %v2467, %v2462
  %v3338 = vpack.c.b16 %v2473, %v2468
  %v3339 = vpack.c.b16 %v2474, %v2469
  %v3340 = vpack.c.b16 %v2475, %v2470
  %v3341 = vpack.c.b16 %v2476, %v2471
  %v3342 = vpack.c.b16 %v2477, %v2472
  %v3343 = vpack.c.b16 %v2483, %v2478
  %v3344 = vpack.c.b16 %v2484, %v2479
  %v3345 = vpack.c.b16 %v2485, %v2480
  %v3346 = vpack.c.b16 %v2486, %v2481
  %v3347 = vpack.c.b16 %v2487, %v2482
  %v3348 = vpack.c.b16 %v2493, %v2488
  %v3349 = vpack.c.b16 %v2494, %v2489
  %v3350 = vpack.c.b16 %v2495, %v2490
  %v3351 = vpack.c.b16 %v2496, %v2491
  %v3352 = vpack.c.b16 %v2497, %v2492
  %v3353 = vpack.c.b16 %v2503, %v2498
  %v3354 = vpack.c.b16 %v2504, %v2499
  %v3355 = vpack.c.b16 %v2505, %v2500
  %v3356 = vpack.c.b16 %v2506, %v2501
  %v3357 = vpack.c.b16 %v2507, %v2502
  %v3358 = vpack.c.b16 %v2513, %v2508
  %v3359 = vpack.c.b16 %v2514, %v2509
  %v3360 = vpack.c.b16 %v2515, %v2510
  %v3361 = vpack.c.b16 %v2516, %v2511
  %v3362 = vpack.c.b16 %v2517, %v2512
  %v3363 = vpack.c.b16 %v2523, %v2518
  %v3364 = vpack.c.b16 %v2524, %v2519
  %v3365 = vpack.c.b16 %v2525, %v2520
  %v3366 = vpack.c.b16 %v2526, %v2521
  %v3367 = vpack.c.b16 %v2527, %v2522
  %v3368 = vpack.c.b16 %v2533, %v2528
  %v3369 = vpack.c.b16 %v2534, %v2529
  %v3370 = vpack.c.b16 %v2535, %v2530
  %v3371 = vpack.c.b16 %v2536, %v2531
  %v3372 = vpack.c.b16 %v2537, %v2532
  %v3373 = vpack.c.b16 %v2543, %v2538
  %v3374 = vpack.c.b16 %v2544, %v2539
  %v3375 = vpack.c.b16 %v2545, %v2540
  %v3376 = vpack.c.b16 %v2546, %v2541
  %v3377 = vpack.c.b16 %v2547, %v2542
  %v3378 = vpack.c.b16 %v2553, %v2548
  %v3379 = vpack.c.b16 %v2554, %v2549
  %v3380 = vpack.c.b16 %v2555, %v2550
  %v3381 = vpack.c.b16 %v2556, %v2551
  %v3382 = vpack.c.b16 %v2557, %v2552
  %v3383 = vpack.c.b16 %v2563, %v2558
  %v3384 = vpack.c.b16 %v2564, %v2559
  %v3385 = vpack.c.b16 %v2565, %v2560
  %v3386 = vpack.c.b16 %v2566, %v2561
  %v3387 = vpack.c.b16 %v2567, %v2562
  %v3388 = vpack.c.b16 %v2573, %v2568
  %v3389 = vpack.c.b16 %v2574, %v2569
  %v3390 = vpack.c.b16 %v2575, %v2570
  %v3391 = vpack.c.b16 %v2576, %v2571
  %v3392 = vpack.c.b16 %v2577, %v2572
  %v3393 = vpack.c.b16 %v2583, %v2578
  %v3394 = vpack.c.b16 %v2584, %v2579
  %v3395 = vpack.c.b16 %v2585, %v2580
  %v3396 = vpack.c.b16 %v2586, %v2581
  %v3397 = vpack.c.b16 %v2587, %v2582
  %v3398 = vpack.c.b16 %v2593, %v2588
  %v3399 = vpack.c.b16 %v2594, %v2589
  %v3400 = vpack.c.b16 %v2595, %v2590
  %v3401 = vpack.c.b16 %v2596, %v2591
  %v3402 = vpack.c.b16 %v2597, %v2592
  %v3403 = vpack.c.b16 %v2603, %v2598
  %v3404 = vpack.c.b16 %v2604, %v2599
  %v3405 = vpack.c.b16 %v2605, %v2600
  %v3406 = vpack.c.b16 %v2606, %v2601
  %v3407 = vpack.c.b16 %v2607, %v2602
  %v3408 = vpack.c.b16 %v2613, %v2608
  %v3409 = vpack.c.b16 %v2614, %v2609
  %v3410 = vpack.c.b16 %v2615, %v2610
  %v3411 = vpack.c.b16 %v2616, %v2611
  %v3412 = vpack.c.b16 %v2617, %v2612
  %v3413 = vpack.c.b16 %v2623, %v2618
  %v3414 = vpack.c.b16 %v2624, %v2619
  %v3415 = vpack.c.b16 %v2625, %v2620
  %v3416 = vpack.c.b16 %v2626, %v2621
  %v3417 = vpack.c.b16 %v2627, %v2622
  %v3418 = vpack.c.b16 %v2633, %v2628
  %v3419 = vpack.c.b16 %v2634, %v2629
  %v3420 = vpack.c.b16 %v2635, %v2630
  %v3421 = vpack.c.b16 %v2636, %v2631
  %v3422 = vpack.c.b16 %v2637, %v2632
  %v3423 = vpack.c.b16 %v2643, %v2638
  %v3424 = vpack.c.b16 %v2644, %v2639
  %v3425 = vpack.c.b16 %v2645, %v2640
  %v3426 = vpack.c.b16 %v2646, %v2641
  %v3427 = vpack.c.b16 %v2647, %v2642
  %v3428 = vpack.c.b16 %v2653, %v2648
  %v3429 = vpack.c.b16 %v2654, %v2649
  %v3430 = vpack.c.b16 %v2655, %v2650
  %v3431 = vpack.c.b16 %v2656, %v2651
  %v3432 = vpack.c.b16 %v2657, %v2652
  %v3433 = vpack.c.b16 %v2663, %v2658
  %v3434 = vpack.c.b16 %v2664, %v2659
  %v3435 = vpack.c.b16 %v2665, %v2660
  %v3436 = vpack.c.b16 %v2666, %v2661
  %v3437 = vpack.c.b16 %v2667, %v2662
  %v3438 = vpack.c.b16 %v2673, %v2668
  %v3439 = vpack.c.b16 %v2674, %v2669
  %v3440 = vpack.c.b16 %v2675, %v2670
  %v3441 = vpack.c.b16 %v2676, %v2671
  %v3442 = vpack.c.b16 %v2677, %v2672
  %v3443 = vpack.c.b16 %v2683, %v2678
  %v3444 = vpack.c.b16 %v2684, %v2679
  %v3445 = vpack.c.b16 %v2685, %v2680
  %v3446 = vpack.c.b16 %v2686, %v2681
  %v3447 = vpack.c.b16 %v2687, %v2682
  %v3448 = vpack.c.b16 %v2693, %v2688
  %v3449 = vpack.c.b16 %v2694, %v2689
  %v3450 = vpack.c.b16 %v2695, %v2690
  %v3451 = vpack.c.b16 %v2696, %v2691
  %v3452 = vpack.c.b16 %v2697, %v2692
  %v3453 = vpack.c.b16 %v2703, %v2698
  %v3454 = vpack.c.b16 %v2704, %v2699
  %v3455 = vpack.c.b16 %v2705, %v2700
  %v3456 = vpack.c.b16 %v2706, %v2701
  %v3457 = vpack.c.b16 %v2707, %v2702
  %v3458 = vpack.c.b16 %v2713, %v2708
  %v3459 = vpack.c.b16 %v2714, %v2709
  %v3460 = vpack.c.b16 %v2715, %v2710
  %v3461 = vpack.c.b16 %v2716, %v2711
  %v3462 = vpack.c.b16 %v2717, %v2712
  %v3463 = vpack.c.b16 %v2723, %v2718
  %v3464 = vpack.c.b16 %v2724, %v2719
  %v3465 = vpack.c.b16 %v2725, %v2720
  %v3466 = vpack.c.b16 %v2726, %v2721
  %v3467 = vpack.c.b16 %v2727, %v2722
  %v3468 = vpack.c.b16 %v2733, %v2728
  %v3469 = vpack.c.b16 %v2734, %v2729
  %v3470 = vpack.c.b16 %v2735, %v2730
  %v3471 = vpack.c.b16 %v2736, %v2731
  %v3472 = vpack.c.b16 %v2737, %v2732
  %v3473 = vpack.c.b16 %v2743, %v2738
  %v3474 = vpack.c.b16 %v2744, %v2739
  %v3475 = vpack.c.b16 %v2745, %v2740
  %v3476 = vpack.c.b16 %v2746, %v2741
  %v3477 = vpack.c.b16 %v2747, %v2742
  %v3478 = vpack.c.b16 %v2753, %v2748
  %v3479 = vpack.c.b16 %v2754, %v2749
  %v3480 = vpack.c.b16 %v2755, %v2750
  %v3481 = vpack.c.b16 %v2756, %v2751
  %v3482 = vpack.c.b16 %v2757, %v2752
  %v3483 = vpack.c.b16 %v2763, %v2758
  %v3484 = vpack.c.b16 %v2764, %v2759
  %v3485 = vpack.c.b16 %v2765, %v2760
  %v3486 = vpack.c.b16 %v2766, %v2761
  %v3487 = vpack.c.b16 %v2767, %v2762
  %v3488 = vpack.c.b16 %v2773, %v2768
  %v3489 = vpack.c.b16 %v2774, %v2769
  %v3490 = vpack.c.b16 %v2775, %v2770
  %v3491 = vpack.c.b16 %v2776, %v2771
  %v3492 = vpack.c.b16 %v2777, %v2772
  %v3493 = vpack.c.b16 %v2783, %v2778
  %v3494 = vpack.c.b16 %v2784, %v2779
  %v3495 = vpack.c.b16 %v2785, %v2780
  %v3496 = vpack.c.b16 %v2786, %v2781
  %v3497 = vpack.c.b16 %v2787, %v2782
  %v3498 = vpack.c.b16 %v2793, %v2788
  %v3499 = vpack.c.b16 %v2794, %v2789
  %v3500 = vpack.c.b16 %v2795, %v2790
  %v3501 = vpack.c.b16 %v2796, %v2791
  %v3502 = vpack.c.b16 %v2797, %v2792
  %v3503 = vpack.c.b16 %v2803, %v2798
  %v3504 = vpack.c.b16 %v2804, %v2799
  %v3505 = vpack.c.b16 %v2805, %v2800
  %v3506 = vpack.c.b16 %v2806, %v2801
  %v3507 = vpack.c.b16 %v2807, %v2802
  %v3508 = vpack.c.b16 %v2813, %v2808
  %v3509 = vpack.c.b16 %v2814, %v2809
  %v3510 = vpack.c.b16 %v2815, %v2810
  %v3511 = vpack.c.b16 %v2816, %v2811
  %v3512 = vpack.c.b16 %v2817, %v2812
  %v3513 = vpack.c.b16 %v2823, %v2818
  %v3514 = vpack.c.b16 %v2824, %v2819
  %v3515 = vpack.c.b16 %v2825, %v2820
  %v3516 = vpack.c.b16 %v2826, %v2821
  %v3517 = vpack.c.b16 %v2827, %v2822
  %v3518 = vpack.c.b16 %v2833, %v2828
  %v3519 = vpack.c.b16 %v2834, %v2829
  %v3520 = vpack.c.b16 %v2835, %v2830
  %v3521 = vpack.c.b16 %v2836, %v2831
  %v3522 = vpack.c.b16 %v2837, %v2832
  %v3523 = vpack.c.b16 %v2843, %v2838
  %v3524 = vpack.c.b16 %v2844, %v2839
  %v3525 = vpack.c.b16 %v2845, %v2840
  %v3526 = vpack.c.b16 %v2846, %v2841
  %v3527 = vpack.c.b16 %v2847, %v2842
  %v3528 = vpack.c.b16 %v2853, %v2848
  %v3529 = vpack.c.b16 %v2854, %v2849
  %v3530 = vpack.c.b16 %v2855, %v2850
  %v3531 = vpack.c.b16 %v2856, %v2851
  %v3532 = vpack.c.b16 %v2857, %v2852
  %v3533 = vpack.c.b16 %v2863, %v2858
  %v3534 = vpack.c.b16 %v2864, %v2859
  %v3535 = vpack.c.b16 %v2865, %v2860
  %v3536 = vpack.c.b16 %v2866, %v2861
  %v3537 = vpack.c.b16 %v2867, %v2862
  %v3538 = vpack.c.b16 %v2873, %v2868
  %v3539 = vpack.c.b16 %v2874, %v2869
  %v3540 = vpack.c.b16 %v2875, %v2870
  %v3541 = vpack.c.b16 %v2876, %v2871
  %v3542 = vpack.c.b16 %v2877, %v2872
  %v3543 = vpack.c.b16 %v2883, %v2878
  %v3544 = vpack.c.b16 %v2884, %v2879
  %v3545 = vpack.c.b16 %v2885, %v2880
  %v3546 = vpack.c.b16 %v2886, %v2881
  %v3547 = vpack.c.b16 %v2887, %v2882
  %v3548 = vpack.c.b16 %v2893, %v2888
  %v3549 = vpack.c.b16 %v2894, %v2889
  %v3550 = vpack.c.b16 %v2895, %v2890
  %v3551 = vpack.c.b16 %v2896, %v2891
  %v3552 = vpack.c.b16 %v2897, %v2892
  %v3553 = vpack.c.b16 %v2903, %v2898
  %v3554 = vpack.c.b16 %v2904, %v2899
  %v3555 = vpack.c.b16 %v2905, %v2900
  %v3556 = vpack.c.b16 %v2906, %v2901
  %v3557 = vpack.c.b16 %v2907, %v2902
  %v3558 = vpack.c.b16 %v2913, %v2908
  %v3559 = vpack.c.b16 %v2914, %v2909
  %v3560 = vpack.c.b16 %v2915, %v2910
  %v3561 = vpack.c.b16 %v2916, %v2911
  %v3562 = vpack.c.b16 %v2917, %v2912
  %v3563 = vpack.c.b16 %v2923, %v2918
  %v3564 = vpack.c.b16 %v2924, %v2919
  %v3565 = vpack.c.b16 %v2925, %v2920
  %v3566 = vpack.c.b16 %v2926, %v2921
  %v3567 = vpack.c.b16 %v2927, %v2922
  %4208 = vmatprep.subr.bf16.mxu0 %v2929
  %4209 = vmatpush1.bf16.msra.mxu0 %v2928
  %4210 = vmatprep.subr.bf16.mxu0 %v2934
  %4211 = vmatpush1.bf16.msra.mxu0 %v2933
  %4212 = vmatprep.subr.bf16.mxu0 %v2939
  %4213 = vmatpush1.bf16.msra.mxu0 %v2938
  %4214 = vmatprep.subr.bf16.mxu0 %v2944
  %4215 = vmatpush1.bf16.msra.mxu0 %v2943
  %4216 = vmatprep.subr.bf16.mxu0 %v2949
  %4217 = vmatpush1.bf16.msra.mxu0 %v2948
  %4218 = vmatprep.subr.bf16.mxu0 %v2954
  %4219 = vmatpush1.bf16.msra.mxu0 %v2953
  %4220 = vmatprep.subr.bf16.mxu0 %v2959
  %4221 = vmatpush1.bf16.msra.mxu0 %v2958
  %4222 = vmatprep.subr.bf16.mxu0 %v2964
  %4223 = vmatpush1.bf16.msra.mxu0 %v2963
  %4224 = vmatprep.subr.bf16.mxu0 %v2969
  %4225 = vmatpush1.bf16.msra.mxu0 %v2968
  %4226 = vmatprep.subr.bf16.mxu0 %v2974
  %4227 = vmatpush1.bf16.msra.mxu0 %v2973
  %4228 = vmatprep.subr.bf16.mxu0 %v2979
  %4229 = vmatpush1.bf16.msra.mxu0 %v2978
  %4230 = vmatprep.subr.bf16.mxu0 %v2984
  %4231 = vmatpush1.bf16.msra.mxu0 %v2983
  %4232 = vmatprep.subr.bf16.mxu0 %v2989
  %4233 = vmatpush1.bf16.msra.mxu0 %v2988
  %4234 = vmatprep.subr.bf16.mxu0 %v2994
  %4235 = vmatpush1.bf16.msra.mxu0 %v2993
  %4236 = vmatprep.subr.bf16.mxu0 %v2999
  %4237 = vmatpush1.bf16.msra.mxu0 %v2998
  %4238 = vmatprep.subr.bf16.mxu0 %v3004
  %4239 = vmatpush1.bf16.msra.mxu0 %v3003
  %4240 = vmatprep.mubr.bf16.mxu0 %v849
  %4241 = vmatmul.mubr.bf16.gmra.mrb[0].mxu0 %v848
  %v4242 = vpop.f32.mrb[0].mxu0
  %v4243 = vadd.f32 %v802, %v4242
  %v4244 = vpop.f32.mrb[0].mxu0
  %v4245 = vadd.f32 %v806, %v4244
  %v4246 = vpop.f32.mrb[0].mxu0
  %v4247 = vpop.f32.mrb[0].mxu0
  %4248 = vdwg.mxu0
  %4249 = vmatprep.subr.bf16.mxu0 %v3009
  %4250 = vmatpush1.bf16.msra.mxu0 %v3008
  %4251 = vmatprep.subr.bf16.mxu0 %v3014
  %4252 = vmatpush1.bf16.msra.mxu0 %v3013
  %4253 = vmatprep.subr.bf16.mxu0 %v3019
  %4254 = vmatpush1.bf16.msra.mxu0 %v3018
  %4255 = vmatprep.subr.bf16.mxu0 %v3024
  %4256 = vmatpush1.bf16.msra.mxu0 %v3023
  %4257 = vmatprep.subr.bf16.mxu0 %v3029
  %4258 = vmatpush1.bf16.msra.mxu0 %v3028
  %4259 = vmatprep.subr.bf16.mxu0 %v3034
  %4260 = vmatpush1.bf16.msra.mxu0 %v3033
  %4261 = vmatprep.subr.bf16.mxu0 %v3039
  %4262 = vmatpush1.bf16.msra.mxu0 %v3038
  %4263 = vmatprep.subr.bf16.mxu0 %v3044
  %4264 = vmatpush1.bf16.msra.mxu0 %v3043
  %4265 = vmatprep.subr.bf16.mxu0 %v3049
  %4266 = vmatpush1.bf16.msra.mxu0 %v3048
  %4267 = vmatprep.subr.bf16.mxu0 %v3054
  %4268 = vmatpush1.bf16.msra.mxu0 %v3053
  %4269 = vmatprep.subr.bf16.mxu0 %v3059
  %4270 = vmatpush1.bf16.msra.mxu0 %v3058
  %4271 = vmatprep.subr.bf16.mxu0 %v3064
  %4272 = vmatpush1.bf16.msra.mxu0 %v3063
  %4273 = vmatprep.subr.bf16.mxu0 %v3069
  %4274 = vmatpush1.bf16.msra.mxu0 %v3068
  %4275 = vmatprep.subr.bf16.mxu0 %v3074
  %4276 = vmatpush1.bf16.msra.mxu0 %v3073
  %4277 = vmatprep.subr.bf16.mxu0 %v3079
  %4278 = vmatpush1.bf16.msra.mxu0 %v3078
  %4279 = vmatprep.subr.bf16.mxu0 %v3084
  %4280 = vmatpush1.bf16.msra.mxu0 %v3083
  %4281 = vmatprep.mubr.bf16.mxu0 %v851
  %4282 = vmatmul.mubr.bf16.gmra.mrb[0].mxu0 %v850
  %v4283 = vpop.f32.mrb[0].mxu0
  %v4284 = vadd.f32 %v4243, %v4283
  %v4285 = vpop.f32.mrb[0].mxu0
  %v4286 = vadd.f32 %v4245, %v4285
  %v4287 = vpop.f32.mrb[0].mxu0
  %v4288 = vpop.f32.mrb[0].mxu0
  %4289 = vdwg.mxu0
  %4290 = vmatprep.subr.bf16.mxu0 %v3089
  %4291 = vmatpush1.bf16.msra.mxu0 %v3088
  %4292 = vmatprep.subr.bf16.mxu0 %v3094
  %4293 = vmatpush1.bf16.msra.mxu0 %v3093
  %4294 = vmatprep.subr.bf16.mxu0 %v3099
  %4295 = vmatpush1.bf16.msra.mxu0 %v3098
  %4296 = vmatprep.subr.bf16.mxu0 %v3104
  %4297 = vmatpush1.bf16.msra.mxu0 %v3103
  %4298 = vmatprep.subr.bf16.mxu0 %v3109
  %4299 = vmatpush1.bf16.msra.mxu0 %v3108
  %4300 = vmatprep.subr.bf16.mxu0 %v3114
  %4301 = vmatpush1.bf16.msra.mxu0 %v3113
  %4302 = vmatprep.subr.bf16.mxu0 %v3119
  %4303 = vmatpush1.bf16.msra.mxu0 %v3118
  %4304 = vmatprep.subr.bf16.mxu0 %v3124
  %4305 = vmatpush1.bf16.msra.mxu0 %v3123
  %4306 = vmatprep.subr.bf16.mxu0 %v3129
  %4307 = vmatpush1.bf16.msra.mxu0 %v3128
  %4308 = vmatprep.subr.bf16.mxu0 %v3134
  %4309 = vmatpush1.bf16.msra.mxu0 %v3133
  %4310 = vmatprep.subr.bf16.mxu0 %v3139
  %4311 = vmatpush1.bf16.msra.mxu0 %v3138
  %4312 = vmatprep.subr.bf16.mxu0 %v3144
  %4313 = vmatpush1.bf16.msra.mxu0 %v3143
  %4314 = vmatprep.subr.bf16.mxu0 %v3149
  %4315 = vmatpush1.bf16.msra.mxu0 %v3148
  %4316 = vmatprep.subr.bf16.mxu0 %v3154
  %4317 = vmatpush1.bf16.msra.mxu0 %v3153
  %4318 = vmatprep.subr.bf16.mxu0 %v3159
  %4319 = vmatpush1.bf16.msra.mxu0 %v3158
  %4320 = vmatprep.subr.bf16.mxu0 %v3164
  %4321 = vmatpush1.bf16.msra.mxu0 %v3163
  %4322 = vmatprep.mubr.bf16.mxu0 %v853
  %4323 = vmatmul.mubr.bf16.gmra.mrb[0].mxu0 %v852
  %v4324 = vpop.f32.mrb[0].mxu0
  %v4325 = vadd.f32 %v4284, %v4324
  %v4326 = vpop.f32.mrb[0].mxu0
  %v4327 = vadd.f32 %v4286, %v4326
  %v4328 = vpop.f32.mrb[0].mxu0
  %v4329 = vpop.f32.mrb[0].mxu0
  %4330 = vdwg.mxu0
  %4331 = vmatprep.subr.bf16.mxu0 %v3169
  %4332 = vmatpush1.bf16.msra.mxu0 %v3168
  %4333 = vmatprep.subr.bf16.mxu0 %v3174
  %4334 = vmatpush1.bf16.msra.mxu0 %v3173
  %4335 = vmatprep.subr.bf16.mxu0 %v3179
  %4336 = vmatpush1.bf16.msra.mxu0 %v3178
  %4337 = vmatprep.subr.bf16.mxu0 %v3184
  %4338 = vmatpush1.bf16.msra.mxu0 %v3183
  %4339 = vmatprep.subr.bf16.mxu0 %v3189
  %4340 = vmatpush1.bf16.msra.mxu0 %v3188
  %4341 = vmatprep.subr.bf16.mxu0 %v3194
  %4342 = vmatpush1.bf16.msra.mxu0 %v3193
  %4343 = vmatprep.subr.bf16.mxu0 %v3199
  %4344 = vmatpush1.bf16.msra.mxu0 %v3198
  %4345 = vmatprep.subr.bf16.mxu0 %v3204
  %4346 = vmatpush1.bf16.msra.mxu0 %v3203
  %4347 = vmatprep.subr.bf16.mxu0 %v3209
  %4348 = vmatpush1.bf16.msra.mxu0 %v3208
  %4349 = vmatprep.subr.bf16.mxu0 %v3214
  %4350 = vmatpush1.bf16.msra.mxu0 %v3213
  %4351 = vmatprep.subr.bf16.mxu0 %v3219
  %4352 = vmatpush1.bf16.msra.mxu0 %v3218
  %4353 = vmatprep.subr.bf16.mxu0 %v3224
  %4354 = vmatpush1.bf16.msra.mxu0 %v3223
  %4355 = vmatprep.subr.bf16.mxu0 %v3229
  %4356 = vmatpush1.bf16.msra.mxu0 %v3228
  %4357 = vmatprep.subr.bf16.mxu0 %v3234
  %4358 = vmatpush1.bf16.msra.mxu0 %v3233
  %4359 = vmatprep.subr.bf16.mxu0 %v3239
  %4360 = vmatpush1.bf16.msra.mxu0 %v3238
  %4361 = vmatprep.subr.bf16.mxu0 %v3244
  %4362 = vmatpush1.bf16.msra.mxu0 %v3243
  %4363 = vmatprep.mubr.bf16.mxu0 %v855
  %4364 = vmatmul.mubr.bf16.gmra.mrb[0].mxu0 %v854
  %v4365 = vpop.f32.mrb[0].mxu0
  %v4366 = vadd.f32 %v4325, %v4365
  %v4367 = vpop.f32.mrb[0].mxu0
  %v4368 = vadd.f32 %v4327, %v4367
  %v4369 = vpop.f32.mrb[0].mxu0
  %v4370 = vpop.f32.mrb[0].mxu0
  %4371 = vdwg.mxu0
  %4372 = vmatprep.subr.bf16.mxu0 %v3249
  %4373 = vmatpush1.bf16.msra.mxu0 %v3248
  %4374 = vmatprep.subr.bf16.mxu0 %v3254
  %4375 = vmatpush1.bf16.msra.mxu0 %v3253
  %4376 = vmatprep.subr.bf16.mxu0 %v3259
  %4377 = vmatpush1.bf16.msra.mxu0 %v3258
  %4378 = vmatprep.subr.bf16.mxu0 %v3264
  %4379 = vmatpush1.bf16.msra.mxu0 %v3263
  %4380 = vmatprep.subr.bf16.mxu0 %v3269
  %4381 = vmatpush1.bf16.msra.mxu0 %v3268
  %4382 = vmatprep.subr.bf16.mxu0 %v3274
  %4383 = vmatpush1.bf16.msra.mxu0 %v3273
  %4384 = vmatprep.subr.bf16.mxu0 %v3279
  %4385 = vmatpush1.bf16.msra.mxu0 %v3278
  %4386 = vmatprep.subr.bf16.mxu0 %v3284
  %4387 = vmatpush1.bf16.msra.mxu0 %v3283
  %4388 = vmatprep.subr.bf16.mxu0 %v3289
  %4389 = vmatpush1.bf16.msra.mxu0 %v3288
  %4390 = vmatprep.subr.bf16.mxu0 %v3294
  %4391 = vmatpush1.bf16.msra.mxu0 %v3293
  %4392 = vmatprep.subr.bf16.mxu0 %v3299
  %4393 = vmatpush1.bf16.msra.mxu0 %v3298
  %4394 = vmatprep.subr.bf16.mxu0 %v3304
  %4395 = vmatpush1.bf16.msra.mxu0 %v3303
  %4396 = vmatprep.subr.bf16.mxu0 %v3309
  %4397 = vmatpush1.bf16.msra.mxu0 %v3308
  %4398 = vmatprep.subr.bf16.mxu0 %v3314
  %4399 = vmatpush1.bf16.msra.mxu0 %v3313
  %4400 = vmatprep.subr.bf16.mxu0 %v3319
  %4401 = vmatpush1.bf16.msra.mxu0 %v3318
  %4402 = vmatprep.subr.bf16.mxu0 %v3324
  %4403 = vmatpush1.bf16.msra.mxu0 %v3323
  %4404 = vmatprep.mubr.bf16.mxu0 %v857
  %4405 = vmatmul.mubr.bf16.gmra.mrb[0].mxu0 %v856
  %v4406 = vpop.f32.mrb[0].mxu0
  %v4407 = vadd.f32 %v4366, %v4406
  %v4408 = vpop.f32.mrb[0].mxu0
  %v4409 = vadd.f32 %v4368, %v4408
  %v4410 = vpop.f32.mrb[0].mxu0
  %v4411 = vpop.f32.mrb[0].mxu0
  %4412 = vdwg.mxu0
  %4413 = vmatprep.subr.bf16.mxu0 %v3329
  %4414 = vmatpush1.bf16.msra.mxu0 %v3328
  %4415 = vmatprep.subr.bf16.mxu0 %v3334
  %4416 = vmatpush1.bf16.msra.mxu0 %v3333
  %4417 = vmatprep.subr.bf16.mxu0 %v3339
  %4418 = vmatpush1.bf16.msra.mxu0 %v3338
  %4419 = vmatprep.subr.bf16.mxu0 %v3344
  %4420 = vmatpush1.bf16.msra.mxu0 %v3343
  %4421 = vmatprep.subr.bf16.mxu0 %v3349
  %4422 = vmatpush1.bf16.msra.mxu0 %v3348
  %4423 = vmatprep.subr.bf16.mxu0 %v3354
  %4424 = vmatpush1.bf16.msra.mxu0 %v3353
  %4425 = vmatprep.subr.bf16.mxu0 %v3359
  %4426 = vmatpush1.bf16.msra.mxu0 %v3358
  %4427 = vmatprep.subr.bf16.mxu0 %v3364
  %4428 = vmatpush1.bf16.msra.mxu0 %v3363
  %4429 = vmatprep.subr.bf16.mxu0 %v3369
  %4430 = vmatpush1.bf16.msra.mxu0 %v3368
  %4431 = vmatprep.subr.bf16.mxu0 %v3374
  %4432 = vmatpush1.bf16.msra.mxu0 %v3373
  %4433 = vmatprep.subr.bf16.mxu0 %v3379
  %4434 = vmatpush1.bf16.msra.mxu0 %v3378
  %4435 = vmatprep.subr.bf16.mxu0 %v3384
  %4436 = vmatpush1.bf16.msra.mxu0 %v3383
  %4437 = vmatprep.subr.bf16.mxu0 %v3389
  %4438 = vmatpush1.bf16.msra.mxu0 %v3388
  %4439 = vmatprep.subr.bf16.mxu0 %v3394
  %4440 = vmatpush1.bf16.msra.mxu0 %v3393
  %4441 = vmatprep.subr.bf16.mxu0 %v3399
  %4442 = vmatpush1.bf16.msra.mxu0 %v3398
  %4443 = vmatprep.subr.bf16.mxu0 %v3404
  %4444 = vmatpush1.bf16.msra.mxu0 %v3403
  %4445 = vmatprep.mubr.bf16.mxu0 %v859
  %4446 = vmatmul.mubr.bf16.gmra.mrb[0].mxu0 %v858
  %v4447 = vpop.f32.mrb[0].mxu0
  %v4448 = vadd.f32 %v4407, %v4447
  %v4449 = vpop.f32.mrb[0].mxu0
  %v4450 = vadd.f32 %v4409, %v4449
  %v4451 = vpop.f32.mrb[0].mxu0
  %v4452 = vpop.f32.mrb[0].mxu0
  %4453 = vdwg.mxu0
  %4454 = vmatprep.subr.bf16.mxu0 %v3409
  %4455 = vmatpush1.bf16.msra.mxu0 %v3408
  %4456 = vmatprep.subr.bf16.mxu0 %v3414
  %4457 = vmatpush1.bf16.msra.mxu0 %v3413
  %4458 = vmatprep.subr.bf16.mxu0 %v3419
  %4459 = vmatpush1.bf16.msra.mxu0 %v3418
  %4460 = vmatprep.subr.bf16.mxu0 %v3424
  %4461 = vmatpush1.bf16.msra.mxu0 %v3423
  %4462 = vmatprep.subr.bf16.mxu0 %v3429
  %4463 = vmatpush1.bf16.msra.mxu0 %v3428
  %4464 = vmatprep.subr.bf16.mxu0 %v3434
  %4465 = vmatpush1.bf16.msra.mxu0 %v3433
  %4466 = vmatprep.subr.bf16.mxu0 %v3439
  %4467 = vmatpush1.bf16.msra.mxu0 %v3438
  %4468 = vmatprep.subr.bf16.mxu0 %v3444
  %4469 = vmatpush1.bf16.msra.mxu0 %v3443
  %4470 = vmatprep.subr.bf16.mxu0 %v3449
  %4471 = vmatpush1.bf16.msra.mxu0 %v3448
  %4472 = vmatprep.subr.bf16.mxu0 %v3454
  %4473 = vmatpush1.bf16.msra.mxu0 %v3453
  %4474 = vmatprep.subr.bf16.mxu0 %v3459
  %4475 = vmatpush1.bf16.msra.mxu0 %v3458
  %4476 = vmatprep.subr.bf16.mxu0 %v3464
  %4477 = vmatpush1.bf16.msra.mxu0 %v3463
  %4478 = vmatprep.subr.bf16.mxu0 %v3469
  %4479 = vmatpush1.bf16.msra.mxu0 %v3468
  %4480 = vmatprep.subr.bf16.mxu0 %v3474
  %4481 = vmatpush1.bf16.msra.mxu0 %v3473
  %4482 = vmatprep.subr.bf16.mxu0 %v3479
  %4483 = vmatpush1.bf16.msra.mxu0 %v3478
  %4484 = vmatprep.subr.bf16.mxu0 %v3484
  %4485 = vmatpush1.bf16.msra.mxu0 %v3483
  %4486 = vmatprep.mubr.bf16.mxu0 %v861
  %4487 = vmatmul.mubr.bf16.gmra.mrb[0].mxu0 %v860
  %v4488 = vpop.f32.mrb[0].mxu0
  %v4489 = vadd.f32 %v4448, %v4488
  %v4490 = vpop.f32.mrb[0].mxu0
  %v4491 = vadd.f32 %v4450, %v4490
  %v4492 = vpop.f32.mrb[0].mxu0
  %v4493 = vpop.f32.mrb[0].mxu0
  %4494 = vdwg.mxu0
  %4495 = vmatprep.subr.bf16.mxu0 %v3489
  %4496 = vmatpush1.bf16.msra.mxu0 %v3488
  %4497 = vmatprep.subr.bf16.mxu0 %v3494
  %4498 = vmatpush1.bf16.msra.mxu0 %v3493
  %4499 = vmatprep.subr.bf16.mxu0 %v3499
  %4500 = vmatpush1.bf16.msra.mxu0 %v3498
  %4501 = vmatprep.subr.bf16.mxu0 %v3504
  %4502 = vmatpush1.bf16.msra.mxu0 %v3503
  %4503 = vmatprep.subr.bf16.mxu0 %v3509
  %4504 = vmatpush1.bf16.msra.mxu0 %v3508
  %4505 = vmatprep.subr.bf16.mxu0 %v3514
  %4506 = vmatpush1.bf16.msra.mxu0 %v3513
  %4507 = vmatprep.subr.bf16.mxu0 %v3519
  %4508 = vmatpush1.bf16.msra.mxu0 %v3518
  %4509 = vmatprep.subr.bf16.mxu0 %v3524
  %4510 = vmatpush1.bf16.msra.mxu0 %v3523
  %4511 = vmatprep.subr.bf16.mxu0 %v3529
  %4512 = vmatpush1.bf16.msra.mxu0 %v3528
  %4513 = vmatprep.subr.bf16.mxu0 %v3534
  %4514 = vmatpush1.bf16.msra.mxu0 %v3533
  %4515 = vmatprep.subr.bf16.mxu0 %v3539
  %4516 = vmatpush1.bf16.msra.mxu0 %v3538
  %4517 = vmatprep.subr.bf16.mxu0 %v3544
  %4518 = vmatpush1.bf16.msra.mxu0 %v3543
  %4519 = vmatprep.subr.bf16.mxu0 %v3549
  %4520 = vmatpush1.bf16.msra.mxu0 %v3548
  %4521 = vmatprep.subr.bf16.mxu0 %v3554
  %4522 = vmatpush1.bf16.msra.mxu0 %v3553
  %4523 = vmatprep.subr.bf16.mxu0 %v3559
  %4524 = vmatpush1.bf16.msra.mxu0 %v3558
  %4525 = vmatprep.subr.bf16.mxu0 %v3564
  %4526 = vmatpush1.bf16.msra.mxu0 %v3563
  %4527 = vmatprep.mubr.bf16.mxu0 %v863
  %4528 = vmatmul.mubr.bf16.gmra.mrb[0].mxu0 %v862
  %v4529 = vpop.f32.mrb[0].mxu0
  %v4530 = vadd.f32 %v4489, %v4529
  %v4531 = vpop.f32.mrb[0].mxu0
  %v4532 = vadd.f32 %v4491, %v4531
  %v4533 = vpop.f32.mrb[0].mxu0
  %v4534 = vpop.f32.mrb[0].mxu0
  %4535 = vdwg.mxu0
  %4536 = vmatprep.subr.bf16.mxu0 %v2931
  %4537 = vmatpush1.bf16.msra.mxu0 %v2930
  %4538 = vmatprep.subr.bf16.mxu0 %v2936
  %4539 = vmatpush1.bf16.msra.mxu0 %v2935
  %4540 = vmatprep.subr.bf16.mxu0 %v2941
  %4541 = vmatpush1.bf16.msra.mxu0 %v2940
  %4542 = vmatprep.subr.bf16.mxu0 %v2946
  %4543 = vmatpush1.bf16.msra.mxu0 %v2945
  %4544 = vmatprep.subr.bf16.mxu0 %v2951
  %4545 = vmatpush1.bf16.msra.mxu0 %v2950
  %4546 = vmatprep.subr.bf16.mxu0 %v2956
  %4547 = vmatpush1.bf16.msra.mxu0 %v2955
  %4548 = vmatprep.subr.bf16.mxu0 %v2961
  %4549 = vmatpush1.bf16.msra.mxu0 %v2960
  %4550 = vmatprep.subr.bf16.mxu0 %v2966
  %4551 = vmatpush1.bf16.msra.mxu0 %v2965
  %4552 = vmatprep.subr.bf16.mxu0 %v2971
  %4553 = vmatpush1.bf16.msra.mxu0 %v2970
  %4554 = vmatprep.subr.bf16.mxu0 %v2976
  %4555 = vmatpush1.bf16.msra.mxu0 %v2975
  %4556 = vmatprep.subr.bf16.mxu0 %v2981
  %4557 = vmatpush1.bf16.msra.mxu0 %v2980
  %4558 = vmatprep.subr.bf16.mxu0 %v2986
  %4559 = vmatpush1.bf16.msra.mxu0 %v2985
  %4560 = vmatprep.subr.bf16.mxu0 %v2991
  %4561 = vmatpush1.bf16.msra.mxu0 %v2990
  %4562 = vmatprep.subr.bf16.mxu0 %v2996
  %4563 = vmatpush1.bf16.msra.mxu0 %v2995
  %4564 = vmatprep.subr.bf16.mxu0 %v3001
  %4565 = vmatpush1.bf16.msra.mxu0 %v3000
  %4566 = vmatprep.subr.bf16.mxu0 %v3006
  %4567 = vmatpush1.bf16.msra.mxu0 %v3005
  %4568 = vmatprep.mubr.bf16.mxu0 %v849
  %4569 = vmatmul.mubr.bf16.gmra.mrb[0].mxu0 %v848
  %v4570 = vpop.f32.mrb[0].mxu0
  %v4571 = vadd.f32 %v810, %v4570
  %v4572 = vpop.f32.mrb[0].mxu0
  %v4573 = vadd.f32 %v814, %v4572
  %v4574 = vpop.f32.mrb[0].mxu0
  %v4575 = vpop.f32.mrb[0].mxu0
  %4576 = vdwg.mxu0
  %4577 = vmatprep.subr.bf16.mxu0 %v3011
  %4578 = vmatpush1.bf16.msra.mxu0 %v3010
  %4579 = vmatprep.subr.bf16.mxu0 %v3016
  %4580 = vmatpush1.bf16.msra.mxu0 %v3015
  %4581 = vmatprep.subr.bf16.mxu0 %v3021
  %4582 = vmatpush1.bf16.msra.mxu0 %v3020
  %4583 = vmatprep.subr.bf16.mxu0 %v3026
  %4584 = vmatpush1.bf16.msra.mxu0 %v3025
  %4585 = vmatprep.subr.bf16.mxu0 %v3031
  %4586 = vmatpush1.bf16.msra.mxu0 %v3030
  %4587 = vmatprep.subr.bf16.mxu0 %v3036
  %4588 = vmatpush1.bf16.msra.mxu0 %v3035
  %4589 = vmatprep.subr.bf16.mxu0 %v3041
  %4590 = vmatpush1.bf16.msra.mxu0 %v3040
  %4591 = vmatprep.subr.bf16.mxu0 %v3046
  %4592 = vmatpush1.bf16.msra.mxu0 %v3045
  %4593 = vmatprep.subr.bf16.mxu0 %v3051
  %4594 = vmatpush1.bf16.msra.mxu0 %v3050
  %4595 = vmatprep.subr.bf16.mxu0 %v3056
  %4596 = vmatpush1.bf16.msra.mxu0 %v3055
  %4597 = vmatprep.subr.bf16.mxu0 %v3061
  %4598 = vmatpush1.bf16.msra.mxu0 %v3060
  %4599 = vmatprep.subr.bf16.mxu0 %v3066
  %4600 = vmatpush1.bf16.msra.mxu0 %v3065
  %4601 = vmatprep.subr.bf16.mxu0 %v3071
  %4602 = vmatpush1.bf16.msra.mxu0 %v3070
  %4603 = vmatprep.subr.bf16.mxu0 %v3076
  %4604 = vmatpush1.bf16.msra.mxu0 %v3075
  %4605 = vmatprep.subr.bf16.mxu0 %v3081
  %4606 = vmatpush1.bf16.msra.mxu0 %v3080
  %4607 = vmatprep.subr.bf16.mxu0 %v3086
  %4608 = vmatpush1.bf16.msra.mxu0 %v3085
  %4609 = vmatprep.mubr.bf16.mxu0 %v851
  %4610 = vmatmul.mubr.bf16.gmra.mrb[0].mxu0 %v850
  %v4611 = vpop.f32.mrb[0].mxu0
  %v4612 = vadd.f32 %v4571, %v4611
  %v4613 = vpop.f32.mrb[0].mxu0
  %v4614 = vadd.f32 %v4573, %v4613
  %v4615 = vpop.f32.mrb[0].mxu0
  %v4616 = vpop.f32.mrb[0].mxu0
  %4617 = vdwg.mxu0
  %4618 = vmatprep.subr.bf16.mxu0 %v3091
  %4619 = vmatpush1.bf16.msra.mxu0 %v3090
  %4620 = vmatprep.subr.bf16.mxu0 %v3096
  %4621 = vmatpush1.bf16.msra.mxu0 %v3095
  %4622 = vmatprep.subr.bf16.mxu0 %v3101
  %4623 = vmatpush1.bf16.msra.mxu0 %v3100
  %4624 = vmatprep.subr.bf16.mxu0 %v3106
  %4625 = vmatpush1.bf16.msra.mxu0 %v3105
  %4626 = vmatprep.subr.bf16.mxu0 %v3111
  %4627 = vmatpush1.bf16.msra.mxu0 %v3110
  %4628 = vmatprep.subr.bf16.mxu0 %v3116
  %4629 = vmatpush1.bf16.msra.mxu0 %v3115
  %4630 = vmatprep.subr.bf16.mxu0 %v3121
  %4631 = vmatpush1.bf16.msra.mxu0 %v3120
  %4632 = vmatprep.subr.bf16.mxu0 %v3126
  %4633 = vmatpush1.bf16.msra.mxu0 %v3125
  %4634 = vmatprep.subr.bf16.mxu0 %v3131
  %4635 = vmatpush1.bf16.msra.mxu0 %v3130
  %4636 = vmatprep.subr.bf16.mxu0 %v3136
  %4637 = vmatpush1.bf16.msra.mxu0 %v3135
  %4638 = vmatprep.subr.bf16.mxu0 %v3141
  %4639 = vmatpush1.bf16.msra.mxu0 %v3140
  %4640 = vmatprep.subr.bf16.mxu0 %v3146
  %4641 = vmatpush1.bf16.msra.mxu0 %v3145
  %4642 = vmatprep.subr.bf16.mxu0 %v3151
  %4643 = vmatpush1.bf16.msra.mxu0 %v3150
  %4644 = vmatprep.subr.bf16.mxu0 %v3156
  %4645 = vmatpush1.bf16.msra.mxu0 %v3155
  %4646 = vmatprep.subr.bf16.mxu0 %v3161
  %4647 = vmatpush1.bf16.msra.mxu0 %v3160
  %4648 = vmatprep.subr.bf16.mxu0 %v3166
  %4649 = vmatpush1.bf16.msra.mxu0 %v3165
  %4650 = vmatprep.mubr.bf16.mxu0 %v853
  %4651 = vmatmul.mubr.bf16.gmra.mrb[0].mxu0 %v852
  %v4652 = vpop.f32.mrb[0].mxu0
  %v4653 = vadd.f32 %v4612, %v4652
  %v4654 = vpop.f32.mrb[0].mxu0
  %v4655 = vadd.f32 %v4614, %v4654
  %v4656 = vpop.f32.mrb[0].mxu0
  %v4657 = vpop.f32.mrb[0].mxu0
  %4658 = vdwg.mxu0
  %4659 = vmatprep.subr.bf16.mxu0 %v3171
  %4660 = vmatpush1.bf16.msra.mxu0 %v3170
  %4661 = vmatprep.subr.bf16.mxu0 %v3176
  %4662 = vmatpush1.bf16.msra.mxu0 %v3175
  %4663 = vmatprep.subr.bf16.mxu0 %v3181
  %4664 = vmatpush1.bf16.msra.mxu0 %v3180
  %4665 = vmatprep.subr.bf16.mxu0 %v3186
  %4666 = vmatpush1.bf16.msra.mxu0 %v3185
  %4667 = vmatprep.subr.bf16.mxu0 %v3191
  %4668 = vmatpush1.bf16.msra.mxu0 %v3190
  %4669 = vmatprep.subr.bf16.mxu0 %v3196
  %4670 = vmatpush1.bf16.msra.mxu0 %v3195
  %4671 = vmatprep.subr.bf16.mxu0 %v3201
  %4672 = vmatpush1.bf16.msra.mxu0 %v3200
  %4673 = vmatprep.subr.bf16.mxu0 %v3206
  %4674 = vmatpush1.bf16.msra.mxu0 %v3205
  %4675 = vmatprep.subr.bf16.mxu0 %v3211
  %4676 = vmatpush1.bf16.msra.mxu0 %v3210
  %4677 = vmatprep.subr.bf16.mxu0 %v3216
  %4678 = vmatpush1.bf16.msra.mxu0 %v3215
  %4679 = vmatprep.subr.bf16.mxu0 %v3221
  %4680 = vmatpush1.bf16.msra.mxu0 %v3220
  %4681 = vmatprep.subr.bf16.mxu0 %v3226
  %4682 = vmatpush1.bf16.msra.mxu0 %v3225
  %4683 = vmatprep.subr.bf16.mxu0 %v3231
  %4684 = vmatpush1.bf16.msra.mxu0 %v3230
  %4685 = vmatprep.subr.bf16.mxu0 %v3236
  %4686 = vmatpush1.bf16.msra.mxu0 %v3235
  %4687 = vmatprep.subr.bf16.mxu0 %v3241
  %4688 = vmatpush1.bf16.msra.mxu0 %v3240
  %4689 = vmatprep.subr.bf16.mxu0 %v3246
  %4690 = vmatpush1.bf16.msra.mxu0 %v3245
  %4691 = vmatprep.mubr.bf16.mxu0 %v855
  %4692 = vmatmul.mubr.bf16.gmra.mrb[0].mxu0 %v854
  %v4693 = vpop.f32.mrb[0].mxu0
  %v4694 = vadd.f32 %v4653, %v4693
  %v4695 = vpop.f32.mrb[0].mxu0
  %v4696 = vadd.f32 %v4655, %v4695
  %v4697 = vpop.f32.mrb[0].mxu0
  %v4698 = vpop.f32.mrb[0].mxu0
  %4699 = vdwg.mxu0
  %4700 = vmatprep.subr.bf16.mxu0 %v3251
  %4701 = vmatpush1.bf16.msra.mxu0 %v3250
  %4702 = vmatprep.subr.bf16.mxu0 %v3256
  %4703 = vmatpush1.bf16.msra.mxu0 %v3255
  %4704 = vmatprep.subr.bf16.mxu0 %v3261
  %4705 = vmatpush1.bf16.msra.mxu0 %v3260
  %4706 = vmatprep.subr.bf16.mxu0 %v3266
  %4707 = vmatpush1.bf16.msra.mxu0 %v3265
  %4708 = vmatprep.subr.bf16.mxu0 %v3271
  %4709 = vmatpush1.bf16.msra.mxu0 %v3270
  %4710 = vmatprep.subr.bf16.mxu0 %v3276
  %4711 = vmatpush1.bf16.msra.mxu0 %v3275
  %4712 = vmatprep.subr.bf16.mxu0 %v3281
  %4713 = vmatpush1.bf16.msra.mxu0 %v3280
  %4714 = vmatprep.subr.bf16.mxu0 %v3286
  %4715 = vmatpush1.bf16.msra.mxu0 %v3285
  %4716 = vmatprep.subr.bf16.mxu0 %v3291
  %4717 = vmatpush1.bf16.msra.mxu0 %v3290
  %4718 = vmatprep.subr.bf16.mxu0 %v3296
  %4719 = vmatpush1.bf16.msra.mxu0 %v3295
  %4720 = vmatprep.subr.bf16.mxu0 %v3301
  %4721 = vmatpush1.bf16.msra.mxu0 %v3300
  %4722 = vmatprep.subr.bf16.mxu0 %v3306
  %4723 = vmatpush1.bf16.msra.mxu0 %v3305
  %4724 = vmatprep.subr.bf16.mxu0 %v3311
  %4725 = vmatpush1.bf16.msra.mxu0 %v3310
  %4726 = vmatprep.subr.bf16.mxu0 %v3316
  %4727 = vmatpush1.bf16.msra.mxu0 %v3315
  %4728 = vmatprep.subr.bf16.mxu0 %v3321
  %4729 = vmatpush1.bf16.msra.mxu0 %v3320
  %4730 = vmatprep.subr.bf16.mxu0 %v3326
  %4731 = vmatpush1.bf16.msra.mxu0 %v3325
  %4732 = vmatprep.mubr.bf16.mxu0 %v857
  %4733 = vmatmul.mubr.bf16.gmra.mrb[0].mxu0 %v856
  %v4734 = vpop.f32.mrb[0].mxu0
  %v4735 = vadd.f32 %v4694, %v4734
  %v4736 = vpop.f32.mrb[0].mxu0
  %v4737 = vadd.f32 %v4696, %v4736
  %v4738 = vpop.f32.mrb[0].mxu0
  %v4739 = vpop.f32.mrb[0].mxu0
  %4740 = vdwg.mxu0
  %4741 = vmatprep.subr.bf16.mxu0 %v3331
  %4742 = vmatpush1.bf16.msra.mxu0 %v3330
  %4743 = vmatprep.subr.bf16.mxu0 %v3336
  %4744 = vmatpush1.bf16.msra.mxu0 %v3335
  %4745 = vmatprep.subr.bf16.mxu0 %v3341
  %4746 = vmatpush1.bf16.msra.mxu0 %v3340
  %4747 = vmatprep.subr.bf16.mxu0 %v3346
  %4748 = vmatpush1.bf16.msra.mxu0 %v3345
  %4749 = vmatprep.subr.bf16.mxu0 %v3351
  %4750 = vmatpush1.bf16.msra.mxu0 %v3350
  %4751 = vmatprep.subr.bf16.mxu0 %v3356
  %4752 = vmatpush1.bf16.msra.mxu0 %v3355
  %4753 = vmatprep.subr.bf16.mxu0 %v3361
  %4754 = vmatpush1.bf16.msra.mxu0 %v3360
  %4755 = vmatprep.subr.bf16.mxu0 %v3366
  %4756 = vmatpush1.bf16.msra.mxu0 %v3365
  %4757 = vmatprep.subr.bf16.mxu0 %v3371
  %4758 = vmatpush1.bf16.msra.mxu0 %v3370
  %4759 = vmatprep.subr.bf16.mxu0 %v3376
  %4760 = vmatpush1.bf16.msra.mxu0 %v3375
  %4761 = vmatprep.subr.bf16.mxu0 %v3381
  %4762 = vmatpush1.bf16.msra.mxu0 %v3380
  %4763 = vmatprep.subr.bf16.mxu0 %v3386
  %4764 = vmatpush1.bf16.msra.mxu0 %v3385
  %4765 = vmatprep.subr.bf16.mxu0 %v3391
  %4766 = vmatpush1.bf16.msra.mxu0 %v3390
  %4767 = vmatprep.subr.bf16.mxu0 %v3396
  %4768 = vmatpush1.bf16.msra.mxu0 %v3395
  %4769 = vmatprep.subr.bf16.mxu0 %v3401
  %4770 = vmatpush1.bf16.msra.mxu0 %v3400
  %4771 = vmatprep.subr.bf16.mxu0 %v3406
  %4772 = vmatpush1.bf16.msra.mxu0 %v3405
  %4773 = vmatprep.mubr.bf16.mxu0 %v859
  %4774 = vmatmul.mubr.bf16.gmra.mrb[0].mxu0 %v858
  %v4775 = vpop.f32.mrb[0].mxu0
  %v4776 = vadd.f32 %v4735, %v4775
  %v4777 = vpop.f32.mrb[0].mxu0
  %v4778 = vadd.f32 %v4737, %v4777
  %v4779 = vpop.f32.mrb[0].mxu0
  %v4780 = vpop.f32.mrb[0].mxu0
  %4781 = vdwg.mxu0
  %4782 = vmatprep.subr.bf16.mxu0 %v3411
  %4783 = vmatpush1.bf16.msra.mxu0 %v3410
  %4784 = vmatprep.subr.bf16.mxu0 %v3416
  %4785 = vmatpush1.bf16.msra.mxu0 %v3415
  %4786 = vmatprep.subr.bf16.mxu0 %v3421
  %4787 = vmatpush1.bf16.msra.mxu0 %v3420
  %4788 = vmatprep.subr.bf16.mxu0 %v3426
  %4789 = vmatpush1.bf16.msra.mxu0 %v3425
  %4790 = vmatprep.subr.bf16.mxu0 %v3431
  %4791 = vmatpush1.bf16.msra.mxu0 %v3430
  %4792 = vmatprep.subr.bf16.mxu0 %v3436
  %4793 = vmatpush1.bf16.msra.mxu0 %v3435
  %4794 = vmatprep.subr.bf16.mxu0 %v3441
  %4795 = vmatpush1.bf16.msra.mxu0 %v3440
  %4796 = vmatprep.subr.bf16.mxu0 %v3446
  %4797 = vmatpush1.bf16.msra.mxu0 %v3445
  %4798 = vmatprep.subr.bf16.mxu0 %v3451
  %4799 = vmatpush1.bf16.msra.mxu0 %v3450
  %4800 = vmatprep.subr.bf16.mxu0 %v3456
  %4801 = vmatpush1.bf16.msra.mxu0 %v3455
  %4802 = vmatprep.subr.bf16.mxu0 %v3461
  %4803 = vmatpush1.bf16.msra.mxu0 %v3460
  %4804 = vmatprep.subr.bf16.mxu0 %v3466
  %4805 = vmatpush1.bf16.msra.mxu0 %v3465
  %4806 = vmatprep.subr.bf16.mxu0 %v3471
  %4807 = vmatpush1.bf16.msra.mxu0 %v3470
  %4808 = vmatprep.subr.bf16.mxu0 %v3476
  %4809 = vmatpush1.bf16.msra.mxu0 %v3475
  %4810 = vmatprep.subr.bf16.mxu0 %v3481
  %4811 = vmatpush1.bf16.msra.mxu0 %v3480
  %4812 = vmatprep.subr.bf16.mxu0 %v3486
  %4813 = vmatpush1.bf16.msra.mxu0 %v3485
  %4814 = vmatprep.mubr.bf16.mxu0 %v861
  %4815 = vmatmul.mubr.bf16.gmra.mrb[0].mxu0 %v860
  %v4816 = vpop.f32.mrb[0].mxu0
  %v4817 = vadd.f32 %v4776, %v4816
  %v4818 = vpop.f32.mrb[0].mxu0
  %v4819 = vadd.f32 %v4778, %v4818
  %v4820 = vpop.f32.mrb[0].mxu0
  %v4821 = vpop.f32.mrb[0].mxu0
  %4822 = vdwg.mxu0
  %4823 = vmatprep.subr.bf16.mxu0 %v3491
  %4824 = vmatpush1.bf16.msra.mxu0 %v3490
  %4825 = vmatprep.subr.bf16.mxu0 %v3496
  %4826 = vmatpush1.bf16.msra.mxu0 %v3495
  %4827 = vmatprep.subr.bf16.mxu0 %v3501
  %4828 = vmatpush1.bf16.msra.mxu0 %v3500
  %4829 = vmatprep.subr.bf16.mxu0 %v3506
  %4830 = vmatpush1.bf16.msra.mxu0 %v3505
  %4831 = vmatprep.subr.bf16.mxu0 %v3511
  %4832 = vmatpush1.bf16.msra.mxu0 %v3510
  %4833 = vmatprep.subr.bf16.mxu0 %v3516
  %4834 = vmatpush1.bf16.msra.mxu0 %v3515
  %4835 = vmatprep.subr.bf16.mxu0 %v3521
  %4836 = vmatpush1.bf16.msra.mxu0 %v3520
  %4837 = vmatprep.subr.bf16.mxu0 %v3526
  %4838 = vmatpush1.bf16.msra.mxu0 %v3525
  %4839 = vmatprep.subr.bf16.mxu0 %v3531
  %4840 = vmatpush1.bf16.msra.mxu0 %v3530
  %4841 = vmatprep.subr.bf16.mxu0 %v3536
  %4842 = vmatpush1.bf16.msra.mxu0 %v3535
  %4843 = vmatprep.subr.bf16.mxu0 %v3541
  %4844 = vmatpush1.bf16.msra.mxu0 %v3540
  %4845 = vmatprep.subr.bf16.mxu0 %v3546
  %4846 = vmatpush1.bf16.msra.mxu0 %v3545
  %4847 = vmatprep.subr.bf16.mxu0 %v3551
  %4848 = vmatpush1.bf16.msra.mxu0 %v3550
  %4849 = vmatprep.subr.bf16.mxu0 %v3556
  %4850 = vmatpush1.bf16.msra.mxu0 %v3555
  %4851 = vmatprep.subr.bf16.mxu0 %v3561
  %4852 = vmatpush1.bf16.msra.mxu0 %v3560
  %4853 = vmatprep.subr.bf16.mxu0 %v3566
  %4854 = vmatpush1.bf16.msra.mxu0 %v3565
  %4855 = vmatprep.mubr.bf16.mxu0 %v863
  %4856 = vmatmul.mubr.bf16.gmra.mrb[0].mxu0 %v862
  %v4857 = vpop.f32.mrb[0].mxu0
  %v4858 = vadd.f32 %v4817, %v4857
  %v4859 = vpop.f32.mrb[0].mxu0
  %v4860 = vadd.f32 %v4819, %v4859
  %v4861 = vpop.f32.mrb[0].mxu0
  %v4862 = vpop.f32.mrb[0].mxu0
  %4863 = vdwg.mxu0
  %4864 = vmatprep.subr.bf16.mxu0 0
  %4865 = vmatpush1.bf16.msra.mxu0 %v2932
  %4866 = vmatprep.subr.bf16.mxu0 0
  %4867 = vmatpush1.bf16.msra.mxu0 %v2937
  %4868 = vmatprep.subr.bf16.mxu0 0
  %4869 = vmatpush1.bf16.msra.mxu0 %v2942
  %4870 = vmatprep.subr.bf16.mxu0 0
  %4871 = vmatpush1.bf16.msra.mxu0 %v2947
  %4872 = vmatprep.subr.bf16.mxu0 0
  %4873 = vmatpush1.bf16.msra.mxu0 %v2952
  %4874 = vmatprep.subr.bf16.mxu0 0
  %4875 = vmatpush1.bf16.msra.mxu0 %v2957
  %4876 = vmatprep.subr.bf16.mxu0 0
  %4877 = vmatpush1.bf16.msra.mxu0 %v2962
  %4878 = vmatprep.subr.bf16.mxu0 0
  %4879 = vmatpush1.bf16.msra.mxu0 %v2967
  %4880 = vmatprep.subr.bf16.mxu0 0
  %4881 = vmatpush1.bf16.msra.mxu0 %v2972
  %4882 = vmatprep.subr.bf16.mxu0 0
  %4883 = vmatpush1.bf16.msra.mxu0 %v2977
  %4884 = vmatprep.subr.bf16.mxu0 0
  %4885 = vmatpush1.bf16.msra.mxu0 %v2982
  %4886 = vmatprep.subr.bf16.mxu0 0
  %4887 = vmatpush1.bf16.msra.mxu0 %v2987
  %4888 = vmatprep.subr.bf16.mxu0 0
  %4889 = vmatpush1.bf16.msra.mxu0 %v2992
  %4890 = vmatprep.subr.bf16.mxu0 0
  %4891 = vmatpush1.bf16.msra.mxu0 %v2997
  %4892 = vmatprep.subr.bf16.mxu0 0
  %4893 = vmatpush1.bf16.msra.mxu0 %v3002
  %4894 = vmatprep.subr.bf16.mxu0 0
  %4895 = vmatpush1.bf16.msra.mxu0 %v3007
  %4896 = vmatprep.mubr.bf16.mxu0 %v849
  %4897 = vmatmul.mubr.bf16.gmra.mrb[0].mxu0 %v848
  %v4898 = vpop.f32.mrb[0].mxu0
  %v4899 = vadd.f32 %v818, %v4898
  %v4900 = vpop.f32.mrb[0].mxu0
  %v4901 = vpop.f32.mrb[0].mxu0
  %v4902 = vpop.f32.mrb[0].mxu0
  %4903 = vdwg.mxu0
  %4904 = vmatprep.subr.bf16.mxu0 0
  %4905 = vmatpush1.bf16.msra.mxu0 %v3012
  %4906 = vmatprep.subr.bf16.mxu0 0
  %4907 = vmatpush1.bf16.msra.mxu0 %v3017
  %4908 = vmatprep.subr.bf16.mxu0 0
  %4909 = vmatpush1.bf16.msra.mxu0 %v3022
  %4910 = vmatprep.subr.bf16.mxu0 0
  %4911 = vmatpush1.bf16.msra.mxu0 %v3027
  %4912 = vmatprep.subr.bf16.mxu0 0
  %4913 = vmatpush1.bf16.msra.mxu0 %v3032
  %4914 = vmatprep.subr.bf16.mxu0 0
  %4915 = vmatpush1.bf16.msra.mxu0 %v3037
  %4916 = vmatprep.subr.bf16.mxu0 0
  %4917 = vmatpush1.bf16.msra.mxu0 %v3042
  %4918 = vmatprep.subr.bf16.mxu0 0
  %4919 = vmatpush1.bf16.msra.mxu0 %v3047
  %4920 = vmatprep.subr.bf16.mxu0 0
  %4921 = vmatpush1.bf16.msra.mxu0 %v3052
  %4922 = vmatprep.subr.bf16.mxu0 0
  %4923 = vmatpush1.bf16.msra.mxu0 %v3057
  %4924 = vmatprep.subr.bf16.mxu0 0
  %4925 = vmatpush1.bf16.msra.mxu0 %v3062
  %4926 = vmatprep.subr.bf16.mxu0 0
  %4927 = vmatpush1.bf16.msra.mxu0 %v3067
  %4928 = vmatprep.subr.bf16.mxu0 0
  %4929 = vmatpush1.bf16.msra.mxu0 %v3072
  %4930 = vmatprep.subr.bf16.mxu0 0
  %4931 = vmatpush1.bf16.msra.mxu0 %v3077
  %4932 = vmatprep.subr.bf16.mxu0 0
  %4933 = vmatpush1.bf16.msra.mxu0 %v3082
  %4934 = vmatprep.subr.bf16.mxu0 0
  %4935 = vmatpush1.bf16.msra.mxu0 %v3087
  %4936 = vmatprep.mubr.bf16.mxu0 %v851
  %4937 = vmatmul.mubr.bf16.gmra.mrb[0].mxu0 %v850
  %v4938 = vpop.f32.mrb[0].mxu0
  %v4939 = vadd.f32 %v4899, %v4938
  %v4940 = vpop.f32.mrb[0].mxu0
  %v4941 = vpop.f32.mrb[0].mxu0
  %v4942 = vpop.f32.mrb[0].mxu0
  %4943 = vdwg.mxu0
  %4944 = vmatprep.subr.bf16.mxu0 0
  %4945 = vmatpush1.bf16.msra.mxu0 %v3092
  %4946 = vmatprep.subr.bf16.mxu0 0
  %4947 = vmatpush1.bf16.msra.mxu0 %v3097
  %4948 = vmatprep.subr.bf16.mxu0 0
  %4949 = vmatpush1.bf16.msra.mxu0 %v3102
  %4950 = vmatprep.subr.bf16.mxu0 0
  %4951 = vmatpush1.bf16.msra.mxu0 %v3107
  %4952 = vmatprep.subr.bf16.mxu0 0
  %4953 = vmatpush1.bf16.msra.mxu0 %v3112
  %4954 = vmatprep.subr.bf16.mxu0 0
  %4955 = vmatpush1.bf16.msra.mxu0 %v3117
  %4956 = vmatprep.subr.bf16.mxu0 0
  %4957 = vmatpush1.bf16.msra.mxu0 %v3122
  %4958 = vmatprep.subr.bf16.mxu0 0
  %4959 = vmatpush1.bf16.msra.mxu0 %v3127
  %4960 = vmatprep.subr.bf16.mxu0 0
  %4961 = vmatpush1.bf16.msra.mxu0 %v3132
  %4962 = vmatprep.subr.bf16.mxu0 0
  %4963 = vmatpush1.bf16.msra.mxu0 %v3137
  %4964 = vmatprep.subr.bf16.mxu0 0
  %4965 = vmatpush1.bf16.msra.mxu0 %v3142
  %4966 = vmatprep.subr.bf16.mxu0 0
  %4967 = vmatpush1.bf16.msra.mxu0 %v3147
  %4968 = vmatprep.subr.bf16.mxu0 0
  %4969 = vmatpush1.bf16.msra.mxu0 %v3152
  %4970 = vmatprep.subr.bf16.mxu0 0
  %4971 = vmatpush1.bf16.msra.mxu0 %v3157
  %4972 = vmatprep.subr.bf16.mxu0 0
  %4973 = vmatpush1.bf16.msra.mxu0 %v3162
  %4974 = vmatprep.subr.bf16.mxu0 0
  %4975 = vmatpush1.bf16.msra.mxu0 %v3167
  %4976 = vmatprep.mubr.bf16.mxu0 %v853
  %4977 = vmatmul.mubr.bf16.gmra.mrb[0].mxu0 %v852
  %v4978 = vpop.f32.mrb[0].mxu0
  %v4979 = vadd.f32 %v4939, %v4978
  %v4980 = vpop.f32.mrb[0].mxu0
  %v4981 = vpop.f32.mrb[0].mxu0
  %v4982 = vpop.f32.mrb[0].mxu0
  %4983 = vdwg.mxu0
  %4984 = vmatprep.subr.bf16.mxu0 0
  %4985 = vmatpush1.bf16.msra.mxu0 %v3172
  %4986 = vmatprep.subr.bf16.mxu0 0
  %4987 = vmatpush1.bf16.msra.mxu0 %v3177
  %4988 = vmatprep.subr.bf16.mxu0 0
  %4989 = vmatpush1.bf16.msra.mxu0 %v3182
  %4990 = vmatprep.subr.bf16.mxu0 0
  %4991 = vmatpush1.bf16.msra.mxu0 %v3187
  %4992 = vmatprep.subr.bf16.mxu0 0
  %4993 = vmatpush1.bf16.msra.mxu0 %v3192
  %4994 = vmatprep.subr.bf16.mxu0 0
  %4995 = vmatpush1.bf16.msra.mxu0 %v3197
  %4996 = vmatprep.subr.bf16.mxu0 0
  %4997 = vmatpush1.bf16.msra.mxu0 %v3202
  %4998 = vmatprep.subr.bf16.mxu0 0
  %4999 = vmatpush1.bf16.msra.mxu0 %v3207
  %5000 = vmatprep.subr.bf16.mxu0 0
  %5001 = vmatpush1.bf16.msra.mxu0 %v3212
  %5002 = vmatprep.subr.bf16.mxu0 0
  %5003 = vmatpush1.bf16.msra.mxu0 %v3217
  %5004 = vmatprep.subr.bf16.mxu0 0
  %5005 = vmatpush1.bf16.msra.mxu0 %v3222
  %5006 = vmatprep.subr.bf16.mxu0 0
  %5007 = vmatpush1.bf16.msra.mxu0 %v3227
  %5008 = vmatprep.subr.bf16.mxu0 0
  %5009 = vmatpush1.bf16.msra.mxu0 %v3232
  %5010 = vmatprep.subr.bf16.mxu0 0
  %5011 = vmatpush1.bf16.msra.mxu0 %v3237
  %5012 = vmatprep.subr.bf16.mxu0 0
  %5013 = vmatpush1.bf16.msra.mxu0 %v3242
  %5014 = vmatprep.subr.bf16.mxu0 0
  %5015 = vmatpush1.bf16.msra.mxu0 %v3247
  %5016 = vmatprep.mubr.bf16.mxu0 %v855
  %5017 = vmatmul.mubr.bf16.gmra.mrb[0].mxu0 %v854
  %v5018 = vpop.f32.mrb[0].mxu0
  %v5019 = vadd.f32 %v4979, %v5018
  %v5020 = vpop.f32.mrb[0].mxu0
  %v5021 = vpop.f32.mrb[0].mxu0
  %v5022 = vpop.f32.mrb[0].mxu0
  %5023 = vdwg.mxu0
  %5024 = vmatprep.subr.bf16.mxu0 0
  %5025 = vmatpush1.bf16.msra.mxu0 %v3252
  %5026 = vmatprep.subr.bf16.mxu0 0
  %5027 = vmatpush1.bf16.msra.mxu0 %v3257
  %5028 = vmatprep.subr.bf16.mxu0 0
  %5029 = vmatpush1.bf16.msra.mxu0 %v3262
  %5030 = vmatprep.subr.bf16.mxu0 0
  %5031 = vmatpush1.bf16.msra.mxu0 %v3267
  %5032 = vmatprep.subr.bf16.mxu0 0
  %5033 = vmatpush1.bf16.msra.mxu0 %v3272
  %5034 = vmatprep.subr.bf16.mxu0 0
  %5035 = vmatpush1.bf16.msra.mxu0 %v3277
  %5036 = vmatprep.subr.bf16.mxu0 0
  %5037 = vmatpush1.bf16.msra.mxu0 %v3282
  %5038 = vmatprep.subr.bf16.mxu0 0
  %5039 = vmatpush1.bf16.msra.mxu0 %v3287
  %5040 = vmatprep.subr.bf16.mxu0 0
  %5041 = vmatpush1.bf16.msra.mxu0 %v3292
  %5042 = vmatprep.subr.bf16.mxu0 0
  %5043 = vmatpush1.bf16.msra.mxu0 %v3297
  %5044 = vmatprep.subr.bf16.mxu0 0
  %5045 = vmatpush1.bf16.msra.mxu0 %v3302
  %5046 = vmatprep.subr.bf16.mxu0 0
  %5047 = vmatpush1.bf16.msra.mxu0 %v3307
  %5048 = vmatprep.subr.bf16.mxu0 0
  %5049 = vmatpush1.bf16.msra.mxu0 %v3312
  %5050 = vmatprep.subr.bf16.mxu0 0
  %5051 = vmatpush1.bf16.msra.mxu0 %v3317
  %5052 = vmatprep.subr.bf16.mxu0 0
  %5053 = vmatpush1.bf16.msra.mxu0 %v3322
  %5054 = vmatprep.subr.bf16.mxu0 0
  %5055 = vmatpush1.bf16.msra.mxu0 %v3327
  %5056 = vmatprep.mubr.bf16.mxu0 %v857
  %5057 = vmatmul.mubr.bf16.gmra.mrb[0].mxu0 %v856
  %v5058 = vpop.f32.mrb[0].mxu0
  %v5059 = vadd.f32 %v5019, %v5058
  %v5060 = vpop.f32.mrb[0].mxu0
  %v5061 = vpop.f32.mrb[0].mxu0
  %v5062 = vpop.f32.mrb[0].mxu0
  %5063 = vdwg.mxu0
  %5064 = vmatprep.subr.bf16.mxu0 0
  %5065 = vmatpush1.bf16.msra.mxu0 %v3332
  %5066 = vmatprep.subr.bf16.mxu0 0
  %5067 = vmatpush1.bf16.msra.mxu0 %v3337
  %5068 = vmatprep.subr.bf16.mxu0 0
  %5069 = vmatpush1.bf16.msra.mxu0 %v3342
  %5070 = vmatprep.subr.bf16.mxu0 0
  %5071 = vmatpush1.bf16.msra.mxu0 %v3347
  %5072 = vmatprep.subr.bf16.mxu0 0
  %5073 = vmatpush1.bf16.msra.mxu0 %v3352
  %5074 = vmatprep.subr.bf16.mxu0 0
  %5075 = vmatpush1.bf16.msra.mxu0 %v3357
  %5076 = vmatprep.subr.bf16.mxu0 0
  %5077 = vmatpush1.bf16.msra.mxu0 %v3362
  %5078 = vmatprep.subr.bf16.mxu0 0
  %5079 = vmatpush1.bf16.msra.mxu0 %v3367
  %5080 = vmatprep.subr.bf16.mxu0 0
  %5081 = vmatpush1.bf16.msra.mxu0 %v3372
  %5082 = vmatprep.subr.bf16.mxu0 0
  %5083 = vmatpush1.bf16.msra.mxu0 %v3377
  %5084 = vmatprep.subr.bf16.mxu0 0
  %5085 = vmatpush1.bf16.msra.mxu0 %v3382
  %5086 = vmatprep.subr.bf16.mxu0 0
  %5087 = vmatpush1.bf16.msra.mxu0 %v3387
  %5088 = vmatprep.subr.bf16.mxu0 0
  %5089 = vmatpush1.bf16.msra.mxu0 %v3392
  %5090 = vmatprep.subr.bf16.mxu0 0
  %5091 = vmatpush1.bf16.msra.mxu0 %v3397
  %5092 = vmatprep.subr.bf16.mxu0 0
  %5093 = vmatpush1.bf16.msra.mxu0 %v3402
  %5094 = vmatprep.subr.bf16.mxu0 0
  %5095 = vmatpush1.bf16.msra.mxu0 %v3407
  %5096 = vmatprep.mubr.bf16.mxu0 %v859
  %5097 = vmatmul.mubr.bf16.gmra.mrb[0].mxu0 %v858
  %v5098 = vpop.f32.mrb[0].mxu0
  %v5099 = vadd.f32 %v5059, %v5098
  %v5100 = vpop.f32.mrb[0].mxu0
  %v5101 = vpop.f32.mrb[0].mxu0
  %v5102 = vpop.f32.mrb[0].mxu0
  %5103 = vdwg.mxu0
  %5104 = vmatprep.subr.bf16.mxu0 0
  %5105 = vmatpush1.bf16.msra.mxu0 %v3412
  %5106 = vmatprep.subr.bf16.mxu0 0
  %5107 = vmatpush1.bf16.msra.mxu0 %v3417
  %5108 = vmatprep.subr.bf16.mxu0 0
  %5109 = vmatpush1.bf16.msra.mxu0 %v3422
  %5110 = vmatprep.subr.bf16.mxu0 0
  %5111 = vmatpush1.bf16.msra.mxu0 %v3427
  %5112 = vmatprep.subr.bf16.mxu0 0
  %5113 = vmatpush1.bf16.msra.mxu0 %v3432
  %5114 = vmatprep.subr.bf16.mxu0 0
  %5115 = vmatpush1.bf16.msra.mxu0 %v3437
  %5116 = vmatprep.subr.bf16.mxu0 0
  %5117 = vmatpush1.bf16.msra.mxu0 %v3442
  %5118 = vmatprep.subr.bf16.mxu0 0
  %5119 = vmatpush1.bf16.msra.mxu0 %v3447
  %5120 = vmatprep.subr.bf16.mxu0 0
  %5121 = vmatpush1.bf16.msra.mxu0 %v3452
  %5122 = vmatprep.subr.bf16.mxu0 0
  %5123 = vmatpush1.bf16.msra.mxu0 %v3457
  %5124 = vmatprep.subr.bf16.mxu0 0
  %5125 = vmatpush1.bf16.msra.mxu0 %v3462
  %5126 = vmatprep.subr.bf16.mxu0 0
  %5127 = vmatpush1.bf16.msra.mxu0 %v3467
  %5128 = vmatprep.subr.bf16.mxu0 0
  %5129 = vmatpush1.bf16.msra.mxu0 %v3472
  %5130 = vmatprep.subr.bf16.mxu0 0
  %5131 = vmatpush1.bf16.msra.mxu0 %v3477
  %5132 = vmatprep.subr.bf16.mxu0 0
  %5133 = vmatpush1.bf16.msra.mxu0 %v3482
  %5134 = vmatprep.subr.bf16.mxu0 0
  %5135 = vmatpush1.bf16.msra.mxu0 %v3487
  %5136 = vmatprep.mubr.bf16.mxu0 %v861
  %5137 = vmatmul.mubr.bf16.gmra.mrb[0].mxu0 %v860
  %v5138 = vpop.f32.mrb[0].mxu0
  %v5139 = vadd.f32 %v5099, %v5138
  %v5140 = vpop.f32.mrb[0].mxu0
  %v5141 = vpop.f32.mrb[0].mxu0
  %v5142 = vpop.f32.mrb[0].mxu0
  %5143 = vdwg.mxu0
  %5144 = vmatprep.subr.bf16.mxu0 0
  %5145 = vmatpush1.bf16.msra.mxu0 %v3492
  %5146 = vmatprep.subr.bf16.mxu0 0
  %5147 = vmatpush1.bf16.msra.mxu0 %v3497
  %5148 = vmatprep.subr.bf16.mxu0 0
  %5149 = vmatpush1.bf16.msra.mxu0 %v3502
  %5150 = vmatprep.subr.bf16.mxu0 0
  %5151 = vmatpush1.bf16.msra.mxu0 %v3507
  %5152 = vmatprep.subr.bf16.mxu0 0
  %5153 = vmatpush1.bf16.msra.mxu0 %v3512
  %5154 = vmatprep.subr.bf16.mxu0 0
  %5155 = vmatpush1.bf16.msra.mxu0 %v3517
  %5156 = vmatprep.subr.bf16.mxu0 0
  %5157 = vmatpush1.bf16.msra.mxu0 %v3522
  %5158 = vmatprep.subr.bf16.mxu0 0
  %5159 = vmatpush1.bf16.msra.mxu0 %v3527
  %5160 = vmatprep.subr.bf16.mxu0 0
  %5161 = vmatpush1.bf16.msra.mxu0 %v3532
  %5162 = vmatprep.subr.bf16.mxu0 0
  %5163 = vmatpush1.bf16.msra.mxu0 %v3537
  %5164 = vmatprep.subr.bf16.mxu0 0
  %5165 = vmatpush1.bf16.msra.mxu0 %v3542
  %5166 = vmatprep.subr.bf16.mxu0 0
  %5167 = vmatpush1.bf16.msra.mxu0 %v3547
  %5168 = vmatprep.subr.bf16.mxu0 0
  %5169 = vmatpush1.bf16.msra.mxu0 %v3552
  %5170 = vmatprep.subr.bf16.mxu0 0
  %5171 = vmatpush1.bf16.msra.mxu0 %v3557
  %5172 = vmatprep.subr.bf16.mxu0 0
  %5173 = vmatpush1.bf16.msra.mxu0 %v3562
  %5174 = vmatprep.subr.bf16.mxu0 0
  %5175 = vmatpush1.bf16.msra.mxu0 %v3567
  %5176 = vmatprep.mubr.bf16.mxu0 %v863
  %5177 = vmatmul.mubr.bf16.gmra.mrb[0].mxu0 %v862
  %v5178 = vpop.f32.mrb[0].mxu0
  %v5179 = vadd.f32 %v5139, %v5178
  %v5180 = vpop.f32.mrb[0].mxu0
  %v5181 = vpop.f32.mrb[0].mxu0
  %v5182 = vpop.f32.mrb[0].mxu0
  %5183 = vdwg.mxu0
  %v5184 = vmax.f32 %v4530, 0.0
  %v5185 = vmax.f32 %v4532, 0.0
  %v5186 = vmax.f32 %v4858, 0.0
  %v5187 = vmax.f32 %v4860, 0.0
  %v5188 = vmax.f32 %v5179, 0.0
  %v5189 = vpack.c.bf16 %v5184, %v5184
  %v5190 = vpack.c.bf16 %v5185, %v5185
  %v5191 = vpack.c.bf16 %v5186, %v5186
  %v5192 = vpack.c.bf16 %v5187, %v5187
  %v5193 = vpack.c.bf16 %v5188, %v5188
  %v5194 = vld [vmem:[%s3] sm:$0xf]
  %v5195 = vld [vmem:[%s3 + $0x4] sm:$0xf]
  %v5196 = vld [vmem:[%s3 + $0x8] sm:$0xf]
  %v5197 = vld [vmem:[%s3 + $0xc] sm:$0xf]
  %v5198 = vld [vmem:[%s3 + $0x10] sm:$0xf]
  %v5199 = vld [vmem:[%s3 + $0x14] sm:$0xf]
  %v5200 = vld [vmem:[%s3 + $0x18] sm:$0xf]
  %v5201 = vld [vmem:[%s3 + $0x1c] sm:$0xf]
  %v5202 = vld [vmem:[%s3 + $0x20] sm:$0xf]
  %v5203 = vld [vmem:[%s3 + $0x24] sm:$0xf]
  %v5204 = vld [vmem:[%s3 + $0x28] sm:$0xf]
  %v5205 = vld [vmem:[%s3 + $0x2c] sm:$0xf]
  %v5206 = vld [vmem:[%s3 + $0x30] sm:$0xf]
  %v5207 = vld [vmem:[%s3 + $0x34] sm:$0xf]
  %v5208 = vld [vmem:[%s3 + $0x38] sm:$0xf]
  %v5209 = vld [vmem:[%s3 + $0x3c] sm:$0xf]
  %v5210 = vld [vmem:[%s3 + $0x40] sm:$0xf]
  %v5211 = vld [vmem:[%s3 + $0x44] sm:$0xf]
  %v5212 = vld [vmem:[%s3 + $0x48] sm:$0xf]
  %v5213 = vld [vmem:[%s3 + $0x4c] sm:$0xf]
  %v5214 = vld [vmem:[%s3 + $0x50] sm:$0xf]
  %v5215 = vld [vmem:[%s3 + $0x54] sm:$0xf]
  %v5216 = vld [vmem:[%s3 + $0x58] sm:$0xf]
  %v5217 = vld [vmem:[%s3 + $0x5c] sm:$0xf]
  %v5218 = vld [vmem:[%s3 + $0x60] sm:$0xf]
  %v5219 = vld [vmem:[%s3 + $0x64] sm:$0xf]
  %v5220 = vld [vmem:[%s3 + $0x68] sm:$0xf]
  %v5221 = vld [vmem:[%s3 + $0x6c] sm:$0xf]
  %v5222 = vld [vmem:[%s3 + $0x70] sm:$0xf]
  %v5223 = vld [vmem:[%s3 + $0x74] sm:$0xf]
  %v5224 = vld [vmem:[%s3 + $0x78] sm:$0xf]
  %v5225 = vld [vmem:[%s3 + $0x7c] sm:$0xf]
  %v5226 = vld [vmem:[%s3 + $0x80] sm:$0xf]
  %v5227 = vld [vmem:[%s3 + $0x84] sm:$0xf]
  %v5228 = vld [vmem:[%s3 + $0x88] sm:$0xf]
  %v5229 = vld [vmem:[%s3 + $0x8c] sm:$0xf]
  %v5230 = vld [vmem:[%s3 + $0x90] sm:$0xf]
  %v5231 = vld [vmem:[%s3 + $0x94] sm:$0xf]
  %v5232 = vld [vmem:[%s3 + $0x98] sm:$0xf]
  %v5233 = vld [vmem:[%s3 + $0x9c] sm:$0xf]
  %v5234 = vld [vmem:[%s3 + $0xa0] sm:$0xf]
  %v5235 = vld [vmem:[%s3 + $0xa4] sm:$0xf]
  %v5236 = vld [vmem:[%s3 + $0xa8] sm:$0xf]
  %v5237 = vld [vmem:[%s3 + $0xac] sm:$0xf]
  %v5238 = vld [vmem:[%s3 + $0xb0] sm:$0xf]
  %v5239 = vld [vmem:[%s3 + $0xb4] sm:$0xf]
  %v5240 = vld [vmem:[%s3 + $0xb8] sm:$0xf]
  %v5241 = vld [vmem:[%s3 + $0xbc] sm:$0xf]
  %v5242 = vld [vmem:[%s3 + $0xc0] sm:$0xf]
  %v5243 = vld [vmem:[%s3 + $0xc4] sm:$0xf]
  %v5244 = vld [vmem:[%s3 + $0xc8] sm:$0xf]
  %v5245 = vld [vmem:[%s3 + $0xcc] sm:$0xf]
  %v5246 = vld [vmem:[%s3 + $0xd0] sm:$0xf]
  %v5247 = vld [vmem:[%s3 + $0xd4] sm:$0xf]
  %v5248 = vld [vmem:[%s3 + $0xd8] sm:$0xf]
  %v5249 = vld [vmem:[%s3 + $0xdc] sm:$0xf]
  %v5250 = vld [vmem:[%s3 + $0xe0] sm:$0xf]
  %v5251 = vld [vmem:[%s3 + $0xe4] sm:$0xf]
  %v5252 = vld [vmem:[%s3 + $0xe8] sm:$0xf]
  %v5253 = vld [vmem:[%s3 + $0xec] sm:$0xf]
  %v5254 = vld [vmem:[%s3 + $0xf0] sm:$0xf]
  %v5255 = vld [vmem:[%s3 + $0xf4] sm:$0xf]
  %v5256 = vld [vmem:[%s3 + $0xf8] sm:$0xf]
  %v5257 = vld [vmem:[%s3 + $0xfc] sm:$0xf]
  %v5258 = vld [vmem:[%s3 + $0x100] sm:$0xf]
  %v5259 = vld [vmem:[%s3 + $0x104] sm:$0xf]
  %v5260 = vld [vmem:[%s3 + $0x108] sm:$0xf]
  %v5261 = vld [vmem:[%s3 + $0x10c] sm:$0xf]
  %v5262 = vld [vmem:[%s3 + $0x110] sm:$0xf]
  %v5263 = vld [vmem:[%s3 + $0x114] sm:$0xf]
  %v5264 = vld [vmem:[%s3 + $0x118] sm:$0xf]
  %v5265 = vld [vmem:[%s3 + $0x11c] sm:$0xf]
  %v5266 = vld [vmem:[%s3 + $0x120] sm:$0xf]
  %v5267 = vld [vmem:[%s3 + $0x124] sm:$0xf]
  %v5268 = vld [vmem:[%s3 + $0x128] sm:$0xf]
  %v5269 = vld [vmem:[%s3 + $0x12c] sm:$0xf]
  %v5270 = vld [vmem:[%s3 + $0x130] sm:$0xf]
  %v5271 = vld [vmem:[%s3 + $0x134] sm:$0xf]
  %v5272 = vld [vmem:[%s3 + $0x138] sm:$0xf]
  %v5273 = vld [vmem:[%s3 + $0x13c] sm:$0xf]
  %v5274 = vld [vmem:[%s4] sm:$0x1]
  %v5276 = vlaneseq
  %v5277 = vshrl.u32 %v5276, 7
  %v5278 = vsub.s32 0, %v5277
  %v5279 = vrot.slane %v5274, %v5278
  %v5361 = vunpack.c.l.b16 %v5194
  %v5362 = vunpack.c.l.b16 %v5195
  %v5363 = vunpack.c.l.b16 %v5196
  %v5364 = vunpack.c.l.b16 %v5197
  %v5365 = vunpack.c.l.b16 %v5198
  %v5366 = vunpack.c.l.b16 %v5199
  %v5367 = vunpack.c.l.b16 %v5200
  %v5368 = vunpack.c.l.b16 %v5201
  %v5369 = vunpack.c.l.b16 %v5202
  %v5370 = vunpack.c.l.b16 %v5203
  %v5371 = vunpack.c.l.b16 %v5204
  %v5372 = vunpack.c.l.b16 %v5205
  %v5373 = vunpack.c.l.b16 %v5206
  %v5374 = vunpack.c.l.b16 %v5207
  %v5375 = vunpack.c.l.b16 %v5208
  %v5376 = vunpack.c.l.b16 %v5209
  %v5377 = vunpack.c.l.b16 %v5210
  %v5378 = vunpack.c.l.b16 %v5211
  %v5379 = vunpack.c.l.b16 %v5212
  %v5380 = vunpack.c.l.b16 %v5213
  %v5381 = vunpack.c.l.b16 %v5214
  %v5382 = vunpack.c.l.b16 %v5215
  %v5383 = vunpack.c.l.b16 %v5216
  %v5384 = vunpack.c.l.b16 %v5217
  %v5385 = vunpack.c.l.b16 %v5218
  %v5386 = vunpack.c.l.b16 %v5219
  %v5387 = vunpack.c.l.b16 %v5220
  %v5388 = vunpack.c.l.b16 %v5221
  %v5389 = vunpack.c.l.b16 %v5222
  %v5390 = vunpack.c.l.b16 %v5223
  %v5391 = vunpack.c.l.b16 %v5224
  %v5392 = vunpack.c.l.b16 %v5225
  %v5393 = vunpack.c.l.b16 %v5226
  %v5394 = vunpack.c.l.b16 %v5227
  %v5395 = vunpack.c.l.b16 %v5228
  %v5396 = vunpack.c.l.b16 %v5229
  %v5397 = vunpack.c.l.b16 %v5230
  %v5398 = vunpack.c.l.b16 %v5231
  %v5399 = vunpack.c.l.b16 %v5232
  %v5400 = vunpack.c.l.b16 %v5233
  %v5401 = vunpack.c.l.b16 %v5234
  %v5402 = vunpack.c.l.b16 %v5235
  %v5403 = vunpack.c.l.b16 %v5236
  %v5404 = vunpack.c.l.b16 %v5237
  %v5405 = vunpack.c.l.b16 %v5238
  %v5406 = vunpack.c.l.b16 %v5239
  %v5407 = vunpack.c.l.b16 %v5240
  %v5408 = vunpack.c.l.b16 %v5241
  %v5409 = vunpack.c.l.b16 %v5242
  %v5410 = vunpack.c.l.b16 %v5243
  %v5411 = vunpack.c.l.b16 %v5244
  %v5412 = vunpack.c.l.b16 %v5245
  %v5413 = vunpack.c.l.b16 %v5246
  %v5414 = vunpack.c.l.b16 %v5247
  %v5415 = vunpack.c.l.b16 %v5248
  %v5416 = vunpack.c.l.b16 %v5249
  %v5417 = vunpack.c.l.b16 %v5250
  %v5418 = vunpack.c.l.b16 %v5251
  %v5419 = vunpack.c.l.b16 %v5252
  %v5420 = vunpack.c.l.b16 %v5253
  %v5421 = vunpack.c.l.b16 %v5254
  %v5422 = vunpack.c.l.b16 %v5255
  %v5423 = vunpack.c.l.b16 %v5256
  %v5424 = vunpack.c.l.b16 %v5257
  %v5425 = vunpack.c.l.b16 %v5258
  %v5426 = vunpack.c.l.b16 %v5259
  %v5427 = vunpack.c.l.b16 %v5260
  %v5428 = vunpack.c.l.b16 %v5261
  %v5429 = vunpack.c.l.b16 %v5262
  %v5430 = vunpack.c.l.b16 %v5263
  %v5431 = vunpack.c.l.b16 %v5264
  %v5432 = vunpack.c.l.b16 %v5265
  %v5433 = vunpack.c.l.b16 %v5266
  %v5434 = vunpack.c.l.b16 %v5267
  %v5435 = vunpack.c.l.b16 %v5268
  %v5436 = vunpack.c.l.b16 %v5269
  %v5437 = vunpack.c.l.b16 %v5270
  %v5438 = vunpack.c.l.b16 %v5271
  %v5439 = vunpack.c.l.b16 %v5272
  %v5440 = vunpack.c.l.b16 %v5273
  %v5441 = vpack.c.b16 %v5362, %v5361
  %v5442 = vpack.c.b16 %v5364, %v5363
  %v5443 = vpack.c.b16 %v5366, %v5365
  %v5444 = vpack.c.b16 %v5368, %v5367
  %v5445 = vpack.c.b16 %v5370, %v5369
  %v5446 = vpack.c.b16 %v5372, %v5371
  %v5447 = vpack.c.b16 %v5374, %v5373
  %v5448 = vpack.c.b16 %v5376, %v5375
  %v5449 = vpack.c.b16 %v5378, %v5377
  %v5450 = vpack.c.b16 %v5380, %v5379
  %v5451 = vpack.c.b16 %v5382, %v5381
  %v5452 = vpack.c.b16 %v5384, %v5383
  %v5453 = vpack.c.b16 %v5386, %v5385
  %v5454 = vpack.c.b16 %v5388, %v5387
  %v5455 = vpack.c.b16 %v5390, %v5389
  %v5456 = vpack.c.b16 %v5392, %v5391
  %v5457 = vpack.c.b16 %v5394, %v5393
  %v5458 = vpack.c.b16 %v5396, %v5395
  %v5459 = vpack.c.b16 %v5398, %v5397
  %v5460 = vpack.c.b16 %v5400, %v5399
  %v5461 = vpack.c.b16 %v5402, %v5401
  %v5462 = vpack.c.b16 %v5404, %v5403
  %v5463 = vpack.c.b16 %v5406, %v5405
  %v5464 = vpack.c.b16 %v5408, %v5407
  %v5465 = vpack.c.b16 %v5410, %v5409
  %v5466 = vpack.c.b16 %v5412, %v5411
  %v5467 = vpack.c.b16 %v5414, %v5413
  %v5468 = vpack.c.b16 %v5416, %v5415
  %v5469 = vpack.c.b16 %v5418, %v5417
  %v5470 = vpack.c.b16 %v5420, %v5419
  %v5471 = vpack.c.b16 %v5422, %v5421
  %v5472 = vpack.c.b16 %v5424, %v5423
  %v5473 = vpack.c.b16 %v5426, %v5425
  %v5474 = vpack.c.b16 %v5428, %v5427
  %v5475 = vpack.c.b16 %v5430, %v5429
  %v5476 = vpack.c.b16 %v5432, %v5431
  %v5477 = vpack.c.b16 %v5434, %v5433
  %v5478 = vpack.c.b16 %v5436, %v5435
  %v5479 = vpack.c.b16 %v5438, %v5437
  %v5480 = vpack.c.b16 %v5440, %v5439
  %5521 = vmatprep.subr.bf16.mxu0 0
  %5522 = vmatpush1.bf16.msra.mxu0 %v5441
  %5523 = vmatprep.subr.bf16.mxu0 0
  %5524 = vmatpush1.bf16.msra.mxu0 %v5442
  %5525 = vmatprep.subr.bf16.mxu0 0
  %5526 = vmatpush1.bf16.msra.mxu0 %v5443
  %5527 = vmatprep.subr.bf16.mxu0 0
  %5528 = vmatpush1.bf16.msra.mxu0 %v5444
  %5529 = vmatprep.subr.bf16.mxu0 0
  %5530 = vmatpush1.bf16.msra.mxu0 %v5445
  %5531 = vmatprep.subr.bf16.mxu0 0
  %5532 = vmatpush1.bf16.msra.mxu0 %v5446
  %5533 = vmatprep.subr.bf16.mxu0 0
  %5534 = vmatpush1.bf16.msra.mxu0 %v5447
  %5535 = vmatprep.subr.bf16.mxu0 0
  %5536 = vmatpush1.bf16.msra.mxu0 %v5448
  %5537 = vmatprep.subr.bf16.mxu0 0
  %5538 = vmatpush1.bf16.msra.mxu0 %v5449
  %5539 = vmatprep.subr.bf16.mxu0 0
  %5540 = vmatpush1.bf16.msra.mxu0 %v5450
  %5541 = vmatprep.subr.bf16.mxu0 0
  %5542 = vmatpush1.bf16.msra.mxu0 %v5451
  %5543 = vmatprep.subr.bf16.mxu0 0
  %5544 = vmatpush1.bf16.msra.mxu0 %v5452
  %5545 = vmatprep.subr.bf16.mxu0 0
  %5546 = vmatpush1.bf16.msra.mxu0 %v5453
  %5547 = vmatprep.subr.bf16.mxu0 0
  %5548 = vmatpush1.bf16.msra.mxu0 %v5454
  %5549 = vmatprep.subr.bf16.mxu0 0
  %5550 = vmatpush1.bf16.msra.mxu0 %v5455
  %5551 = vmatprep.subr.bf16.mxu0 0
  %5552 = vmatpush1.bf16.msra.mxu0 %v5456
  %5553 = vmatprep.mubr.bf16.mxu0 %v5190
  %5554 = vmatmul.mubr.bf16.gmra.mrb[0].mxu0 %v5189
  %v5555 = vpop.f32.mrb[0].mxu0
  %v5556 = vadd.f32 %v5279, %v5555
  %v5557 = vpop.f32.mrb[0].mxu0
  %v5558 = vpop.f32.mrb[0].mxu0
  %v5559 = vpop.f32.mrb[0].mxu0
  %5560 = vdwg.mxu0
  %5561 = vmatprep.subr.bf16.mxu0 0
  %5562 = vmatpush1.bf16.msra.mxu0 %v5457
  %5563 = vmatprep.subr.bf16.mxu0 0
  %5564 = vmatpush1.bf16.msra.mxu0 %v5458
  %5565 = vmatprep.subr.bf16.mxu0 0
  %5566 = vmatpush1.bf16.msra.mxu0 %v5459
  %5567 = vmatprep.subr.bf16.mxu0 0
  %5568 = vmatpush1.bf16.msra.mxu0 %v5460
  %5569 = vmatprep.subr.bf16.mxu0 0
  %5570 = vmatpush1.bf16.msra.mxu0 %v5461
  %5571 = vmatprep.subr.bf16.mxu0 0
  %5572 = vmatpush1.bf16.msra.mxu0 %v5462
  %5573 = vmatprep.subr.bf16.mxu0 0
  %5574 = vmatpush1.bf16.msra.mxu0 %v5463
  %5575 = vmatprep.subr.bf16.mxu0 0
  %5576 = vmatpush1.bf16.msra.mxu0 %v5464
  %5577 = vmatprep.subr.bf16.mxu0 0
  %5578 = vmatpush1.bf16.msra.mxu0 %v5465
  %5579 = vmatprep.subr.bf16.mxu0 0
  %5580 = vmatpush1.bf16.msra.mxu0 %v5466
  %5581 = vmatprep.subr.bf16.mxu0 0
  %5582 = vmatpush1.bf16.msra.mxu0 %v5467
  %5583 = vmatprep.subr.bf16.mxu0 0
  %5584 = vmatpush1.bf16.msra.mxu0 %v5468
  %5585 = vmatprep.subr.bf16.mxu0 0
  %5586 = vmatpush1.bf16.msra.mxu0 %v5469
  %5587 = vmatprep.subr.bf16.mxu0 0
  %5588 = vmatpush1.bf16.msra.mxu0 %v5470
  %5589 = vmatprep.subr.bf16.mxu0 0
  %5590 = vmatpush1.bf16.msra.mxu0 %v5471
  %5591 = vmatprep.subr.bf16.mxu0 0
  %5592 = vmatpush1.bf16.msra.mxu0 %v5472
  %5593 = vmatprep.mubr.bf16.mxu0 %v5192
  %5594 = vmatmul.mubr.bf16.gmra.mrb[0].mxu0 %v5191
  %v5595 = vpop.f32.mrb[0].mxu0
  %v5596 = vadd.f32 %v5556, %v5595
  %v5597 = vpop.f32.mrb[0].mxu0
  %v5598 = vpop.f32.mrb[0].mxu0
  %v5599 = vpop.f32.mrb[0].mxu0
  %5600 = vdwg.mxu0
  %5601 = vmatprep.subr.bf16.mxu0 0
  %5602 = vmatpush1.bf16.msra.mxu0 %v5473
  %5603 = vmatprep.subr.bf16.mxu0 0
  %5604 = vmatpush1.bf16.msra.mxu0 %v5474
  %5605 = vmatprep.subr.bf16.mxu0 0
  %5606 = vmatpush1.bf16.msra.mxu0 %v5475
  %5607 = vmatprep.subr.bf16.mxu0 0
  %5608 = vmatpush1.bf16.msra.mxu0 %v5476
  %5609 = vmatprep.subr.bf16.mxu0 0
  %5610 = vmatpush1.bf16.msra.mxu0 %v5477
  %5611 = vmatprep.subr.bf16.mxu0 0
  %5612 = vmatpush1.bf16.msra.mxu0 %v5478
  %5613 = vmatprep.subr.bf16.mxu0 0
  %5614 = vmatpush1.bf16.msra.mxu0 %v5479
  %5615 = vmatprep.subr.bf16.mxu0 0
  %5616 = vmatpush1.bf16.msra.mxu0 %v5480
  %5617 = vmatprep.subr.bf16.mxu0 0
  %5618 = vmatpush1.bf16.msra.mxu0 0
  %5619 = vmatprep.subr.bf16.mxu0 0
  %5620 = vmatpush1.bf16.msra.mxu0 0
  %5621 = vmatprep.subr.bf16.mxu0 0
  %5622 = vmatpush1.bf16.msra.mxu0 0
  %5623 = vmatprep.subr.bf16.mxu0 0
  %5624 = vmatpush1.bf16.msra.mxu0 0
  %5625 = vmatprep.subr.bf16.mxu0 0
  %5626 = vmatpush1.bf16.msra.mxu0 0
  %5627 = vmatprep.subr.bf16.mxu0 0
  %5628 = vmatpush1.bf16.msra.mxu0 0
  %5629 = vmatprep.subr.bf16.mxu0 0
  %5630 = vmatpush1.bf16.msra.mxu0 0
  %5631 = vmatprep.subr.bf16.mxu0 0
  %5632 = vmatpush1.bf16.msra.mxu0 0
  %5633 = vmatprep.mubr.bf16.mxu0 0
  %5634 = vmatmul.mubr.bf16.gmra.mrb[0].mxu0 %v5193
  %v5635 = vpop.f32.mrb[0].mxu0
  %v5636 = vadd.f32 %v5596, %v5635
  %v5637 = vpop.f32.mrb[0].mxu0
  %v5638 = vpop.f32.mrb[0].mxu0
  %v5639 = vpop.f32.mrb[0].mxu0
  %5640 = vdwg.mxu0
  %5641 = vst [vmem:[%s5] sm:$0xff] %v5636
  // Predicated region
  $region22: #{cnn_forward.7} parent=0 // pred_check
    _
  $region23: #{cnn_forward.7} parent=0 // pred_check_branch
    %5643 = sbr.rel (0) target = $region25
  $region24: #{cnn_forward.7} parent=0 // pred_region
    _
  $region25: #{cnn_forward.7} parent=0 // pred_fallthru
    _
  // Predicated region
  $region26: #{cnn_forward.7} parent=0 // pred_check
    _
  $region27: #{cnn_forward.7} parent=0 // pred_check_branch
    %5645 = sbr.rel (0) target = $region29
  $region28: #{cnn_forward.7} parent=0 // pred_region
    _
  $region29: #{cnn_forward.7} parent=0 // pred_fallthru
    _

</llo_original>
